<compile_context>
chip_gen: v5e
topology: v5e:2x2
jax: 0.10.0
libtpu: 0.0.40
codegen_flags: <defaults>
</compile_context>

<pallas_src>
import jax
import jax.numpy as jnp
from jax.experimental import pallas as pl
from jax.experimental.pallas import tpu as pltpu


# Branch channel widths fixed by the InceptionAUnit spec.
_C_B1 = 64    # branch1: 1x1 conv
_C_B2A = 48   # branch2: leading 1x1 conv
_C_B2 = 64    # branch2: 5x5 conv
_C_B3A = 64   # branch3: leading 1x1 conv
_C_B3 = 96    # branch3: both 3x3 convs


# ---------------------------------------------------------------------------
# Fused Pallas kernel (whole Inception-A block)
# ---------------------------------------------------------------------------
def _inception_a_kernel(
    x_ref,                        # (Bb, H, W, Cin)           bf16 (MXU dtype)
    w1_ref, bias1_ref,            # (Cin, 176+Cp), (1, 176+Cp) fused 1x1 convs
    w2_ref, bias2_ref,            # (25*48, 64),  (1, 64)      branch2 5x5
    w3a_ref, bias3a_ref,          # (9*64, 96),   (1, 96)      branch3 3x3 #1
    w3b_ref, bias3b_ref,          # (9*96, 96),   (1, 96)      branch3 3x3 #2
    bias4_ref,                    # (1, Cp)                    pool-branch bias
    o_ref,                        # (Bb, H, W, 256)
    pad2_ref, pad3a_ref, pad3b_ref, pad4_ref,   # zero-padded VMEM scratch
):
    Bb, H, W, Cin = x_ref.shape
    M = Bb * H * W
    f32 = jnp.float32
    mxu_dtype = w1_ref.dtype
    c_pool = bias4_ref.shape[-1]

    def store_padded(pad_ref, flat_val, p):
        # Zero-pad inside VMEM scratch (no jnp.pad / HBM round trip).
        c = pad_ref.shape[-1]
        pad_ref[...] = jnp.zeros(pad_ref.shape, pad_ref.dtype)
        pad_ref[:, p:p + H, p:p + W, :] = (
            flat_val.reshape(Bb, H, W, c).astype(pad_ref.dtype))

    def im2col(pad_ref, k):
        # (M, k*k*C) patch matrix -> one fat GEMM instead of k*k skinny ones.
        c = pad_ref.shape[-1]
        taps = [pad_ref[:, dy:dy + H, dx:dx + W, :]
                for dy in range(k) for dx in range(k)]
        return jnp.concatenate(taps, axis=-1).reshape(M, k * k * c).astype(mxu_dtype)

    def conv_gemm_relu(patches, w_ref, b_ref):
        y = jnp.dot(patches, w_ref[...], preferred_element_type=f32) + b_ref[...]
        return jnp.maximum(y, 0.0)

    # ---- Stage 1: all four branches' leading 1x1 convs as ONE GEMM -------
    # Columns ordered [b1 | b3a | b2a | b4]; BN scale already folded into w1.
    x2 = x_ref[...].reshape(M, Cin)
    t = jnp.dot(x2, w1_ref[...], preferred_element_type=f32) + bias1_ref[...]

    b1_out = jnp.maximum(t[:, :_C_B1], 0.0)
    t3a = jnp.maximum(t[:, _C_B1:_C_B1 + _C_B3A], 0.0)
    t2a = jnp.maximum(t[:, _C_B1 + _C_B3A:_C_B1 + _C_B3A + _C_B2A], 0.0)
    t4 = t[:, _C_B1 + _C_B3A + _C_B2A:]      # pool branch: bias/ReLU after pool

    # ---- Branch 2: 5x5 conv, pad 2 (im2col K = 25*48 = 1200) --------------
    store_padded(pad2_ref, t2a, 2)
    b2_out = conv_gemm_relu(im2col(pad2_ref, 5), w2_ref, bias2_ref)

    # ---- Branch 3: 3x3 conv, pad 1  ->  3x3 conv, pad 1 --------------------
    store_padded(pad3a_ref, t3a, 1)
    t3b = conv_gemm_relu(im2col(pad3a_ref, 3), w3a_ref, bias3a_ref)
    store_padded(pad3b_ref, t3b, 1)
    b3_out = conv_gemm_relu(im2col(pad3b_ref, 3), w3b_ref, bias3b_ref)

    # ---- Branch 4: 3x3/s1/p1 avg pool (count_include_pad=True) ------------
    # The branch's 1x1 conv commutes with this linear pool, so it was already
    # applied in the stage-1 GEMM; only pool + BN-bias + ReLU remain.
    store_padded(pad4_ref, t4, 1)
    acc = jnp.zeros((Bb, H, W, c_pool), f32)
    for dy in range(3):
        for dx in range(3):
            acc = acc + pad4_ref[:, dy:dy + H, dx:dx + W, :]
    b4_out = jnp.maximum(acc.reshape(M, c_pool) * (1.0 / 9.0) + bias4_ref[...], 0.0)

    # ---- Lane-dense 256-channel output, single unmasked store -------------
    out = jnp.concatenate([b1_out, b2_out, b3_out, b4_out], axis=-1)
    o_ref[...] = out.reshape(Bb, H, W, out.shape[-1]).astype(o_ref.dtype)


# ---------------------------------------------------------------------------
# Wrapper
# ---------------------------------------------------------------------------
def inception_a_pallas(x_nhwc, fp):
    B, H, W, Cin = x_nhwc.shape
    pool_out = fp["bias4"].shape[-1]
    c_out = _C_B1 + _C_B2 + _C_B3 + pool_out
    compute_dtype = fp["w1"].dtype

    # Whole batch per grid step -> GEMM M = B*H*W (128 rows at the demo shapes).
    # TODO(synk): for production InceptionV3 shapes (35x35, larger B) tile the
    #             batch/rows here and bump vmem_limit_bytes for v7x's 64 MiB VMEM.
    bb = B
    grid = (pl.cdiv(B, bb),)

    def full_spec(a):
        nd = a.ndim

        def imap(i):
            return (0,) * nd

        return pl.BlockSpec(a.shape, imap)

    return pl.pallas_call(
        _inception_a_kernel,
        out_shape=jax.ShapeDtypeStruct((B, H, W, c_out), x_nhwc.dtype),
        grid=grid,
        in_specs=[
            pl.BlockSpec((bb, H, W, Cin), lambda i: (i, 0, 0, 0)),
            full_spec(fp["w1"]), full_spec(fp["bias1"]),
            full_spec(fp["w2"]), full_spec(fp["bias2"]),
            full_spec(fp["w3a"]), full_spec(fp["bias3a"]),
            full_spec(fp["w3b"]), full_spec(fp["bias3b"]),
            full_spec(fp["bias4"]),
        ],
        out_specs=pl.BlockSpec((bb, H, W, c_out), lambda i: (i, 0, 0, 0)),
        scratch_shapes=[
            pltpu.VMEM((bb, H + 4, W + 4, _C_B2A), jnp.float32),   # branch2 pad-2
            pltpu.VMEM((bb, H + 2, W + 2, _C_B3A), jnp.float32),   # branch3 pad-1
            pltpu.VMEM((bb, H + 2, W + 2, _C_B3), jnp.float32),    # branch3 pad-1
            pltpu.VMEM((bb, H + 2, W + 2, pool_out), jnp.float32), # pool pad-1
        ],
        compiler_params=pltpu.CompilerParams(
            dimension_semantics=("parallel",)),
    )(x_nhwc.astype(compute_dtype),
      fp["w1"], fp["bias1"], fp["w2"], fp["bias2"],
      fp["w3a"], fp["bias3a"], fp["w3b"], fp["bias3b"], fp["bias4"])


@jax.jit
def inception_a_unit(x_nchw, fused_params):
    x = jnp.transpose(x_nchw, (0, 2, 3, 1))      # NCHW -> NHWC (channels = lanes)
    y = inception_a_pallas(x, fused_params)
    return jnp.transpose(y, (0, 3, 1, 2))        # NHWC -> NCHW


# ---------------------------------------------------------------------------
# Parameters (deterministic, synthetic) + fusion/folding prep
# ---------------------------------------------------------------------------
def make_incept_conv_params(key, cin, cout, ksize):
    """Conv weight (kh, kw, cin, cout) + folded-BN scale/bias (inference mode)."""
    kh = kw = ksize
    k1, k2, k3, k4, k5 = jax.random.split(key, 5)
    fan_in = cin * kh * kw
    bound = 1.0 / (fan_in ** 0.5)
    w = jax.random.uniform(k1, (kh, kw, cin, cout), jnp.float32, -bound, bound)
    gamma = 1.0 + 0.1 * jax.random.normal(k2, (cout,), jnp.float32)
    beta = 0.1 * jax.random.normal(k3, (cout,), jnp.float32)
    running_mean = 0.1 * jax.random.normal(k4, (cout,), jnp.float32)
    running_var = jnp.abs(jax.random.normal(k5, (cout,), jnp.float32)) + 0.5
    eps = 1e-3  # BatchNorm2d(eps=0.001)
    scale = gamma / jnp.sqrt(running_var + eps)
    bias = beta - running_mean * scale
    return {"w": w, "scale": scale, "bias": bias}


def make_inception_a_params(key, in_channels, out_channels):
    assert out_channels > 224
    pool_out = out_channels - 224
    ks = jax.random.split(key, 7)
    return {
        "b1_conv1": make_incept_conv_params(ks[0], in_channels, 64, 1),
        "b2_conv1": make_incept_conv_params(ks[1], in_channels, 48, 1),
        "b2_conv2": make_incept_conv_params(ks[2], 48, 64, 5),
        "b3_conv1": make_incept_conv_params(ks[3], in_channels, 64, 1),
        "b3_conv2": make_incept_conv_params(ks[4], 64, 96, 3),
        "b3_conv3": make_incept_conv_params(ks[5], 96, 96, 3),
        "b4_conv1": make_incept_conv_params(ks[6], in_channels, pool_out, 1),
    }


def prepare_inception_a_params(params, compute_dtype=jnp.bfloat16):
    """Fold BN scale into the conv weights, fuse the four leading 1x1 convs into
    one GEMM weight, and reshape spatial conv weights to im2col layout."""
    def fold(p):
        return p["w"] * p["scale"], p["bias"]

    w_b1, bias_b1 = fold(params["b1_conv1"])     # (1,1,Cin,64)
    w_b2a, bias_b2a = fold(params["b2_conv1"])   # (1,1,Cin,48)
    w_b2b, bias_b2b = fold(params["b2_conv2"])   # (5,5,48,64)
    w_b3a, bias_b3a = fold(params["b3_conv1"])   # (1,1,Cin,64)
    w_b3b, bias_b3b = fold(params["b3_conv2"])   # (3,3,64,96)
    w_b3c, bias_b3c = fold(params["b3_conv3"])   # (3,3,96,96)
    w_b4, bias_b4 = fold(params["b4_conv1"])     # (1,1,Cin,pool_out)

    cin = w_b1.shape[2]
    pool_out = w_b4.shape[3]

    # Fused stage-1 1x1 GEMM, columns ordered [b1 | b3a | b2a | b4].
    # Branch4's 1x1 conv commutes with the (linear, zero-padded) 3x3 avg pool,
    # so it is applied before the pool; its BN bias must be added after the
    # pool, hence zeros for that slice here.
    w1 = jnp.concatenate([
        w_b1.reshape(cin, _C_B1),
        w_b3a.reshape(cin, _C_B3A),
        w_b2a.reshape(cin, _C_B2A),
        w_b4.reshape(cin, pool_out),
    ], axis=-1)
    bias1 = jnp.concatenate(
        [bias_b1, bias_b3a, bias_b2a, jnp.zeros_like(bias_b4)])[None, :]

    return {
        "w1": w1.astype(compute_dtype),
        "bias1": bias1.astype(jnp.float32),
        "w2": w_b2b.reshape(5 * 5 * _C_B2A, _C_B2).astype(compute_dtype),
        "bias2": bias_b2b[None, :].astype(jnp.float32),
        "w3a": w_b3b.reshape(3 * 3 * _C_B3A, _C_B3).astype(compute_dtype),
        "bias3a": bias_b3b[None, :].astype(jnp.float32),
        "w3b": w_b3c.reshape(3 * 3 * _C_B3, _C_B3).astype(compute_dtype),
        "bias3b": bias_b3c[None, :].astype(jnp.float32),
        "bias4": bias_b4[None, :].astype(jnp.float32),
    }


# ---------------------------------------------------------------------------
# Pure-XLA f32 reference (for a numerical sanity check)
# ---------------------------------------------------------------------------
def _reference_inception_a(x_nhwc, params):
    def conv_bn_relu(v, p, pad):
        y = jax.lax.conv_general_dilated(
            v, p["w"], window_strides=(1, 1),
            padding=((pad, pad), (pad, pad)),
            dimension_numbers=("NHWC", "HWIO", "NHWC"))
        return jnp.maximum(y * p["scale"] + p["bias"], 0.0)

    def avgpool3(v):
        H, W = v.shape[1], v.shape[2]
        vp = jnp.pad(v, ((0, 0), (1, 1), (1, 1), (0, 0)))
        acc = sum(vp[:, dy:dy + H, dx:dx + W, :]
                  for dy in range(3) for dx in range(3))
        return acc / 9.0

    b1 = conv_bn_relu(x_nhwc, params["b1_conv1"], 0)
    b2 = conv_bn_relu(conv_bn_relu(x_nhwc, params["b2_conv1"], 0),
                      params["b2_conv2"], 2)
    b3 = conv_bn_relu(x_nhwc, params["b3_conv1"], 0)
    b3 = conv_bn_relu(b3, params["b3_conv2"], 1)
    b3 = conv_bn_relu(b3, params["b3_conv3"], 1)
    b4 = conv_bn_relu(avgpool3(x_nhwc), params["b4_conv1"], 0)
    return jnp.concatenate([b1, b2, b3, b4], axis=-1)


if __name__ == "__main__":
    key = jax.random.PRNGKey(0)
    kp, kx = jax.random.split(key)

    in_channels = 8
    out_channels = 256          # must be > 224; pool branch gets 256 - 224 = 32
    B, H, W = 2, 8, 8           # B*H*W = 128 rows -> a full MXU M dimension

    raw_params = make_inception_a_params(kp, in_channels, out_channels)
    fused_params = prepare_inception_a_params(raw_params)   # bf16 MXU operands
    x = jax.random.normal(kx, (B, in_channels, H, W), jnp.float32)

    y = jax.block_until_ready(inception_a_unit(x, fused_params))
    assert y.shape == (B, out_channels, H, W), y.shape
    assert bool(jnp.all(jnp.isfinite(y)))
    assert bool(jnp.all(y >= 0.0))          # every branch ends in ReLU

    # Numerical sanity check against a pure-XLA f32 reference
    # (loose tolerance: the kernel uses bf16 MXU operands).
    ref = jax.jit(_reference_inception_a)(jnp.transpose(x, (0, 2, 3, 1)),
                                          raw_params)
    ref = jnp.transpose(ref, (0, 3, 1, 2))
    assert float(jnp.max(jnp.abs(y - ref))) < 0.2

    print("KERNEL_OK")
</pallas_src>

<mosaic_0001>
module attributes {stable_mosaic.version = 11 : i64} {
  func.func @_inception_a_kernel(%arg0: i32, %arg1: memref<2x8x8x8xbf16, #tpu.memory_space<vmem>>, %arg2: memref<8x208xbf16, #tpu.memory_space<vmem>>, %arg3: memref<1x208xf32, #tpu.memory_space<vmem>>, %arg4: memref<1200x64xbf16, #tpu.memory_space<vmem>>, %arg5: memref<1x64xf32, #tpu.memory_space<vmem>>, %arg6: memref<576x96xbf16, #tpu.memory_space<vmem>>, %arg7: memref<1x96xf32, #tpu.memory_space<vmem>>, %arg8: memref<864x96xbf16, #tpu.memory_space<vmem>>, %arg9: memref<1x96xf32, #tpu.memory_space<vmem>>, %arg10: memref<1x32xf32, #tpu.memory_space<vmem>>, %arg11: memref<2x8x8x256xf32, #tpu.memory_space<vmem>>, %arg12: memref<2x12x12x48xf32, #tpu.memory_space<vmem>>, %arg13: memref<2x10x10x64xf32, #tpu.memory_space<vmem>>, %arg14: memref<2x10x10x96xf32, #tpu.memory_space<vmem>>, %arg15: memref<2x10x10x32xf32, #tpu.memory_space<vmem>>) attributes {dimension_semantics = [#tpu.dimension_semantics<parallel>], iteration_bounds = array<i64: 1>, scalar_prefetch = 0 : i64, scratch_operands = 4 : i64, tpu.core_type = #tpu.core_type<tc>, window_params = [{transform_indices = @transform_0, window_bounds = array<i64: 2, 8, 8, 8>}, {pipeline_mode = #tpu.pipeline_mode<synchronous>, transform_indices = @transform_1, window_bounds = array<i64: 8, 208>}, {pipeline_mode = #tpu.pipeline_mode<synchronous>, transform_indices = @transform_2, window_bounds = array<i64: 1, 208>}, {pipeline_mode = #tpu.pipeline_mode<synchronous>, transform_indices = @transform_3, window_bounds = array<i64: 1200, 64>}, {pipeline_mode = #tpu.pipeline_mode<synchronous>, transform_indices = @transform_4, window_bounds = array<i64: 1, 64>}, {pipeline_mode = #tpu.pipeline_mode<synchronous>, transform_indices = @transform_5, window_bounds = array<i64: 576, 96>}, {pipeline_mode = #tpu.pipeline_mode<synchronous>, transform_indices = @transform_6, window_bounds = array<i64: 1, 96>}, {pipeline_mode = #tpu.pipeline_mode<synchronous>, transform_indices = @transform_7, window_bounds = array<i64: 864, 96>}, {pipeline_mode = #tpu.pipeline_mode<synchronous>, transform_indices = @transform_8, window_bounds = array<i64: 1, 96>}, {pipeline_mode = #tpu.pipeline_mode<synchronous>, transform_indices = @transform_9, window_bounds = array<i64: 1, 32>}, {transform_indices = @transform_10, window_bounds = array<i64: 2, 8, 8, 256>}]} {
    %c0 = arith.constant 0 : index
    %c0_0 = arith.constant 0 : index
    %c0_1 = arith.constant 0 : index
    %c0_2 = arith.constant 0 : index
    %0 = vector.load %arg1[%c0, %c0_0, %c0_1, %c0_2] : memref<2x8x8x8xbf16, #tpu.memory_space<vmem>>, vector<2x8x8x8xbf16>
    %1 = vector.shape_cast %0 : vector<2x8x8x8xbf16> to vector<128x8xbf16>
    %c0_3 = arith.constant 0 : index
    %c0_4 = arith.constant 0 : index
    %2 = vector.load %arg2[%c0_3, %c0_4] : memref<8x208xbf16, #tpu.memory_space<vmem>>, vector<8x208xbf16>
    %cst = arith.constant dense<0.000000e+00> : vector<128x208xf32>
    %3 = tpu.matmul %1, %2, %cst {dimension_numbers = #tpu.dot_dimension_numbers<[1], [0], [0], [1], [0, 0, 1, 1], [], []>} : vector<128x8xbf16>, vector<8x208xbf16>, vector<128x208xf32> -> vector<128x208xf32>
    %c0_5 = arith.constant 0 : index
    %c0_6 = arith.constant 0 : index
    %4 = vector.load %arg3[%c0_5, %c0_6] : memref<1x208xf32, #tpu.memory_space<vmem>>, vector<1x208xf32>
    %5 = vector.broadcast %4 : vector<1x208xf32> to vector<128x208xf32>
    %6 = arith.addf %3, %5 : vector<128x208xf32>
    %7 = vector.extract_strided_slice %6 {offsets = [0, 0], sizes = [128, 64], strides = [1, 1]} : vector<128x208xf32> to vector<128x64xf32>
    %cst_7 = arith.constant 0.000000e+00 : f32
    %8 = vector.broadcast %cst_7 : f32 to vector<128x64xf32>
    %9 = arith.maximumf %7, %8 : vector<128x64xf32>
    %10 = vector.extract_strided_slice %6 {offsets = [0, 64], sizes = [128, 64], strides = [1, 1]} : vector<128x208xf32> to vector<128x64xf32>
    %cst_8 = arith.constant 0.000000e+00 : f32
    %11 = vector.broadcast %cst_8 : f32 to vector<128x64xf32>
    %12 = arith.maximumf %10, %11 : vector<128x64xf32>
    %13 = vector.extract_strided_slice %6 {offsets = [0, 128], sizes = [128, 48], strides = [1, 1]} : vector<128x208xf32> to vector<128x48xf32>
    %cst_9 = arith.constant 0.000000e+00 : f32
    %14 = vector.broadcast %cst_9 : f32 to vector<128x48xf32>
    %15 = arith.maximumf %13, %14 : vector<128x48xf32>
    %16 = vector.extract_strided_slice %6 {offsets = [0, 176], sizes = [128, 32], strides = [1, 1]} : vector<128x208xf32> to vector<128x32xf32>
    %cst_10 = arith.constant 0.000000e+00 : f32
    %17 = vector.broadcast %cst_10 : f32 to vector<2x12x12x48xf32>
    %c0_11 = arith.constant 0 : index
    %c0_12 = arith.constant 0 : index
    %c0_13 = arith.constant 0 : index
    %c0_14 = arith.constant 0 : index
    %18 = vector.load %arg12[%c0_11, %c0_12, %c0_13, %c0_14] : memref<2x12x12x48xf32, #tpu.memory_space<vmem>>, vector<2x12x12x48xf32>
    tpu.vector_store %arg12[%c0_11, %c0_12, %c0_13, %c0_14], %17 {strides = array<i32>} : memref<2x12x12x48xf32, #tpu.memory_space<vmem>>, vector<2x12x12x48xf32>,
    %19 = vector.shape_cast %15 : vector<128x48xf32> to vector<2x8x8x48xf32>
    %c0_15 = arith.constant 0 : index
    %c2 = arith.constant 2 : index
    %c2_16 = arith.constant 2 : index
    %c0_17 = arith.constant 0 : index
    %20 = vector.load %arg12[%c0_15, %c2, %c2_16, %c0_17] : memref<2x12x12x48xf32, #tpu.memory_space<vmem>>, vector<2x8x8x48xf32>
    tpu.vector_store %arg12[%c0_15, %c2, %c2_16, %c0_17], %19 {strides = array<i32>} : memref<2x12x12x48xf32, #tpu.memory_space<vmem>>, vector<2x8x8x48xf32>,
    %c0_18 = arith.constant 0 : index
    %c0_19 = arith.constant 0 : index
    %c0_20 = arith.constant 0 : index
    %c0_21 = arith.constant 0 : index
    %21 = vector.load %arg12[%c0_18, %c0_19, %c0_20, %c0_21] : memref<2x12x12x48xf32, #tpu.memory_space<vmem>>, vector<2x8x8x48xf32>
    %c0_22 = arith.constant 0 : index
    %c0_23 = arith.constant 0 : index
    %c1 = arith.constant 1 : index
    %c0_24 = arith.constant 0 : index
    %22 = vector.load %arg12[%c0_22, %c0_23, %c1, %c0_24] : memref<2x12x12x48xf32, #tpu.memory_space<vmem>>, vector<2x8x8x48xf32>
    %c0_25 = arith.constant 0 : index
    %c0_26 = arith.constant 0 : index
    %c2_27 = arith.constant 2 : index
    %c0_28 = arith.constant 0 : index
    %23 = vector.load %arg12[%c0_25, %c0_26, %c2_27, %c0_28] : memref<2x12x12x48xf32, #tpu.memory_space<vmem>>, vector<2x8x8x48xf32>
    %c0_29 = arith.constant 0 : index
    %c0_30 = arith.constant 0 : index
    %c3 = arith.constant 3 : index
    %c0_31 = arith.constant 0 : index
    %24 = vector.load %arg12[%c0_29, %c0_30, %c3, %c0_31] : memref<2x12x12x48xf32, #tpu.memory_space<vmem>>, vector<2x8x8x48xf32>
    %c0_32 = arith.constant 0 : index
    %c0_33 = arith.constant 0 : index
    %c4 = arith.constant 4 : index
    %c0_34 = arith.constant 0 : index
    %25 = vector.load %arg12[%c0_32, %c0_33, %c4, %c0_34] : memref<2x12x12x48xf32, #tpu.memory_space<vmem>>, vector<2x8x8x48xf32>
    %c0_35 = arith.constant 0 : index
    %c1_36 = arith.constant 1 : index
    %c0_37 = arith.constant 0 : index
    %c0_38 = arith.constant 0 : index
    %26 = vector.load %arg12[%c0_35, %c1_36, %c0_37, %c0_38] : memref<2x12x12x48xf32, #tpu.memory_space<vmem>>, vector<2x8x8x48xf32>
    %c0_39 = arith.constant 0 : index
    %c1_40 = arith.constant 1 : index
    %c1_41 = arith.constant 1 : index
    %c0_42 = arith.constant 0 : index
    %27 = vector.load %arg12[%c0_39, %c1_40, %c1_41, %c0_42] : memref<2x12x12x48xf32, #tpu.memory_space<vmem>>, vector<2x8x8x48xf32>
    %c0_43 = arith.constant 0 : index
    %c1_44 = arith.constant 1 : index
    %c2_45 = arith.constant 2 : index
    %c0_46 = arith.constant 0 : index
    %28 = vector.load %arg12[%c0_43, %c1_44, %c2_45, %c0_46] : memref<2x12x12x48xf32, #tpu.memory_space<vmem>>, vector<2x8x8x48xf32>
    %c0_47 = arith.constant 0 : index
    %c1_48 = arith.constant 1 : index
    %c3_49 = arith.constant 3 : index
    %c0_50 = arith.constant 0 : index
    %29 = vector.load %arg12[%c0_47, %c1_48, %c3_49, %c0_50] : memref<2x12x12x48xf32, #tpu.memory_space<vmem>>, vector<2x8x8x48xf32>
    %c0_51 = arith.constant 0 : index
    %c1_52 = arith.constant 1 : index
    %c4_53 = arith.constant 4 : index
    %c0_54 = arith.constant 0 : index
    %30 = vector.load %arg12[%c0_51, %c1_52, %c4_53, %c0_54] : memref<2x12x12x48xf32, #tpu.memory_space<vmem>>, vector<2x8x8x48xf32>
    %c0_55 = arith.constant 0 : index
    %c2_56 = arith.constant 2 : index
    %c0_57 = arith.constant 0 : index
    %c0_58 = arith.constant 0 : index
    %31 = vector.load %arg12[%c0_55, %c2_56, %c0_57, %c0_58] : memref<2x12x12x48xf32, #tpu.memory_space<vmem>>, vector<2x8x8x48xf32>
    %c0_59 = arith.constant 0 : index
    %c2_60 = arith.constant 2 : index
    %c1_61 = arith.constant 1 : index
    %c0_62 = arith.constant 0 : index
    %32 = vector.load %arg12[%c0_59, %c2_60, %c1_61, %c0_62] : memref<2x12x12x48xf32, #tpu.memory_space<vmem>>, vector<2x8x8x48xf32>
    %c0_63 = arith.constant 0 : index
    %c2_64 = arith.constant 2 : index
    %c2_65 = arith.constant 2 : index
    %c0_66 = arith.constant 0 : index
    %33 = vector.load %arg12[%c0_63, %c2_64, %c2_65, %c0_66] : memref<2x12x12x48xf32, #tpu.memory_space<vmem>>, vector<2x8x8x48xf32>
    %c0_67 = arith.constant 0 : index
    %c2_68 = arith.constant 2 : index
    %c3_69 = arith.constant 3 : index
    %c0_70 = arith.constant 0 : index
    %34 = vector.load %arg12[%c0_67, %c2_68, %c3_69, %c0_70] : memref<2x12x12x48xf32, #tpu.memory_space<vmem>>, vector<2x8x8x48xf32>
    %c0_71 = arith.constant 0 : index
    %c2_72 = arith.constant 2 : index
    %c4_73 = arith.constant 4 : index
    %c0_74 = arith.constant 0 : index
    %35 = vector.load %arg12[%c0_71, %c2_72, %c4_73, %c0_74] : memref<2x12x12x48xf32, #tpu.memory_space<vmem>>, vector<2x8x8x48xf32>
    %c0_75 = arith.constant 0 : index
    %c3_76 = arith.constant 3 : index
    %c0_77 = arith.constant 0 : index
    %c0_78 = arith.constant 0 : index
    %36 = vector.load %arg12[%c0_75, %c3_76, %c0_77, %c0_78] : memref<2x12x12x48xf32, #tpu.memory_space<vmem>>, vector<2x8x8x48xf32>
    %c0_79 = arith.constant 0 : index
    %c3_80 = arith.constant 3 : index
    %c1_81 = arith.constant 1 : index
    %c0_82 = arith.constant 0 : index
    %37 = vector.load %arg12[%c0_79, %c3_80, %c1_81, %c0_82] : memref<2x12x12x48xf32, #tpu.memory_space<vmem>>, vector<2x8x8x48xf32>
    %c0_83 = arith.constant 0 : index
    %c3_84 = arith.constant 3 : index
    %c2_85 = arith.constant 2 : index
    %c0_86 = arith.constant 0 : index
    %38 = vector.load %arg12[%c0_83, %c3_84, %c2_85, %c0_86] : memref<2x12x12x48xf32, #tpu.memory_space<vmem>>, vector<2x8x8x48xf32>
    %c0_87 = arith.constant 0 : index
    %c3_88 = arith.constant 3 : index
    %c3_89 = arith.constant 3 : index
    %c0_90 = arith.constant 0 : index
    %39 = vector.load %arg12[%c0_87, %c3_88, %c3_89, %c0_90] : memref<2x12x12x48xf32, #tpu.memory_space<vmem>>, vector<2x8x8x48xf32>
    %c0_91 = arith.constant 0 : index
    %c3_92 = arith.constant 3 : index
    %c4_93 = arith.constant 4 : index
    %c0_94 = arith.constant 0 : index
    %40 = vector.load %arg12[%c0_91, %c3_92, %c4_93, %c0_94] : memref<2x12x12x48xf32, #tpu.memory_space<vmem>>, vector<2x8x8x48xf32>
    %c0_95 = arith.constant 0 : index
    %c4_96 = arith.constant 4 : index
    %c0_97 = arith.constant 0 : index
    %c0_98 = arith.constant 0 : index
    %41 = vector.load %arg12[%c0_95, %c4_96, %c0_97, %c0_98] : memref<2x12x12x48xf32, #tpu.memory_space<vmem>>, vector<2x8x8x48xf32>
    %c0_99 = arith.constant 0 : index
    %c4_100 = arith.constant 4 : index
    %c1_101 = arith.constant 1 : index
    %c0_102 = arith.constant 0 : index
    %42 = vector.load %arg12[%c0_99, %c4_100, %c1_101, %c0_102] : memref<2x12x12x48xf32, #tpu.memory_space<vmem>>, vector<2x8x8x48xf32>
    %c0_103 = arith.constant 0 : index
    %c4_104 = arith.constant 4 : index
    %c2_105 = arith.constant 2 : index
    %c0_106 = arith.constant 0 : index
    %43 = vector.load %arg12[%c0_103, %c4_104, %c2_105, %c0_106] : memref<2x12x12x48xf32, #tpu.memory_space<vmem>>, vector<2x8x8x48xf32>
    %c0_107 = arith.constant 0 : index
    %c4_108 = arith.constant 4 : index
    %c3_109 = arith.constant 3 : index
    %c0_110 = arith.constant 0 : index
    %44 = vector.load %arg12[%c0_107, %c4_108, %c3_109, %c0_110] : memref<2x12x12x48xf32, #tpu.memory_space<vmem>>, vector<2x8x8x48xf32>
    %c0_111 = arith.constant 0 : index
    %c4_112 = arith.constant 4 : index
    %c4_113 = arith.constant 4 : index
    %c0_114 = arith.constant 0 : index
    %45 = vector.load %arg12[%c0_111, %c4_112, %c4_113, %c0_114] : memref<2x12x12x48xf32, #tpu.memory_space<vmem>>, vector<2x8x8x48xf32>
    %46 = tpu.concatenate %21, %22, %23, %24, %25, %26, %27, %28, %29, %30, %31, %32, %33, %34, %35, %36 in 3 : vector<2x8x8x48xf32>, vector<2x8x8x48xf32>, vector<2x8x8x48xf32>, vector<2x8x8x48xf32>, vector<2x8x8x48xf32>, vector<2x8x8x48xf32>, vector<2x8x8x48xf32>, vector<2x8x8x48xf32>, vector<2x8x8x48xf32>, vector<2x8x8x48xf32>, vector<2x8x8x48xf32>, vector<2x8x8x48xf32>, vector<2x8x8x48xf32>, vector<2x8x8x48xf32>, vector<2x8x8x48xf32>, vector<2x8x8x48xf32> -> vector<2x8x8x768xf32>
    %47 = tpu.concatenate %37, %38, %39, %40, %41, %42, %43, %44, %45 in 3 : vector<2x8x8x48xf32>, vector<2x8x8x48xf32>, vector<2x8x8x48xf32>, vector<2x8x8x48xf32>, vector<2x8x8x48xf32>, vector<2x8x8x48xf32>, vector<2x8x8x48xf32>, vector<2x8x8x48xf32>, vector<2x8x8x48xf32> -> vector<2x8x8x432xf32>
    %48 = tpu.concatenate %46, %47 in 3 : vector<2x8x8x768xf32>, vector<2x8x8x432xf32> -> vector<2x8x8x1200xf32>
    %49 = vector.shape_cast %48 : vector<2x8x8x1200xf32> to vector<128x1200xf32>
    %50 = arith.truncf %49 : vector<128x1200xf32> to vector<128x1200xbf16>
    %c0_115 = arith.constant 0 : index
    %c0_116 = arith.constant 0 : index
    %51 = vector.load %arg4[%c0_115, %c0_116] : memref<1200x64xbf16, #tpu.memory_space<vmem>>, vector<1200x64xbf16>
    %cst_117 = arith.constant dense<0.000000e+00> : vector<128x64xf32>
    %52 = tpu.matmul %50, %51, %cst_117 {dimension_numbers = #tpu.dot_dimension_numbers<[1], [0], [0], [1], [0, 0, 1, 1], [], []>} : vector<128x1200xbf16>, vector<1200x64xbf16>, vector<128x64xf32> -> vector<128x64xf32>
    %c0_118 = arith.constant 0 : index
    %c0_119 = arith.constant 0 : index
    %53 = vector.load %arg5[%c0_118, %c0_119] : memref<1x64xf32, #tpu.memory_space<vmem>>, vector<1x64xf32>
    %54 = vector.broadcast %53 : vector<1x64xf32> to vector<128x64xf32>
    %55 = arith.addf %52, %54 : vector<128x64xf32>
    %cst_120 = arith.constant 0.000000e+00 : f32
    %56 = vector.broadcast %cst_120 : f32 to vector<128x64xf32>
    %57 = arith.maximumf %55, %56 : vector<128x64xf32>
    %cst_121 = arith.constant 0.000000e+00 : f32
    %58 = vector.broadcast %cst_121 : f32 to vector<2x10x10x64xf32>
    %c0_122 = arith.constant 0 : index
    %c0_123 = arith.constant 0 : index
    %c0_124 = arith.constant 0 : index
    %c0_125 = arith.constant 0 : index
    %59 = vector.load %arg13[%c0_122, %c0_123, %c0_124, %c0_125] : memref<2x10x10x64xf32, #tpu.memory_space<vmem>>, vector<2x10x10x64xf32>
    tpu.vector_store %arg13[%c0_122, %c0_123, %c0_124, %c0_125], %58 {strides = array<i32>} : memref<2x10x10x64xf32, #tpu.memory_space<vmem>>, vector<2x10x10x64xf32>,
    %60 = vector.shape_cast %12 : vector<128x64xf32> to vector<2x8x8x64xf32>
    %c0_126 = arith.constant 0 : index
    %c1_127 = arith.constant 1 : index
    %c1_128 = arith.constant 1 : index
    %c0_129 = arith.constant 0 : index
    %61 = vector.load %arg13[%c0_126, %c1_127, %c1_128, %c0_129] : memref<2x10x10x64xf32, #tpu.memory_space<vmem>>, vector<2x8x8x64xf32>
    tpu.vector_store %arg13[%c0_126, %c1_127, %c1_128, %c0_129], %60 {strides = array<i32>} : memref<2x10x10x64xf32, #tpu.memory_space<vmem>>, vector<2x8x8x64xf32>,
    %c0_130 = arith.constant 0 : index
    %c0_131 = arith.constant 0 : index
    %c0_132 = arith.constant 0 : index
    %c0_133 = arith.constant 0 : index
    %62 = vector.load %arg13[%c0_130, %c0_131, %c0_132, %c0_133] : memref<2x10x10x64xf32, #tpu.memory_space<vmem>>, vector<2x8x8x64xf32>
    %c0_134 = arith.constant 0 : index
    %c0_135 = arith.constant 0 : index
    %c1_136 = arith.constant 1 : index
    %c0_137 = arith.constant 0 : index
    %63 = vector.load %arg13[%c0_134, %c0_135, %c1_136, %c0_137] : memref<2x10x10x64xf32, #tpu.memory_space<vmem>>, vector<2x8x8x64xf32>
    %c0_138 = arith.constant 0 : index
    %c0_139 = arith.constant 0 : index
    %c2_140 = arith.constant 2 : index
    %c0_141 = arith.constant 0 : index
    %64 = vector.load %arg13[%c0_138, %c0_139, %c2_140, %c0_141] : memref<2x10x10x64xf32, #tpu.memory_space<vmem>>, vector<2x8x8x64xf32>
    %c0_142 = arith.constant 0 : index
    %c1_143 = arith.constant 1 : index
    %c0_144 = arith.constant 0 : index
    %c0_145 = arith.constant 0 : index
    %65 = vector.load %arg13[%c0_142, %c1_143, %c0_144, %c0_145] : memref<2x10x10x64xf32, #tpu.memory_space<vmem>>, vector<2x8x8x64xf32>
    %c0_146 = arith.constant 0 : index
    %c1_147 = arith.constant 1 : index
    %c1_148 = arith.constant 1 : index
    %c0_149 = arith.constant 0 : index
    %66 = vector.load %arg13[%c0_146, %c1_147, %c1_148, %c0_149] : memref<2x10x10x64xf32, #tpu.memory_space<vmem>>, vector<2x8x8x64xf32>
    %c0_150 = arith.constant 0 : index
    %c1_151 = arith.constant 1 : index
    %c2_152 = arith.constant 2 : index
    %c0_153 = arith.constant 0 : index
    %67 = vector.load %arg13[%c0_150, %c1_151, %c2_152, %c0_153] : memref<2x10x10x64xf32, #tpu.memory_space<vmem>>, vector<2x8x8x64xf32>
    %c0_154 = arith.constant 0 : index
    %c2_155 = arith.constant 2 : index
    %c0_156 = arith.constant 0 : index
    %c0_157 = arith.constant 0 : index
    %68 = vector.load %arg13[%c0_154, %c2_155, %c0_156, %c0_157] : memref<2x10x10x64xf32, #tpu.memory_space<vmem>>, vector<2x8x8x64xf32>
    %c0_158 = arith.constant 0 : index
    %c2_159 = arith.constant 2 : index
    %c1_160 = arith.constant 1 : index
    %c0_161 = arith.constant 0 : index
    %69 = vector.load %arg13[%c0_158, %c2_159, %c1_160, %c0_161] : memref<2x10x10x64xf32, #tpu.memory_space<vmem>>, vector<2x8x8x64xf32>
    %c0_162 = arith.constant 0 : index
    %c2_163 = arith.constant 2 : index
    %c2_164 = arith.constant 2 : index
    %c0_165 = arith.constant 0 : index
    %70 = vector.load %arg13[%c0_162, %c2_163, %c2_164, %c0_165] : memref<2x10x10x64xf32, #tpu.memory_space<vmem>>, vector<2x8x8x64xf32>
    %71 = tpu.concatenate %62, %63, %64, %65, %66, %67, %68, %69, %70 in 3 : vector<2x8x8x64xf32>, vector<2x8x8x64xf32>, vector<2x8x8x64xf32>, vector<2x8x8x64xf32>, vector<2x8x8x64xf32>, vector<2x8x8x64xf32>, vector<2x8x8x64xf32>, vector<2x8x8x64xf32>, vector<2x8x8x64xf32> -> vector<2x8x8x576xf32>
    %72 = vector.shape_cast %71 : vector<2x8x8x576xf32> to vector<128x576xf32>
    %73 = arith.truncf %72 : vector<128x576xf32> to vector<128x576xbf16>
    %c0_166 = arith.constant 0 : index
    %c0_167 = arith.constant 0 : index
    %74 = vector.load %arg6[%c0_166, %c0_167] : memref<576x96xbf16, #tpu.memory_space<vmem>>, vector<576x96xbf16>
    %cst_168 = arith.constant dense<0.000000e+00> : vector<128x96xf32>
    %75 = tpu.matmul %73, %74, %cst_168 {dimension_numbers = #tpu.dot_dimension_numbers<[1], [0], [0], [1], [0, 0, 1, 1], [], []>} : vector<128x576xbf16>, vector<576x96xbf16>, vector<128x96xf32> -> vector<128x96xf32>
    %c0_169 = arith.constant 0 : index
    %c0_170 = arith.constant 0 : index
    %76 = vector.load %arg7[%c0_169, %c0_170] : memref<1x96xf32, #tpu.memory_space<vmem>>, vector<1x96xf32>
    %77 = vector.broadcast %76 : vector<1x96xf32> to vector<128x96xf32>
    %78 = arith.addf %75, %77 : vector<128x96xf32>
    %cst_171 = arith.constant 0.000000e+00 : f32
    %79 = vector.broadcast %cst_171 : f32 to vector<128x96xf32>
    %80 = arith.maximumf %78, %79 : vector<128x96xf32>
    %cst_172 = arith.constant 0.000000e+00 : f32
    %81 = vector.broadcast %cst_172 : f32 to vector<2x10x10x96xf32>
    %c0_173 = arith.constant 0 : index
    %c0_174 = arith.constant 0 : index
    %c0_175 = arith.constant 0 : index
    %c0_176 = arith.constant 0 : index
    %82 = vector.load %arg14[%c0_173, %c0_174, %c0_175, %c0_176] : memref<2x10x10x96xf32, #tpu.memory_space<vmem>>, vector<2x10x10x96xf32>
    tpu.vector_store %arg14[%c0_173, %c0_174, %c0_175, %c0_176], %81 {strides = array<i32>} : memref<2x10x10x96xf32, #tpu.memory_space<vmem>>, vector<2x10x10x96xf32>,
    %83 = vector.shape_cast %80 : vector<128x96xf32> to vector<2x8x8x96xf32>
    %c0_177 = arith.constant 0 : index
    %c1_178 = arith.constant 1 : index
    %c1_179 = arith.constant 1 : index
    %c0_180 = arith.constant 0 : index
    %84 = vector.load %arg14[%c0_177, %c1_178, %c1_179, %c0_180] : memref<2x10x10x96xf32, #tpu.memory_space<vmem>>, vector<2x8x8x96xf32>
    tpu.vector_store %arg14[%c0_177, %c1_178, %c1_179, %c0_180], %83 {strides = array<i32>} : memref<2x10x10x96xf32, #tpu.memory_space<vmem>>, vector<2x8x8x96xf32>,
    %c0_181 = arith.constant 0 : index
    %c0_182 = arith.constant 0 : index
    %c0_183 = arith.constant 0 : index
    %c0_184 = arith.constant 0 : index
    %85 = vector.load %arg14[%c0_181, %c0_182, %c0_183, %c0_184] : memref<2x10x10x96xf32, #tpu.memory_space<vmem>>, vector<2x8x8x96xf32>
    %c0_185 = arith.constant 0 : index
    %c0_186 = arith.constant 0 : index
    %c1_187 = arith.constant 1 : index
    %c0_188 = arith.constant 0 : index
    %86 = vector.load %arg14[%c0_185, %c0_186, %c1_187, %c0_188] : memref<2x10x10x96xf32, #tpu.memory_space<vmem>>, vector<2x8x8x96xf32>
    %c0_189 = arith.constant 0 : index
    %c0_190 = arith.constant 0 : index
    %c2_191 = arith.constant 2 : index
    %c0_192 = arith.constant 0 : index
    %87 = vector.load %arg14[%c0_189, %c0_190, %c2_191, %c0_192] : memref<2x10x10x96xf32, #tpu.memory_space<vmem>>, vector<2x8x8x96xf32>
    %c0_193 = arith.constant 0 : index
    %c1_194 = arith.constant 1 : index
    %c0_195 = arith.constant 0 : index
    %c0_196 = arith.constant 0 : index
    %88 = vector.load %arg14[%c0_193, %c1_194, %c0_195, %c0_196] : memref<2x10x10x96xf32, #tpu.memory_space<vmem>>, vector<2x8x8x96xf32>
    %c0_197 = arith.constant 0 : index
    %c1_198 = arith.constant 1 : index
    %c1_199 = arith.constant 1 : index
    %c0_200 = arith.constant 0 : index
    %89 = vector.load %arg14[%c0_197, %c1_198, %c1_199, %c0_200] : memref<2x10x10x96xf32, #tpu.memory_space<vmem>>, vector<2x8x8x96xf32>
    %c0_201 = arith.constant 0 : index
    %c1_202 = arith.constant 1 : index
    %c2_203 = arith.constant 2 : index
    %c0_204 = arith.constant 0 : index
    %90 = vector.load %arg14[%c0_201, %c1_202, %c2_203, %c0_204] : memref<2x10x10x96xf32, #tpu.memory_space<vmem>>, vector<2x8x8x96xf32>
    %c0_205 = arith.constant 0 : index
    %c2_206 = arith.constant 2 : index
    %c0_207 = arith.constant 0 : index
    %c0_208 = arith.constant 0 : index
    %91 = vector.load %arg14[%c0_205, %c2_206, %c0_207, %c0_208] : memref<2x10x10x96xf32, #tpu.memory_space<vmem>>, vector<2x8x8x96xf32>
    %c0_209 = arith.constant 0 : index
    %c2_210 = arith.constant 2 : index
    %c1_211 = arith.constant 1 : index
    %c0_212 = arith.constant 0 : index
    %92 = vector.load %arg14[%c0_209, %c2_210, %c1_211, %c0_212] : memref<2x10x10x96xf32, #tpu.memory_space<vmem>>, vector<2x8x8x96xf32>
    %c0_213 = arith.constant 0 : index
    %c2_214 = arith.constant 2 : index
    %c2_215 = arith.constant 2 : index
    %c0_216 = arith.constant 0 : index
    %93 = vector.load %arg14[%c0_213, %c2_214, %c2_215, %c0_216] : memref<2x10x10x96xf32, #tpu.memory_space<vmem>>, vector<2x8x8x96xf32>
    %94 = tpu.concatenate %85, %86, %87, %88, %89, %90, %91, %92, %93 in 3 : vector<2x8x8x96xf32>, vector<2x8x8x96xf32>, vector<2x8x8x96xf32>, vector<2x8x8x96xf32>, vector<2x8x8x96xf32>, vector<2x8x8x96xf32>, vector<2x8x8x96xf32>, vector<2x8x8x96xf32>, vector<2x8x8x96xf32> -> vector<2x8x8x864xf32>
    %95 = vector.shape_cast %94 : vector<2x8x8x864xf32> to vector<128x864xf32>
    %96 = arith.truncf %95 : vector<128x864xf32> to vector<128x864xbf16>
    %c0_217 = arith.constant 0 : index
    %c0_218 = arith.constant 0 : index
    %97 = vector.load %arg8[%c0_217, %c0_218] : memref<864x96xbf16, #tpu.memory_space<vmem>>, vector<864x96xbf16>
    %cst_219 = arith.constant dense<0.000000e+00> : vector<128x96xf32>
    %98 = tpu.matmul %96, %97, %cst_219 {dimension_numbers = #tpu.dot_dimension_numbers<[1], [0], [0], [1], [0, 0, 1, 1], [], []>} : vector<128x864xbf16>, vector<864x96xbf16>, vector<128x96xf32> -> vector<128x96xf32>
    %c0_220 = arith.constant 0 : index
    %c0_221 = arith.constant 0 : index
    %99 = vector.load %arg9[%c0_220, %c0_221] : memref<1x96xf32, #tpu.memory_space<vmem>>, vector<1x96xf32>
    %100 = vector.broadcast %99 : vector<1x96xf32> to vector<128x96xf32>
    %101 = arith.addf %98, %100 : vector<128x96xf32>
    %cst_222 = arith.constant 0.000000e+00 : f32
    %102 = vector.broadcast %cst_222 : f32 to vector<128x96xf32>
    %103 = arith.maximumf %101, %102 : vector<128x96xf32>
    %cst_223 = arith.constant 0.000000e+00 : f32
    %104 = vector.broadcast %cst_223 : f32 to vector<2x10x10x32xf32>
    %c0_224 = arith.constant 0 : index
    %c0_225 = arith.constant 0 : index
    %c0_226 = arith.constant 0 : index
    %c0_227 = arith.constant 0 : index
    %105 = vector.load %arg15[%c0_224, %c0_225, %c0_226, %c0_227] : memref<2x10x10x32xf32, #tpu.memory_space<vmem>>, vector<2x10x10x32xf32>
    tpu.vector_store %arg15[%c0_224, %c0_225, %c0_226, %c0_227], %104 {strides = array<i32>} : memref<2x10x10x32xf32, #tpu.memory_space<vmem>>, vector<2x10x10x32xf32>,
    %106 = vector.shape_cast %16 : vector<128x32xf32> to vector<2x8x8x32xf32>
    %c0_228 = arith.constant 0 : index
    %c1_229 = arith.constant 1 : index
    %c1_230 = arith.constant 1 : index
    %c0_231 = arith.constant 0 : index
    %107 = vector.load %arg15[%c0_228, %c1_229, %c1_230, %c0_231] : memref<2x10x10x32xf32, #tpu.memory_space<vmem>>, vector<2x8x8x32xf32>
    tpu.vector_store %arg15[%c0_228, %c1_229, %c1_230, %c0_231], %106 {strides = array<i32>} : memref<2x10x10x32xf32, #tpu.memory_space<vmem>>, vector<2x8x8x32xf32>,
    %cst_232 = arith.constant 0.000000e+00 : f32
    %108 = vector.broadcast %cst_232 : f32 to vector<2x8x8x32xf32>
    %c0_233 = arith.constant 0 : index
    %c0_234 = arith.constant 0 : index
    %c0_235 = arith.constant 0 : index
    %c0_236 = arith.constant 0 : index
    %109 = vector.load %arg15[%c0_233, %c0_234, %c0_235, %c0_236] : memref<2x10x10x32xf32, #tpu.memory_space<vmem>>, vector<2x8x8x32xf32>
    %110 = arith.addf %108, %109 : vector<2x8x8x32xf32>
    %c0_237 = arith.constant 0 : index
    %c0_238 = arith.constant 0 : index
    %c1_239 = arith.constant 1 : index
    %c0_240 = arith.constant 0 : index
    %111 = vector.load %arg15[%c0_237, %c0_238, %c1_239, %c0_240] : memref<2x10x10x32xf32, #tpu.memory_space<vmem>>, vector<2x8x8x32xf32>
    %112 = arith.addf %110, %111 : vector<2x8x8x32xf32>
    %c0_241 = arith.constant 0 : index
    %c0_242 = arith.constant 0 : index
    %c2_243 = arith.constant 2 : index
    %c0_244 = arith.constant 0 : index
    %113 = vector.load %arg15[%c0_241, %c0_242, %c2_243, %c0_244] : memref<2x10x10x32xf32, #tpu.memory_space<vmem>>, vector<2x8x8x32xf32>
    %114 = arith.addf %112, %113 : vector<2x8x8x32xf32>
    %c0_245 = arith.constant 0 : index
    %c1_246 = arith.constant 1 : index
    %c0_247 = arith.constant 0 : index
    %c0_248 = arith.constant 0 : index
    %115 = vector.load %arg15[%c0_245, %c1_246, %c0_247, %c0_248] : memref<2x10x10x32xf32, #tpu.memory_space<vmem>>, vector<2x8x8x32xf32>
    %116 = arith.addf %114, %115 : vector<2x8x8x32xf32>
    %c0_249 = arith.constant 0 : index
    %c1_250 = arith.constant 1 : index
    %c1_251 = arith.constant 1 : index
    %c0_252 = arith.constant 0 : index
    %117 = vector.load %arg15[%c0_249, %c1_250, %c1_251, %c0_252] : memref<2x10x10x32xf32, #tpu.memory_space<vmem>>, vector<2x8x8x32xf32>
    %118 = arith.addf %116, %117 : vector<2x8x8x32xf32>
    %c0_253 = arith.constant 0 : index
    %c1_254 = arith.constant 1 : index
    %c2_255 = arith.constant 2 : index
    %c0_256 = arith.constant 0 : index
    %119 = vector.load %arg15[%c0_253, %c1_254, %c2_255, %c0_256] : memref<2x10x10x32xf32, #tpu.memory_space<vmem>>, vector<2x8x8x32xf32>
    %120 = arith.addf %118, %119 : vector<2x8x8x32xf32>
    %c0_257 = arith.constant 0 : index
    %c2_258 = arith.constant 2 : index
    %c0_259 = arith.constant 0 : index
    %c0_260 = arith.constant 0 : index
    %121 = vector.load %arg15[%c0_257, %c2_258, %c0_259, %c0_260] : memref<2x10x10x32xf32, #tpu.memory_space<vmem>>, vector<2x8x8x32xf32>
    %122 = arith.addf %120, %121 : vector<2x8x8x32xf32>
    %c0_261 = arith.constant 0 : index
    %c2_262 = arith.constant 2 : index
    %c1_263 = arith.constant 1 : index
    %c0_264 = arith.constant 0 : index
    %123 = vector.load %arg15[%c0_261, %c2_262, %c1_263, %c0_264] : memref<2x10x10x32xf32, #tpu.memory_space<vmem>>, vector<2x8x8x32xf32>
    %124 = arith.addf %122, %123 : vector<2x8x8x32xf32>
    %c0_265 = arith.constant 0 : index
    %c2_266 = arith.constant 2 : index
    %c2_267 = arith.constant 2 : index
    %c0_268 = arith.constant 0 : index
    %125 = vector.load %arg15[%c0_265, %c2_266, %c2_267, %c0_268] : memref<2x10x10x32xf32, #tpu.memory_space<vmem>>, vector<2x8x8x32xf32>
    %126 = arith.addf %124, %125 : vector<2x8x8x32xf32>
    %127 = vector.shape_cast %126 : vector<2x8x8x32xf32> to vector<128x32xf32>
    %cst_269 = arith.constant 0.111111112 : f32
    %128 = vector.broadcast %cst_269 : f32 to vector<128x32xf32>
    %129 = arith.mulf %127, %128 : vector<128x32xf32>
    %c0_270 = arith.constant 0 : index
    %c0_271 = arith.constant 0 : index
    %130 = vector.load %arg10[%c0_270, %c0_271] : memref<1x32xf32, #tpu.memory_space<vmem>>, vector<1x32xf32>
    %131 = vector.broadcast %130 : vector<1x32xf32> to vector<128x32xf32>
    %132 = arith.addf %129, %131 : vector<128x32xf32>
    %cst_272 = arith.constant 0.000000e+00 : f32
    %133 = vector.broadcast %cst_272 : f32 to vector<128x32xf32>
    %134 = arith.maximumf %132, %133 : vector<128x32xf32>
    %135 = tpu.concatenate %9, %57, %103, %134 in 1 : vector<128x64xf32>, vector<128x64xf32>, vector<128x96xf32>, vector<128x32xf32> -> vector<128x256xf32>
    %136 = vector.shape_cast %135 : vector<128x256xf32> to vector<2x8x8x256xf32>
    %c0_273 = arith.constant 0 : index
    %c0_274 = arith.constant 0 : index
    %c0_275 = arith.constant 0 : index
    %c0_276 = arith.constant 0 : index
    %137 = vector.load %arg11[%c0_273, %c0_274, %c0_275, %c0_276] : memref<2x8x8x256xf32, #tpu.memory_space<vmem>>, vector<2x8x8x256xf32>
    tpu.vector_store %arg11[%c0_273, %c0_274, %c0_275, %c0_276], %136 {strides = array<i32>} : memref<2x8x8x256xf32, #tpu.memory_space<vmem>>, vector<2x8x8x256xf32>,
    return
  }
  func.func @transform_0(%arg0: i32) -> (i32, i32, i32, i32) {
    %c0_i32 = arith.constant 0 : i32
    %c0_i32_0 = arith.constant 0 : i32
    %c0_i32_1 = arith.constant 0 : i32
    %c0_i32_2 = arith.constant 0 : i32
    return %arg0, %c0_i32, %c0_i32_0, %c0_i32_1 : i32, i32, i32, i32
  }
  func.func @transform_1(%arg0: i32) -> (i32, i32) {
    %c0_i32 = arith.constant 0 : i32
    %c0_i32_0 = arith.constant 0 : i32
    %c0_i32_1 = arith.constant 0 : i32
    return %c0_i32, %c0_i32_0 : i32, i32
  }
  func.func @transform_2(%arg0: i32) -> (i32, i32) {
    %c0_i32 = arith.constant 0 : i32
    %c0_i32_0 = arith.constant 0 : i32
    %c0_i32_1 = arith.constant 0 : i32
    return %c0_i32, %c0_i32_0 : i32, i32
  }
  func.func @transform_3(%arg0: i32) -> (i32, i32) {
    %c0_i32 = arith.constant 0 : i32
    %c0_i32_0 = arith.constant 0 : i32
    %c0_i32_1 = arith.constant 0 : i32
    return %c0_i32, %c0_i32_0 : i32, i32
  }
  func.func @transform_4(%arg0: i32) -> (i32, i32) {
    %c0_i32 = arith.constant 0 : i32
    %c0_i32_0 = arith.constant 0 : i32
    %c0_i32_1 = arith.constant 0 : i32
    return %c0_i32, %c0_i32_0 : i32, i32
  }
  func.func @transform_5(%arg0: i32) -> (i32, i32) {
    %c0_i32 = arith.constant 0 : i32
    %c0_i32_0 = arith.constant 0 : i32
    %c0_i32_1 = arith.constant 0 : i32
    return %c0_i32, %c0_i32_0 : i32, i32
  }
  func.func @transform_6(%arg0: i32) -> (i32, i32) {
    %c0_i32 = arith.constant 0 : i32
    %c0_i32_0 = arith.constant 0 : i32
    %c0_i32_1 = arith.constant 0 : i32
    return %c0_i32, %c0_i32_0 : i32, i32
  }
  func.func @transform_7(%arg0: i32) -> (i32, i32) {
    %c0_i32 = arith.constant 0 : i32
    %c0_i32_0 = arith.constant 0 : i32
    %c0_i32_1 = arith.constant 0 : i32
    return %c0_i32, %c0_i32_0 : i32, i32
  }
  func.func @transform_8(%arg0: i32) -> (i32, i32) {
    %c0_i32 = arith.constant 0 : i32
    %c0_i32_0 = arith.constant 0 : i32
    %c0_i32_1 = arith.constant 0 : i32
    return %c0_i32, %c0_i32_0 : i32, i32
  }
  func.func @transform_9(%arg0: i32) -> (i32, i32) {
    %c0_i32 = arith.constant 0 : i32
    %c0_i32_0 = arith.constant 0 : i32
    %c0_i32_1 = arith.constant 0 : i32
    return %c0_i32, %c0_i32_0 : i32, i32
  }
  func.func @transform_10(%arg0: i32) -> (i32, i32, i32, i32) {
    %c0_i32 = arith.constant 0 : i32
    %c0_i32_0 = arith.constant 0 : i32
    %c0_i32_1 = arith.constant 0 : i32
    %c0_i32_2 = arith.constant 0 : i32
    return %arg0, %c0_i32, %c0_i32_0, %c0_i32_1 : i32, i32, i32, i32
  }
}

</mosaic_0001>

<llo_original>
// kernel: inception_a_unit.1
$region0: #{inception_a_unit.1}
  #allocation0 [shape = 'u32[]', space=smem, size = 0x4, offset = 0x4, fixed_abs, tag = 'smem constant byte address 0x4 - core index']
  #allocation1 [shape = 'u32[72,128]{1,0:T(1,128)}', space=vmem, size = 0x9000, scoped, tag = 'internal scratch']
  #allocation2 [shape = 'f32[2,12,12,48]{3,2,1,0:T(8,128)}', space=vmem, size = 0x30000, scoped, tag = 'scratch operand']
  #allocation3 [shape = 'f32[2,10,10,64]{3,2,1,0:T(8,128)}', space=vmem, size = 0x28000, scoped, tag = 'scratch operand']
  #allocation4 [shape = 'f32[2,10,10,96]{3,2,1,0:T(8,128)}', space=vmem, size = 0x28000, scoped, tag = 'scratch operand']
  #allocation5 [shape = 'f32[2,10,10,32]{3,2,1,0:T(8,128)}', space=vmem, size = 0x28000, scoped, tag = 'scratch operand']
  %s0 = inlined_call_operand.vmem [shape: bf16[2,8,8,8], index: 0, kind: input, shape index: {}]
  %s1 = inlined_call_operand.vmem [shape: bf16[8,208], index: 1, kind: input, shape index: {}]
  %s2 = inlined_call_operand.vmem [shape: f32[1,208], index: 2, kind: input, shape index: {}]
  %s3 = inlined_call_operand.vmem [shape: bf16[1200,64], index: 3, kind: input, shape index: {}]
  %s4 = inlined_call_operand.vmem [shape: f32[1,64], index: 4, kind: input, shape index: {}]
  %s5 = inlined_call_operand.vmem [shape: bf16[576,96], index: 5, kind: input, shape index: {}]
  %s6 = inlined_call_operand.vmem [shape: f32[1,96], index: 6, kind: input, shape index: {}]
  %s7 = inlined_call_operand.vmem [shape: bf16[864,96], index: 7, kind: input, shape index: {}]
  %s8 = inlined_call_operand.vmem [shape: f32[1,96], index: 8, kind: input, shape index: {}]
  %s9 = inlined_call_operand.vmem [shape: f32[1,32], index: 9, kind: input, shape index: {}]
  %s10 = inlined_call_operand.hbm [shape: f32[2,8,8,256], index: 10, kind: output, shape index: {}]
  %s11 = sld [smem:[#allocation0]]
  $region50: #{inception_a_unit.1} parent=0
    _
  %s13 = ssub.s32 1, %s11
  %s14 = scalar_select 0, %s13, %s11
  $region1: #{inception_a_unit.1} parent=0
    #allocation6 [shape = 'u8[131072]{0}', space=vmem, size = 0x20000, scoped, tag = 'output window, operand 0, single buffered']
    #allocation7 [shape = 's32[1]{0}', space=sflag, size = 0x4, scoped, tag = 'scoped memory for inception_a_unit.1']
    %15 = vsyncpa [#allocation7], 0
    // Predicated region
    $region2: #{inception_a_unit.1} parent=1 // pred_check
      _
    $region3: #{inception_a_unit.1} parent=1 // pred_check_branch
      %17 = sbr.rel (0) target = $region5
    $region4: #{inception_a_unit.1} parent=1 // pred_region
      _
    $region5: #{inception_a_unit.1} parent=1 // pred_fallthru
      _
    // Predicated region
    $region6: #{inception_a_unit.1} parent=1 // pred_check
      _
    $region7: #{inception_a_unit.1} parent=1 // pred_check_branch
      %19 = sbr.rel (0) target = $region9
    $region8: #{inception_a_unit.1} parent=1 // pred_region
      _
    $region9: #{inception_a_unit.1} parent=1 // pred_fallthru
      _
    // Predicated region
    $region10: #{inception_a_unit.1} parent=1 // pred_check
      _
    $region11: #{inception_a_unit.1} parent=1 // pred_check_branch
      %21 = sbr.rel (0) target = $region13
    $region12: #{inception_a_unit.1} parent=1 // pred_region
      _
    $region13: #{inception_a_unit.1} parent=1 // pred_fallthru
      _
    // Predicated region
    $region14: #{inception_a_unit.1} parent=1 // pred_check
      _
    $region15: #{inception_a_unit.1} parent=1 // pred_check_branch
      %23 = sbr.rel (0) target = $region17
    $region16: #{inception_a_unit.1} parent=1 // pred_region
      _
    $region17: #{inception_a_unit.1} parent=1 // pred_fallthru
      _
    // Predicated region
    $region18: #{inception_a_unit.1} parent=1 // pred_check
      _
    $region19: #{inception_a_unit.1} parent=1 // pred_check_branch
      %25 = sbr.rel (0) target = $region21
    $region20: #{inception_a_unit.1} parent=1 // pred_region
      _
    $region21: #{inception_a_unit.1} parent=1 // pred_fallthru
      _
    // Predicated region
    $region22: #{inception_a_unit.1} parent=1 // pred_check
      _
    $region23: #{inception_a_unit.1} parent=1 // pred_check_branch
      %27 = sbr.rel (0) target = $region25
    $region24: #{inception_a_unit.1} parent=1 // pred_region
      _
    $region25: #{inception_a_unit.1} parent=1 // pred_fallthru
      _
    // Predicated region
    $region26: #{inception_a_unit.1} parent=1 // pred_check
      _
    $region27: #{inception_a_unit.1} parent=1 // pred_check_branch
      %29 = sbr.rel (0) target = $region29
    $region28: #{inception_a_unit.1} parent=1 // pred_region
      _
    $region29: #{inception_a_unit.1} parent=1 // pred_fallthru
      _
    // Predicated region
    $region30: #{inception_a_unit.1} parent=1 // pred_check
      _
    $region31: #{inception_a_unit.1} parent=1 // pred_check_branch
      %31 = sbr.rel (0) target = $region33
    $region32: #{inception_a_unit.1} parent=1 // pred_region
      _
    $region33: #{inception_a_unit.1} parent=1 // pred_fallthru
      _
    // Predicated region
    $region34: #{inception_a_unit.1} parent=1 // pred_check
      _
    $region35: #{inception_a_unit.1} parent=1 // pred_check_branch
      %33 = sbr.rel (0) target = $region37
    $region36: #{inception_a_unit.1} parent=1 // pred_region
      _
    $region37: #{inception_a_unit.1} parent=1 // pred_fallthru
      _
    // Predicated region
    $region38: #{inception_a_unit.1} parent=1 // pred_check
      _
    $region39: #{inception_a_unit.1} parent=1 // pred_check_branch
      %35 = sbr.rel (0) target = $region41
    $region40: #{inception_a_unit.1} parent=1 // pred_region
      _
    $region41: #{inception_a_unit.1} parent=1 // pred_fallthru
      _
    %v37 = vld [vmem:[%s0] sm:$0xf]
    %v38 = vld [vmem:[%s0 + $0x4] sm:$0xf]
    %v39 = vld [vmem:[%s0 + $0x8] sm:$0xf]
    %v40 = vld [vmem:[%s0 + $0xc] sm:$0xf]
    %v41 = vld [vmem:[%s0 + $0x10] sm:$0xf]
    %v42 = vld [vmem:[%s0 + $0x14] sm:$0xf]
    %v43 = vld [vmem:[%s0 + $0x18] sm:$0xf]
    %v44 = vld [vmem:[%s0 + $0x1c] sm:$0xf]
    %v45 = vld [vmem:[%s0 + $0x20] sm:$0xf]
    %v46 = vld [vmem:[%s0 + $0x24] sm:$0xf]
    %v47 = vld [vmem:[%s0 + $0x28] sm:$0xf]
    %v48 = vld [vmem:[%s0 + $0x2c] sm:$0xf]
    %v49 = vld [vmem:[%s0 + $0x30] sm:$0xf]
    %v50 = vld [vmem:[%s0 + $0x34] sm:$0xf]
    %v51 = vld [vmem:[%s0 + $0x38] sm:$0xf]
    %v52 = vld [vmem:[%s0 + $0x3c] sm:$0xf]
    %v53 = vld [vmem:[%s1] sm:$0xff]
    %v54 = vld [vmem:[%s2] sm:$0x3]
    %v56 = vperm.slane %v54, 0
    %v57 = vperm.slane %v54, 1
    %v76 = vunpack.c.l.b16 %v37
    %v77 = vunpack.c.l.b16 %v38
    %v78 = vunpack.c.l.b16 %v39
    %v79 = vunpack.c.l.b16 %v40
    %v80 = vunpack.c.l.b16 %v41
    %v81 = vunpack.c.l.b16 %v42
    %v82 = vunpack.c.l.b16 %v43
    %v83 = vunpack.c.l.b16 %v44
    %v84 = vunpack.c.l.b16 %v45
    %v85 = vunpack.c.l.b16 %v46
    %v86 = vunpack.c.l.b16 %v47
    %v87 = vunpack.c.l.b16 %v48
    %v88 = vunpack.c.l.b16 %v49
    %v89 = vunpack.c.l.b16 %v50
    %v90 = vunpack.c.l.b16 %v51
    %v91 = vunpack.c.l.b16 %v52
    %v92 = vpack.c.b16 %v77, %v76
    %v93 = vpack.c.b16 %v79, %v78
    %v94 = vpack.c.b16 %v81, %v80
    %v95 = vpack.c.b16 %v83, %v82
    %v96 = vpack.c.b16 %v85, %v84
    %v97 = vpack.c.b16 %v87, %v86
    %v98 = vpack.c.b16 %v89, %v88
    %v99 = vpack.c.b16 %v91, %v90
    %v101 = vunpack.c.l.b16 %v53
    %v102 = vunpack.c.h.b16 %v53
    %v103 = vpack.c.b16 %v101, %v101
    %v104 = vpack.c.b16 %v102, %v102
    %vm105 = vcmask 64512
    %v107 = vsel %vm105, %v92, 0
    %v110 = vsel %vm105, %v93, 0
    %v113 = vsel %vm105, %v94, 0
    %v116 = vsel %vm105, %v95, 0
    %v119 = vsel %vm105, %v96, 0
    %v122 = vsel %vm105, %v97, 0
    %v125 = vsel %vm105, %v98, 0
    %v128 = vsel %vm105, %v99, 0
    %vm130 = vcmask 1043456
    %v132 = vsel %vm130, %v103, 0
    %v135 = vsel %vm130, %v104, 0
    %137 = vmatpush.bf16.msra.mxu0 0
    %138 = vmatpush.bf16.msra.mxu0 0
    %139 = vmatpush.bf16.msra.mxu0 0
    %140 = vmatpush.bf16.msra.mxu0 0
    %141 = vmatpush.bf16.msra.mxu0 0
    %142 = vmatpush.bf16.msra.mxu0 0
    %143 = vmatpush.bf16.msra.mxu0 0
    %144 = vmatpush.bf16.msra.mxu0 %v132
    %145 = vmatmul.bf16.gmra.mxu0 %v107
    %v146 = vpop.f32.mrf.mxu0
    %v147 = vadd.f32 %v56, %v146
    %v148 = vpop.f32.mrf.mxu0
    %v149 = vadd.f32 %v56, %v148
    %150 = vmatmul.bf16.gmra.mxu0 %v110
    %v151 = vpop.f32.mrf.mxu0
    %v152 = vadd.f32 %v56, %v151
    %v153 = vpop.f32.mrf.mxu0
    %v154 = vadd.f32 %v56, %v153
    %155 = vmatmul.bf16.gmra.mxu0 %v113
    %v156 = vpop.f32.mrf.mxu0
    %v157 = vadd.f32 %v56, %v156
    %v158 = vpop.f32.mrf.mxu0
    %v159 = vadd.f32 %v56, %v158
    %160 = vmatmul.bf16.gmra.mxu0 %v116
    %v161 = vpop.f32.mrf.mxu0
    %v162 = vadd.f32 %v56, %v161
    %v163 = vpop.f32.mrf.mxu0
    %v164 = vadd.f32 %v56, %v163
    %165 = vmatmul.bf16.gmra.mxu0 %v119
    %v166 = vpop.f32.mrf.mxu0
    %v167 = vadd.f32 %v56, %v166
    %v168 = vpop.f32.mrf.mxu0
    %v169 = vadd.f32 %v56, %v168
    %170 = vmatmul.bf16.gmra.mxu0 %v122
    %v171 = vpop.f32.mrf.mxu0
    %v172 = vadd.f32 %v56, %v171
    %v173 = vpop.f32.mrf.mxu0
    %v174 = vadd.f32 %v56, %v173
    %175 = vmatmul.bf16.gmra.mxu0 %v125
    %v176 = vpop.f32.mrf.mxu0
    %v177 = vadd.f32 %v56, %v176
    %v178 = vpop.f32.mrf.mxu0
    %v179 = vadd.f32 %v56, %v178
    %180 = vmatmul.bf16.gmra.mxu0 %v128
    %v181 = vpop.f32.mrf.mxu0
    %v182 = vadd.f32 %v56, %v181
    %v183 = vpop.f32.mrf.mxu0
    %v184 = vadd.f32 %v56, %v183
    %185 = vdwg.mxu0
    %186 = vmatpush.bf16.msra.mxu0 0
    %187 = vmatpush.bf16.msra.mxu0 0
    %188 = vmatpush.bf16.msra.mxu0 0
    %189 = vmatpush.bf16.msra.mxu0 0
    %190 = vmatpush.bf16.msra.mxu0 0
    %191 = vmatpush.bf16.msra.mxu0 0
    %192 = vmatpush.bf16.msra.mxu0 0
    %193 = vmatpush.bf16.msra.mxu0 %v135
    %194 = vmatmul.bf16.gmra.mxu0 %v107
    %v195 = vpop.f32.mrf.mxu0
    %v196 = vadd.f32 %v57, %v195
    %v197 = vpop.f32.mrf.mxu0
    %v198 = vadd.f32 %v57, %v197
    %199 = vmatmul.bf16.gmra.mxu0 %v110
    %v200 = vpop.f32.mrf.mxu0
    %v201 = vadd.f32 %v57, %v200
    %v202 = vpop.f32.mrf.mxu0
    %v203 = vadd.f32 %v57, %v202
    %204 = vmatmul.bf16.gmra.mxu0 %v113
    %v205 = vpop.f32.mrf.mxu0
    %v206 = vadd.f32 %v57, %v205
    %v207 = vpop.f32.mrf.mxu0
    %v208 = vadd.f32 %v57, %v207
    %209 = vmatmul.bf16.gmra.mxu0 %v116
    %v210 = vpop.f32.mrf.mxu0
    %v211 = vadd.f32 %v57, %v210
    %v212 = vpop.f32.mrf.mxu0
    %v213 = vadd.f32 %v57, %v212
    %214 = vmatmul.bf16.gmra.mxu0 %v119
    %v215 = vpop.f32.mrf.mxu0
    %v216 = vadd.f32 %v57, %v215
    %v217 = vpop.f32.mrf.mxu0
    %v218 = vadd.f32 %v57, %v217
    %219 = vmatmul.bf16.gmra.mxu0 %v122
    %v220 = vpop.f32.mrf.mxu0
    %v221 = vadd.f32 %v57, %v220
    %v222 = vpop.f32.mrf.mxu0
    %v223 = vadd.f32 %v57, %v222
    %224 = vmatmul.bf16.gmra.mxu0 %v125
    %v225 = vpop.f32.mrf.mxu0
    %v226 = vadd.f32 %v57, %v225
    %v227 = vpop.f32.mrf.mxu0
    %v228 = vadd.f32 %v57, %v227
    %229 = vmatmul.bf16.gmra.mxu0 %v128
    %v230 = vpop.f32.mrf.mxu0
    %v231 = vadd.f32 %v57, %v230
    %v232 = vpop.f32.mrf.mxu0
    %v233 = vadd.f32 %v57, %v232
    %234 = vdwg.mxu0
    %v235 = vmax.f32 %v147, 0.0
    %v236 = vmax.f32 %v149, 0.0
    %v237 = vmax.f32 %v152, 0.0
    %v238 = vmax.f32 %v154, 0.0
    %v239 = vmax.f32 %v157, 0.0
    %v240 = vmax.f32 %v159, 0.0
    %v241 = vmax.f32 %v162, 0.0
    %v242 = vmax.f32 %v164, 0.0
    %v243 = vmax.f32 %v167, 0.0
    %v244 = vmax.f32 %v169, 0.0
    %v245 = vmax.f32 %v172, 0.0
    %v246 = vmax.f32 %v174, 0.0
    %v247 = vmax.f32 %v177, 0.0
    %v248 = vmax.f32 %v179, 0.0
    %v249 = vmax.f32 %v182, 0.0
    %v250 = vmax.f32 %v184, 0.0
    %v251 = vmax.f32 %v196, 0.0
    %v252 = vmax.f32 %v198, 0.0
    %v253 = vmax.f32 %v201, 0.0
    %v254 = vmax.f32 %v203, 0.0
    %v255 = vmax.f32 %v206, 0.0
    %v256 = vmax.f32 %v208, 0.0
    %v257 = vmax.f32 %v211, 0.0
    %v258 = vmax.f32 %v213, 0.0
    %v259 = vmax.f32 %v216, 0.0
    %v260 = vmax.f32 %v218, 0.0
    %v261 = vmax.f32 %v221, 0.0
    %v262 = vmax.f32 %v223, 0.0
    %v263 = vmax.f32 %v226, 0.0
    %v264 = vmax.f32 %v228, 0.0
    %v265 = vmax.f32 %v231, 0.0
    %v266 = vmax.f32 %v233, 0.0
    %vm267 = vcmask 392192
    %268 = vst.msk [vmem:[#allocation2] sm:$0xff] %vm267, 0.0
    %vm269 = vcmask 388096
    %270 = vst.msk [vmem:[#allocation2 + $0x8] sm:$0xf] %vm269, 0.0
    %271 = vst.msk [vmem:[#allocation2 + $0x10] sm:$0xff] %vm267, 0.0
    %272 = vst.msk [vmem:[#allocation2 + $0x18] sm:$0xf] %vm269, 0.0
    %273 = vst.msk [vmem:[#allocation2 + $0x20] sm:$0xff] %vm267, 0.0
    %274 = vst.msk [vmem:[#allocation2 + $0x28] sm:$0xf] %vm269, 0.0
    %275 = vst.msk [vmem:[#allocation2 + $0x30] sm:$0xff] %vm267, 0.0
    %276 = vst.msk [vmem:[#allocation2 + $0x38] sm:$0xf] %vm269, 0.0
    %277 = vst.msk [vmem:[#allocation2 + $0x40] sm:$0xff] %vm267, 0.0
    %278 = vst.msk [vmem:[#allocation2 + $0x48] sm:$0xf] %vm269, 0.0
    %279 = vst.msk [vmem:[#allocation2 + $0x50] sm:$0xff] %vm267, 0.0
    %280 = vst.msk [vmem:[#allocation2 + $0x58] sm:$0xf] %vm269, 0.0
    %281 = vst.msk [vmem:[#allocation2 + $0x60] sm:$0xff] %vm267, 0.0
    %282 = vst.msk [vmem:[#allocation2 + $0x68] sm:$0xf] %vm269, 0.0
    %283 = vst.msk [vmem:[#allocation2 + $0x70] sm:$0xff] %vm267, 0.0
    %284 = vst.msk [vmem:[#allocation2 + $0x78] sm:$0xf] %vm269, 0.0
    %285 = vst.msk [vmem:[#allocation2 + $0x80] sm:$0xff] %vm267, 0.0
    %286 = vst.msk [vmem:[#allocation2 + $0x88] sm:$0xf] %vm269, 0.0
    %287 = vst.msk [vmem:[#allocation2 + $0x90] sm:$0xff] %vm267, 0.0
    %288 = vst.msk [vmem:[#allocation2 + $0x98] sm:$0xf] %vm269, 0.0
    %289 = vst.msk [vmem:[#allocation2 + $0xa0] sm:$0xff] %vm267, 0.0
    %290 = vst.msk [vmem:[#allocation2 + $0xa8] sm:$0xf] %vm269, 0.0
    %291 = vst.msk [vmem:[#allocation2 + $0xb0] sm:$0xff] %vm267, 0.0
    %292 = vst.msk [vmem:[#allocation2 + $0xb8] sm:$0xf] %vm269, 0.0
    %293 = vst.msk [vmem:[#allocation2 + $0xc0] sm:$0xff] %vm267, 0.0
    %294 = vst.msk [vmem:[#allocation2 + $0xc8] sm:$0xf] %vm269, 0.0
    %295 = vst.msk [vmem:[#allocation2 + $0xd0] sm:$0xff] %vm267, 0.0
    %296 = vst.msk [vmem:[#allocation2 + $0xd8] sm:$0xf] %vm269, 0.0
    %297 = vst.msk [vmem:[#allocation2 + $0xe0] sm:$0xff] %vm267, 0.0
    %298 = vst.msk [vmem:[#allocation2 + $0xe8] sm:$0xf] %vm269, 0.0
    %299 = vst.msk [vmem:[#allocation2 + $0xf0] sm:$0xff] %vm267, 0.0
    %300 = vst.msk [vmem:[#allocation2 + $0xf8] sm:$0xf] %vm269, 0.0
    %301 = vst.msk [vmem:[#allocation2 + $0x100] sm:$0xff] %vm267, 0.0
    %302 = vst.msk [vmem:[#allocation2 + $0x108] sm:$0xf] %vm269, 0.0
    %303 = vst.msk [vmem:[#allocation2 + $0x110] sm:$0xff] %vm267, 0.0
    %304 = vst.msk [vmem:[#allocation2 + $0x118] sm:$0xf] %vm269, 0.0
    %305 = vst.msk [vmem:[#allocation2 + $0x120] sm:$0xff] %vm267, 0.0
    %306 = vst.msk [vmem:[#allocation2 + $0x128] sm:$0xf] %vm269, 0.0
    %307 = vst.msk [vmem:[#allocation2 + $0x130] sm:$0xff] %vm267, 0.0
    %308 = vst.msk [vmem:[#allocation2 + $0x138] sm:$0xf] %vm269, 0.0
    %309 = vst.msk [vmem:[#allocation2 + $0x140] sm:$0xff] %vm267, 0.0
    %310 = vst.msk [vmem:[#allocation2 + $0x148] sm:$0xf] %vm269, 0.0
    %311 = vst.msk [vmem:[#allocation2 + $0x150] sm:$0xff] %vm267, 0.0
    %312 = vst.msk [vmem:[#allocation2 + $0x158] sm:$0xf] %vm269, 0.0
    %313 = vst.msk [vmem:[#allocation2 + $0x160] sm:$0xff] %vm267, 0.0
    %314 = vst.msk [vmem:[#allocation2 + $0x168] sm:$0xf] %vm269, 0.0
    %315 = vst.msk [vmem:[#allocation2 + $0x170] sm:$0xff] %vm267, 0.0
    %316 = vst.msk [vmem:[#allocation2 + $0x178] sm:$0xf] %vm269, 0.0
    %s317 = scalar_lea.vmem [#allocation2], 32
    %318 = vst.msk [vmem:[%s317 + $0x2] sm:$0xff] %vm267, %v251
    %319 = vst.msk [vmem:[%s317 + $0x12] sm:$0xff] %vm267, %v252
    %320 = vst.msk [vmem:[%s317 + $0x22] sm:$0xff] %vm267, %v253
    %321 = vst.msk [vmem:[%s317 + $0x32] sm:$0xff] %vm267, %v254
    %322 = vst.msk [vmem:[%s317 + $0x42] sm:$0xff] %vm267, %v255
    %323 = vst.msk [vmem:[%s317 + $0x52] sm:$0xff] %vm267, %v256
    %324 = vst.msk [vmem:[%s317 + $0x62] sm:$0xff] %vm267, %v257
    %325 = vst.msk [vmem:[%s317 + $0x72] sm:$0xff] %vm267, %v258
    %326 = vst.msk [vmem:[%s317 + $0xc2] sm:$0xff] %vm267, %v259
    %327 = vst.msk [vmem:[%s317 + $0xd2] sm:$0xff] %vm267, %v260
    %328 = vst.msk [vmem:[%s317 + $0xe2] sm:$0xff] %vm267, %v261
    %329 = vst.msk [vmem:[%s317 + $0xf2] sm:$0xff] %vm267, %v262
    %330 = vst.msk [vmem:[%s317 + $0x102] sm:$0xff] %vm267, %v263
    %331 = vst.msk [vmem:[%s317 + $0x112] sm:$0xff] %vm267, %v264
    %332 = vst.msk [vmem:[%s317 + $0x122] sm:$0xff] %vm267, %v265
    %333 = vst.msk [vmem:[%s317 + $0x132] sm:$0xff] %vm267, %v266
    %v334 = vld [vmem:[#allocation2] sm:$0xff]
    %v335 = vld [vmem:[#allocation2 + $0x10] sm:$0xff]
    %v336 = vld [vmem:[#allocation2 + $0x20] sm:$0xff]
    %v337 = vld [vmem:[#allocation2 + $0x30] sm:$0xff]
    %v338 = vld [vmem:[#allocation2 + $0x40] sm:$0xff]
    %v339 = vld [vmem:[#allocation2 + $0x50] sm:$0xff]
    %v340 = vld [vmem:[#allocation2 + $0x60] sm:$0xff]
    %v341 = vld [vmem:[#allocation2 + $0x70] sm:$0xff]
    %v342 = vld [vmem:[#allocation2 + $0xc0] sm:$0xff]
    %v343 = vld [vmem:[#allocation2 + $0xd0] sm:$0xff]
    %v344 = vld [vmem:[#allocation2 + $0xe0] sm:$0xff]
    %v345 = vld [vmem:[#allocation2 + $0xf0] sm:$0xff]
    %v346 = vld [vmem:[#allocation2 + $0x100] sm:$0xff]
    %v347 = vld [vmem:[#allocation2 + $0x110] sm:$0xff]
    %v348 = vld [vmem:[#allocation2 + $0x120] sm:$0xff]
    %v349 = vld [vmem:[#allocation2 + $0x130] sm:$0xff]
    %v350 = vld [vmem:[#allocation2 + $0x1] sm:$0xff]
    %v351 = vld [vmem:[#allocation2 + $0x11] sm:$0xff]
    %v352 = vld [vmem:[#allocation2 + $0x21] sm:$0xff]
    %v353 = vld [vmem:[#allocation2 + $0x31] sm:$0xff]
    %v354 = vld [vmem:[#allocation2 + $0x41] sm:$0xff]
    %v355 = vld [vmem:[#allocation2 + $0x51] sm:$0xff]
    %v356 = vld [vmem:[#allocation2 + $0x61] sm:$0xff]
    %v357 = vld [vmem:[#allocation2 + $0x71] sm:$0xff]
    %v358 = vld [vmem:[#allocation2 + $0xc1] sm:$0xff]
    %v359 = vld [vmem:[#allocation2 + $0xd1] sm:$0xff]
    %v360 = vld [vmem:[#allocation2 + $0xe1] sm:$0xff]
    %v361 = vld [vmem:[#allocation2 + $0xf1] sm:$0xff]
    %v362 = vld [vmem:[#allocation2 + $0x101] sm:$0xff]
    %v363 = vld [vmem:[#allocation2 + $0x111] sm:$0xff]
    %v364 = vld [vmem:[#allocation2 + $0x121] sm:$0xff]
    %v365 = vld [vmem:[#allocation2 + $0x131] sm:$0xff]
    %v366 = vld [vmem:[#allocation2 + $0x2] sm:$0xff]
    %v367 = vld [vmem:[#allocation2 + $0x12] sm:$0xff]
    %v368 = vld [vmem:[#allocation2 + $0x22] sm:$0xff]
    %v369 = vld [vmem:[#allocation2 + $0x32] sm:$0xff]
    %v370 = vld [vmem:[#allocation2 + $0x42] sm:$0xff]
    %v371 = vld [vmem:[#allocation2 + $0x52] sm:$0xff]
    %v372 = vld [vmem:[#allocation2 + $0x62] sm:$0xff]
    %v373 = vld [vmem:[#allocation2 + $0x72] sm:$0xff]
    %v374 = vld [vmem:[#allocation2 + $0xc2] sm:$0xff]
    %v375 = vld [vmem:[#allocation2 + $0xd2] sm:$0xff]
    %v376 = vld [vmem:[#allocation2 + $0xe2] sm:$0xff]
    %v377 = vld [vmem:[#allocation2 + $0xf2] sm:$0xff]
    %v378 = vld [vmem:[#allocation2 + $0x102] sm:$0xff]
    %v379 = vld [vmem:[#allocation2 + $0x112] sm:$0xff]
    %v380 = vld [vmem:[#allocation2 + $0x122] sm:$0xff]
    %v381 = vld [vmem:[#allocation2 + $0x132] sm:$0xff]
    %v382 = vld [vmem:[#allocation2 + $0x3] sm:$0xff]
    %v383 = vld [vmem:[#allocation2 + $0x13] sm:$0xff]
    %v384 = vld [vmem:[#allocation2 + $0x23] sm:$0xff]
    %v385 = vld [vmem:[#allocation2 + $0x33] sm:$0xff]
    %v386 = vld [vmem:[#allocation2 + $0x43] sm:$0xff]
    %v387 = vld [vmem:[#allocation2 + $0x53] sm:$0xff]
    %v388 = vld [vmem:[#allocation2 + $0x63] sm:$0xff]
    %v389 = vld [vmem:[#allocation2 + $0x73] sm:$0xff]
    %v390 = vld [vmem:[#allocation2 + $0xc3] sm:$0xff]
    %v391 = vld [vmem:[#allocation2 + $0xd3] sm:$0xff]
    %v392 = vld [vmem:[#allocation2 + $0xe3] sm:$0xff]
    %v393 = vld [vmem:[#allocation2 + $0xf3] sm:$0xff]
    %v394 = vld [vmem:[#allocation2 + $0x103] sm:$0xff]
    %v395 = vld [vmem:[#allocation2 + $0x113] sm:$0xff]
    %v396 = vld [vmem:[#allocation2 + $0x123] sm:$0xff]
    %v397 = vld [vmem:[#allocation2 + $0x133] sm:$0xff]
    %v398 = vld [vmem:[#allocation2 + $0x4] sm:$0xff]
    %v399 = vld [vmem:[#allocation2 + $0x14] sm:$0xff]
    %v400 = vld [vmem:[#allocation2 + $0x24] sm:$0xff]
    %v401 = vld [vmem:[#allocation2 + $0x34] sm:$0xff]
    %v402 = vld [vmem:[#allocation2 + $0x44] sm:$0xff]
    %v403 = vld [vmem:[#allocation2 + $0x54] sm:$0xff]
    %v404 = vld [vmem:[#allocation2 + $0x64] sm:$0xff]
    %v405 = vld [vmem:[#allocation2 + $0x74] sm:$0xff]
    %v406 = vld [vmem:[#allocation2 + $0xc4] sm:$0xff]
    %v407 = vld [vmem:[#allocation2 + $0xd4] sm:$0xff]
    %v408 = vld [vmem:[#allocation2 + $0xe4] sm:$0xff]
    %v409 = vld [vmem:[#allocation2 + $0xf4] sm:$0xff]
    %v410 = vld [vmem:[#allocation2 + $0x104] sm:$0xff]
    %v411 = vld [vmem:[#allocation2 + $0x114] sm:$0xff]
    %v412 = vld [vmem:[#allocation2 + $0x124] sm:$0xff]
    %v413 = vld [vmem:[#allocation2 + $0x134] sm:$0xff]
    %s414 = scalar_lea.vmem [#allocation2], 16
    %v415 = vld [vmem:[%s414] sm:$0xff]
    %v416 = vld [vmem:[%s414 + $0x10] sm:$0xff]
    %v417 = vld [vmem:[%s414 + $0x20] sm:$0xff]
    %v418 = vld [vmem:[%s414 + $0x30] sm:$0xff]
    %v419 = vld [vmem:[%s414 + $0x40] sm:$0xff]
    %v420 = vld [vmem:[%s414 + $0x50] sm:$0xff]
    %v421 = vld [vmem:[%s414 + $0x60] sm:$0xff]
    %v422 = vld [vmem:[%s414 + $0x70] sm:$0xff]
    %v423 = vld [vmem:[%s414 + $0xc0] sm:$0xff]
    %v424 = vld [vmem:[%s414 + $0xd0] sm:$0xff]
    %v425 = vld [vmem:[%s414 + $0xe0] sm:$0xff]
    %v426 = vld [vmem:[%s414 + $0xf0] sm:$0xff]
    %v427 = vld [vmem:[%s414 + $0x100] sm:$0xff]
    %v428 = vld [vmem:[%s414 + $0x110] sm:$0xff]
    %v429 = vld [vmem:[%s414 + $0x120] sm:$0xff]
    %v430 = vld [vmem:[%s414 + $0x130] sm:$0xff]
    %v431 = vld [vmem:[%s414 + $0x1] sm:$0xff]
    %v432 = vld [vmem:[%s414 + $0x11] sm:$0xff]
    %v433 = vld [vmem:[%s414 + $0x21] sm:$0xff]
    %v434 = vld [vmem:[%s414 + $0x31] sm:$0xff]
    %v435 = vld [vmem:[%s414 + $0x41] sm:$0xff]
    %v436 = vld [vmem:[%s414 + $0x51] sm:$0xff]
    %v437 = vld [vmem:[%s414 + $0x61] sm:$0xff]
    %v438 = vld [vmem:[%s414 + $0x71] sm:$0xff]
    %v439 = vld [vmem:[%s414 + $0xc1] sm:$0xff]
    %v440 = vld [vmem:[%s414 + $0xd1] sm:$0xff]
    %v441 = vld [vmem:[%s414 + $0xe1] sm:$0xff]
    %v442 = vld [vmem:[%s414 + $0xf1] sm:$0xff]
    %v443 = vld [vmem:[%s414 + $0x101] sm:$0xff]
    %v444 = vld [vmem:[%s414 + $0x111] sm:$0xff]
    %v445 = vld [vmem:[%s414 + $0x121] sm:$0xff]
    %v446 = vld [vmem:[%s414 + $0x131] sm:$0xff]
    %v447 = vld [vmem:[%s414 + $0x2] sm:$0xff]
    %v448 = vld [vmem:[%s414 + $0x12] sm:$0xff]
    %v449 = vld [vmem:[%s414 + $0x22] sm:$0xff]
    %v450 = vld [vmem:[%s414 + $0x32] sm:$0xff]
    %v451 = vld [vmem:[%s414 + $0x42] sm:$0xff]
    %v452 = vld [vmem:[%s414 + $0x52] sm:$0xff]
    %v453 = vld [vmem:[%s414 + $0x62] sm:$0xff]
    %v454 = vld [vmem:[%s414 + $0x72] sm:$0xff]
    %v455 = vld [vmem:[%s414 + $0xc2] sm:$0xff]
    %v456 = vld [vmem:[%s414 + $0xd2] sm:$0xff]
    %v457 = vld [vmem:[%s414 + $0xe2] sm:$0xff]
    %v458 = vld [vmem:[%s414 + $0xf2] sm:$0xff]
    %v459 = vld [vmem:[%s414 + $0x102] sm:$0xff]
    %v460 = vld [vmem:[%s414 + $0x112] sm:$0xff]
    %v461 = vld [vmem:[%s414 + $0x122] sm:$0xff]
    %v462 = vld [vmem:[%s414 + $0x132] sm:$0xff]
    %v463 = vld [vmem:[%s414 + $0x3] sm:$0xff]
    %v464 = vld [vmem:[%s414 + $0x13] sm:$0xff]
    %v465 = vld [vmem:[%s414 + $0x23] sm:$0xff]
    %v466 = vld [vmem:[%s414 + $0x33] sm:$0xff]
    %v467 = vld [vmem:[%s414 + $0x43] sm:$0xff]
    %v468 = vld [vmem:[%s414 + $0x53] sm:$0xff]
    %v469 = vld [vmem:[%s414 + $0x63] sm:$0xff]
    %v470 = vld [vmem:[%s414 + $0x73] sm:$0xff]
    %v471 = vld [vmem:[%s414 + $0xc3] sm:$0xff]
    %v472 = vld [vmem:[%s414 + $0xd3] sm:$0xff]
    %v473 = vld [vmem:[%s414 + $0xe3] sm:$0xff]
    %v474 = vld [vmem:[%s414 + $0xf3] sm:$0xff]
    %v475 = vld [vmem:[%s414 + $0x103] sm:$0xff]
    %v476 = vld [vmem:[%s414 + $0x113] sm:$0xff]
    %v477 = vld [vmem:[%s414 + $0x123] sm:$0xff]
    %v478 = vld [vmem:[%s414 + $0x133] sm:$0xff]
    %v479 = vld [vmem:[%s414 + $0x4] sm:$0xff]
    %v480 = vld [vmem:[%s414 + $0x14] sm:$0xff]
    %v481 = vld [vmem:[%s414 + $0x24] sm:$0xff]
    %v482 = vld [vmem:[%s414 + $0x34] sm:$0xff]
    %v483 = vld [vmem:[%s414 + $0x44] sm:$0xff]
    %v484 = vld [vmem:[%s414 + $0x54] sm:$0xff]
    %v485 = vld [vmem:[%s414 + $0x64] sm:$0xff]
    %v486 = vld [vmem:[%s414 + $0x74] sm:$0xff]
    %v487 = vld [vmem:[%s414 + $0xc4] sm:$0xff]
    %v488 = vld [vmem:[%s414 + $0xd4] sm:$0xff]
    %v489 = vld [vmem:[%s414 + $0xe4] sm:$0xff]
    %v490 = vld [vmem:[%s414 + $0xf4] sm:$0xff]
    %v491 = vld [vmem:[%s414 + $0x104] sm:$0xff]
    %v492 = vld [vmem:[%s414 + $0x114] sm:$0xff]
    %v493 = vld [vmem:[%s414 + $0x124] sm:$0xff]
    %v494 = vld [vmem:[%s414 + $0x134] sm:$0xff]
    %v495 = vld [vmem:[%s317] sm:$0xff]
    %v496 = vld [vmem:[%s317 + $0x10] sm:$0xff]
    %v497 = vld [vmem:[%s317 + $0x20] sm:$0xff]
    %v498 = vld [vmem:[%s317 + $0x30] sm:$0xff]
    %v499 = vld [vmem:[%s317 + $0x40] sm:$0xff]
    %v500 = vld [vmem:[%s317 + $0x50] sm:$0xff]
    %v501 = vld [vmem:[%s317 + $0x60] sm:$0xff]
    %v502 = vld [vmem:[%s317 + $0x70] sm:$0xff]
    %v503 = vld [vmem:[%s317 + $0xc0] sm:$0xff]
    %v504 = vld [vmem:[%s317 + $0xd0] sm:$0xff]
    %v505 = vld [vmem:[%s317 + $0xe0] sm:$0xff]
    %v506 = vld [vmem:[%s317 + $0xf0] sm:$0xff]
    %v507 = vld [vmem:[%s317 + $0x100] sm:$0xff]
    %v508 = vld [vmem:[%s317 + $0x110] sm:$0xff]
    %v509 = vld [vmem:[%s317 + $0x120] sm:$0xff]
    %v510 = vld [vmem:[%s317 + $0x130] sm:$0xff]
    %v511 = vld [vmem:[%s317 + $0x1] sm:$0xff]
    %v512 = vld [vmem:[%s317 + $0x11] sm:$0xff]
    %v513 = vld [vmem:[%s317 + $0x21] sm:$0xff]
    %v514 = vld [vmem:[%s317 + $0x31] sm:$0xff]
    %v515 = vld [vmem:[%s317 + $0x41] sm:$0xff]
    %v516 = vld [vmem:[%s317 + $0x51] sm:$0xff]
    %v517 = vld [vmem:[%s317 + $0x61] sm:$0xff]
    %v518 = vld [vmem:[%s317 + $0x71] sm:$0xff]
    %v519 = vld [vmem:[%s317 + $0xc1] sm:$0xff]
    %v520 = vld [vmem:[%s317 + $0xd1] sm:$0xff]
    %v521 = vld [vmem:[%s317 + $0xe1] sm:$0xff]
    %v522 = vld [vmem:[%s317 + $0xf1] sm:$0xff]
    %v523 = vld [vmem:[%s317 + $0x101] sm:$0xff]
    %v524 = vld [vmem:[%s317 + $0x111] sm:$0xff]
    %v525 = vld [vmem:[%s317 + $0x121] sm:$0xff]
    %v526 = vld [vmem:[%s317 + $0x131] sm:$0xff]
    %v527 = vld [vmem:[%s317 + $0x2] sm:$0xff]
    %v528 = vld [vmem:[%s317 + $0x12] sm:$0xff]
    %v529 = vld [vmem:[%s317 + $0x22] sm:$0xff]
    %v530 = vld [vmem:[%s317 + $0x32] sm:$0xff]
    %v531 = vld [vmem:[%s317 + $0x42] sm:$0xff]
    %v532 = vld [vmem:[%s317 + $0x52] sm:$0xff]
    %v533 = vld [vmem:[%s317 + $0x62] sm:$0xff]
    %v534 = vld [vmem:[%s317 + $0x72] sm:$0xff]
    %v535 = vld [vmem:[%s317 + $0xc2] sm:$0xff]
    %v536 = vld [vmem:[%s317 + $0xd2] sm:$0xff]
    %v537 = vld [vmem:[%s317 + $0xe2] sm:$0xff]
    %v538 = vld [vmem:[%s317 + $0xf2] sm:$0xff]
    %v539 = vld [vmem:[%s317 + $0x102] sm:$0xff]
    %v540 = vld [vmem:[%s317 + $0x112] sm:$0xff]
    %v541 = vld [vmem:[%s317 + $0x122] sm:$0xff]
    %v542 = vld [vmem:[%s317 + $0x132] sm:$0xff]
    %v543 = vld [vmem:[%s317 + $0x3] sm:$0xff]
    %v544 = vld [vmem:[%s317 + $0x13] sm:$0xff]
    %v545 = vld [vmem:[%s317 + $0x23] sm:$0xff]
    %v546 = vld [vmem:[%s317 + $0x33] sm:$0xff]
    %v547 = vld [vmem:[%s317 + $0x43] sm:$0xff]
    %v548 = vld [vmem:[%s317 + $0x53] sm:$0xff]
    %v549 = vld [vmem:[%s317 + $0x63] sm:$0xff]
    %v550 = vld [vmem:[%s317 + $0x73] sm:$0xff]
    %v551 = vld [vmem:[%s317 + $0xc3] sm:$0xff]
    %v552 = vld [vmem:[%s317 + $0xd3] sm:$0xff]
    %v553 = vld [vmem:[%s317 + $0xe3] sm:$0xff]
    %v554 = vld [vmem:[%s317 + $0xf3] sm:$0xff]
    %v555 = vld [vmem:[%s317 + $0x103] sm:$0xff]
    %v556 = vld [vmem:[%s317 + $0x113] sm:$0xff]
    %v557 = vld [vmem:[%s317 + $0x123] sm:$0xff]
    %v558 = vld [vmem:[%s317 + $0x133] sm:$0xff]
    %v559 = vld [vmem:[%s317 + $0x4] sm:$0xff]
    %v560 = vld [vmem:[%s317 + $0x14] sm:$0xff]
    %v561 = vld [vmem:[%s317 + $0x24] sm:$0xff]
    %v562 = vld [vmem:[%s317 + $0x34] sm:$0xff]
    %v563 = vld [vmem:[%s317 + $0x44] sm:$0xff]
    %v564 = vld [vmem:[%s317 + $0x54] sm:$0xff]
    %v565 = vld [vmem:[%s317 + $0x64] sm:$0xff]
    %v566 = vld [vmem:[%s317 + $0x74] sm:$0xff]
    %v567 = vld [vmem:[%s317 + $0xc4] sm:$0xff]
    %v568 = vld [vmem:[%s317 + $0xd4] sm:$0xff]
    %v569 = vld [vmem:[%s317 + $0xe4] sm:$0xff]
    %v570 = vld [vmem:[%s317 + $0xf4] sm:$0xff]
    %v571 = vld [vmem:[%s317 + $0x104] sm:$0xff]
    %v572 = vld [vmem:[%s317 + $0x114] sm:$0xff]
    %v573 = vld [vmem:[%s317 + $0x124] sm:$0xff]
    %v574 = vld [vmem:[%s317 + $0x134] sm:$0xff]
    %s575 = scalar_lea.vmem [#allocation2], 48
    %v576 = vld [vmem:[%s575] sm:$0xff]
    %v577 = vld [vmem:[%s575 + $0x10] sm:$0xff]
    %v578 = vld [vmem:[%s575 + $0x20] sm:$0xff]
    %v579 = vld [vmem:[%s575 + $0x30] sm:$0xff]
    %v580 = vld [vmem:[%s575 + $0x40] sm:$0xff]
    %v581 = vld [vmem:[%s575 + $0x50] sm:$0xff]
    %v582 = vld [vmem:[%s575 + $0x60] sm:$0xff]
    %v583 = vld [vmem:[%s575 + $0x70] sm:$0xff]
    %v584 = vld [vmem:[%s575 + $0xc0] sm:$0xff]
    %v585 = vld [vmem:[%s575 + $0xd0] sm:$0xff]
    %v586 = vld [vmem:[%s575 + $0xe0] sm:$0xff]
    %v587 = vld [vmem:[%s575 + $0xf0] sm:$0xff]
    %v588 = vld [vmem:[%s575 + $0x100] sm:$0xff]
    %v589 = vld [vmem:[%s575 + $0x110] sm:$0xff]
    %v590 = vld [vmem:[%s575 + $0x120] sm:$0xff]
    %v591 = vld [vmem:[%s575 + $0x130] sm:$0xff]
    %v592 = vld [vmem:[%s575 + $0x1] sm:$0xff]
    %v593 = vld [vmem:[%s575 + $0x11] sm:$0xff]
    %v594 = vld [vmem:[%s575 + $0x21] sm:$0xff]
    %v595 = vld [vmem:[%s575 + $0x31] sm:$0xff]
    %v596 = vld [vmem:[%s575 + $0x41] sm:$0xff]
    %v597 = vld [vmem:[%s575 + $0x51] sm:$0xff]
    %v598 = vld [vmem:[%s575 + $0x61] sm:$0xff]
    %v599 = vld [vmem:[%s575 + $0x71] sm:$0xff]
    %v600 = vld [vmem:[%s575 + $0xc1] sm:$0xff]
    %v601 = vld [vmem:[%s575 + $0xd1] sm:$0xff]
    %v602 = vld [vmem:[%s575 + $0xe1] sm:$0xff]
    %v603 = vld [vmem:[%s575 + $0xf1] sm:$0xff]
    %v604 = vld [vmem:[%s575 + $0x101] sm:$0xff]
    %v605 = vld [vmem:[%s575 + $0x111] sm:$0xff]
    %v606 = vld [vmem:[%s575 + $0x121] sm:$0xff]
    %v607 = vld [vmem:[%s575 + $0x131] sm:$0xff]
    %v608 = vld [vmem:[%s575 + $0x2] sm:$0xff]
    %v609 = vld [vmem:[%s575 + $0x12] sm:$0xff]
    %v610 = vld [vmem:[%s575 + $0x22] sm:$0xff]
    %v611 = vld [vmem:[%s575 + $0x32] sm:$0xff]
    %v612 = vld [vmem:[%s575 + $0x42] sm:$0xff]
    %v613 = vld [vmem:[%s575 + $0x52] sm:$0xff]
    %v614 = vld [vmem:[%s575 + $0x62] sm:$0xff]
    %v615 = vld [vmem:[%s575 + $0x72] sm:$0xff]
    %v616 = vld [vmem:[%s575 + $0xc2] sm:$0xff]
    %v617 = vld [vmem:[%s575 + $0xd2] sm:$0xff]
    %v618 = vld [vmem:[%s575 + $0xe2] sm:$0xff]
    %v619 = vld [vmem:[%s575 + $0xf2] sm:$0xff]
    %v620 = vld [vmem:[%s575 + $0x102] sm:$0xff]
    %v621 = vld [vmem:[%s575 + $0x112] sm:$0xff]
    %v622 = vld [vmem:[%s575 + $0x122] sm:$0xff]
    %v623 = vld [vmem:[%s575 + $0x132] sm:$0xff]
    %v624 = vld [vmem:[%s575 + $0x3] sm:$0xff]
    %v625 = vld [vmem:[%s575 + $0x13] sm:$0xff]
    %v626 = vld [vmem:[%s575 + $0x23] sm:$0xff]
    %v627 = vld [vmem:[%s575 + $0x33] sm:$0xff]
    %v628 = vld [vmem:[%s575 + $0x43] sm:$0xff]
    %v629 = vld [vmem:[%s575 + $0x53] sm:$0xff]
    %v630 = vld [vmem:[%s575 + $0x63] sm:$0xff]
    %v631 = vld [vmem:[%s575 + $0x73] sm:$0xff]
    %v632 = vld [vmem:[%s575 + $0xc3] sm:$0xff]
    %v633 = vld [vmem:[%s575 + $0xd3] sm:$0xff]
    %v634 = vld [vmem:[%s575 + $0xe3] sm:$0xff]
    %v635 = vld [vmem:[%s575 + $0xf3] sm:$0xff]
    %v636 = vld [vmem:[%s575 + $0x103] sm:$0xff]
    %v637 = vld [vmem:[%s575 + $0x113] sm:$0xff]
    %v638 = vld [vmem:[%s575 + $0x123] sm:$0xff]
    %v639 = vld [vmem:[%s575 + $0x133] sm:$0xff]
    %v640 = vld [vmem:[%s575 + $0x4] sm:$0xff]
    %v641 = vld [vmem:[%s575 + $0x14] sm:$0xff]
    %v642 = vld [vmem:[%s575 + $0x24] sm:$0xff]
    %v643 = vld [vmem:[%s575 + $0x34] sm:$0xff]
    %v644 = vld [vmem:[%s575 + $0x44] sm:$0xff]
    %v645 = vld [vmem:[%s575 + $0x54] sm:$0xff]
    %v646 = vld [vmem:[%s575 + $0x64] sm:$0xff]
    %v647 = vld [vmem:[%s575 + $0x74] sm:$0xff]
    %v648 = vld [vmem:[%s575 + $0xc4] sm:$0xff]
    %v649 = vld [vmem:[%s575 + $0xd4] sm:$0xff]
    %v650 = vld [vmem:[%s575 + $0xe4] sm:$0xff]
    %v651 = vld [vmem:[%s575 + $0xf4] sm:$0xff]
    %v652 = vld [vmem:[%s575 + $0x104] sm:$0xff]
    %v653 = vld [vmem:[%s575 + $0x114] sm:$0xff]
    %v654 = vld [vmem:[%s575 + $0x124] sm:$0xff]
    %v655 = vld [vmem:[%s575 + $0x134] sm:$0xff]
    %s656 = scalar_lea.vmem [#allocation2], 64
    %v657 = vld [vmem:[%s656] sm:$0xff]
    %v658 = vld [vmem:[%s656 + $0x10] sm:$0xff]
    %v659 = vld [vmem:[%s656 + $0x20] sm:$0xff]
    %v660 = vld [vmem:[%s656 + $0x30] sm:$0xff]
    %v661 = vld [vmem:[%s656 + $0x40] sm:$0xff]
    %v662 = vld [vmem:[%s656 + $0x50] sm:$0xff]
    %v663 = vld [vmem:[%s656 + $0x60] sm:$0xff]
    %v664 = vld [vmem:[%s656 + $0x70] sm:$0xff]
    %v665 = vld [vmem:[%s656 + $0xc0] sm:$0xff]
    %v666 = vld [vmem:[%s656 + $0xd0] sm:$0xff]
    %v667 = vld [vmem:[%s656 + $0xe0] sm:$0xff]
    %v668 = vld [vmem:[%s656 + $0xf0] sm:$0xff]
    %v669 = vld [vmem:[%s656 + $0x100] sm:$0xff]
    %v670 = vld [vmem:[%s656 + $0x110] sm:$0xff]
    %v671 = vld [vmem:[%s656 + $0x120] sm:$0xff]
    %v672 = vld [vmem:[%s656 + $0x130] sm:$0xff]
    %v673 = vld [vmem:[%s656 + $0x1] sm:$0xff]
    %v674 = vld [vmem:[%s656 + $0x11] sm:$0xff]
    %v675 = vld [vmem:[%s656 + $0x21] sm:$0xff]
    %v676 = vld [vmem:[%s656 + $0x31] sm:$0xff]
    %v677 = vld [vmem:[%s656 + $0x41] sm:$0xff]
    %v678 = vld [vmem:[%s656 + $0x51] sm:$0xff]
    %v679 = vld [vmem:[%s656 + $0x61] sm:$0xff]
    %v680 = vld [vmem:[%s656 + $0x71] sm:$0xff]
    %v681 = vld [vmem:[%s656 + $0xc1] sm:$0xff]
    %v682 = vld [vmem:[%s656 + $0xd1] sm:$0xff]
    %v683 = vld [vmem:[%s656 + $0xe1] sm:$0xff]
    %v684 = vld [vmem:[%s656 + $0xf1] sm:$0xff]
    %v685 = vld [vmem:[%s656 + $0x101] sm:$0xff]
    %v686 = vld [vmem:[%s656 + $0x111] sm:$0xff]
    %v687 = vld [vmem:[%s656 + $0x121] sm:$0xff]
    %v688 = vld [vmem:[%s656 + $0x131] sm:$0xff]
    %v689 = vld [vmem:[%s656 + $0x2] sm:$0xff]
    %v690 = vld [vmem:[%s656 + $0x12] sm:$0xff]
    %v691 = vld [vmem:[%s656 + $0x22] sm:$0xff]
    %v692 = vld [vmem:[%s656 + $0x32] sm:$0xff]
    %v693 = vld [vmem:[%s656 + $0x42] sm:$0xff]
    %v694 = vld [vmem:[%s656 + $0x52] sm:$0xff]
    %v695 = vld [vmem:[%s656 + $0x62] sm:$0xff]
    %v696 = vld [vmem:[%s656 + $0x72] sm:$0xff]
    %v697 = vld [vmem:[%s656 + $0xc2] sm:$0xff]
    %v698 = vld [vmem:[%s656 + $0xd2] sm:$0xff]
    %v699 = vld [vmem:[%s656 + $0xe2] sm:$0xff]
    %v700 = vld [vmem:[%s656 + $0xf2] sm:$0xff]
    %v701 = vld [vmem:[%s656 + $0x102] sm:$0xff]
    %v702 = vld [vmem:[%s656 + $0x112] sm:$0xff]
    %v703 = vld [vmem:[%s656 + $0x122] sm:$0xff]
    %v704 = vld [vmem:[%s656 + $0x132] sm:$0xff]
    %v705 = vld [vmem:[%s656 + $0x3] sm:$0xff]
    %v706 = vld [vmem:[%s656 + $0x13] sm:$0xff]
    %v707 = vld [vmem:[%s656 + $0x23] sm:$0xff]
    %v708 = vld [vmem:[%s656 + $0x33] sm:$0xff]
    %v709 = vld [vmem:[%s656 + $0x43] sm:$0xff]
    %v710 = vld [vmem:[%s656 + $0x53] sm:$0xff]
    %v711 = vld [vmem:[%s656 + $0x63] sm:$0xff]
    %v712 = vld [vmem:[%s656 + $0x73] sm:$0xff]
    %v713 = vld [vmem:[%s656 + $0xc3] sm:$0xff]
    %v714 = vld [vmem:[%s656 + $0xd3] sm:$0xff]
    %v715 = vld [vmem:[%s656 + $0xe3] sm:$0xff]
    %v716 = vld [vmem:[%s656 + $0xf3] sm:$0xff]
    %v717 = vld [vmem:[%s656 + $0x103] sm:$0xff]
    %v718 = vld [vmem:[%s656 + $0x113] sm:$0xff]
    %v719 = vld [vmem:[%s656 + $0x123] sm:$0xff]
    %v720 = vld [vmem:[%s656 + $0x133] sm:$0xff]
    %v721 = vld [vmem:[%s656 + $0x4] sm:$0xff]
    %v722 = vld [vmem:[%s656 + $0x14] sm:$0xff]
    %v723 = vld [vmem:[%s656 + $0x24] sm:$0xff]
    %v724 = vld [vmem:[%s656 + $0x34] sm:$0xff]
    %v725 = vld [vmem:[%s656 + $0x44] sm:$0xff]
    %v726 = vld [vmem:[%s656 + $0x54] sm:$0xff]
    %v727 = vld [vmem:[%s656 + $0x64] sm:$0xff]
    %v728 = vld [vmem:[%s656 + $0x74] sm:$0xff]
    %v729 = vld [vmem:[%s656 + $0xc4] sm:$0xff]
    %v730 = vld [vmem:[%s656 + $0xd4] sm:$0xff]
    %v731 = vld [vmem:[%s656 + $0xe4] sm:$0xff]
    %v732 = vld [vmem:[%s656 + $0xf4] sm:$0xff]
    %v733 = vld [vmem:[%s656 + $0x104] sm:$0xff]
    %v734 = vld [vmem:[%s656 + $0x114] sm:$0xff]
    %v735 = vld [vmem:[%s656 + $0x124] sm:$0xff]
    %v736 = vld [vmem:[%s656 + $0x134] sm:$0xff]
    %753 = vrot.lane.b32.xlu0 %v350, 48
    %v754 = vpop.permute.xlu0 %753
    %755 = vrot.lane.b32.xlu0 %v351, 48
    %v756 = vpop.permute.xlu0 %755
    %757 = vrot.lane.b32.xlu0 %v352, 48
    %v758 = vpop.permute.xlu0 %757
    %759 = vrot.lane.b32.xlu0 %v353, 48
    %v760 = vpop.permute.xlu0 %759
    %761 = vrot.lane.b32.xlu0 %v354, 48
    %v762 = vpop.permute.xlu0 %761
    %763 = vrot.lane.b32.xlu0 %v355, 48
    %v764 = vpop.permute.xlu0 %763
    %765 = vrot.lane.b32.xlu0 %v356, 48
    %v766 = vpop.permute.xlu0 %765
    %767 = vrot.lane.b32.xlu0 %v357, 48
    %v768 = vpop.permute.xlu0 %767
    %769 = vrot.lane.b32.xlu0 %v358, 48
    %v770 = vpop.permute.xlu0 %769
    %771 = vrot.lane.b32.xlu0 %v359, 48
    %v772 = vpop.permute.xlu0 %771
    %773 = vrot.lane.b32.xlu0 %v360, 48
    %v774 = vpop.permute.xlu0 %773
    %775 = vrot.lane.b32.xlu0 %v361, 48
    %v776 = vpop.permute.xlu0 %775
    %777 = vrot.lane.b32.xlu0 %v362, 48
    %v778 = vpop.permute.xlu0 %777
    %779 = vrot.lane.b32.xlu0 %v363, 48
    %v780 = vpop.permute.xlu0 %779
    %781 = vrot.lane.b32.xlu0 %v364, 48
    %v782 = vpop.permute.xlu0 %781
    %783 = vrot.lane.b32.xlu0 %v365, 48
    %v784 = vpop.permute.xlu0 %783
    %817 = vrot.lane.b32.xlu0 %v366, 96
    %v818 = vpop.permute.xlu0 %817
    %819 = vrot.lane.b32.xlu0 %v367, 96
    %v820 = vpop.permute.xlu0 %819
    %821 = vrot.lane.b32.xlu0 %v368, 96
    %v822 = vpop.permute.xlu0 %821
    %823 = vrot.lane.b32.xlu0 %v369, 96
    %v824 = vpop.permute.xlu0 %823
    %825 = vrot.lane.b32.xlu0 %v370, 96
    %v826 = vpop.permute.xlu0 %825
    %827 = vrot.lane.b32.xlu0 %v371, 96
    %v828 = vpop.permute.xlu0 %827
    %829 = vrot.lane.b32.xlu0 %v372, 96
    %v830 = vpop.permute.xlu0 %829
    %831 = vrot.lane.b32.xlu0 %v373, 96
    %v832 = vpop.permute.xlu0 %831
    %833 = vrot.lane.b32.xlu0 %v374, 96
    %v834 = vpop.permute.xlu0 %833
    %835 = vrot.lane.b32.xlu0 %v375, 96
    %v836 = vpop.permute.xlu0 %835
    %837 = vrot.lane.b32.xlu0 %v376, 96
    %v838 = vpop.permute.xlu0 %837
    %839 = vrot.lane.b32.xlu0 %v377, 96
    %v840 = vpop.permute.xlu0 %839
    %841 = vrot.lane.b32.xlu0 %v378, 96
    %v842 = vpop.permute.xlu0 %841
    %843 = vrot.lane.b32.xlu0 %v379, 96
    %v844 = vpop.permute.xlu0 %843
    %845 = vrot.lane.b32.xlu0 %v380, 96
    %v846 = vpop.permute.xlu0 %845
    %847 = vrot.lane.b32.xlu0 %v381, 96
    %v848 = vpop.permute.xlu0 %847
    %881 = vrot.lane.b32.xlu0 %v382, 16
    %v882 = vpop.permute.xlu0 %881
    %883 = vrot.lane.b32.xlu0 %v383, 16
    %v884 = vpop.permute.xlu0 %883
    %885 = vrot.lane.b32.xlu0 %v384, 16
    %v886 = vpop.permute.xlu0 %885
    %887 = vrot.lane.b32.xlu0 %v385, 16
    %v888 = vpop.permute.xlu0 %887
    %889 = vrot.lane.b32.xlu0 %v386, 16
    %v890 = vpop.permute.xlu0 %889
    %891 = vrot.lane.b32.xlu0 %v387, 16
    %v892 = vpop.permute.xlu0 %891
    %893 = vrot.lane.b32.xlu0 %v388, 16
    %v894 = vpop.permute.xlu0 %893
    %895 = vrot.lane.b32.xlu0 %v389, 16
    %v896 = vpop.permute.xlu0 %895
    %897 = vrot.lane.b32.xlu0 %v390, 16
    %v898 = vpop.permute.xlu0 %897
    %899 = vrot.lane.b32.xlu0 %v391, 16
    %v900 = vpop.permute.xlu0 %899
    %901 = vrot.lane.b32.xlu0 %v392, 16
    %v902 = vpop.permute.xlu0 %901
    %903 = vrot.lane.b32.xlu0 %v393, 16
    %v904 = vpop.permute.xlu0 %903
    %905 = vrot.lane.b32.xlu0 %v394, 16
    %v906 = vpop.permute.xlu0 %905
    %907 = vrot.lane.b32.xlu0 %v395, 16
    %v908 = vpop.permute.xlu0 %907
    %909 = vrot.lane.b32.xlu0 %v396, 16
    %v910 = vpop.permute.xlu0 %909
    %911 = vrot.lane.b32.xlu0 %v397, 16
    %v912 = vpop.permute.xlu0 %911
    %945 = vrot.lane.b32.xlu0 %v398, 64
    %v946 = vpop.permute.xlu0 %945
    %947 = vrot.lane.b32.xlu0 %v399, 64
    %v948 = vpop.permute.xlu0 %947
    %949 = vrot.lane.b32.xlu0 %v400, 64
    %v950 = vpop.permute.xlu0 %949
    %951 = vrot.lane.b32.xlu0 %v401, 64
    %v952 = vpop.permute.xlu0 %951
    %953 = vrot.lane.b32.xlu0 %v402, 64
    %v954 = vpop.permute.xlu0 %953
    %955 = vrot.lane.b32.xlu0 %v403, 64
    %v956 = vpop.permute.xlu0 %955
    %957 = vrot.lane.b32.xlu0 %v404, 64
    %v958 = vpop.permute.xlu0 %957
    %959 = vrot.lane.b32.xlu0 %v405, 64
    %v960 = vpop.permute.xlu0 %959
    %961 = vrot.lane.b32.xlu0 %v406, 64
    %v962 = vpop.permute.xlu0 %961
    %963 = vrot.lane.b32.xlu0 %v407, 64
    %v964 = vpop.permute.xlu0 %963
    %965 = vrot.lane.b32.xlu0 %v408, 64
    %v966 = vpop.permute.xlu0 %965
    %967 = vrot.lane.b32.xlu0 %v409, 64
    %v968 = vpop.permute.xlu0 %967
    %969 = vrot.lane.b32.xlu0 %v410, 64
    %v970 = vpop.permute.xlu0 %969
    %971 = vrot.lane.b32.xlu0 %v411, 64
    %v972 = vpop.permute.xlu0 %971
    %973 = vrot.lane.b32.xlu0 %v412, 64
    %v974 = vpop.permute.xlu0 %973
    %975 = vrot.lane.b32.xlu0 %v413, 64
    %v976 = vpop.permute.xlu0 %975
    %1009 = vrot.lane.b32.xlu0 %v415, 112
    %v1010 = vpop.permute.xlu0 %1009
    %1011 = vrot.lane.b32.xlu0 %v416, 112
    %v1012 = vpop.permute.xlu0 %1011
    %1013 = vrot.lane.b32.xlu0 %v417, 112
    %v1014 = vpop.permute.xlu0 %1013
    %1015 = vrot.lane.b32.xlu0 %v418, 112
    %v1016 = vpop.permute.xlu0 %1015
    %1017 = vrot.lane.b32.xlu0 %v419, 112
    %v1018 = vpop.permute.xlu0 %1017
    %1019 = vrot.lane.b32.xlu0 %v420, 112
    %v1020 = vpop.permute.xlu0 %1019
    %1021 = vrot.lane.b32.xlu0 %v421, 112
    %v1022 = vpop.permute.xlu0 %1021
    %1023 = vrot.lane.b32.xlu0 %v422, 112
    %v1024 = vpop.permute.xlu0 %1023
    %1025 = vrot.lane.b32.xlu0 %v423, 112
    %v1026 = vpop.permute.xlu0 %1025
    %1027 = vrot.lane.b32.xlu0 %v424, 112
    %v1028 = vpop.permute.xlu0 %1027
    %1029 = vrot.lane.b32.xlu0 %v425, 112
    %v1030 = vpop.permute.xlu0 %1029
    %1031 = vrot.lane.b32.xlu0 %v426, 112
    %v1032 = vpop.permute.xlu0 %1031
    %1033 = vrot.lane.b32.xlu0 %v427, 112
    %v1034 = vpop.permute.xlu0 %1033
    %1035 = vrot.lane.b32.xlu0 %v428, 112
    %v1036 = vpop.permute.xlu0 %1035
    %1037 = vrot.lane.b32.xlu0 %v429, 112
    %v1038 = vpop.permute.xlu0 %1037
    %1039 = vrot.lane.b32.xlu0 %v430, 112
    %v1040 = vpop.permute.xlu0 %1039
    %1073 = vrot.lane.b32.xlu0 %v431, 32
    %v1074 = vpop.permute.xlu0 %1073
    %1075 = vrot.lane.b32.xlu0 %v432, 32
    %v1076 = vpop.permute.xlu0 %1075
    %1077 = vrot.lane.b32.xlu0 %v433, 32
    %v1078 = vpop.permute.xlu0 %1077
    %1079 = vrot.lane.b32.xlu0 %v434, 32
    %v1080 = vpop.permute.xlu0 %1079
    %1081 = vrot.lane.b32.xlu0 %v435, 32
    %v1082 = vpop.permute.xlu0 %1081
    %1083 = vrot.lane.b32.xlu0 %v436, 32
    %v1084 = vpop.permute.xlu0 %1083
    %1085 = vrot.lane.b32.xlu0 %v437, 32
    %v1086 = vpop.permute.xlu0 %1085
    %1087 = vrot.lane.b32.xlu0 %v438, 32
    %v1088 = vpop.permute.xlu0 %1087
    %1089 = vrot.lane.b32.xlu0 %v439, 32
    %v1090 = vpop.permute.xlu0 %1089
    %1091 = vrot.lane.b32.xlu0 %v440, 32
    %v1092 = vpop.permute.xlu0 %1091
    %1093 = vrot.lane.b32.xlu0 %v441, 32
    %v1094 = vpop.permute.xlu0 %1093
    %1095 = vrot.lane.b32.xlu0 %v442, 32
    %v1096 = vpop.permute.xlu0 %1095
    %1097 = vrot.lane.b32.xlu0 %v443, 32
    %v1098 = vpop.permute.xlu0 %1097
    %1099 = vrot.lane.b32.xlu0 %v444, 32
    %v1100 = vpop.permute.xlu0 %1099
    %1101 = vrot.lane.b32.xlu0 %v445, 32
    %v1102 = vpop.permute.xlu0 %1101
    %1103 = vrot.lane.b32.xlu0 %v446, 32
    %v1104 = vpop.permute.xlu0 %1103
    %1137 = vrot.lane.b32.xlu0 %v447, 80
    %v1138 = vpop.permute.xlu0 %1137
    %1139 = vrot.lane.b32.xlu0 %v448, 80
    %v1140 = vpop.permute.xlu0 %1139
    %1141 = vrot.lane.b32.xlu0 %v449, 80
    %v1142 = vpop.permute.xlu0 %1141
    %1143 = vrot.lane.b32.xlu0 %v450, 80
    %v1144 = vpop.permute.xlu0 %1143
    %1145 = vrot.lane.b32.xlu0 %v451, 80
    %v1146 = vpop.permute.xlu0 %1145
    %1147 = vrot.lane.b32.xlu0 %v452, 80
    %v1148 = vpop.permute.xlu0 %1147
    %1149 = vrot.lane.b32.xlu0 %v453, 80
    %v1150 = vpop.permute.xlu0 %1149
    %1151 = vrot.lane.b32.xlu0 %v454, 80
    %v1152 = vpop.permute.xlu0 %1151
    %1153 = vrot.lane.b32.xlu0 %v455, 80
    %v1154 = vpop.permute.xlu0 %1153
    %1155 = vrot.lane.b32.xlu0 %v456, 80
    %v1156 = vpop.permute.xlu0 %1155
    %1157 = vrot.lane.b32.xlu0 %v457, 80
    %v1158 = vpop.permute.xlu0 %1157
    %1159 = vrot.lane.b32.xlu0 %v458, 80
    %v1160 = vpop.permute.xlu0 %1159
    %1161 = vrot.lane.b32.xlu0 %v459, 80
    %v1162 = vpop.permute.xlu0 %1161
    %1163 = vrot.lane.b32.xlu0 %v460, 80
    %v1164 = vpop.permute.xlu0 %1163
    %1165 = vrot.lane.b32.xlu0 %v461, 80
    %v1166 = vpop.permute.xlu0 %1165
    %1167 = vrot.lane.b32.xlu0 %v462, 80
    %v1168 = vpop.permute.xlu0 %1167
    %1201 = vrot.lane.b32.xlu0 %v479, 48
    %v1202 = vpop.permute.xlu0 %1201
    %1203 = vrot.lane.b32.xlu0 %v480, 48
    %v1204 = vpop.permute.xlu0 %1203
    %1205 = vrot.lane.b32.xlu0 %v481, 48
    %v1206 = vpop.permute.xlu0 %1205
    %1207 = vrot.lane.b32.xlu0 %v482, 48
    %v1208 = vpop.permute.xlu0 %1207
    %1209 = vrot.lane.b32.xlu0 %v483, 48
    %v1210 = vpop.permute.xlu0 %1209
    %1211 = vrot.lane.b32.xlu0 %v484, 48
    %v1212 = vpop.permute.xlu0 %1211
    %1213 = vrot.lane.b32.xlu0 %v485, 48
    %v1214 = vpop.permute.xlu0 %1213
    %1215 = vrot.lane.b32.xlu0 %v486, 48
    %v1216 = vpop.permute.xlu0 %1215
    %1217 = vrot.lane.b32.xlu0 %v487, 48
    %v1218 = vpop.permute.xlu0 %1217
    %1219 = vrot.lane.b32.xlu0 %v488, 48
    %v1220 = vpop.permute.xlu0 %1219
    %1221 = vrot.lane.b32.xlu0 %v489, 48
    %v1222 = vpop.permute.xlu0 %1221
    %1223 = vrot.lane.b32.xlu0 %v490, 48
    %v1224 = vpop.permute.xlu0 %1223
    %1225 = vrot.lane.b32.xlu0 %v491, 48
    %v1226 = vpop.permute.xlu0 %1225
    %1227 = vrot.lane.b32.xlu0 %v492, 48
    %v1228 = vpop.permute.xlu0 %1227
    %1229 = vrot.lane.b32.xlu0 %v493, 48
    %v1230 = vpop.permute.xlu0 %1229
    %1231 = vrot.lane.b32.xlu0 %v494, 48
    %v1232 = vpop.permute.xlu0 %1231
    %1265 = vrot.lane.b32.xlu0 %v495, 96
    %v1266 = vpop.permute.xlu0 %1265
    %1267 = vrot.lane.b32.xlu0 %v496, 96
    %v1268 = vpop.permute.xlu0 %1267
    %1269 = vrot.lane.b32.xlu0 %v497, 96
    %v1270 = vpop.permute.xlu0 %1269
    %1271 = vrot.lane.b32.xlu0 %v498, 96
    %v1272 = vpop.permute.xlu0 %1271
    %1273 = vrot.lane.b32.xlu0 %v499, 96
    %v1274 = vpop.permute.xlu0 %1273
    %1275 = vrot.lane.b32.xlu0 %v500, 96
    %v1276 = vpop.permute.xlu0 %1275
    %1277 = vrot.lane.b32.xlu0 %v501, 96
    %v1278 = vpop.permute.xlu0 %1277
    %1279 = vrot.lane.b32.xlu0 %v502, 96
    %v1280 = vpop.permute.xlu0 %1279
    %1281 = vrot.lane.b32.xlu0 %v503, 96
    %v1282 = vpop.permute.xlu0 %1281
    %1283 = vrot.lane.b32.xlu0 %v504, 96
    %v1284 = vpop.permute.xlu0 %1283
    %1285 = vrot.lane.b32.xlu0 %v505, 96
    %v1286 = vpop.permute.xlu0 %1285
    %1287 = vrot.lane.b32.xlu0 %v506, 96
    %v1288 = vpop.permute.xlu0 %1287
    %1289 = vrot.lane.b32.xlu0 %v507, 96
    %v1290 = vpop.permute.xlu0 %1289
    %1291 = vrot.lane.b32.xlu0 %v508, 96
    %v1292 = vpop.permute.xlu0 %1291
    %1293 = vrot.lane.b32.xlu0 %v509, 96
    %v1294 = vpop.permute.xlu0 %1293
    %1295 = vrot.lane.b32.xlu0 %v510, 96
    %v1296 = vpop.permute.xlu0 %1295
    %1329 = vrot.lane.b32.xlu0 %v511, 16
    %v1330 = vpop.permute.xlu0 %1329
    %1331 = vrot.lane.b32.xlu0 %v512, 16
    %v1332 = vpop.permute.xlu0 %1331
    %1333 = vrot.lane.b32.xlu0 %v513, 16
    %v1334 = vpop.permute.xlu0 %1333
    %1335 = vrot.lane.b32.xlu0 %v514, 16
    %v1336 = vpop.permute.xlu0 %1335
    %1337 = vrot.lane.b32.xlu0 %v515, 16
    %v1338 = vpop.permute.xlu0 %1337
    %1339 = vrot.lane.b32.xlu0 %v516, 16
    %v1340 = vpop.permute.xlu0 %1339
    %1341 = vrot.lane.b32.xlu0 %v517, 16
    %v1342 = vpop.permute.xlu0 %1341
    %1343 = vrot.lane.b32.xlu0 %v518, 16
    %v1344 = vpop.permute.xlu0 %1343
    %1345 = vrot.lane.b32.xlu0 %v519, 16
    %v1346 = vpop.permute.xlu0 %1345
    %1347 = vrot.lane.b32.xlu0 %v520, 16
    %v1348 = vpop.permute.xlu0 %1347
    %1349 = vrot.lane.b32.xlu0 %v521, 16
    %v1350 = vpop.permute.xlu0 %1349
    %1351 = vrot.lane.b32.xlu0 %v522, 16
    %v1352 = vpop.permute.xlu0 %1351
    %1353 = vrot.lane.b32.xlu0 %v523, 16
    %v1354 = vpop.permute.xlu0 %1353
    %1355 = vrot.lane.b32.xlu0 %v524, 16
    %v1356 = vpop.permute.xlu0 %1355
    %1357 = vrot.lane.b32.xlu0 %v525, 16
    %v1358 = vpop.permute.xlu0 %1357
    %1359 = vrot.lane.b32.xlu0 %v526, 16
    %v1360 = vpop.permute.xlu0 %1359
    %1393 = vrot.lane.b32.xlu0 %v527, 64
    %v1394 = vpop.permute.xlu0 %1393
    %1395 = vrot.lane.b32.xlu0 %v528, 64
    %v1396 = vpop.permute.xlu0 %1395
    %1397 = vrot.lane.b32.xlu0 %v529, 64
    %v1398 = vpop.permute.xlu0 %1397
    %1399 = vrot.lane.b32.xlu0 %v530, 64
    %v1400 = vpop.permute.xlu0 %1399
    %1401 = vrot.lane.b32.xlu0 %v531, 64
    %v1402 = vpop.permute.xlu0 %1401
    %1403 = vrot.lane.b32.xlu0 %v532, 64
    %v1404 = vpop.permute.xlu0 %1403
    %1405 = vrot.lane.b32.xlu0 %v533, 64
    %v1406 = vpop.permute.xlu0 %1405
    %1407 = vrot.lane.b32.xlu0 %v534, 64
    %v1408 = vpop.permute.xlu0 %1407
    %1409 = vrot.lane.b32.xlu0 %v535, 64
    %v1410 = vpop.permute.xlu0 %1409
    %1411 = vrot.lane.b32.xlu0 %v536, 64
    %v1412 = vpop.permute.xlu0 %1411
    %1413 = vrot.lane.b32.xlu0 %v537, 64
    %v1414 = vpop.permute.xlu0 %1413
    %1415 = vrot.lane.b32.xlu0 %v538, 64
    %v1416 = vpop.permute.xlu0 %1415
    %1417 = vrot.lane.b32.xlu0 %v539, 64
    %v1418 = vpop.permute.xlu0 %1417
    %1419 = vrot.lane.b32.xlu0 %v540, 64
    %v1420 = vpop.permute.xlu0 %1419
    %1421 = vrot.lane.b32.xlu0 %v541, 64
    %v1422 = vpop.permute.xlu0 %1421
    %1423 = vrot.lane.b32.xlu0 %v542, 64
    %v1424 = vpop.permute.xlu0 %1423
    %1457 = vrot.lane.b32.xlu0 %v543, 112
    %v1458 = vpop.permute.xlu0 %1457
    %1459 = vrot.lane.b32.xlu0 %v544, 112
    %v1460 = vpop.permute.xlu0 %1459
    %1461 = vrot.lane.b32.xlu0 %v545, 112
    %v1462 = vpop.permute.xlu0 %1461
    %1463 = vrot.lane.b32.xlu0 %v546, 112
    %v1464 = vpop.permute.xlu0 %1463
    %1465 = vrot.lane.b32.xlu0 %v547, 112
    %v1466 = vpop.permute.xlu0 %1465
    %1467 = vrot.lane.b32.xlu0 %v548, 112
    %v1468 = vpop.permute.xlu0 %1467
    %1469 = vrot.lane.b32.xlu0 %v549, 112
    %v1470 = vpop.permute.xlu0 %1469
    %1471 = vrot.lane.b32.xlu0 %v550, 112
    %v1472 = vpop.permute.xlu0 %1471
    %1473 = vrot.lane.b32.xlu0 %v551, 112
    %v1474 = vpop.permute.xlu0 %1473
    %1475 = vrot.lane.b32.xlu0 %v552, 112
    %v1476 = vpop.permute.xlu0 %1475
    %1477 = vrot.lane.b32.xlu0 %v553, 112
    %v1478 = vpop.permute.xlu0 %1477
    %1479 = vrot.lane.b32.xlu0 %v554, 112
    %v1480 = vpop.permute.xlu0 %1479
    %1481 = vrot.lane.b32.xlu0 %v555, 112
    %v1482 = vpop.permute.xlu0 %1481
    %1483 = vrot.lane.b32.xlu0 %v556, 112
    %v1484 = vpop.permute.xlu0 %1483
    %1485 = vrot.lane.b32.xlu0 %v557, 112
    %v1486 = vpop.permute.xlu0 %1485
    %1487 = vrot.lane.b32.xlu0 %v558, 112
    %v1488 = vpop.permute.xlu0 %1487
    %1521 = vrot.lane.b32.xlu0 %v559, 32
    %v1522 = vpop.permute.xlu0 %1521
    %1523 = vrot.lane.b32.xlu0 %v560, 32
    %v1524 = vpop.permute.xlu0 %1523
    %1525 = vrot.lane.b32.xlu0 %v561, 32
    %v1526 = vpop.permute.xlu0 %1525
    %1527 = vrot.lane.b32.xlu0 %v562, 32
    %v1528 = vpop.permute.xlu0 %1527
    %1529 = vrot.lane.b32.xlu0 %v563, 32
    %v1530 = vpop.permute.xlu0 %1529
    %1531 = vrot.lane.b32.xlu0 %v564, 32
    %v1532 = vpop.permute.xlu0 %1531
    %1533 = vrot.lane.b32.xlu0 %v565, 32
    %v1534 = vpop.permute.xlu0 %1533
    %1535 = vrot.lane.b32.xlu0 %v566, 32
    %v1536 = vpop.permute.xlu0 %1535
    %1537 = vrot.lane.b32.xlu0 %v567, 32
    %v1538 = vpop.permute.xlu0 %1537
    %1539 = vrot.lane.b32.xlu0 %v568, 32
    %v1540 = vpop.permute.xlu0 %1539
    %1541 = vrot.lane.b32.xlu0 %v569, 32
    %v1542 = vpop.permute.xlu0 %1541
    %1543 = vrot.lane.b32.xlu0 %v570, 32
    %v1544 = vpop.permute.xlu0 %1543
    %1545 = vrot.lane.b32.xlu0 %v571, 32
    %v1546 = vpop.permute.xlu0 %1545
    %1547 = vrot.lane.b32.xlu0 %v572, 32
    %v1548 = vpop.permute.xlu0 %1547
    %1549 = vrot.lane.b32.xlu0 %v573, 32
    %v1550 = vpop.permute.xlu0 %1549
    %1551 = vrot.lane.b32.xlu0 %v574, 32
    %v1552 = vpop.permute.xlu0 %1551
    %1585 = vrot.lane.b32.xlu0 %v576, 80
    %v1586 = vpop.permute.xlu0 %1585
    %1587 = vrot.lane.b32.xlu0 %v577, 80
    %v1588 = vpop.permute.xlu0 %1587
    %1589 = vrot.lane.b32.xlu0 %v578, 80
    %v1590 = vpop.permute.xlu0 %1589
    %1591 = vrot.lane.b32.xlu0 %v579, 80
    %v1592 = vpop.permute.xlu0 %1591
    %1593 = vrot.lane.b32.xlu0 %v580, 80
    %v1594 = vpop.permute.xlu0 %1593
    %1595 = vrot.lane.b32.xlu0 %v581, 80
    %v1596 = vpop.permute.xlu0 %1595
    %1597 = vrot.lane.b32.xlu0 %v582, 80
    %v1598 = vpop.permute.xlu0 %1597
    %1599 = vrot.lane.b32.xlu0 %v583, 80
    %v1600 = vpop.permute.xlu0 %1599
    %1601 = vrot.lane.b32.xlu0 %v584, 80
    %v1602 = vpop.permute.xlu0 %1601
    %1603 = vrot.lane.b32.xlu0 %v585, 80
    %v1604 = vpop.permute.xlu0 %1603
    %1605 = vrot.lane.b32.xlu0 %v586, 80
    %v1606 = vpop.permute.xlu0 %1605
    %1607 = vrot.lane.b32.xlu0 %v587, 80
    %v1608 = vpop.permute.xlu0 %1607
    %1609 = vrot.lane.b32.xlu0 %v588, 80
    %v1610 = vpop.permute.xlu0 %1609
    %1611 = vrot.lane.b32.xlu0 %v589, 80
    %v1612 = vpop.permute.xlu0 %1611
    %1613 = vrot.lane.b32.xlu0 %v590, 80
    %v1614 = vpop.permute.xlu0 %1613
    %1615 = vrot.lane.b32.xlu0 %v591, 80
    %v1616 = vpop.permute.xlu0 %1615
    %v1633 = vsel %vm267, %v334, %v754
    %v1634 = vsel %vm267, %v335, %v756
    %v1635 = vsel %vm267, %v336, %v758
    %v1636 = vsel %vm267, %v337, %v760
    %v1637 = vsel %vm267, %v338, %v762
    %v1638 = vsel %vm267, %v339, %v764
    %v1639 = vsel %vm267, %v340, %v766
    %v1640 = vsel %vm267, %v341, %v768
    %v1641 = vsel %vm267, %v342, %v770
    %v1642 = vsel %vm267, %v343, %v772
    %v1643 = vsel %vm267, %v344, %v774
    %v1644 = vsel %vm267, %v345, %v776
    %v1645 = vsel %vm267, %v346, %v778
    %v1646 = vsel %vm267, %v347, %v780
    %v1647 = vsel %vm267, %v348, %v782
    %v1648 = vsel %vm267, %v349, %v784
    %vm1649 = vcmask 785408
    %v1650 = vsel %vm1649, %v1633, %v818
    %v1651 = vsel %vm1649, %v1634, %v820
    %v1652 = vsel %vm1649, %v1635, %v822
    %v1653 = vsel %vm1649, %v1636, %v824
    %v1654 = vsel %vm1649, %v1637, %v826
    %v1655 = vsel %vm1649, %v1638, %v828
    %v1656 = vsel %vm1649, %v1639, %v830
    %v1657 = vsel %vm1649, %v1640, %v832
    %v1658 = vsel %vm1649, %v1641, %v834
    %v1659 = vsel %vm1649, %v1642, %v836
    %v1660 = vsel %vm1649, %v1643, %v838
    %v1661 = vsel %vm1649, %v1644, %v840
    %v1662 = vsel %vm1649, %v1645, %v842
    %v1663 = vsel %vm1649, %v1646, %v844
    %v1664 = vsel %vm1649, %v1647, %v846
    %v1665 = vsel %vm1649, %v1648, %v848
    %vm1666 = vcmask 130048
    %v1667 = vsel %vm1666, %v818, %v882
    %v1668 = vsel %vm1666, %v820, %v884
    %v1669 = vsel %vm1666, %v822, %v886
    %v1670 = vsel %vm1666, %v824, %v888
    %v1671 = vsel %vm1666, %v826, %v890
    %v1672 = vsel %vm1666, %v828, %v892
    %v1673 = vsel %vm1666, %v830, %v894
    %v1674 = vsel %vm1666, %v832, %v896
    %v1675 = vsel %vm1666, %v834, %v898
    %v1676 = vsel %vm1666, %v836, %v900
    %v1677 = vsel %vm1666, %v838, %v902
    %v1678 = vsel %vm1666, %v840, %v904
    %v1679 = vsel %vm1666, %v842, %v906
    %v1680 = vsel %vm1666, %v844, %v908
    %v1681 = vsel %vm1666, %v846, %v910
    %v1682 = vsel %vm1666, %v848, %v912
    %vm1683 = vcmask 523264
    %v1684 = vsel %vm1683, %v1667, %v946
    %v1685 = vsel %vm1683, %v1668, %v948
    %v1686 = vsel %vm1683, %v1669, %v950
    %v1687 = vsel %vm1683, %v1670, %v952
    %v1688 = vsel %vm1683, %v1671, %v954
    %v1689 = vsel %vm1683, %v1672, %v956
    %v1690 = vsel %vm1683, %v1673, %v958
    %v1691 = vsel %vm1683, %v1674, %v960
    %v1692 = vsel %vm1683, %v1675, %v962
    %v1693 = vsel %vm1683, %v1676, %v964
    %v1694 = vsel %vm1683, %v1677, %v966
    %v1695 = vsel %vm1683, %v1678, %v968
    %v1696 = vsel %vm1683, %v1679, %v970
    %v1697 = vsel %vm1683, %v1680, %v972
    %v1698 = vsel %vm1683, %v1681, %v974
    %v1699 = vsel %vm1683, %v1682, %v976
    %vm1700 = vcmask 916480
    %v1701 = vsel %vm1700, %v1684, %v1010
    %v1702 = vsel %vm1700, %v1685, %v1012
    %v1703 = vsel %vm1700, %v1686, %v1014
    %v1704 = vsel %vm1700, %v1687, %v1016
    %v1705 = vsel %vm1700, %v1688, %v1018
    %v1706 = vsel %vm1700, %v1689, %v1020
    %v1707 = vsel %vm1700, %v1690, %v1022
    %v1708 = vsel %vm1700, %v1691, %v1024
    %v1709 = vsel %vm1700, %v1692, %v1026
    %v1710 = vsel %vm1700, %v1693, %v1028
    %v1711 = vsel %vm1700, %v1694, %v1030
    %v1712 = vsel %vm1700, %v1695, %v1032
    %v1713 = vsel %vm1700, %v1696, %v1034
    %v1714 = vsel %vm1700, %v1697, %v1036
    %v1715 = vsel %vm1700, %v1698, %v1038
    %v1716 = vsel %vm1700, %v1699, %v1040
    %vm1717 = vcmask 261120
    %v1718 = vsel %vm1717, %v1010, %v1074
    %v1719 = vsel %vm1717, %v1012, %v1076
    %v1720 = vsel %vm1717, %v1014, %v1078
    %v1721 = vsel %vm1717, %v1016, %v1080
    %v1722 = vsel %vm1717, %v1018, %v1082
    %v1723 = vsel %vm1717, %v1020, %v1084
    %v1724 = vsel %vm1717, %v1022, %v1086
    %v1725 = vsel %vm1717, %v1024, %v1088
    %v1726 = vsel %vm1717, %v1026, %v1090
    %v1727 = vsel %vm1717, %v1028, %v1092
    %v1728 = vsel %vm1717, %v1030, %v1094
    %v1729 = vsel %vm1717, %v1032, %v1096
    %v1730 = vsel %vm1717, %v1034, %v1098
    %v1731 = vsel %vm1717, %v1036, %v1100
    %v1732 = vsel %vm1717, %v1038, %v1102
    %v1733 = vsel %vm1717, %v1040, %v1104
    %vm1734 = vcmask 654336
    %v1735 = vsel %vm1734, %v1718, %v1138
    %v1736 = vsel %vm1734, %v1719, %v1140
    %v1737 = vsel %vm1734, %v1720, %v1142
    %v1738 = vsel %vm1734, %v1721, %v1144
    %v1739 = vsel %vm1734, %v1722, %v1146
    %v1740 = vsel %vm1734, %v1723, %v1148
    %v1741 = vsel %vm1734, %v1724, %v1150
    %v1742 = vsel %vm1734, %v1725, %v1152
    %v1743 = vsel %vm1734, %v1726, %v1154
    %v1744 = vsel %vm1734, %v1727, %v1156
    %v1745 = vsel %vm1734, %v1728, %v1158
    %v1746 = vsel %vm1734, %v1729, %v1160
    %v1747 = vsel %vm1734, %v1730, %v1162
    %v1748 = vsel %vm1734, %v1731, %v1164
    %v1749 = vsel %vm1734, %v1732, %v1166
    %v1750 = vsel %vm1734, %v1733, %v1168
    %v1751 = vsel %vm267, %v463, %v1202
    %v1752 = vsel %vm267, %v464, %v1204
    %v1753 = vsel %vm267, %v465, %v1206
    %v1754 = vsel %vm267, %v466, %v1208
    %v1755 = vsel %vm267, %v467, %v1210
    %v1756 = vsel %vm267, %v468, %v1212
    %v1757 = vsel %vm267, %v469, %v1214
    %v1758 = vsel %vm267, %v470, %v1216
    %v1759 = vsel %vm267, %v471, %v1218
    %v1760 = vsel %vm267, %v472, %v1220
    %v1761 = vsel %vm267, %v473, %v1222
    %v1762 = vsel %vm267, %v474, %v1224
    %v1763 = vsel %vm267, %v475, %v1226
    %v1764 = vsel %vm267, %v476, %v1228
    %v1765 = vsel %vm267, %v477, %v1230
    %v1766 = vsel %vm267, %v478, %v1232
    %v1767 = vsel %vm1649, %v1751, %v1266
    %v1768 = vsel %vm1649, %v1752, %v1268
    %v1769 = vsel %vm1649, %v1753, %v1270
    %v1770 = vsel %vm1649, %v1754, %v1272
    %v1771 = vsel %vm1649, %v1755, %v1274
    %v1772 = vsel %vm1649, %v1756, %v1276
    %v1773 = vsel %vm1649, %v1757, %v1278
    %v1774 = vsel %vm1649, %v1758, %v1280
    %v1775 = vsel %vm1649, %v1759, %v1282
    %v1776 = vsel %vm1649, %v1760, %v1284
    %v1777 = vsel %vm1649, %v1761, %v1286
    %v1778 = vsel %vm1649, %v1762, %v1288
    %v1779 = vsel %vm1649, %v1763, %v1290
    %v1780 = vsel %vm1649, %v1764, %v1292
    %v1781 = vsel %vm1649, %v1765, %v1294
    %v1782 = vsel %vm1649, %v1766, %v1296
    %v1783 = vsel %vm1666, %v1266, %v1330
    %v1784 = vsel %vm1666, %v1268, %v1332
    %v1785 = vsel %vm1666, %v1270, %v1334
    %v1786 = vsel %vm1666, %v1272, %v1336
    %v1787 = vsel %vm1666, %v1274, %v1338
    %v1788 = vsel %vm1666, %v1276, %v1340
    %v1789 = vsel %vm1666, %v1278, %v1342
    %v1790 = vsel %vm1666, %v1280, %v1344
    %v1791 = vsel %vm1666, %v1282, %v1346
    %v1792 = vsel %vm1666, %v1284, %v1348
    %v1793 = vsel %vm1666, %v1286, %v1350
    %v1794 = vsel %vm1666, %v1288, %v1352
    %v1795 = vsel %vm1666, %v1290, %v1354
    %v1796 = vsel %vm1666, %v1292, %v1356
    %v1797 = vsel %vm1666, %v1294, %v1358
    %v1798 = vsel %vm1666, %v1296, %v1360
    %v1799 = vsel %vm1683, %v1783, %v1394
    %v1800 = vsel %vm1683, %v1784, %v1396
    %v1801 = vsel %vm1683, %v1785, %v1398
    %v1802 = vsel %vm1683, %v1786, %v1400
    %v1803 = vsel %vm1683, %v1787, %v1402
    %v1804 = vsel %vm1683, %v1788, %v1404
    %v1805 = vsel %vm1683, %v1789, %v1406
    %v1806 = vsel %vm1683, %v1790, %v1408
    %v1807 = vsel %vm1683, %v1791, %v1410
    %v1808 = vsel %vm1683, %v1792, %v1412
    %v1809 = vsel %vm1683, %v1793, %v1414
    %v1810 = vsel %vm1683, %v1794, %v1416
    %v1811 = vsel %vm1683, %v1795, %v1418
    %v1812 = vsel %vm1683, %v1796, %v1420
    %v1813 = vsel %vm1683, %v1797, %v1422
    %v1814 = vsel %vm1683, %v1798, %v1424
    %v1815 = vsel %vm1700, %v1799, %v1458
    %v1816 = vsel %vm1700, %v1800, %v1460
    %v1817 = vsel %vm1700, %v1801, %v1462
    %v1818 = vsel %vm1700, %v1802, %v1464
    %v1819 = vsel %vm1700, %v1803, %v1466
    %v1820 = vsel %vm1700, %v1804, %v1468
    %v1821 = vsel %vm1700, %v1805, %v1470
    %v1822 = vsel %vm1700, %v1806, %v1472
    %v1823 = vsel %vm1700, %v1807, %v1474
    %v1824 = vsel %vm1700, %v1808, %v1476
    %v1825 = vsel %vm1700, %v1809, %v1478
    %v1826 = vsel %vm1700, %v1810, %v1480
    %v1827 = vsel %vm1700, %v1811, %v1482
    %v1828 = vsel %vm1700, %v1812, %v1484
    %v1829 = vsel %vm1700, %v1813, %v1486
    %v1830 = vsel %vm1700, %v1814, %v1488
    %v1831 = vsel %vm1717, %v1458, %v1522
    %v1832 = vsel %vm1717, %v1460, %v1524
    %v1833 = vsel %vm1717, %v1462, %v1526
    %v1834 = vsel %vm1717, %v1464, %v1528
    %v1835 = vsel %vm1717, %v1466, %v1530
    %v1836 = vsel %vm1717, %v1468, %v1532
    %v1837 = vsel %vm1717, %v1470, %v1534
    %v1838 = vsel %vm1717, %v1472, %v1536
    %v1839 = vsel %vm1717, %v1474, %v1538
    %v1840 = vsel %vm1717, %v1476, %v1540
    %v1841 = vsel %vm1717, %v1478, %v1542
    %v1842 = vsel %vm1717, %v1480, %v1544
    %v1843 = vsel %vm1717, %v1482, %v1546
    %v1844 = vsel %vm1717, %v1484, %v1548
    %v1845 = vsel %vm1717, %v1486, %v1550
    %v1846 = vsel %vm1717, %v1488, %v1552
    %v1847 = vsel %vm1734, %v1831, %v1586
    %v1848 = vsel %vm1734, %v1832, %v1588
    %v1849 = vsel %vm1734, %v1833, %v1590
    %v1850 = vsel %vm1734, %v1834, %v1592
    %v1851 = vsel %vm1734, %v1835, %v1594
    %v1852 = vsel %vm1734, %v1836, %v1596
    %v1853 = vsel %vm1734, %v1837, %v1598
    %v1854 = vsel %vm1734, %v1838, %v1600
    %v1855 = vsel %vm1734, %v1839, %v1602
    %v1856 = vsel %vm1734, %v1840, %v1604
    %v1857 = vsel %vm1734, %v1841, %v1606
    %v1858 = vsel %vm1734, %v1842, %v1608
    %v1859 = vsel %vm1734, %v1843, %v1610
    %v1860 = vsel %vm1734, %v1844, %v1612
    %v1861 = vsel %vm1734, %v1845, %v1614
    %v1862 = vsel %vm1734, %v1846, %v1616
    %1879 = vrot.lane.b32.xlu0 %v608, 48
    %v1880 = vpop.permute.xlu0 %1879
    %1881 = vrot.lane.b32.xlu0 %v609, 48
    %v1882 = vpop.permute.xlu0 %1881
    %1883 = vrot.lane.b32.xlu0 %v610, 48
    %v1884 = vpop.permute.xlu0 %1883
    %1885 = vrot.lane.b32.xlu0 %v611, 48
    %v1886 = vpop.permute.xlu0 %1885
    %1887 = vrot.lane.b32.xlu0 %v612, 48
    %v1888 = vpop.permute.xlu0 %1887
    %1889 = vrot.lane.b32.xlu0 %v613, 48
    %v1890 = vpop.permute.xlu0 %1889
    %1891 = vrot.lane.b32.xlu0 %v614, 48
    %v1892 = vpop.permute.xlu0 %1891
    %1893 = vrot.lane.b32.xlu0 %v615, 48
    %v1894 = vpop.permute.xlu0 %1893
    %1895 = vrot.lane.b32.xlu0 %v616, 48
    %v1896 = vpop.permute.xlu0 %1895
    %1897 = vrot.lane.b32.xlu0 %v617, 48
    %v1898 = vpop.permute.xlu0 %1897
    %1899 = vrot.lane.b32.xlu0 %v618, 48
    %v1900 = vpop.permute.xlu0 %1899
    %1901 = vrot.lane.b32.xlu0 %v619, 48
    %v1902 = vpop.permute.xlu0 %1901
    %1903 = vrot.lane.b32.xlu0 %v620, 48
    %v1904 = vpop.permute.xlu0 %1903
    %1905 = vrot.lane.b32.xlu0 %v621, 48
    %v1906 = vpop.permute.xlu0 %1905
    %1907 = vrot.lane.b32.xlu0 %v622, 48
    %v1908 = vpop.permute.xlu0 %1907
    %1909 = vrot.lane.b32.xlu0 %v623, 48
    %v1910 = vpop.permute.xlu0 %1909
    %1943 = vrot.lane.b32.xlu0 %v624, 96
    %v1944 = vpop.permute.xlu0 %1943
    %1945 = vrot.lane.b32.xlu0 %v625, 96
    %v1946 = vpop.permute.xlu0 %1945
    %1947 = vrot.lane.b32.xlu0 %v626, 96
    %v1948 = vpop.permute.xlu0 %1947
    %1949 = vrot.lane.b32.xlu0 %v627, 96
    %v1950 = vpop.permute.xlu0 %1949
    %1951 = vrot.lane.b32.xlu0 %v628, 96
    %v1952 = vpop.permute.xlu0 %1951
    %1953 = vrot.lane.b32.xlu0 %v629, 96
    %v1954 = vpop.permute.xlu0 %1953
    %1955 = vrot.lane.b32.xlu0 %v630, 96
    %v1956 = vpop.permute.xlu0 %1955
    %1957 = vrot.lane.b32.xlu0 %v631, 96
    %v1958 = vpop.permute.xlu0 %1957
    %1959 = vrot.lane.b32.xlu0 %v632, 96
    %v1960 = vpop.permute.xlu0 %1959
    %1961 = vrot.lane.b32.xlu0 %v633, 96
    %v1962 = vpop.permute.xlu0 %1961
    %1963 = vrot.lane.b32.xlu0 %v634, 96
    %v1964 = vpop.permute.xlu0 %1963
    %1965 = vrot.lane.b32.xlu0 %v635, 96
    %v1966 = vpop.permute.xlu0 %1965
    %1967 = vrot.lane.b32.xlu0 %v636, 96
    %v1968 = vpop.permute.xlu0 %1967
    %1969 = vrot.lane.b32.xlu0 %v637, 96
    %v1970 = vpop.permute.xlu0 %1969
    %1971 = vrot.lane.b32.xlu0 %v638, 96
    %v1972 = vpop.permute.xlu0 %1971
    %1973 = vrot.lane.b32.xlu0 %v639, 96
    %v1974 = vpop.permute.xlu0 %1973
    %2007 = vrot.lane.b32.xlu0 %v640, 16
    %v2008 = vpop.permute.xlu0 %2007
    %2009 = vrot.lane.b32.xlu0 %v641, 16
    %v2010 = vpop.permute.xlu0 %2009
    %2011 = vrot.lane.b32.xlu0 %v642, 16
    %v2012 = vpop.permute.xlu0 %2011
    %2013 = vrot.lane.b32.xlu0 %v643, 16
    %v2014 = vpop.permute.xlu0 %2013
    %2015 = vrot.lane.b32.xlu0 %v644, 16
    %v2016 = vpop.permute.xlu0 %2015
    %2017 = vrot.lane.b32.xlu0 %v645, 16
    %v2018 = vpop.permute.xlu0 %2017
    %2019 = vrot.lane.b32.xlu0 %v646, 16
    %v2020 = vpop.permute.xlu0 %2019
    %2021 = vrot.lane.b32.xlu0 %v647, 16
    %v2022 = vpop.permute.xlu0 %2021
    %2023 = vrot.lane.b32.xlu0 %v648, 16
    %v2024 = vpop.permute.xlu0 %2023
    %2025 = vrot.lane.b32.xlu0 %v649, 16
    %v2026 = vpop.permute.xlu0 %2025
    %2027 = vrot.lane.b32.xlu0 %v650, 16
    %v2028 = vpop.permute.xlu0 %2027
    %2029 = vrot.lane.b32.xlu0 %v651, 16
    %v2030 = vpop.permute.xlu0 %2029
    %2031 = vrot.lane.b32.xlu0 %v652, 16
    %v2032 = vpop.permute.xlu0 %2031
    %2033 = vrot.lane.b32.xlu0 %v653, 16
    %v2034 = vpop.permute.xlu0 %2033
    %2035 = vrot.lane.b32.xlu0 %v654, 16
    %v2036 = vpop.permute.xlu0 %2035
    %2037 = vrot.lane.b32.xlu0 %v655, 16
    %v2038 = vpop.permute.xlu0 %2037
    %2071 = vrot.lane.b32.xlu0 %v657, 64
    %v2072 = vpop.permute.xlu0 %2071
    %2073 = vrot.lane.b32.xlu0 %v658, 64
    %v2074 = vpop.permute.xlu0 %2073
    %2075 = vrot.lane.b32.xlu0 %v659, 64
    %v2076 = vpop.permute.xlu0 %2075
    %2077 = vrot.lane.b32.xlu0 %v660, 64
    %v2078 = vpop.permute.xlu0 %2077
    %2079 = vrot.lane.b32.xlu0 %v661, 64
    %v2080 = vpop.permute.xlu0 %2079
    %2081 = vrot.lane.b32.xlu0 %v662, 64
    %v2082 = vpop.permute.xlu0 %2081
    %2083 = vrot.lane.b32.xlu0 %v663, 64
    %v2084 = vpop.permute.xlu0 %2083
    %2085 = vrot.lane.b32.xlu0 %v664, 64
    %v2086 = vpop.permute.xlu0 %2085
    %2087 = vrot.lane.b32.xlu0 %v665, 64
    %v2088 = vpop.permute.xlu0 %2087
    %2089 = vrot.lane.b32.xlu0 %v666, 64
    %v2090 = vpop.permute.xlu0 %2089
    %2091 = vrot.lane.b32.xlu0 %v667, 64
    %v2092 = vpop.permute.xlu0 %2091
    %2093 = vrot.lane.b32.xlu0 %v668, 64
    %v2094 = vpop.permute.xlu0 %2093
    %2095 = vrot.lane.b32.xlu0 %v669, 64
    %v2096 = vpop.permute.xlu0 %2095
    %2097 = vrot.lane.b32.xlu0 %v670, 64
    %v2098 = vpop.permute.xlu0 %2097
    %2099 = vrot.lane.b32.xlu0 %v671, 64
    %v2100 = vpop.permute.xlu0 %2099
    %2101 = vrot.lane.b32.xlu0 %v672, 64
    %v2102 = vpop.permute.xlu0 %2101
    %2135 = vrot.lane.b32.xlu0 %v673, 112
    %v2136 = vpop.permute.xlu0 %2135
    %2137 = vrot.lane.b32.xlu0 %v674, 112
    %v2138 = vpop.permute.xlu0 %2137
    %2139 = vrot.lane.b32.xlu0 %v675, 112
    %v2140 = vpop.permute.xlu0 %2139
    %2141 = vrot.lane.b32.xlu0 %v676, 112
    %v2142 = vpop.permute.xlu0 %2141
    %2143 = vrot.lane.b32.xlu0 %v677, 112
    %v2144 = vpop.permute.xlu0 %2143
    %2145 = vrot.lane.b32.xlu0 %v678, 112
    %v2146 = vpop.permute.xlu0 %2145
    %2147 = vrot.lane.b32.xlu0 %v679, 112
    %v2148 = vpop.permute.xlu0 %2147
    %2149 = vrot.lane.b32.xlu0 %v680, 112
    %v2150 = vpop.permute.xlu0 %2149
    %2151 = vrot.lane.b32.xlu0 %v681, 112
    %v2152 = vpop.permute.xlu0 %2151
    %2153 = vrot.lane.b32.xlu0 %v682, 112
    %v2154 = vpop.permute.xlu0 %2153
    %2155 = vrot.lane.b32.xlu0 %v683, 112
    %v2156 = vpop.permute.xlu0 %2155
    %2157 = vrot.lane.b32.xlu0 %v684, 112
    %v2158 = vpop.permute.xlu0 %2157
    %2159 = vrot.lane.b32.xlu0 %v685, 112
    %v2160 = vpop.permute.xlu0 %2159
    %2161 = vrot.lane.b32.xlu0 %v686, 112
    %v2162 = vpop.permute.xlu0 %2161
    %2163 = vrot.lane.b32.xlu0 %v687, 112
    %v2164 = vpop.permute.xlu0 %2163
    %2165 = vrot.lane.b32.xlu0 %v688, 112
    %v2166 = vpop.permute.xlu0 %2165
    %2199 = vrot.lane.b32.xlu0 %v689, 32
    %v2200 = vpop.permute.xlu0 %2199
    %2201 = vrot.lane.b32.xlu0 %v690, 32
    %v2202 = vpop.permute.xlu0 %2201
    %2203 = vrot.lane.b32.xlu0 %v691, 32
    %v2204 = vpop.permute.xlu0 %2203
    %2205 = vrot.lane.b32.xlu0 %v692, 32
    %v2206 = vpop.permute.xlu0 %2205
    %2207 = vrot.lane.b32.xlu0 %v693, 32
    %v2208 = vpop.permute.xlu0 %2207
    %2209 = vrot.lane.b32.xlu0 %v694, 32
    %v2210 = vpop.permute.xlu0 %2209
    %2211 = vrot.lane.b32.xlu0 %v695, 32
    %v2212 = vpop.permute.xlu0 %2211
    %2213 = vrot.lane.b32.xlu0 %v696, 32
    %v2214 = vpop.permute.xlu0 %2213
    %2215 = vrot.lane.b32.xlu0 %v697, 32
    %v2216 = vpop.permute.xlu0 %2215
    %2217 = vrot.lane.b32.xlu0 %v698, 32
    %v2218 = vpop.permute.xlu0 %2217
    %2219 = vrot.lane.b32.xlu0 %v699, 32
    %v2220 = vpop.permute.xlu0 %2219
    %2221 = vrot.lane.b32.xlu0 %v700, 32
    %v2222 = vpop.permute.xlu0 %2221
    %2223 = vrot.lane.b32.xlu0 %v701, 32
    %v2224 = vpop.permute.xlu0 %2223
    %2225 = vrot.lane.b32.xlu0 %v702, 32
    %v2226 = vpop.permute.xlu0 %2225
    %2227 = vrot.lane.b32.xlu0 %v703, 32
    %v2228 = vpop.permute.xlu0 %2227
    %2229 = vrot.lane.b32.xlu0 %v704, 32
    %v2230 = vpop.permute.xlu0 %2229
    %2263 = vrot.lane.b32.xlu0 %v705, 80
    %v2264 = vpop.permute.xlu0 %2263
    %2265 = vrot.lane.b32.xlu0 %v706, 80
    %v2266 = vpop.permute.xlu0 %2265
    %2267 = vrot.lane.b32.xlu0 %v707, 80
    %v2268 = vpop.permute.xlu0 %2267
    %2269 = vrot.lane.b32.xlu0 %v708, 80
    %v2270 = vpop.permute.xlu0 %2269
    %2271 = vrot.lane.b32.xlu0 %v709, 80
    %v2272 = vpop.permute.xlu0 %2271
    %2273 = vrot.lane.b32.xlu0 %v710, 80
    %v2274 = vpop.permute.xlu0 %2273
    %2275 = vrot.lane.b32.xlu0 %v711, 80
    %v2276 = vpop.permute.xlu0 %2275
    %2277 = vrot.lane.b32.xlu0 %v712, 80
    %v2278 = vpop.permute.xlu0 %2277
    %2279 = vrot.lane.b32.xlu0 %v713, 80
    %v2280 = vpop.permute.xlu0 %2279
    %2281 = vrot.lane.b32.xlu0 %v714, 80
    %v2282 = vpop.permute.xlu0 %2281
    %2283 = vrot.lane.b32.xlu0 %v715, 80
    %v2284 = vpop.permute.xlu0 %2283
    %2285 = vrot.lane.b32.xlu0 %v716, 80
    %v2286 = vpop.permute.xlu0 %2285
    %2287 = vrot.lane.b32.xlu0 %v717, 80
    %v2288 = vpop.permute.xlu0 %2287
    %2289 = vrot.lane.b32.xlu0 %v718, 80
    %v2290 = vpop.permute.xlu0 %2289
    %2291 = vrot.lane.b32.xlu0 %v719, 80
    %v2292 = vpop.permute.xlu0 %2291
    %2293 = vrot.lane.b32.xlu0 %v720, 80
    %v2294 = vpop.permute.xlu0 %2293
    %v2311 = vsel %vm267, %v592, %v1880
    %v2312 = vsel %vm267, %v593, %v1882
    %v2313 = vsel %vm267, %v594, %v1884
    %v2314 = vsel %vm267, %v595, %v1886
    %v2315 = vsel %vm267, %v596, %v1888
    %v2316 = vsel %vm267, %v597, %v1890
    %v2317 = vsel %vm267, %v598, %v1892
    %v2318 = vsel %vm267, %v599, %v1894
    %v2319 = vsel %vm267, %v600, %v1896
    %v2320 = vsel %vm267, %v601, %v1898
    %v2321 = vsel %vm267, %v602, %v1900
    %v2322 = vsel %vm267, %v603, %v1902
    %v2323 = vsel %vm267, %v604, %v1904
    %v2324 = vsel %vm267, %v605, %v1906
    %v2325 = vsel %vm267, %v606, %v1908
    %v2326 = vsel %vm267, %v607, %v1910
    %v2327 = vsel %vm1649, %v2311, %v1944
    %v2328 = vsel %vm1649, %v2312, %v1946
    %v2329 = vsel %vm1649, %v2313, %v1948
    %v2330 = vsel %vm1649, %v2314, %v1950
    %v2331 = vsel %vm1649, %v2315, %v1952
    %v2332 = vsel %vm1649, %v2316, %v1954
    %v2333 = vsel %vm1649, %v2317, %v1956
    %v2334 = vsel %vm1649, %v2318, %v1958
    %v2335 = vsel %vm1649, %v2319, %v1960
    %v2336 = vsel %vm1649, %v2320, %v1962
    %v2337 = vsel %vm1649, %v2321, %v1964
    %v2338 = vsel %vm1649, %v2322, %v1966
    %v2339 = vsel %vm1649, %v2323, %v1968
    %v2340 = vsel %vm1649, %v2324, %v1970
    %v2341 = vsel %vm1649, %v2325, %v1972
    %v2342 = vsel %vm1649, %v2326, %v1974
    %v2343 = vsel %vm1666, %v1944, %v2008
    %v2344 = vsel %vm1666, %v1946, %v2010
    %v2345 = vsel %vm1666, %v1948, %v2012
    %v2346 = vsel %vm1666, %v1950, %v2014
    %v2347 = vsel %vm1666, %v1952, %v2016
    %v2348 = vsel %vm1666, %v1954, %v2018
    %v2349 = vsel %vm1666, %v1956, %v2020
    %v2350 = vsel %vm1666, %v1958, %v2022
    %v2351 = vsel %vm1666, %v1960, %v2024
    %v2352 = vsel %vm1666, %v1962, %v2026
    %v2353 = vsel %vm1666, %v1964, %v2028
    %v2354 = vsel %vm1666, %v1966, %v2030
    %v2355 = vsel %vm1666, %v1968, %v2032
    %v2356 = vsel %vm1666, %v1970, %v2034
    %v2357 = vsel %vm1666, %v1972, %v2036
    %v2358 = vsel %vm1666, %v1974, %v2038
    %v2359 = vsel %vm1683, %v2343, %v2072
    %v2360 = vsel %vm1683, %v2344, %v2074
    %v2361 = vsel %vm1683, %v2345, %v2076
    %v2362 = vsel %vm1683, %v2346, %v2078
    %v2363 = vsel %vm1683, %v2347, %v2080
    %v2364 = vsel %vm1683, %v2348, %v2082
    %v2365 = vsel %vm1683, %v2349, %v2084
    %v2366 = vsel %vm1683, %v2350, %v2086
    %v2367 = vsel %vm1683, %v2351, %v2088
    %v2368 = vsel %vm1683, %v2352, %v2090
    %v2369 = vsel %vm1683, %v2353, %v2092
    %v2370 = vsel %vm1683, %v2354, %v2094
    %v2371 = vsel %vm1683, %v2355, %v2096
    %v2372 = vsel %vm1683, %v2356, %v2098
    %v2373 = vsel %vm1683, %v2357, %v2100
    %v2374 = vsel %vm1683, %v2358, %v2102
    %v2375 = vsel %vm1700, %v2359, %v2136
    %v2376 = vsel %vm1700, %v2360, %v2138
    %v2377 = vsel %vm1700, %v2361, %v2140
    %v2378 = vsel %vm1700, %v2362, %v2142
    %v2379 = vsel %vm1700, %v2363, %v2144
    %v2380 = vsel %vm1700, %v2364, %v2146
    %v2381 = vsel %vm1700, %v2365, %v2148
    %v2382 = vsel %vm1700, %v2366, %v2150
    %v2383 = vsel %vm1700, %v2367, %v2152
    %v2384 = vsel %vm1700, %v2368, %v2154
    %v2385 = vsel %vm1700, %v2369, %v2156
    %v2386 = vsel %vm1700, %v2370, %v2158
    %v2387 = vsel %vm1700, %v2371, %v2160
    %v2388 = vsel %vm1700, %v2372, %v2162
    %v2389 = vsel %vm1700, %v2373, %v2164
    %v2390 = vsel %vm1700, %v2374, %v2166
    %v2391 = vsel %vm1717, %v2136, %v2200
    %v2392 = vsel %vm1717, %v2138, %v2202
    %v2393 = vsel %vm1717, %v2140, %v2204
    %v2394 = vsel %vm1717, %v2142, %v2206
    %v2395 = vsel %vm1717, %v2144, %v2208
    %v2396 = vsel %vm1717, %v2146, %v2210
    %v2397 = vsel %vm1717, %v2148, %v2212
    %v2398 = vsel %vm1717, %v2150, %v2214
    %v2399 = vsel %vm1717, %v2152, %v2216
    %v2400 = vsel %vm1717, %v2154, %v2218
    %v2401 = vsel %vm1717, %v2156, %v2220
    %v2402 = vsel %vm1717, %v2158, %v2222
    %v2403 = vsel %vm1717, %v2160, %v2224
    %v2404 = vsel %vm1717, %v2162, %v2226
    %v2405 = vsel %vm1717, %v2164, %v2228
    %v2406 = vsel %vm1717, %v2166, %v2230
    %v2407 = vsel %vm1734, %v2391, %v2264
    %v2408 = vsel %vm1734, %v2392, %v2266
    %v2409 = vsel %vm1734, %v2393, %v2268
    %v2410 = vsel %vm1734, %v2394, %v2270
    %v2411 = vsel %vm1734, %v2395, %v2272
    %v2412 = vsel %vm1734, %v2396, %v2274
    %v2413 = vsel %vm1734, %v2397, %v2276
    %v2414 = vsel %vm1734, %v2398, %v2278
    %v2415 = vsel %vm1734, %v2399, %v2280
    %v2416 = vsel %vm1734, %v2400, %v2282
    %v2417 = vsel %vm1734, %v2401, %v2284
    %v2418 = vsel %vm1734, %v2402, %v2286
    %v2419 = vsel %vm1734, %v2403, %v2288
    %v2420 = vsel %vm1734, %v2404, %v2290
    %v2421 = vsel %vm1734, %v2405, %v2292
    %v2422 = vsel %vm1734, %v2406, %v2294
    %v2423 = vpack.c.bf16 %v1651, %v1650
    %v2424 = vpack.c.bf16 %v1702, %v1701
    %v2425 = vpack.c.bf16 %v1736, %v1735
    %v2426 = vpack.c.bf16 %v1768, %v1767
    %v2427 = vpack.c.bf16 %v1816, %v1815
    %v2428 = vpack.c.bf16 %v1848, %v1847
    %v2429 = vpack.c.bf16 %v2328, %v2327
    %v2430 = vpack.c.bf16 %v2376, %v2375
    %v2431 = vpack.c.bf16 %v2408, %v2407
    %v2432 = vpack.c.bf16 %v722, %v721
    %v2433 = vpack.c.bf16 %v1653, %v1652
    %v2434 = vpack.c.bf16 %v1704, %v1703
    %v2435 = vpack.c.bf16 %v1738, %v1737
    %v2436 = vpack.c.bf16 %v1770, %v1769
    %v2437 = vpack.c.bf16 %v1818, %v1817
    %v2438 = vpack.c.bf16 %v1850, %v1849
    %v2439 = vpack.c.bf16 %v2330, %v2329
    %v2440 = vpack.c.bf16 %v2378, %v2377
    %v2441 = vpack.c.bf16 %v2410, %v2409
    %v2442 = vpack.c.bf16 %v724, %v723
    %v2443 = vpack.c.bf16 %v1655, %v1654
    %v2444 = vpack.c.bf16 %v1706, %v1705
    %v2445 = vpack.c.bf16 %v1740, %v1739
    %v2446 = vpack.c.bf16 %v1772, %v1771
    %v2447 = vpack.c.bf16 %v1820, %v1819
    %v2448 = vpack.c.bf16 %v1852, %v1851
    %v2449 = vpack.c.bf16 %v2332, %v2331
    %v2450 = vpack.c.bf16 %v2380, %v2379
    %v2451 = vpack.c.bf16 %v2412, %v2411
    %v2452 = vpack.c.bf16 %v726, %v725
    %v2453 = vpack.c.bf16 %v1657, %v1656
    %v2454 = vpack.c.bf16 %v1708, %v1707
    %v2455 = vpack.c.bf16 %v1742, %v1741
    %v2456 = vpack.c.bf16 %v1774, %v1773
    %v2457 = vpack.c.bf16 %v1822, %v1821
    %v2458 = vpack.c.bf16 %v1854, %v1853
    %v2459 = vpack.c.bf16 %v2334, %v2333
    %v2460 = vpack.c.bf16 %v2382, %v2381
    %v2461 = vpack.c.bf16 %v2414, %v2413
    %v2462 = vpack.c.bf16 %v728, %v727
    %v2463 = vpack.c.bf16 %v1659, %v1658
    %v2464 = vpack.c.bf16 %v1710, %v1709
    %v2465 = vpack.c.bf16 %v1744, %v1743
    %v2466 = vpack.c.bf16 %v1776, %v1775
    %v2467 = vpack.c.bf16 %v1824, %v1823
    %v2468 = vpack.c.bf16 %v1856, %v1855
    %v2469 = vpack.c.bf16 %v2336, %v2335
    %v2470 = vpack.c.bf16 %v2384, %v2383
    %v2471 = vpack.c.bf16 %v2416, %v2415
    %v2472 = vpack.c.bf16 %v730, %v729
    %v2473 = vpack.c.bf16 %v1661, %v1660
    %v2474 = vpack.c.bf16 %v1712, %v1711
    %v2475 = vpack.c.bf16 %v1746, %v1745
    %v2476 = vpack.c.bf16 %v1778, %v1777
    %v2477 = vpack.c.bf16 %v1826, %v1825
    %v2478 = vpack.c.bf16 %v1858, %v1857
    %v2479 = vpack.c.bf16 %v2338, %v2337
    %v2480 = vpack.c.bf16 %v2386, %v2385
    %v2481 = vpack.c.bf16 %v2418, %v2417
    %v2482 = vpack.c.bf16 %v732, %v731
    %v2483 = vpack.c.bf16 %v1663, %v1662
    %v2484 = vpack.c.bf16 %v1714, %v1713
    %v2485 = vpack.c.bf16 %v1748, %v1747
    %v2486 = vpack.c.bf16 %v1780, %v1779
    %v2487 = vpack.c.bf16 %v1828, %v1827
    %v2488 = vpack.c.bf16 %v1860, %v1859
    %v2489 = vpack.c.bf16 %v2340, %v2339
    %v2490 = vpack.c.bf16 %v2388, %v2387
    %v2491 = vpack.c.bf16 %v2420, %v2419
    %v2492 = vpack.c.bf16 %v734, %v733
    %v2493 = vpack.c.bf16 %v1665, %v1664
    %v2494 = vpack.c.bf16 %v1716, %v1715
    %v2495 = vpack.c.bf16 %v1750, %v1749
    %v2496 = vpack.c.bf16 %v1782, %v1781
    %v2497 = vpack.c.bf16 %v1830, %v1829
    %v2498 = vpack.c.bf16 %v1862, %v1861
    %v2499 = vpack.c.bf16 %v2342, %v2341
    %v2500 = vpack.c.bf16 %v2390, %v2389
    %v2501 = vpack.c.bf16 %v2422, %v2421
    %v2502 = vpack.c.bf16 %v736, %v735
    %v2503 = vld [vmem:[%s3] sm:$0xf]
    %v2504 = vld [vmem:[%s3 + $0x4] sm:$0xf]
    %v2505 = vld [vmem:[%s3 + $0x8] sm:$0xf]
    %v2506 = vld [vmem:[%s3 + $0xc] sm:$0xf]
    %v2507 = vld [vmem:[%s3 + $0x10] sm:$0xf]
    %v2508 = vld [vmem:[%s3 + $0x14] sm:$0xf]
    %v2509 = vld [vmem:[%s3 + $0x18] sm:$0xf]
    %v2510 = vld [vmem:[%s3 + $0x1c] sm:$0xf]
    %v2511 = vld [vmem:[%s3 + $0x20] sm:$0xf]
    %v2512 = vld [vmem:[%s3 + $0x24] sm:$0xf]
    %v2513 = vld [vmem:[%s3 + $0x28] sm:$0xf]
    %v2514 = vld [vmem:[%s3 + $0x2c] sm:$0xf]
    %v2515 = vld [vmem:[%s3 + $0x30] sm:$0xf]
    %v2516 = vld [vmem:[%s3 + $0x34] sm:$0xf]
    %v2517 = vld [vmem:[%s3 + $0x38] sm:$0xf]
    %v2518 = vld [vmem:[%s3 + $0x3c] sm:$0xf]
    %v2519 = vld [vmem:[%s3 + $0x40] sm:$0xf]
    %v2520 = vld [vmem:[%s3 + $0x44] sm:$0xf]
    %v2521 = vld [vmem:[%s3 + $0x48] sm:$0xf]
    %v2522 = vld [vmem:[%s3 + $0x4c] sm:$0xf]
    %v2523 = vld [vmem:[%s3 + $0x50] sm:$0xf]
    %v2524 = vld [vmem:[%s3 + $0x54] sm:$0xf]
    %v2525 = vld [vmem:[%s3 + $0x58] sm:$0xf]
    %v2526 = vld [vmem:[%s3 + $0x5c] sm:$0xf]
    %v2527 = vld [vmem:[%s3 + $0x60] sm:$0xf]
    %v2528 = vld [vmem:[%s3 + $0x64] sm:$0xf]
    %v2529 = vld [vmem:[%s3 + $0x68] sm:$0xf]
    %v2530 = vld [vmem:[%s3 + $0x6c] sm:$0xf]
    %v2531 = vld [vmem:[%s3 + $0x70] sm:$0xf]
    %v2532 = vld [vmem:[%s3 + $0x74] sm:$0xf]
    %v2533 = vld [vmem:[%s3 + $0x78] sm:$0xf]
    %v2534 = vld [vmem:[%s3 + $0x7c] sm:$0xf]
    %v2535 = vld [vmem:[%s3 + $0x80] sm:$0xf]
    %v2536 = vld [vmem:[%s3 + $0x84] sm:$0xf]
    %v2537 = vld [vmem:[%s3 + $0x88] sm:$0xf]
    %v2538 = vld [vmem:[%s3 + $0x8c] sm:$0xf]
    %v2539 = vld [vmem:[%s3 + $0x90] sm:$0xf]
    %v2540 = vld [vmem:[%s3 + $0x94] sm:$0xf]
    %v2541 = vld [vmem:[%s3 + $0x98] sm:$0xf]
    %v2542 = vld [vmem:[%s3 + $0x9c] sm:$0xf]
    %v2543 = vld [vmem:[%s3 + $0xa0] sm:$0xf]
    %v2544 = vld [vmem:[%s3 + $0xa4] sm:$0xf]
    %v2545 = vld [vmem:[%s3 + $0xa8] sm:$0xf]
    %v2546 = vld [vmem:[%s3 + $0xac] sm:$0xf]
    %v2547 = vld [vmem:[%s3 + $0xb0] sm:$0xf]
    %v2548 = vld [vmem:[%s3 + $0xb4] sm:$0xf]
    %v2549 = vld [vmem:[%s3 + $0xb8] sm:$0xf]
    %v2550 = vld [vmem:[%s3 + $0xbc] sm:$0xf]
    %v2551 = vld [vmem:[%s3 + $0xc0] sm:$0xf]
    %v2552 = vld [vmem:[%s3 + $0xc4] sm:$0xf]
    %v2553 = vld [vmem:[%s3 + $0xc8] sm:$0xf]
    %v2554 = vld [vmem:[%s3 + $0xcc] sm:$0xf]
    %v2555 = vld [vmem:[%s3 + $0xd0] sm:$0xf]
    %v2556 = vld [vmem:[%s3 + $0xd4] sm:$0xf]
    %v2557 = vld [vmem:[%s3 + $0xd8] sm:$0xf]
    %v2558 = vld [vmem:[%s3 + $0xdc] sm:$0xf]
    %v2559 = vld [vmem:[%s3 + $0xe0] sm:$0xf]
    %v2560 = vld [vmem:[%s3 + $0xe4] sm:$0xf]
    %v2561 = vld [vmem:[%s3 + $0xe8] sm:$0xf]
    %v2562 = vld [vmem:[%s3 + $0xec] sm:$0xf]
    %v2563 = vld [vmem:[%s3 + $0xf0] sm:$0xf]
    %v2564 = vld [vmem:[%s3 + $0xf4] sm:$0xf]
    %v2565 = vld [vmem:[%s3 + $0xf8] sm:$0xf]
    %v2566 = vld [vmem:[%s3 + $0xfc] sm:$0xf]
    %v2567 = vld [vmem:[%s3 + $0x100] sm:$0xf]
    %v2568 = vld [vmem:[%s3 + $0x104] sm:$0xf]
    %v2569 = vld [vmem:[%s3 + $0x108] sm:$0xf]
    %v2570 = vld [vmem:[%s3 + $0x10c] sm:$0xf]
    %v2571 = vld [vmem:[%s3 + $0x110] sm:$0xf]
    %v2572 = vld [vmem:[%s3 + $0x114] sm:$0xf]
    %v2573 = vld [vmem:[%s3 + $0x118] sm:$0xf]
    %v2574 = vld [vmem:[%s3 + $0x11c] sm:$0xf]
    %v2575 = vld [vmem:[%s3 + $0x120] sm:$0xf]
    %v2576 = vld [vmem:[%s3 + $0x124] sm:$0xf]
    %v2577 = vld [vmem:[%s3 + $0x128] sm:$0xf]
    %v2578 = vld [vmem:[%s3 + $0x12c] sm:$0xf]
    %v2579 = vld [vmem:[%s3 + $0x130] sm:$0xf]
    %v2580 = vld [vmem:[%s3 + $0x134] sm:$0xf]
    %v2581 = vld [vmem:[%s3 + $0x138] sm:$0xf]
    %v2582 = vld [vmem:[%s3 + $0x13c] sm:$0xf]
    %v2583 = vld [vmem:[%s3 + $0x140] sm:$0xf]
    %v2584 = vld [vmem:[%s3 + $0x144] sm:$0xf]
    %v2585 = vld [vmem:[%s3 + $0x148] sm:$0xf]
    %v2586 = vld [vmem:[%s3 + $0x14c] sm:$0xf]
    %v2587 = vld [vmem:[%s3 + $0x150] sm:$0xf]
    %v2588 = vld [vmem:[%s3 + $0x154] sm:$0xf]
    %v2589 = vld [vmem:[%s3 + $0x158] sm:$0xf]
    %v2590 = vld [vmem:[%s3 + $0x15c] sm:$0xf]
    %v2591 = vld [vmem:[%s3 + $0x160] sm:$0xf]
    %v2592 = vld [vmem:[%s3 + $0x164] sm:$0xf]
    %v2593 = vld [vmem:[%s3 + $0x168] sm:$0xf]
    %v2594 = vld [vmem:[%s3 + $0x16c] sm:$0xf]
    %v2595 = vld [vmem:[%s3 + $0x170] sm:$0xf]
    %v2596 = vld [vmem:[%s3 + $0x174] sm:$0xf]
    %v2597 = vld [vmem:[%s3 + $0x178] sm:$0xf]
    %v2598 = vld [vmem:[%s3 + $0x17c] sm:$0xf]
    %v2599 = vld [vmem:[%s3 + $0x180] sm:$0xf]
    %v2600 = vld [vmem:[%s3 + $0x184] sm:$0xf]
    %v2601 = vld [vmem:[%s3 + $0x188] sm:$0xf]
    %v2602 = vld [vmem:[%s3 + $0x18c] sm:$0xf]
    %v2603 = vld [vmem:[%s3 + $0x190] sm:$0xf]
    %v2604 = vld [vmem:[%s3 + $0x194] sm:$0xf]
    %v2605 = vld [vmem:[%s3 + $0x198] sm:$0xf]
    %v2606 = vld [vmem:[%s3 + $0x19c] sm:$0xf]
    %v2607 = vld [vmem:[%s3 + $0x1a0] sm:$0xf]
    %v2608 = vld [vmem:[%s3 + $0x1a4] sm:$0xf]
    %v2609 = vld [vmem:[%s3 + $0x1a8] sm:$0xf]
    %v2610 = vld [vmem:[%s3 + $0x1ac] sm:$0xf]
    %v2611 = vld [vmem:[%s3 + $0x1b0] sm:$0xf]
    %v2612 = vld [vmem:[%s3 + $0x1b4] sm:$0xf]
    %v2613 = vld [vmem:[%s3 + $0x1b8] sm:$0xf]
    %v2614 = vld [vmem:[%s3 + $0x1bc] sm:$0xf]
    %v2615 = vld [vmem:[%s3 + $0x1c0] sm:$0xf]
    %v2616 = vld [vmem:[%s3 + $0x1c4] sm:$0xf]
    %v2617 = vld [vmem:[%s3 + $0x1c8] sm:$0xf]
    %v2618 = vld [vmem:[%s3 + $0x1cc] sm:$0xf]
    %v2619 = vld [vmem:[%s3 + $0x1d0] sm:$0xf]
    %v2620 = vld [vmem:[%s3 + $0x1d4] sm:$0xf]
    %v2621 = vld [vmem:[%s3 + $0x1d8] sm:$0xf]
    %v2622 = vld [vmem:[%s3 + $0x1dc] sm:$0xf]
    %v2623 = vld [vmem:[%s3 + $0x1e0] sm:$0xf]
    %v2624 = vld [vmem:[%s3 + $0x1e4] sm:$0xf]
    %v2625 = vld [vmem:[%s3 + $0x1e8] sm:$0xf]
    %v2626 = vld [vmem:[%s3 + $0x1ec] sm:$0xf]
    %v2627 = vld [vmem:[%s3 + $0x1f0] sm:$0xf]
    %v2628 = vld [vmem:[%s3 + $0x1f4] sm:$0xf]
    %v2629 = vld [vmem:[%s3 + $0x1f8] sm:$0xf]
    %v2630 = vld [vmem:[%s3 + $0x1fc] sm:$0xf]
    %v2631 = vld [vmem:[%s3 + $0x200] sm:$0xf]
    %v2632 = vld [vmem:[%s3 + $0x204] sm:$0xf]
    %v2633 = vld [vmem:[%s3 + $0x208] sm:$0xf]
    %v2634 = vld [vmem:[%s3 + $0x20c] sm:$0xf]
    %v2635 = vld [vmem:[%s3 + $0x210] sm:$0xf]
    %v2636 = vld [vmem:[%s3 + $0x214] sm:$0xf]
    %v2637 = vld [vmem:[%s3 + $0x218] sm:$0xf]
    %v2638 = vld [vmem:[%s3 + $0x21c] sm:$0xf]
    %v2639 = vld [vmem:[%s3 + $0x220] sm:$0xf]
    %v2640 = vld [vmem:[%s3 + $0x224] sm:$0xf]
    %v2641 = vld [vmem:[%s3 + $0x228] sm:$0xf]
    %v2642 = vld [vmem:[%s3 + $0x22c] sm:$0xf]
    %v2643 = vld [vmem:[%s3 + $0x230] sm:$0xf]
    %v2644 = vld [vmem:[%s3 + $0x234] sm:$0xf]
    %v2645 = vld [vmem:[%s3 + $0x238] sm:$0xf]
    %v2646 = vld [vmem:[%s3 + $0x23c] sm:$0xf]
    %v2647 = vld [vmem:[%s3 + $0x240] sm:$0xf]
    %v2648 = vld [vmem:[%s3 + $0x244] sm:$0xf]
    %v2649 = vld [vmem:[%s3 + $0x248] sm:$0xf]
    %v2650 = vld [vmem:[%s3 + $0x24c] sm:$0xf]
    %v2651 = vld [vmem:[%s3 + $0x250] sm:$0xf]
    %v2652 = vld [vmem:[%s3 + $0x254] sm:$0xf]
    %v2653 = vld [vmem:[%s4] sm:$0x1]
    %v2655 = vperm.slane %v2653, 0
    %v2807 = vunpack.c.l.b16 %v2503
    %v2808 = vunpack.c.l.b16 %v2504
    %v2809 = vunpack.c.l.b16 %v2505
    %v2810 = vunpack.c.l.b16 %v2506
    %v2811 = vunpack.c.l.b16 %v2507
    %v2812 = vunpack.c.l.b16 %v2508
    %v2813 = vunpack.c.l.b16 %v2509
    %v2814 = vunpack.c.l.b16 %v2510
    %v2815 = vunpack.c.l.b16 %v2511
    %v2816 = vunpack.c.l.b16 %v2512
    %v2817 = vunpack.c.l.b16 %v2513
    %v2818 = vunpack.c.l.b16 %v2514
    %v2819 = vunpack.c.l.b16 %v2515
    %v2820 = vunpack.c.l.b16 %v2516
    %v2821 = vunpack.c.l.b16 %v2517
    %v2822 = vunpack.c.l.b16 %v2518
    %v2823 = vunpack.c.l.b16 %v2519
    %v2824 = vunpack.c.l.b16 %v2520
    %v2825 = vunpack.c.l.b16 %v2521
    %v2826 = vunpack.c.l.b16 %v2522
    %v2827 = vunpack.c.l.b16 %v2523
    %v2828 = vunpack.c.l.b16 %v2524
    %v2829 = vunpack.c.l.b16 %v2525
    %v2830 = vunpack.c.l.b16 %v2526
    %v2831 = vunpack.c.l.b16 %v2527
    %v2832 = vunpack.c.l.b16 %v2528
    %v2833 = vunpack.c.l.b16 %v2529
    %v2834 = vunpack.c.l.b16 %v2530
    %v2835 = vunpack.c.l.b16 %v2531
    %v2836 = vunpack.c.l.b16 %v2532
    %v2837 = vunpack.c.l.b16 %v2533
    %v2838 = vunpack.c.l.b16 %v2534
    %v2839 = vunpack.c.l.b16 %v2535
    %v2840 = vunpack.c.l.b16 %v2536
    %v2841 = vunpack.c.l.b16 %v2537
    %v2842 = vunpack.c.l.b16 %v2538
    %v2843 = vunpack.c.l.b16 %v2539
    %v2844 = vunpack.c.l.b16 %v2540
    %v2845 = vunpack.c.l.b16 %v2541
    %v2846 = vunpack.c.l.b16 %v2542
    %v2847 = vunpack.c.l.b16 %v2543
    %v2848 = vunpack.c.l.b16 %v2544
    %v2849 = vunpack.c.l.b16 %v2545
    %v2850 = vunpack.c.l.b16 %v2546
    %v2851 = vunpack.c.l.b16 %v2547
    %v2852 = vunpack.c.l.b16 %v2548
    %v2853 = vunpack.c.l.b16 %v2549
    %v2854 = vunpack.c.l.b16 %v2550
    %v2855 = vunpack.c.l.b16 %v2551
    %v2856 = vunpack.c.l.b16 %v2552
    %v2857 = vunpack.c.l.b16 %v2553
    %v2858 = vunpack.c.l.b16 %v2554
    %v2859 = vunpack.c.l.b16 %v2555
    %v2860 = vunpack.c.l.b16 %v2556
    %v2861 = vunpack.c.l.b16 %v2557
    %v2862 = vunpack.c.l.b16 %v2558
    %v2863 = vunpack.c.l.b16 %v2559
    %v2864 = vunpack.c.l.b16 %v2560
    %v2865 = vunpack.c.l.b16 %v2561
    %v2866 = vunpack.c.l.b16 %v2562
    %v2867 = vunpack.c.l.b16 %v2563
    %v2868 = vunpack.c.l.b16 %v2564
    %v2869 = vunpack.c.l.b16 %v2565
    %v2870 = vunpack.c.l.b16 %v2566
    %v2871 = vunpack.c.l.b16 %v2567
    %v2872 = vunpack.c.l.b16 %v2568
    %v2873 = vunpack.c.l.b16 %v2569
    %v2874 = vunpack.c.l.b16 %v2570
    %v2875 = vunpack.c.l.b16 %v2571
    %v2876 = vunpack.c.l.b16 %v2572
    %v2877 = vunpack.c.l.b16 %v2573
    %v2878 = vunpack.c.l.b16 %v2574
    %v2879 = vunpack.c.l.b16 %v2575
    %v2880 = vunpack.c.l.b16 %v2576
    %v2881 = vunpack.c.l.b16 %v2577
    %v2882 = vunpack.c.l.b16 %v2578
    %v2883 = vunpack.c.l.b16 %v2579
    %v2884 = vunpack.c.l.b16 %v2580
    %v2885 = vunpack.c.l.b16 %v2581
    %v2886 = vunpack.c.l.b16 %v2582
    %v2887 = vunpack.c.l.b16 %v2583
    %v2888 = vunpack.c.l.b16 %v2584
    %v2889 = vunpack.c.l.b16 %v2585
    %v2890 = vunpack.c.l.b16 %v2586
    %v2891 = vunpack.c.l.b16 %v2587
    %v2892 = vunpack.c.l.b16 %v2588
    %v2893 = vunpack.c.l.b16 %v2589
    %v2894 = vunpack.c.l.b16 %v2590
    %v2895 = vunpack.c.l.b16 %v2591
    %v2896 = vunpack.c.l.b16 %v2592
    %v2897 = vunpack.c.l.b16 %v2593
    %v2898 = vunpack.c.l.b16 %v2594
    %v2899 = vunpack.c.l.b16 %v2595
    %v2900 = vunpack.c.l.b16 %v2596
    %v2901 = vunpack.c.l.b16 %v2597
    %v2902 = vunpack.c.l.b16 %v2598
    %v2903 = vunpack.c.l.b16 %v2599
    %v2904 = vunpack.c.l.b16 %v2600
    %v2905 = vunpack.c.l.b16 %v2601
    %v2906 = vunpack.c.l.b16 %v2602
    %v2907 = vunpack.c.l.b16 %v2603
    %v2908 = vunpack.c.l.b16 %v2604
    %v2909 = vunpack.c.l.b16 %v2605
    %v2910 = vunpack.c.l.b16 %v2606
    %v2911 = vunpack.c.l.b16 %v2607
    %v2912 = vunpack.c.l.b16 %v2608
    %v2913 = vunpack.c.l.b16 %v2609
    %v2914 = vunpack.c.l.b16 %v2610
    %v2915 = vunpack.c.l.b16 %v2611
    %v2916 = vunpack.c.l.b16 %v2612
    %v2917 = vunpack.c.l.b16 %v2613
    %v2918 = vunpack.c.l.b16 %v2614
    %v2919 = vunpack.c.l.b16 %v2615
    %v2920 = vunpack.c.l.b16 %v2616
    %v2921 = vunpack.c.l.b16 %v2617
    %v2922 = vunpack.c.l.b16 %v2618
    %v2923 = vunpack.c.l.b16 %v2619
    %v2924 = vunpack.c.l.b16 %v2620
    %v2925 = vunpack.c.l.b16 %v2621
    %v2926 = vunpack.c.l.b16 %v2622
    %v2927 = vunpack.c.l.b16 %v2623
    %v2928 = vunpack.c.l.b16 %v2624
    %v2929 = vunpack.c.l.b16 %v2625
    %v2930 = vunpack.c.l.b16 %v2626
    %v2931 = vunpack.c.l.b16 %v2627
    %v2932 = vunpack.c.l.b16 %v2628
    %v2933 = vunpack.c.l.b16 %v2629
    %v2934 = vunpack.c.l.b16 %v2630
    %v2935 = vunpack.c.l.b16 %v2631
    %v2936 = vunpack.c.l.b16 %v2632
    %v2937 = vunpack.c.l.b16 %v2633
    %v2938 = vunpack.c.l.b16 %v2634
    %v2939 = vunpack.c.l.b16 %v2635
    %v2940 = vunpack.c.l.b16 %v2636
    %v2941 = vunpack.c.l.b16 %v2637
    %v2942 = vunpack.c.l.b16 %v2638
    %v2943 = vunpack.c.l.b16 %v2639
    %v2944 = vunpack.c.l.b16 %v2640
    %v2945 = vunpack.c.l.b16 %v2641
    %v2946 = vunpack.c.l.b16 %v2642
    %v2947 = vunpack.c.l.b16 %v2643
    %v2948 = vunpack.c.l.b16 %v2644
    %v2949 = vunpack.c.l.b16 %v2645
    %v2950 = vunpack.c.l.b16 %v2646
    %v2951 = vunpack.c.l.b16 %v2647
    %v2952 = vunpack.c.l.b16 %v2648
    %v2953 = vunpack.c.l.b16 %v2649
    %v2954 = vunpack.c.l.b16 %v2650
    %v2955 = vunpack.c.l.b16 %v2651
    %v2956 = vunpack.c.l.b16 %v2652
    %v2957 = vpack.c.b16 %v2808, %v2807
    %v2958 = vpack.c.b16 %v2810, %v2809
    %v2959 = vpack.c.b16 %v2812, %v2811
    %v2960 = vpack.c.b16 %v2814, %v2813
    %v2961 = vpack.c.b16 %v2816, %v2815
    %v2962 = vpack.c.b16 %v2818, %v2817
    %v2963 = vpack.c.b16 %v2820, %v2819
    %v2964 = vpack.c.b16 %v2822, %v2821
    %v2965 = vpack.c.b16 %v2824, %v2823
    %v2966 = vpack.c.b16 %v2826, %v2825
    %v2967 = vpack.c.b16 %v2828, %v2827
    %v2968 = vpack.c.b16 %v2830, %v2829
    %v2969 = vpack.c.b16 %v2832, %v2831
    %v2970 = vpack.c.b16 %v2834, %v2833
    %v2971 = vpack.c.b16 %v2836, %v2835
    %v2972 = vpack.c.b16 %v2838, %v2837
    %v2973 = vpack.c.b16 %v2840, %v2839
    %v2974 = vpack.c.b16 %v2842, %v2841
    %v2975 = vpack.c.b16 %v2844, %v2843
    %v2976 = vpack.c.b16 %v2846, %v2845
    %v2977 = vpack.c.b16 %v2848, %v2847
    %v2978 = vpack.c.b16 %v2850, %v2849
    %v2979 = vpack.c.b16 %v2852, %v2851
    %v2980 = vpack.c.b16 %v2854, %v2853
    %v2981 = vpack.c.b16 %v2856, %v2855
    %v2982 = vpack.c.b16 %v2858, %v2857
    %v2983 = vpack.c.b16 %v2860, %v2859
    %v2984 = vpack.c.b16 %v2862, %v2861
    %v2985 = vpack.c.b16 %v2864, %v2863
    %v2986 = vpack.c.b16 %v2866, %v2865
    %v2987 = vpack.c.b16 %v2868, %v2867
    %v2988 = vpack.c.b16 %v2870, %v2869
    %v2989 = vpack.c.b16 %v2872, %v2871
    %v2990 = vpack.c.b16 %v2874, %v2873
    %v2991 = vpack.c.b16 %v2876, %v2875
    %v2992 = vpack.c.b16 %v2878, %v2877
    %v2993 = vpack.c.b16 %v2880, %v2879
    %v2994 = vpack.c.b16 %v2882, %v2881
    %v2995 = vpack.c.b16 %v2884, %v2883
    %v2996 = vpack.c.b16 %v2886, %v2885
    %v2997 = vpack.c.b16 %v2888, %v2887
    %v2998 = vpack.c.b16 %v2890, %v2889
    %v2999 = vpack.c.b16 %v2892, %v2891
    %v3000 = vpack.c.b16 %v2894, %v2893
    %v3001 = vpack.c.b16 %v2896, %v2895
    %v3002 = vpack.c.b16 %v2898, %v2897
    %v3003 = vpack.c.b16 %v2900, %v2899
    %v3004 = vpack.c.b16 %v2902, %v2901
    %v3005 = vpack.c.b16 %v2904, %v2903
    %v3006 = vpack.c.b16 %v2906, %v2905
    %v3007 = vpack.c.b16 %v2908, %v2907
    %v3008 = vpack.c.b16 %v2910, %v2909
    %v3009 = vpack.c.b16 %v2912, %v2911
    %v3010 = vpack.c.b16 %v2914, %v2913
    %v3011 = vpack.c.b16 %v2916, %v2915
    %v3012 = vpack.c.b16 %v2918, %v2917
    %v3013 = vpack.c.b16 %v2920, %v2919
    %v3014 = vpack.c.b16 %v2922, %v2921
    %v3015 = vpack.c.b16 %v2924, %v2923
    %v3016 = vpack.c.b16 %v2926, %v2925
    %v3017 = vpack.c.b16 %v2928, %v2927
    %v3018 = vpack.c.b16 %v2930, %v2929
    %v3019 = vpack.c.b16 %v2932, %v2931
    %v3020 = vpack.c.b16 %v2934, %v2933
    %v3021 = vpack.c.b16 %v2936, %v2935
    %v3022 = vpack.c.b16 %v2938, %v2937
    %v3023 = vpack.c.b16 %v2940, %v2939
    %v3024 = vpack.c.b16 %v2942, %v2941
    %v3025 = vpack.c.b16 %v2944, %v2943
    %v3026 = vpack.c.b16 %v2946, %v2945
    %v3027 = vpack.c.b16 %v2948, %v2947
    %v3028 = vpack.c.b16 %v2950, %v2949
    %v3029 = vpack.c.b16 %v2952, %v2951
    %v3030 = vpack.c.b16 %v2954, %v2953
    %v3031 = vpack.c.b16 %v2956, %v2955
    %v3108 = vsel %vm267, %v2432, 0
    %v3111 = vsel %vm267, %v2442, 0
    %v3114 = vsel %vm267, %v2452, 0
    %v3117 = vsel %vm267, %v2462, 0
    %v3120 = vsel %vm267, %v2472, 0
    %v3123 = vsel %vm267, %v2482, 0
    %v3126 = vsel %vm267, %v2492, 0
    %v3129 = vsel %vm267, %v2502, 0
    %3131 = vmatpush.bf16.msra.mxu0 %v2964
    %3132 = vmatpush.bf16.msra.mxu0 %v2963
    %3133 = vmatpush.bf16.msra.mxu0 %v2962
    %3134 = vmatpush.bf16.msra.mxu0 %v2961
    %3135 = vmatpush.bf16.msra.mxu0 %v2960
    %3136 = vmatpush.bf16.msra.mxu0 %v2959
    %3137 = vmatpush.bf16.msra.mxu0 %v2958
    %3138 = vmatpush.bf16.msra.mxu0 %v2957
    %3139 = vmatmul.bf16.gmra.mxu0 %v2423
    %v3140 = vpop.f32.mrf.mxu0
    %v3141 = vadd.f32 %v2655, %v3140
    %v3142 = vpop.f32.mrf.mxu0
    %v3143 = vadd.f32 %v2655, %v3142
    %3144 = vmatmul.bf16.gmra.mxu0 %v2433
    %v3145 = vpop.f32.mrf.mxu0
    %v3146 = vadd.f32 %v2655, %v3145
    %v3147 = vpop.f32.mrf.mxu0
    %v3148 = vadd.f32 %v2655, %v3147
    %3149 = vmatmul.bf16.gmra.mxu0 %v2443
    %v3150 = vpop.f32.mrf.mxu0
    %v3151 = vadd.f32 %v2655, %v3150
    %v3152 = vpop.f32.mrf.mxu0
    %v3153 = vadd.f32 %v2655, %v3152
    %3154 = vmatmul.bf16.gmra.mxu0 %v2453
    %v3155 = vpop.f32.mrf.mxu0
    %v3156 = vadd.f32 %v2655, %v3155
    %v3157 = vpop.f32.mrf.mxu0
    %v3158 = vadd.f32 %v2655, %v3157
    %3159 = vmatmul.bf16.gmra.mxu0 %v2463
    %v3160 = vpop.f32.mrf.mxu0
    %v3161 = vadd.f32 %v2655, %v3160
    %v3162 = vpop.f32.mrf.mxu0
    %v3163 = vadd.f32 %v2655, %v3162
    %3164 = vmatmul.bf16.gmra.mxu0 %v2473
    %v3165 = vpop.f32.mrf.mxu0
    %v3166 = vadd.f32 %v2655, %v3165
    %v3167 = vpop.f32.mrf.mxu0
    %v3168 = vadd.f32 %v2655, %v3167
    %3169 = vmatmul.bf16.gmra.mxu0 %v2483
    %v3170 = vpop.f32.mrf.mxu0
    %v3171 = vadd.f32 %v2655, %v3170
    %v3172 = vpop.f32.mrf.mxu0
    %v3173 = vadd.f32 %v2655, %v3172
    %3174 = vmatmul.bf16.gmra.mxu0 %v2493
    %v3175 = vpop.f32.mrf.mxu0
    %v3176 = vadd.f32 %v2655, %v3175
    %v3177 = vpop.f32.mrf.mxu0
    %v3178 = vadd.f32 %v2655, %v3177
    %3179 = vdwg.mxu0
    %3180 = vmatpush.bf16.msra.mxu0 %v2972
    %3181 = vmatpush.bf16.msra.mxu0 %v2971
    %3182 = vmatpush.bf16.msra.mxu0 %v2970
    %3183 = vmatpush.bf16.msra.mxu0 %v2969
    %3184 = vmatpush.bf16.msra.mxu0 %v2968
    %3185 = vmatpush.bf16.msra.mxu0 %v2967
    %3186 = vmatpush.bf16.msra.mxu0 %v2966
    %3187 = vmatpush.bf16.msra.mxu0 %v2965
    %3188 = vmatmul.bf16.gmra.mxu0 %v2424
    %v3189 = vpop.f32.mrf.mxu0
    %v3190 = vadd.f32 %v3141, %v3189
    %v3191 = vpop.f32.mrf.mxu0
    %v3192 = vadd.f32 %v3143, %v3191
    %3193 = vmatmul.bf16.gmra.mxu0 %v2434
    %v3194 = vpop.f32.mrf.mxu0
    %v3195 = vadd.f32 %v3146, %v3194
    %v3196 = vpop.f32.mrf.mxu0
    %v3197 = vadd.f32 %v3148, %v3196
    %3198 = vmatmul.bf16.gmra.mxu0 %v2444
    %v3199 = vpop.f32.mrf.mxu0
    %v3200 = vadd.f32 %v3151, %v3199
    %v3201 = vpop.f32.mrf.mxu0
    %v3202 = vadd.f32 %v3153, %v3201
    %3203 = vmatmul.bf16.gmra.mxu0 %v2454
    %v3204 = vpop.f32.mrf.mxu0
    %v3205 = vadd.f32 %v3156, %v3204
    %v3206 = vpop.f32.mrf.mxu0
    %v3207 = vadd.f32 %v3158, %v3206
    %3208 = vmatmul.bf16.gmra.mxu0 %v2464
    %v3209 = vpop.f32.mrf.mxu0
    %v3210 = vadd.f32 %v3161, %v3209
    %v3211 = vpop.f32.mrf.mxu0
    %v3212 = vadd.f32 %v3163, %v3211
    %3213 = vmatmul.bf16.gmra.mxu0 %v2474
    %v3214 = vpop.f32.mrf.mxu0
    %v3215 = vadd.f32 %v3166, %v3214
    %v3216 = vpop.f32.mrf.mxu0
    %v3217 = vadd.f32 %v3168, %v3216
    %3218 = vmatmul.bf16.gmra.mxu0 %v2484
    %v3219 = vpop.f32.mrf.mxu0
    %v3220 = vadd.f32 %v3171, %v3219
    %v3221 = vpop.f32.mrf.mxu0
    %v3222 = vadd.f32 %v3173, %v3221
    %3223 = vmatmul.bf16.gmra.mxu0 %v2494
    %v3224 = vpop.f32.mrf.mxu0
    %v3225 = vadd.f32 %v3176, %v3224
    %v3226 = vpop.f32.mrf.mxu0
    %v3227 = vadd.f32 %v3178, %v3226
    %3228 = vdwg.mxu0
    %3229 = vmatpush.bf16.msra.mxu0 %v2980
    %3230 = vmatpush.bf16.msra.mxu0 %v2979
    %3231 = vmatpush.bf16.msra.mxu0 %v2978
    %3232 = vmatpush.bf16.msra.mxu0 %v2977
    %3233 = vmatpush.bf16.msra.mxu0 %v2976
    %3234 = vmatpush.bf16.msra.mxu0 %v2975
    %3235 = vmatpush.bf16.msra.mxu0 %v2974
    %3236 = vmatpush.bf16.msra.mxu0 %v2973
    %3237 = vmatmul.bf16.gmra.mxu0 %v2425
    %v3238 = vpop.f32.mrf.mxu0
    %v3239 = vadd.f32 %v3190, %v3238
    %v3240 = vpop.f32.mrf.mxu0
    %v3241 = vadd.f32 %v3192, %v3240
    %3242 = vmatmul.bf16.gmra.mxu0 %v2435
    %v3243 = vpop.f32.mrf.mxu0
    %v3244 = vadd.f32 %v3195, %v3243
    %v3245 = vpop.f32.mrf.mxu0
    %v3246 = vadd.f32 %v3197, %v3245
    %3247 = vmatmul.bf16.gmra.mxu0 %v2445
    %v3248 = vpop.f32.mrf.mxu0
    %v3249 = vadd.f32 %v3200, %v3248
    %v3250 = vpop.f32.mrf.mxu0
    %v3251 = vadd.f32 %v3202, %v3250
    %3252 = vmatmul.bf16.gmra.mxu0 %v2455
    %v3253 = vpop.f32.mrf.mxu0
    %v3254 = vadd.f32 %v3205, %v3253
    %v3255 = vpop.f32.mrf.mxu0
    %v3256 = vadd.f32 %v3207, %v3255
    %3257 = vmatmul.bf16.gmra.mxu0 %v2465
    %v3258 = vpop.f32.mrf.mxu0
    %v3259 = vadd.f32 %v3210, %v3258
    %v3260 = vpop.f32.mrf.mxu0
    %v3261 = vadd.f32 %v3212, %v3260
    %3262 = vmatmul.bf16.gmra.mxu0 %v2475
    %v3263 = vpop.f32.mrf.mxu0
    %v3264 = vadd.f32 %v3215, %v3263
    %v3265 = vpop.f32.mrf.mxu0
    %v3266 = vadd.f32 %v3217, %v3265
    %3267 = vmatmul.bf16.gmra.mxu0 %v2485
    %v3268 = vpop.f32.mrf.mxu0
    %v3269 = vadd.f32 %v3220, %v3268
    %v3270 = vpop.f32.mrf.mxu0
    %v3271 = vadd.f32 %v3222, %v3270
    %3272 = vmatmul.bf16.gmra.mxu0 %v2495
    %v3273 = vpop.f32.mrf.mxu0
    %v3274 = vadd.f32 %v3225, %v3273
    %v3275 = vpop.f32.mrf.mxu0
    %v3276 = vadd.f32 %v3227, %v3275
    %3277 = vdwg.mxu0
    %3278 = vmatpush.bf16.msra.mxu0 %v2988
    %3279 = vmatpush.bf16.msra.mxu0 %v2987
    %3280 = vmatpush.bf16.msra.mxu0 %v2986
    %3281 = vmatpush.bf16.msra.mxu0 %v2985
    %3282 = vmatpush.bf16.msra.mxu0 %v2984
    %3283 = vmatpush.bf16.msra.mxu0 %v2983
    %3284 = vmatpush.bf16.msra.mxu0 %v2982
    %3285 = vmatpush.bf16.msra.mxu0 %v2981
    %3286 = vmatmul.bf16.gmra.mxu0 %v2426
    %v3287 = vpop.f32.mrf.mxu0
    %v3288 = vadd.f32 %v3239, %v3287
    %v3289 = vpop.f32.mrf.mxu0
    %v3290 = vadd.f32 %v3241, %v3289
    %3291 = vmatmul.bf16.gmra.mxu0 %v2436
    %v3292 = vpop.f32.mrf.mxu0
    %v3293 = vadd.f32 %v3244, %v3292
    %v3294 = vpop.f32.mrf.mxu0
    %v3295 = vadd.f32 %v3246, %v3294
    %3296 = vmatmul.bf16.gmra.mxu0 %v2446
    %v3297 = vpop.f32.mrf.mxu0
    %v3298 = vadd.f32 %v3249, %v3297
    %v3299 = vpop.f32.mrf.mxu0
    %v3300 = vadd.f32 %v3251, %v3299
    %3301 = vmatmul.bf16.gmra.mxu0 %v2456
    %v3302 = vpop.f32.mrf.mxu0
    %v3303 = vadd.f32 %v3254, %v3302
    %v3304 = vpop.f32.mrf.mxu0
    %v3305 = vadd.f32 %v3256, %v3304
    %3306 = vmatmul.bf16.gmra.mxu0 %v2466
    %v3307 = vpop.f32.mrf.mxu0
    %v3308 = vadd.f32 %v3259, %v3307
    %v3309 = vpop.f32.mrf.mxu0
    %v3310 = vadd.f32 %v3261, %v3309
    %3311 = vmatmul.bf16.gmra.mxu0 %v2476
    %v3312 = vpop.f32.mrf.mxu0
    %v3313 = vadd.f32 %v3264, %v3312
    %v3314 = vpop.f32.mrf.mxu0
    %v3315 = vadd.f32 %v3266, %v3314
    %3316 = vmatmul.bf16.gmra.mxu0 %v2486
    %v3317 = vpop.f32.mrf.mxu0
    %v3318 = vadd.f32 %v3269, %v3317
    %v3319 = vpop.f32.mrf.mxu0
    %v3320 = vadd.f32 %v3271, %v3319
    %3321 = vmatmul.bf16.gmra.mxu0 %v2496
    %v3322 = vpop.f32.mrf.mxu0
    %v3323 = vadd.f32 %v3274, %v3322
    %v3324 = vpop.f32.mrf.mxu0
    %v3325 = vadd.f32 %v3276, %v3324
    %3326 = vdwg.mxu0
    %3327 = vmatpush.bf16.msra.mxu0 %v2996
    %3328 = vmatpush.bf16.msra.mxu0 %v2995
    %3329 = vmatpush.bf16.msra.mxu0 %v2994
    %3330 = vmatpush.bf16.msra.mxu0 %v2993
    %3331 = vmatpush.bf16.msra.mxu0 %v2992
    %3332 = vmatpush.bf16.msra.mxu0 %v2991
    %3333 = vmatpush.bf16.msra.mxu0 %v2990
    %3334 = vmatpush.bf16.msra.mxu0 %v2989
    %3335 = vmatmul.bf16.gmra.mxu0 %v2427
    %v3336 = vpop.f32.mrf.mxu0
    %v3337 = vadd.f32 %v3288, %v3336
    %v3338 = vpop.f32.mrf.mxu0
    %v3339 = vadd.f32 %v3290, %v3338
    %3340 = vmatmul.bf16.gmra.mxu0 %v2437
    %v3341 = vpop.f32.mrf.mxu0
    %v3342 = vadd.f32 %v3293, %v3341
    %v3343 = vpop.f32.mrf.mxu0
    %v3344 = vadd.f32 %v3295, %v3343
    %3345 = vmatmul.bf16.gmra.mxu0 %v2447
    %v3346 = vpop.f32.mrf.mxu0
    %v3347 = vadd.f32 %v3298, %v3346
    %v3348 = vpop.f32.mrf.mxu0
    %v3349 = vadd.f32 %v3300, %v3348
    %3350 = vmatmul.bf16.gmra.mxu0 %v2457
    %v3351 = vpop.f32.mrf.mxu0
    %v3352 = vadd.f32 %v3303, %v3351
    %v3353 = vpop.f32.mrf.mxu0
    %v3354 = vadd.f32 %v3305, %v3353
    %3355 = vmatmul.bf16.gmra.mxu0 %v2467
    %v3356 = vpop.f32.mrf.mxu0
    %v3357 = vadd.f32 %v3308, %v3356
    %v3358 = vpop.f32.mrf.mxu0
    %v3359 = vadd.f32 %v3310, %v3358
    %3360 = vmatmul.bf16.gmra.mxu0 %v2477
    %v3361 = vpop.f32.mrf.mxu0
    %v3362 = vadd.f32 %v3313, %v3361
    %v3363 = vpop.f32.mrf.mxu0
    %v3364 = vadd.f32 %v3315, %v3363
    %3365 = vmatmul.bf16.gmra.mxu0 %v2487
    %v3366 = vpop.f32.mrf.mxu0
    %v3367 = vadd.f32 %v3318, %v3366
    %v3368 = vpop.f32.mrf.mxu0
    %v3369 = vadd.f32 %v3320, %v3368
    %3370 = vmatmul.bf16.gmra.mxu0 %v2497
    %v3371 = vpop.f32.mrf.mxu0
    %v3372 = vadd.f32 %v3323, %v3371
    %v3373 = vpop.f32.mrf.mxu0
    %v3374 = vadd.f32 %v3325, %v3373
    %3375 = vdwg.mxu0
    %3376 = vmatpush.bf16.msra.mxu0 %v3004
    %3377 = vmatpush.bf16.msra.mxu0 %v3003
    %3378 = vmatpush.bf16.msra.mxu0 %v3002
    %3379 = vmatpush.bf16.msra.mxu0 %v3001
    %3380 = vmatpush.bf16.msra.mxu0 %v3000
    %3381 = vmatpush.bf16.msra.mxu0 %v2999
    %3382 = vmatpush.bf16.msra.mxu0 %v2998
    %3383 = vmatpush.bf16.msra.mxu0 %v2997
    %3384 = vmatmul.bf16.gmra.mxu0 %v2428
    %v3385 = vpop.f32.mrf.mxu0
    %v3386 = vadd.f32 %v3337, %v3385
    %v3387 = vpop.f32.mrf.mxu0
    %v3388 = vadd.f32 %v3339, %v3387
    %3389 = vmatmul.bf16.gmra.mxu0 %v2438
    %v3390 = vpop.f32.mrf.mxu0
    %v3391 = vadd.f32 %v3342, %v3390
    %v3392 = vpop.f32.mrf.mxu0
    %v3393 = vadd.f32 %v3344, %v3392
    %3394 = vmatmul.bf16.gmra.mxu0 %v2448
    %v3395 = vpop.f32.mrf.mxu0
    %v3396 = vadd.f32 %v3347, %v3395
    %v3397 = vpop.f32.mrf.mxu0
    %v3398 = vadd.f32 %v3349, %v3397
    %3399 = vmatmul.bf16.gmra.mxu0 %v2458
    %v3400 = vpop.f32.mrf.mxu0
    %v3401 = vadd.f32 %v3352, %v3400
    %v3402 = vpop.f32.mrf.mxu0
    %v3403 = vadd.f32 %v3354, %v3402
    %3404 = vmatmul.bf16.gmra.mxu0 %v2468
    %v3405 = vpop.f32.mrf.mxu0
    %v3406 = vadd.f32 %v3357, %v3405
    %v3407 = vpop.f32.mrf.mxu0
    %v3408 = vadd.f32 %v3359, %v3407
    %3409 = vmatmul.bf16.gmra.mxu0 %v2478
    %v3410 = vpop.f32.mrf.mxu0
    %v3411 = vadd.f32 %v3362, %v3410
    %v3412 = vpop.f32.mrf.mxu0
    %v3413 = vadd.f32 %v3364, %v3412
    %3414 = vmatmul.bf16.gmra.mxu0 %v2488
    %v3415 = vpop.f32.mrf.mxu0
    %v3416 = vadd.f32 %v3367, %v3415
    %v3417 = vpop.f32.mrf.mxu0
    %v3418 = vadd.f32 %v3369, %v3417
    %3419 = vmatmul.bf16.gmra.mxu0 %v2498
    %v3420 = vpop.f32.mrf.mxu0
    %v3421 = vadd.f32 %v3372, %v3420
    %v3422 = vpop.f32.mrf.mxu0
    %v3423 = vadd.f32 %v3374, %v3422
    %3424 = vdwg.mxu0
    %3425 = vmatpush.bf16.msra.mxu0 %v3012
    %3426 = vmatpush.bf16.msra.mxu0 %v3011
    %3427 = vmatpush.bf16.msra.mxu0 %v3010
    %3428 = vmatpush.bf16.msra.mxu0 %v3009
    %3429 = vmatpush.bf16.msra.mxu0 %v3008
    %3430 = vmatpush.bf16.msra.mxu0 %v3007
    %3431 = vmatpush.bf16.msra.mxu0 %v3006
    %3432 = vmatpush.bf16.msra.mxu0 %v3005
    %3433 = vmatmul.bf16.gmra.mxu0 %v2429
    %v3434 = vpop.f32.mrf.mxu0
    %v3435 = vadd.f32 %v3386, %v3434
    %v3436 = vpop.f32.mrf.mxu0
    %v3437 = vadd.f32 %v3388, %v3436
    %3438 = vmatmul.bf16.gmra.mxu0 %v2439
    %v3439 = vpop.f32.mrf.mxu0
    %v3440 = vadd.f32 %v3391, %v3439
    %v3441 = vpop.f32.mrf.mxu0
    %v3442 = vadd.f32 %v3393, %v3441
    %3443 = vmatmul.bf16.gmra.mxu0 %v2449
    %v3444 = vpop.f32.mrf.mxu0
    %v3445 = vadd.f32 %v3396, %v3444
    %v3446 = vpop.f32.mrf.mxu0
    %v3447 = vadd.f32 %v3398, %v3446
    %3448 = vmatmul.bf16.gmra.mxu0 %v2459
    %v3449 = vpop.f32.mrf.mxu0
    %v3450 = vadd.f32 %v3401, %v3449
    %v3451 = vpop.f32.mrf.mxu0
    %v3452 = vadd.f32 %v3403, %v3451
    %3453 = vmatmul.bf16.gmra.mxu0 %v2469
    %v3454 = vpop.f32.mrf.mxu0
    %v3455 = vadd.f32 %v3406, %v3454
    %v3456 = vpop.f32.mrf.mxu0
    %v3457 = vadd.f32 %v3408, %v3456
    %3458 = vmatmul.bf16.gmra.mxu0 %v2479
    %v3459 = vpop.f32.mrf.mxu0
    %v3460 = vadd.f32 %v3411, %v3459
    %v3461 = vpop.f32.mrf.mxu0
    %v3462 = vadd.f32 %v3413, %v3461
    %3463 = vmatmul.bf16.gmra.mxu0 %v2489
    %v3464 = vpop.f32.mrf.mxu0
    %v3465 = vadd.f32 %v3416, %v3464
    %v3466 = vpop.f32.mrf.mxu0
    %v3467 = vadd.f32 %v3418, %v3466
    %3468 = vmatmul.bf16.gmra.mxu0 %v2499
    %v3469 = vpop.f32.mrf.mxu0
    %v3470 = vadd.f32 %v3421, %v3469
    %v3471 = vpop.f32.mrf.mxu0
    %v3472 = vadd.f32 %v3423, %v3471
    %3473 = vdwg.mxu0
    %3474 = vmatpush.bf16.msra.mxu0 %v3020
    %3475 = vmatpush.bf16.msra.mxu0 %v3019
    %3476 = vmatpush.bf16.msra.mxu0 %v3018
    %3477 = vmatpush.bf16.msra.mxu0 %v3017
    %3478 = vmatpush.bf16.msra.mxu0 %v3016
    %3479 = vmatpush.bf16.msra.mxu0 %v3015
    %3480 = vmatpush.bf16.msra.mxu0 %v3014
    %3481 = vmatpush.bf16.msra.mxu0 %v3013
    %3482 = vmatmul.bf16.gmra.mxu0 %v2430
    %v3483 = vpop.f32.mrf.mxu0
    %v3484 = vadd.f32 %v3435, %v3483
    %v3485 = vpop.f32.mrf.mxu0
    %v3486 = vadd.f32 %v3437, %v3485
    %3487 = vmatmul.bf16.gmra.mxu0 %v2440
    %v3488 = vpop.f32.mrf.mxu0
    %v3489 = vadd.f32 %v3440, %v3488
    %v3490 = vpop.f32.mrf.mxu0
    %v3491 = vadd.f32 %v3442, %v3490
    %3492 = vmatmul.bf16.gmra.mxu0 %v2450
    %v3493 = vpop.f32.mrf.mxu0
    %v3494 = vadd.f32 %v3445, %v3493
    %v3495 = vpop.f32.mrf.mxu0
    %v3496 = vadd.f32 %v3447, %v3495
    %3497 = vmatmul.bf16.gmra.mxu0 %v2460
    %v3498 = vpop.f32.mrf.mxu0
    %v3499 = vadd.f32 %v3450, %v3498
    %v3500 = vpop.f32.mrf.mxu0
    %v3501 = vadd.f32 %v3452, %v3500
    %3502 = vmatmul.bf16.gmra.mxu0 %v2470
    %v3503 = vpop.f32.mrf.mxu0
    %v3504 = vadd.f32 %v3455, %v3503
    %v3505 = vpop.f32.mrf.mxu0
    %v3506 = vadd.f32 %v3457, %v3505
    %3507 = vmatmul.bf16.gmra.mxu0 %v2480
    %v3508 = vpop.f32.mrf.mxu0
    %v3509 = vadd.f32 %v3460, %v3508
    %v3510 = vpop.f32.mrf.mxu0
    %v3511 = vadd.f32 %v3462, %v3510
    %3512 = vmatmul.bf16.gmra.mxu0 %v2490
    %v3513 = vpop.f32.mrf.mxu0
    %v3514 = vadd.f32 %v3465, %v3513
    %v3515 = vpop.f32.mrf.mxu0
    %v3516 = vadd.f32 %v3467, %v3515
    %3517 = vmatmul.bf16.gmra.mxu0 %v2500
    %v3518 = vpop.f32.mrf.mxu0
    %v3519 = vadd.f32 %v3470, %v3518
    %v3520 = vpop.f32.mrf.mxu0
    %v3521 = vadd.f32 %v3472, %v3520
    %3522 = vdwg.mxu0
    %3523 = vmatpush.bf16.msra.mxu0 %v3028
    %3524 = vmatpush.bf16.msra.mxu0 %v3027
    %3525 = vmatpush.bf16.msra.mxu0 %v3026
    %3526 = vmatpush.bf16.msra.mxu0 %v3025
    %3527 = vmatpush.bf16.msra.mxu0 %v3024
    %3528 = vmatpush.bf16.msra.mxu0 %v3023
    %3529 = vmatpush.bf16.msra.mxu0 %v3022
    %3530 = vmatpush.bf16.msra.mxu0 %v3021
    %3531 = vmatmul.bf16.gmra.mxu0 %v2431
    %v3532 = vpop.f32.mrf.mxu0
    %v3533 = vadd.f32 %v3484, %v3532
    %v3534 = vpop.f32.mrf.mxu0
    %v3535 = vadd.f32 %v3486, %v3534
    %3536 = vmatmul.bf16.gmra.mxu0 %v2441
    %v3537 = vpop.f32.mrf.mxu0
    %v3538 = vadd.f32 %v3489, %v3537
    %v3539 = vpop.f32.mrf.mxu0
    %v3540 = vadd.f32 %v3491, %v3539
    %3541 = vmatmul.bf16.gmra.mxu0 %v2451
    %v3542 = vpop.f32.mrf.mxu0
    %v3543 = vadd.f32 %v3494, %v3542
    %v3544 = vpop.f32.mrf.mxu0
    %v3545 = vadd.f32 %v3496, %v3544
    %3546 = vmatmul.bf16.gmra.mxu0 %v2461
    %v3547 = vpop.f32.mrf.mxu0
    %v3548 = vadd.f32 %v3499, %v3547
    %v3549 = vpop.f32.mrf.mxu0
    %v3550 = vadd.f32 %v3501, %v3549
    %3551 = vmatmul.bf16.gmra.mxu0 %v2471
    %v3552 = vpop.f32.mrf.mxu0
    %v3553 = vadd.f32 %v3504, %v3552
    %v3554 = vpop.f32.mrf.mxu0
    %v3555 = vadd.f32 %v3506, %v3554
    %3556 = vmatmul.bf16.gmra.mxu0 %v2481
    %v3557 = vpop.f32.mrf.mxu0
    %v3558 = vadd.f32 %v3509, %v3557
    %v3559 = vpop.f32.mrf.mxu0
    %v3560 = vadd.f32 %v3511, %v3559
    %3561 = vmatmul.bf16.gmra.mxu0 %v2491
    %v3562 = vpop.f32.mrf.mxu0
    %v3563 = vadd.f32 %v3514, %v3562
    %v3564 = vpop.f32.mrf.mxu0
    %v3565 = vadd.f32 %v3516, %v3564
    %3566 = vmatmul.bf16.gmra.mxu0 %v2501
    %v3567 = vpop.f32.mrf.mxu0
    %v3568 = vadd.f32 %v3519, %v3567
    %v3569 = vpop.f32.mrf.mxu0
    %v3570 = vadd.f32 %v3521, %v3569
    %3571 = vdwg.mxu0
    %3572 = vmatpush.bf16.msra.mxu0 0
    %3573 = vmatpush.bf16.msra.mxu0 0
    %3574 = vmatpush.bf16.msra.mxu0 0
    %3575 = vmatpush.bf16.msra.mxu0 0
    %3576 = vmatpush.bf16.msra.mxu0 0
    %3577 = vmatpush.bf16.msra.mxu0 %v3031
    %3578 = vmatpush.bf16.msra.mxu0 %v3030
    %3579 = vmatpush.bf16.msra.mxu0 %v3029
    %3580 = vmatmul.bf16.gmra.mxu0 %v3108
    %v3581 = vpop.f32.mrf.mxu0
    %v3582 = vadd.f32 %v3533, %v3581
    %v3583 = vpop.f32.mrf.mxu0
    %v3584 = vadd.f32 %v3535, %v3583
    %3585 = vmatmul.bf16.gmra.mxu0 %v3111
    %v3586 = vpop.f32.mrf.mxu0
    %v3587 = vadd.f32 %v3538, %v3586
    %v3588 = vpop.f32.mrf.mxu0
    %v3589 = vadd.f32 %v3540, %v3588
    %3590 = vmatmul.bf16.gmra.mxu0 %v3114
    %v3591 = vpop.f32.mrf.mxu0
    %v3592 = vadd.f32 %v3543, %v3591
    %v3593 = vpop.f32.mrf.mxu0
    %v3594 = vadd.f32 %v3545, %v3593
    %3595 = vmatmul.bf16.gmra.mxu0 %v3117
    %v3596 = vpop.f32.mrf.mxu0
    %v3597 = vadd.f32 %v3548, %v3596
    %v3598 = vpop.f32.mrf.mxu0
    %v3599 = vadd.f32 %v3550, %v3598
    %3600 = vmatmul.bf16.gmra.mxu0 %v3120
    %v3601 = vpop.f32.mrf.mxu0
    %v3602 = vadd.f32 %v3553, %v3601
    %v3603 = vpop.f32.mrf.mxu0
    %v3604 = vadd.f32 %v3555, %v3603
    %3605 = vmatmul.bf16.gmra.mxu0 %v3123
    %v3606 = vpop.f32.mrf.mxu0
    %v3607 = vadd.f32 %v3558, %v3606
    %v3608 = vpop.f32.mrf.mxu0
    %v3609 = vadd.f32 %v3560, %v3608
    %3610 = vmatmul.bf16.gmra.mxu0 %v3126
    %v3611 = vpop.f32.mrf.mxu0
    %v3612 = vadd.f32 %v3563, %v3611
    %v3613 = vpop.f32.mrf.mxu0
    %v3614 = vadd.f32 %v3565, %v3613
    %3615 = vmatmul.bf16.gmra.mxu0 %v3129
    %v3616 = vpop.f32.mrf.mxu0
    %v3617 = vadd.f32 %v3568, %v3616
    %v3618 = vpop.f32.mrf.mxu0
    %v3619 = vadd.f32 %v3570, %v3618
    %3620 = vdwg.mxu0
    %v3621 = vmax.f32 %v3582, 0.0
    %v3622 = vmax.f32 %v3584, 0.0
    %v3623 = vmax.f32 %v3587, 0.0
    %v3624 = vmax.f32 %v3589, 0.0
    %v3625 = vmax.f32 %v3592, 0.0
    %v3626 = vmax.f32 %v3594, 0.0
    %v3627 = vmax.f32 %v3597, 0.0
    %v3628 = vmax.f32 %v3599, 0.0
    %v3629 = vmax.f32 %v3602, 0.0
    %v3630 = vmax.f32 %v3604, 0.0
    %v3631 = vmax.f32 %v3607, 0.0
    %v3632 = vmax.f32 %v3609, 0.0
    %v3633 = vmax.f32 %v3612, 0.0
    %v3634 = vmax.f32 %v3614, 0.0
    %v3635 = vmax.f32 %v3617, 0.0
    %v3636 = vmax.f32 %v3619, 0.0
    %3637 = vst.msk [vmem:[#allocation3] sm:$0xff] %vm1683, 0.0
    %vm3638 = vcmask 517120
    %3639 = vst.msk [vmem:[#allocation3 + $0x8] sm:$0x3] %vm3638, 0.0
    %3640 = vst.msk [vmem:[#allocation3 + $0x10] sm:$0xff] %vm1683, 0.0
    %3641 = vst.msk [vmem:[#allocation3 + $0x18] sm:$0x3] %vm3638, 0.0
    %3642 = vst.msk [vmem:[#allocation3 + $0x20] sm:$0xff] %vm1683, 0.0
    %3643 = vst.msk [vmem:[#allocation3 + $0x28] sm:$0x3] %vm3638, 0.0
    %3644 = vst.msk [vmem:[#allocation3 + $0x30] sm:$0xff] %vm1683, 0.0
    %3645 = vst.msk [vmem:[#allocation3 + $0x38] sm:$0x3] %vm3638, 0.0
    %3646 = vst.msk [vmem:[#allocation3 + $0x40] sm:$0xff] %vm1683, 0.0
    %3647 = vst.msk [vmem:[#allocation3 + $0x48] sm:$0x3] %vm3638, 0.0
    %3648 = vst.msk [vmem:[#allocation3 + $0x50] sm:$0xff] %vm1683, 0.0
    %3649 = vst.msk [vmem:[#allocation3 + $0x58] sm:$0x3] %vm3638, 0.0
    %3650 = vst.msk [vmem:[#allocation3 + $0x60] sm:$0xff] %vm1683, 0.0
    %3651 = vst.msk [vmem:[#allocation3 + $0x68] sm:$0x3] %vm3638, 0.0
    %3652 = vst.msk [vmem:[#allocation3 + $0x70] sm:$0xff] %vm1683, 0.0
    %3653 = vst.msk [vmem:[#allocation3 + $0x78] sm:$0x3] %vm3638, 0.0
    %3654 = vst.msk [vmem:[#allocation3 + $0x80] sm:$0xff] %vm1683, 0.0
    %3655 = vst.msk [vmem:[#allocation3 + $0x88] sm:$0x3] %vm3638, 0.0
    %3656 = vst.msk [vmem:[#allocation3 + $0x90] sm:$0xff] %vm1683, 0.0
    %3657 = vst.msk [vmem:[#allocation3 + $0x98] sm:$0x3] %vm3638, 0.0
    %3658 = vst.msk [vmem:[#allocation3 + $0xa0] sm:$0xff] %vm1683, 0.0
    %3659 = vst.msk [vmem:[#allocation3 + $0xa8] sm:$0x3] %vm3638, 0.0
    %3660 = vst.msk [vmem:[#allocation3 + $0xb0] sm:$0xff] %vm1683, 0.0
    %3661 = vst.msk [vmem:[#allocation3 + $0xb8] sm:$0x3] %vm3638, 0.0
    %3662 = vst.msk [vmem:[#allocation3 + $0xc0] sm:$0xff] %vm1683, 0.0
    %3663 = vst.msk [vmem:[#allocation3 + $0xc8] sm:$0x3] %vm3638, 0.0
    %3664 = vst.msk [vmem:[#allocation3 + $0xd0] sm:$0xff] %vm1683, 0.0
    %3665 = vst.msk [vmem:[#allocation3 + $0xd8] sm:$0x3] %vm3638, 0.0
    %3666 = vst.msk [vmem:[#allocation3 + $0xe0] sm:$0xff] %vm1683, 0.0
    %3667 = vst.msk [vmem:[#allocation3 + $0xe8] sm:$0x3] %vm3638, 0.0
    %3668 = vst.msk [vmem:[#allocation3 + $0xf0] sm:$0xff] %vm1683, 0.0
    %3669 = vst.msk [vmem:[#allocation3 + $0xf8] sm:$0x3] %vm3638, 0.0
    %3670 = vst.msk [vmem:[#allocation3 + $0x100] sm:$0xff] %vm1683, 0.0
    %3671 = vst.msk [vmem:[#allocation3 + $0x108] sm:$0x3] %vm3638, 0.0
    %3672 = vst.msk [vmem:[#allocation3 + $0x110] sm:$0xff] %vm1683, 0.0
    %3673 = vst.msk [vmem:[#allocation3 + $0x118] sm:$0x3] %vm3638, 0.0
    %3674 = vst.msk [vmem:[#allocation3 + $0x120] sm:$0xff] %vm1683, 0.0
    %3675 = vst.msk [vmem:[#allocation3 + $0x128] sm:$0x3] %vm3638, 0.0
    %3676 = vst.msk [vmem:[#allocation3 + $0x130] sm:$0xff] %vm1683, 0.0
    %3677 = vst.msk [vmem:[#allocation3 + $0x138] sm:$0x3] %vm3638, 0.0
    %3694 = vrot.lane.b32.xlu0 %v235, 64
    %v3695 = vpop.permute.xlu0 %3694
    %3696 = vrot.lane.b32.xlu0 %v236, 64
    %v3697 = vpop.permute.xlu0 %3696
    %3698 = vrot.lane.b32.xlu0 %v237, 64
    %v3699 = vpop.permute.xlu0 %3698
    %3700 = vrot.lane.b32.xlu0 %v238, 64
    %v3701 = vpop.permute.xlu0 %3700
    %3702 = vrot.lane.b32.xlu0 %v239, 64
    %v3703 = vpop.permute.xlu0 %3702
    %3704 = vrot.lane.b32.xlu0 %v240, 64
    %v3705 = vpop.permute.xlu0 %3704
    %3706 = vrot.lane.b32.xlu0 %v241, 64
    %v3707 = vpop.permute.xlu0 %3706
    %3708 = vrot.lane.b32.xlu0 %v242, 64
    %v3709 = vpop.permute.xlu0 %3708
    %3710 = vrot.lane.b32.xlu0 %v243, 64
    %v3711 = vpop.permute.xlu0 %3710
    %3712 = vrot.lane.b32.xlu0 %v244, 64
    %v3713 = vpop.permute.xlu0 %3712
    %3714 = vrot.lane.b32.xlu0 %v245, 64
    %v3715 = vpop.permute.xlu0 %3714
    %3716 = vrot.lane.b32.xlu0 %v246, 64
    %v3717 = vpop.permute.xlu0 %3716
    %3718 = vrot.lane.b32.xlu0 %v247, 64
    %v3719 = vpop.permute.xlu0 %3718
    %3720 = vrot.lane.b32.xlu0 %v248, 64
    %v3721 = vpop.permute.xlu0 %3720
    %3722 = vrot.lane.b32.xlu0 %v249, 64
    %v3723 = vpop.permute.xlu0 %3722
    %3724 = vrot.lane.b32.xlu0 %v250, 64
    %v3725 = vpop.permute.xlu0 %3724
    %s3742 = scalar_lea.vmem [#allocation3], 16
    %3743 = vst.msk [vmem:[%s3742 + $0x1] sm:$0xff] %vm1683, %v3695
    %3744 = vst.msk [vmem:[%s3742 + $0x11] sm:$0xff] %vm1683, %v3697
    %3745 = vst.msk [vmem:[%s3742 + $0x21] sm:$0xff] %vm1683, %v3699
    %3746 = vst.msk [vmem:[%s3742 + $0x31] sm:$0xff] %vm1683, %v3701
    %3747 = vst.msk [vmem:[%s3742 + $0x41] sm:$0xff] %vm1683, %v3703
    %3748 = vst.msk [vmem:[%s3742 + $0x51] sm:$0xff] %vm1683, %v3705
    %3749 = vst.msk [vmem:[%s3742 + $0x61] sm:$0xff] %vm1683, %v3707
    %3750 = vst.msk [vmem:[%s3742 + $0x71] sm:$0xff] %vm1683, %v3709
    %3751 = vst.msk [vmem:[%s3742 + $0xa1] sm:$0xff] %vm1683, %v3711
    %3752 = vst.msk [vmem:[%s3742 + $0xb1] sm:$0xff] %vm1683, %v3713
    %3753 = vst.msk [vmem:[%s3742 + $0xc1] sm:$0xff] %vm1683, %v3715
    %3754 = vst.msk [vmem:[%s3742 + $0xd1] sm:$0xff] %vm1683, %v3717
    %3755 = vst.msk [vmem:[%s3742 + $0xe1] sm:$0xff] %vm1683, %v3719
    %3756 = vst.msk [vmem:[%s3742 + $0xf1] sm:$0xff] %vm1683, %v3721
    %3757 = vst.msk [vmem:[%s3742 + $0x101] sm:$0xff] %vm1683, %v3723
    %3758 = vst.msk [vmem:[%s3742 + $0x111] sm:$0xff] %vm1683, %v3725
    %v3759 = vld [vmem:[#allocation3] sm:$0xff]
    %v3760 = vld [vmem:[#allocation3 + $0x10] sm:$0xff]
    %v3761 = vld [vmem:[#allocation3 + $0x20] sm:$0xff]
    %v3762 = vld [vmem:[#allocation3 + $0x30] sm:$0xff]
    %v3763 = vld [vmem:[#allocation3 + $0x40] sm:$0xff]
    %v3764 = vld [vmem:[#allocation3 + $0x50] sm:$0xff]
    %v3765 = vld [vmem:[#allocation3 + $0x60] sm:$0xff]
    %v3766 = vld [vmem:[#allocation3 + $0x70] sm:$0xff]
    %v3767 = vld [vmem:[#allocation3 + $0xa0] sm:$0xff]
    %v3768 = vld [vmem:[#allocation3 + $0xb0] sm:$0xff]
    %v3769 = vld [vmem:[#allocation3 + $0xc0] sm:$0xff]
    %v3770 = vld [vmem:[#allocation3 + $0xd0] sm:$0xff]
    %v3771 = vld [vmem:[#allocation3 + $0xe0] sm:$0xff]
    %v3772 = vld [vmem:[#allocation3 + $0xf0] sm:$0xff]
    %v3773 = vld [vmem:[#allocation3 + $0x100] sm:$0xff]
    %v3774 = vld [vmem:[#allocation3 + $0x110] sm:$0xff]
    %v3775 = vld [vmem:[#allocation3 + $0x1] sm:$0xff]
    %v3776 = vld [vmem:[#allocation3 + $0x11] sm:$0xff]
    %v3777 = vld [vmem:[#allocation3 + $0x21] sm:$0xff]
    %v3778 = vld [vmem:[#allocation3 + $0x31] sm:$0xff]
    %v3779 = vld [vmem:[#allocation3 + $0x41] sm:$0xff]
    %v3780 = vld [vmem:[#allocation3 + $0x51] sm:$0xff]
    %v3781 = vld [vmem:[#allocation3 + $0x61] sm:$0xff]
    %v3782 = vld [vmem:[#allocation3 + $0x71] sm:$0xff]
    %v3783 = vld [vmem:[#allocation3 + $0xa1] sm:$0xff]
    %v3784 = vld [vmem:[#allocation3 + $0xb1] sm:$0xff]
    %v3785 = vld [vmem:[#allocation3 + $0xc1] sm:$0xff]
    %v3786 = vld [vmem:[#allocation3 + $0xd1] sm:$0xff]
    %v3787 = vld [vmem:[#allocation3 + $0xe1] sm:$0xff]
    %v3788 = vld [vmem:[#allocation3 + $0xf1] sm:$0xff]
    %v3789 = vld [vmem:[#allocation3 + $0x101] sm:$0xff]
    %v3790 = vld [vmem:[#allocation3 + $0x111] sm:$0xff]
    %v3791 = vld [vmem:[#allocation3 + $0x2] sm:$0xff]
    %v3792 = vld [vmem:[#allocation3 + $0x12] sm:$0xff]
    %v3793 = vld [vmem:[#allocation3 + $0x22] sm:$0xff]
    %v3794 = vld [vmem:[#allocation3 + $0x32] sm:$0xff]
    %v3795 = vld [vmem:[#allocation3 + $0x42] sm:$0xff]
    %v3796 = vld [vmem:[#allocation3 + $0x52] sm:$0xff]
    %v3797 = vld [vmem:[#allocation3 + $0x62] sm:$0xff]
    %v3798 = vld [vmem:[#allocation3 + $0x72] sm:$0xff]
    %v3799 = vld [vmem:[#allocation3 + $0xa2] sm:$0xff]
    %v3800 = vld [vmem:[#allocation3 + $0xb2] sm:$0xff]
    %v3801 = vld [vmem:[#allocation3 + $0xc2] sm:$0xff]
    %v3802 = vld [vmem:[#allocation3 + $0xd2] sm:$0xff]
    %v3803 = vld [vmem:[#allocation3 + $0xe2] sm:$0xff]
    %v3804 = vld [vmem:[#allocation3 + $0xf2] sm:$0xff]
    %v3805 = vld [vmem:[#allocation3 + $0x102] sm:$0xff]
    %v3806 = vld [vmem:[#allocation3 + $0x112] sm:$0xff]
    %v3807 = vld [vmem:[%s3742] sm:$0xff]
    %v3808 = vld [vmem:[%s3742 + $0x10] sm:$0xff]
    %v3809 = vld [vmem:[%s3742 + $0x20] sm:$0xff]
    %v3810 = vld [vmem:[%s3742 + $0x30] sm:$0xff]
    %v3811 = vld [vmem:[%s3742 + $0x40] sm:$0xff]
    %v3812 = vld [vmem:[%s3742 + $0x50] sm:$0xff]
    %v3813 = vld [vmem:[%s3742 + $0x60] sm:$0xff]
    %v3814 = vld [vmem:[%s3742 + $0x70] sm:$0xff]
    %v3815 = vld [vmem:[%s3742 + $0xa0] sm:$0xff]
    %v3816 = vld [vmem:[%s3742 + $0xb0] sm:$0xff]
    %v3817 = vld [vmem:[%s3742 + $0xc0] sm:$0xff]
    %v3818 = vld [vmem:[%s3742 + $0xd0] sm:$0xff]
    %v3819 = vld [vmem:[%s3742 + $0xe0] sm:$0xff]
    %v3820 = vld [vmem:[%s3742 + $0xf0] sm:$0xff]
    %v3821 = vld [vmem:[%s3742 + $0x100] sm:$0xff]
    %v3822 = vld [vmem:[%s3742 + $0x110] sm:$0xff]
    %v3823 = vld [vmem:[%s3742 + $0x1] sm:$0xff]
    %v3824 = vld [vmem:[%s3742 + $0x11] sm:$0xff]
    %v3825 = vld [vmem:[%s3742 + $0x21] sm:$0xff]
    %v3826 = vld [vmem:[%s3742 + $0x31] sm:$0xff]
    %v3827 = vld [vmem:[%s3742 + $0x41] sm:$0xff]
    %v3828 = vld [vmem:[%s3742 + $0x51] sm:$0xff]
    %v3829 = vld [vmem:[%s3742 + $0x61] sm:$0xff]
    %v3830 = vld [vmem:[%s3742 + $0x71] sm:$0xff]
    %v3831 = vld [vmem:[%s3742 + $0xa1] sm:$0xff]
    %v3832 = vld [vmem:[%s3742 + $0xb1] sm:$0xff]
    %v3833 = vld [vmem:[%s3742 + $0xc1] sm:$0xff]
    %v3834 = vld [vmem:[%s3742 + $0xd1] sm:$0xff]
    %v3835 = vld [vmem:[%s3742 + $0xe1] sm:$0xff]
    %v3836 = vld [vmem:[%s3742 + $0xf1] sm:$0xff]
    %v3837 = vld [vmem:[%s3742 + $0x101] sm:$0xff]
    %v3838 = vld [vmem:[%s3742 + $0x111] sm:$0xff]
    %v3839 = vld [vmem:[%s3742 + $0x2] sm:$0xff]
    %v3840 = vld [vmem:[%s3742 + $0x12] sm:$0xff]
    %v3841 = vld [vmem:[%s3742 + $0x22] sm:$0xff]
    %v3842 = vld [vmem:[%s3742 + $0x32] sm:$0xff]
    %v3843 = vld [vmem:[%s3742 + $0x42] sm:$0xff]
    %v3844 = vld [vmem:[%s3742 + $0x52] sm:$0xff]
    %v3845 = vld [vmem:[%s3742 + $0x62] sm:$0xff]
    %v3846 = vld [vmem:[%s3742 + $0x72] sm:$0xff]
    %v3847 = vld [vmem:[%s3742 + $0xa2] sm:$0xff]
    %v3848 = vld [vmem:[%s3742 + $0xb2] sm:$0xff]
    %v3849 = vld [vmem:[%s3742 + $0xc2] sm:$0xff]
    %v3850 = vld [vmem:[%s3742 + $0xd2] sm:$0xff]
    %v3851 = vld [vmem:[%s3742 + $0xe2] sm:$0xff]
    %v3852 = vld [vmem:[%s3742 + $0xf2] sm:$0xff]
    %v3853 = vld [vmem:[%s3742 + $0x102] sm:$0xff]
    %v3854 = vld [vmem:[%s3742 + $0x112] sm:$0xff]
    %s3855 = scalar_lea.vmem [#allocation3], 32
    %v3856 = vld [vmem:[%s3855] sm:$0xff]
    %v3857 = vld [vmem:[%s3855 + $0x10] sm:$0xff]
    %v3858 = vld [vmem:[%s3855 + $0x20] sm:$0xff]
    %v3859 = vld [vmem:[%s3855 + $0x30] sm:$0xff]
    %v3860 = vld [vmem:[%s3855 + $0x40] sm:$0xff]
    %v3861 = vld [vmem:[%s3855 + $0x50] sm:$0xff]
    %v3862 = vld [vmem:[%s3855 + $0x60] sm:$0xff]
    %v3863 = vld [vmem:[%s3855 + $0x70] sm:$0xff]
    %v3864 = vld [vmem:[%s3855 + $0xa0] sm:$0xff]
    %v3865 = vld [vmem:[%s3855 + $0xb0] sm:$0xff]
    %v3866 = vld [vmem:[%s3855 + $0xc0] sm:$0xff]
    %v3867 = vld [vmem:[%s3855 + $0xd0] sm:$0xff]
    %v3868 = vld [vmem:[%s3855 + $0xe0] sm:$0xff]
    %v3869 = vld [vmem:[%s3855 + $0xf0] sm:$0xff]
    %v3870 = vld [vmem:[%s3855 + $0x100] sm:$0xff]
    %v3871 = vld [vmem:[%s3855 + $0x110] sm:$0xff]
    %v3872 = vld [vmem:[%s3855 + $0x1] sm:$0xff]
    %v3873 = vld [vmem:[%s3855 + $0x11] sm:$0xff]
    %v3874 = vld [vmem:[%s3855 + $0x21] sm:$0xff]
    %v3875 = vld [vmem:[%s3855 + $0x31] sm:$0xff]
    %v3876 = vld [vmem:[%s3855 + $0x41] sm:$0xff]
    %v3877 = vld [vmem:[%s3855 + $0x51] sm:$0xff]
    %v3878 = vld [vmem:[%s3855 + $0x61] sm:$0xff]
    %v3879 = vld [vmem:[%s3855 + $0x71] sm:$0xff]
    %v3880 = vld [vmem:[%s3855 + $0xa1] sm:$0xff]
    %v3881 = vld [vmem:[%s3855 + $0xb1] sm:$0xff]
    %v3882 = vld [vmem:[%s3855 + $0xc1] sm:$0xff]
    %v3883 = vld [vmem:[%s3855 + $0xd1] sm:$0xff]
    %v3884 = vld [vmem:[%s3855 + $0xe1] sm:$0xff]
    %v3885 = vld [vmem:[%s3855 + $0xf1] sm:$0xff]
    %v3886 = vld [vmem:[%s3855 + $0x101] sm:$0xff]
    %v3887 = vld [vmem:[%s3855 + $0x111] sm:$0xff]
    %v3888 = vld [vmem:[%s3855 + $0x2] sm:$0xff]
    %v3889 = vld [vmem:[%s3855 + $0x12] sm:$0xff]
    %v3890 = vld [vmem:[%s3855 + $0x22] sm:$0xff]
    %v3891 = vld [vmem:[%s3855 + $0x32] sm:$0xff]
    %v3892 = vld [vmem:[%s3855 + $0x42] sm:$0xff]
    %v3893 = vld [vmem:[%s3855 + $0x52] sm:$0xff]
    %v3894 = vld [vmem:[%s3855 + $0x62] sm:$0xff]
    %v3895 = vld [vmem:[%s3855 + $0x72] sm:$0xff]
    %v3896 = vld [vmem:[%s3855 + $0xa2] sm:$0xff]
    %v3897 = vld [vmem:[%s3855 + $0xb2] sm:$0xff]
    %v3898 = vld [vmem:[%s3855 + $0xc2] sm:$0xff]
    %v3899 = vld [vmem:[%s3855 + $0xd2] sm:$0xff]
    %v3900 = vld [vmem:[%s3855 + $0xe2] sm:$0xff]
    %v3901 = vld [vmem:[%s3855 + $0xf2] sm:$0xff]
    %v3902 = vld [vmem:[%s3855 + $0x102] sm:$0xff]
    %v3903 = vld [vmem:[%s3855 + $0x112] sm:$0xff]
    %3920 = vrot.lane.b32.xlu0 %v3775, 64
    %v3921 = vpop.permute.xlu0 %3920
    %3922 = vrot.lane.b32.xlu0 %v3776, 64
    %v3923 = vpop.permute.xlu0 %3922
    %3924 = vrot.lane.b32.xlu0 %v3777, 64
    %v3925 = vpop.permute.xlu0 %3924
    %3926 = vrot.lane.b32.xlu0 %v3778, 64
    %v3927 = vpop.permute.xlu0 %3926
    %3928 = vrot.lane.b32.xlu0 %v3779, 64
    %v3929 = vpop.permute.xlu0 %3928
    %3930 = vrot.lane.b32.xlu0 %v3780, 64
    %v3931 = vpop.permute.xlu0 %3930
    %3932 = vrot.lane.b32.xlu0 %v3781, 64
    %v3933 = vpop.permute.xlu0 %3932
    %3934 = vrot.lane.b32.xlu0 %v3782, 64
    %v3935 = vpop.permute.xlu0 %3934
    %3936 = vrot.lane.b32.xlu0 %v3783, 64
    %v3937 = vpop.permute.xlu0 %3936
    %3938 = vrot.lane.b32.xlu0 %v3784, 64
    %v3939 = vpop.permute.xlu0 %3938
    %3940 = vrot.lane.b32.xlu0 %v3785, 64
    %v3941 = vpop.permute.xlu0 %3940
    %3942 = vrot.lane.b32.xlu0 %v3786, 64
    %v3943 = vpop.permute.xlu0 %3942
    %3944 = vrot.lane.b32.xlu0 %v3787, 64
    %v3945 = vpop.permute.xlu0 %3944
    %3946 = vrot.lane.b32.xlu0 %v3788, 64
    %v3947 = vpop.permute.xlu0 %3946
    %3948 = vrot.lane.b32.xlu0 %v3789, 64
    %v3949 = vpop.permute.xlu0 %3948
    %3950 = vrot.lane.b32.xlu0 %v3790, 64
    %v3951 = vpop.permute.xlu0 %3950
    %3984 = vrot.lane.b32.xlu0 %v3807, 64
    %v3985 = vpop.permute.xlu0 %3984
    %3986 = vrot.lane.b32.xlu0 %v3808, 64
    %v3987 = vpop.permute.xlu0 %3986
    %3988 = vrot.lane.b32.xlu0 %v3809, 64
    %v3989 = vpop.permute.xlu0 %3988
    %3990 = vrot.lane.b32.xlu0 %v3810, 64
    %v3991 = vpop.permute.xlu0 %3990
    %3992 = vrot.lane.b32.xlu0 %v3811, 64
    %v3993 = vpop.permute.xlu0 %3992
    %3994 = vrot.lane.b32.xlu0 %v3812, 64
    %v3995 = vpop.permute.xlu0 %3994
    %3996 = vrot.lane.b32.xlu0 %v3813, 64
    %v3997 = vpop.permute.xlu0 %3996
    %3998 = vrot.lane.b32.xlu0 %v3814, 64
    %v3999 = vpop.permute.xlu0 %3998
    %4000 = vrot.lane.b32.xlu0 %v3815, 64
    %v4001 = vpop.permute.xlu0 %4000
    %4002 = vrot.lane.b32.xlu0 %v3816, 64
    %v4003 = vpop.permute.xlu0 %4002
    %4004 = vrot.lane.b32.xlu0 %v3817, 64
    %v4005 = vpop.permute.xlu0 %4004
    %4006 = vrot.lane.b32.xlu0 %v3818, 64
    %v4007 = vpop.permute.xlu0 %4006
    %4008 = vrot.lane.b32.xlu0 %v3819, 64
    %v4009 = vpop.permute.xlu0 %4008
    %4010 = vrot.lane.b32.xlu0 %v3820, 64
    %v4011 = vpop.permute.xlu0 %4010
    %4012 = vrot.lane.b32.xlu0 %v3821, 64
    %v4013 = vpop.permute.xlu0 %4012
    %4014 = vrot.lane.b32.xlu0 %v3822, 64
    %v4015 = vpop.permute.xlu0 %4014
    %4048 = vrot.lane.b32.xlu0 %v3839, 64
    %v4049 = vpop.permute.xlu0 %4048
    %4050 = vrot.lane.b32.xlu0 %v3840, 64
    %v4051 = vpop.permute.xlu0 %4050
    %4052 = vrot.lane.b32.xlu0 %v3841, 64
    %v4053 = vpop.permute.xlu0 %4052
    %4054 = vrot.lane.b32.xlu0 %v3842, 64
    %v4055 = vpop.permute.xlu0 %4054
    %4056 = vrot.lane.b32.xlu0 %v3843, 64
    %v4057 = vpop.permute.xlu0 %4056
    %4058 = vrot.lane.b32.xlu0 %v3844, 64
    %v4059 = vpop.permute.xlu0 %4058
    %4060 = vrot.lane.b32.xlu0 %v3845, 64
    %v4061 = vpop.permute.xlu0 %4060
    %4062 = vrot.lane.b32.xlu0 %v3846, 64
    %v4063 = vpop.permute.xlu0 %4062
    %4064 = vrot.lane.b32.xlu0 %v3847, 64
    %v4065 = vpop.permute.xlu0 %4064
    %4066 = vrot.lane.b32.xlu0 %v3848, 64
    %v4067 = vpop.permute.xlu0 %4066
    %4068 = vrot.lane.b32.xlu0 %v3849, 64
    %v4069 = vpop.permute.xlu0 %4068
    %4070 = vrot.lane.b32.xlu0 %v3850, 64
    %v4071 = vpop.permute.xlu0 %4070
    %4072 = vrot.lane.b32.xlu0 %v3851, 64
    %v4073 = vpop.permute.xlu0 %4072
    %4074 = vrot.lane.b32.xlu0 %v3852, 64
    %v4075 = vpop.permute.xlu0 %4074
    %4076 = vrot.lane.b32.xlu0 %v3853, 64
    %v4077 = vpop.permute.xlu0 %4076
    %4078 = vrot.lane.b32.xlu0 %v3854, 64
    %v4079 = vpop.permute.xlu0 %4078
    %4112 = vrot.lane.b32.xlu0 %v3872, 64
    %v4113 = vpop.permute.xlu0 %4112
    %4114 = vrot.lane.b32.xlu0 %v3873, 64
    %v4115 = vpop.permute.xlu0 %4114
    %4116 = vrot.lane.b32.xlu0 %v3874, 64
    %v4117 = vpop.permute.xlu0 %4116
    %4118 = vrot.lane.b32.xlu0 %v3875, 64
    %v4119 = vpop.permute.xlu0 %4118
    %4120 = vrot.lane.b32.xlu0 %v3876, 64
    %v4121 = vpop.permute.xlu0 %4120
    %4122 = vrot.lane.b32.xlu0 %v3877, 64
    %v4123 = vpop.permute.xlu0 %4122
    %4124 = vrot.lane.b32.xlu0 %v3878, 64
    %v4125 = vpop.permute.xlu0 %4124
    %4126 = vrot.lane.b32.xlu0 %v3879, 64
    %v4127 = vpop.permute.xlu0 %4126
    %4128 = vrot.lane.b32.xlu0 %v3880, 64
    %v4129 = vpop.permute.xlu0 %4128
    %4130 = vrot.lane.b32.xlu0 %v3881, 64
    %v4131 = vpop.permute.xlu0 %4130
    %4132 = vrot.lane.b32.xlu0 %v3882, 64
    %v4133 = vpop.permute.xlu0 %4132
    %4134 = vrot.lane.b32.xlu0 %v3883, 64
    %v4135 = vpop.permute.xlu0 %4134
    %4136 = vrot.lane.b32.xlu0 %v3884, 64
    %v4137 = vpop.permute.xlu0 %4136
    %4138 = vrot.lane.b32.xlu0 %v3885, 64
    %v4139 = vpop.permute.xlu0 %4138
    %4140 = vrot.lane.b32.xlu0 %v3886, 64
    %v4141 = vpop.permute.xlu0 %4140
    %4142 = vrot.lane.b32.xlu0 %v3887, 64
    %v4143 = vpop.permute.xlu0 %4142
    %v4160 = vsel %vm1683, %v3759, %v3921
    %v4161 = vsel %vm1683, %v3760, %v3923
    %v4162 = vsel %vm1683, %v3761, %v3925
    %v4163 = vsel %vm1683, %v3762, %v3927
    %v4164 = vsel %vm1683, %v3763, %v3929
    %v4165 = vsel %vm1683, %v3764, %v3931
    %v4166 = vsel %vm1683, %v3765, %v3933
    %v4167 = vsel %vm1683, %v3766, %v3935
    %v4168 = vsel %vm1683, %v3767, %v3937
    %v4169 = vsel %vm1683, %v3768, %v3939
    %v4170 = vsel %vm1683, %v3769, %v3941
    %v4171 = vsel %vm1683, %v3770, %v3943
    %v4172 = vsel %vm1683, %v3771, %v3945
    %v4173 = vsel %vm1683, %v3772, %v3947
    %v4174 = vsel %vm1683, %v3773, %v3949
    %v4175 = vsel %vm1683, %v3774, %v3951
    %v4176 = vsel %vm1683, %v3791, %v3985
    %v4177 = vsel %vm1683, %v3792, %v3987
    %v4178 = vsel %vm1683, %v3793, %v3989
    %v4179 = vsel %vm1683, %v3794, %v3991
    %v4180 = vsel %vm1683, %v3795, %v3993
    %v4181 = vsel %vm1683, %v3796, %v3995
    %v4182 = vsel %vm1683, %v3797, %v3997
    %v4183 = vsel %vm1683, %v3798, %v3999
    %v4184 = vsel %vm1683, %v3799, %v4001
    %v4185 = vsel %vm1683, %v3800, %v4003
    %v4186 = vsel %vm1683, %v3801, %v4005
    %v4187 = vsel %vm1683, %v3802, %v4007
    %v4188 = vsel %vm1683, %v3803, %v4009
    %v4189 = vsel %vm1683, %v3804, %v4011
    %v4190 = vsel %vm1683, %v3805, %v4013
    %v4191 = vsel %vm1683, %v3806, %v4015
    %v4192 = vsel %vm1683, %v3823, %v4049
    %v4193 = vsel %vm1683, %v3824, %v4051
    %v4194 = vsel %vm1683, %v3825, %v4053
    %v4195 = vsel %vm1683, %v3826, %v4055
    %v4196 = vsel %vm1683, %v3827, %v4057
    %v4197 = vsel %vm1683, %v3828, %v4059
    %v4198 = vsel %vm1683, %v3829, %v4061
    %v4199 = vsel %vm1683, %v3830, %v4063
    %v4200 = vsel %vm1683, %v3831, %v4065
    %v4201 = vsel %vm1683, %v3832, %v4067
    %v4202 = vsel %vm1683, %v3833, %v4069
    %v4203 = vsel %vm1683, %v3834, %v4071
    %v4204 = vsel %vm1683, %v3835, %v4073
    %v4205 = vsel %vm1683, %v3836, %v4075
    %v4206 = vsel %vm1683, %v3837, %v4077
    %v4207 = vsel %vm1683, %v3838, %v4079
    %v4208 = vsel %vm1683, %v3856, %v4113
    %v4209 = vsel %vm1683, %v3857, %v4115
    %v4210 = vsel %vm1683, %v3858, %v4117
    %v4211 = vsel %vm1683, %v3859, %v4119
    %v4212 = vsel %vm1683, %v3860, %v4121
    %v4213 = vsel %vm1683, %v3861, %v4123
    %v4214 = vsel %vm1683, %v3862, %v4125
    %v4215 = vsel %vm1683, %v3863, %v4127
    %v4216 = vsel %vm1683, %v3864, %v4129
    %v4217 = vsel %vm1683, %v3865, %v4131
    %v4218 = vsel %vm1683, %v3866, %v4133
    %v4219 = vsel %vm1683, %v3867, %v4135
    %v4220 = vsel %vm1683, %v3868, %v4137
    %v4221 = vsel %vm1683, %v3869, %v4139
    %v4222 = vsel %vm1683, %v3870, %v4141
    %v4223 = vsel %vm1683, %v3871, %v4143
    %v4224 = vpack.c.bf16 %v4161, %v4160
    %v4225 = vpack.c.bf16 %v4177, %v4176
    %v4226 = vpack.c.bf16 %v4193, %v4192
    %v4227 = vpack.c.bf16 %v4209, %v4208
    %v4228 = vpack.c.bf16 %v3889, %v3888
    %v4229 = vpack.c.bf16 %v4163, %v4162
    %v4230 = vpack.c.bf16 %v4179, %v4178
    %v4231 = vpack.c.bf16 %v4195, %v4194
    %v4232 = vpack.c.bf16 %v4211, %v4210
    %v4233 = vpack.c.bf16 %v3891, %v3890
    %v4234 = vpack.c.bf16 %v4165, %v4164
    %v4235 = vpack.c.bf16 %v4181, %v4180
    %v4236 = vpack.c.bf16 %v4197, %v4196
    %v4237 = vpack.c.bf16 %v4213, %v4212
    %v4238 = vpack.c.bf16 %v3893, %v3892
    %v4239 = vpack.c.bf16 %v4167, %v4166
    %v4240 = vpack.c.bf16 %v4183, %v4182
    %v4241 = vpack.c.bf16 %v4199, %v4198
    %v4242 = vpack.c.bf16 %v4215, %v4214
    %v4243 = vpack.c.bf16 %v3895, %v3894
    %v4244 = vpack.c.bf16 %v4169, %v4168
    %v4245 = vpack.c.bf16 %v4185, %v4184
    %v4246 = vpack.c.bf16 %v4201, %v4200
    %v4247 = vpack.c.bf16 %v4217, %v4216
    %v4248 = vpack.c.bf16 %v3897, %v3896
    %v4249 = vpack.c.bf16 %v4171, %v4170
    %v4250 = vpack.c.bf16 %v4187, %v4186
    %v4251 = vpack.c.bf16 %v4203, %v4202
    %v4252 = vpack.c.bf16 %v4219, %v4218
    %v4253 = vpack.c.bf16 %v3899, %v3898
    %v4254 = vpack.c.bf16 %v4173, %v4172
    %v4255 = vpack.c.bf16 %v4189, %v4188
    %v4256 = vpack.c.bf16 %v4205, %v4204
    %v4257 = vpack.c.bf16 %v4221, %v4220
    %v4258 = vpack.c.bf16 %v3901, %v3900
    %v4259 = vpack.c.bf16 %v4175, %v4174
    %v4260 = vpack.c.bf16 %v4191, %v4190
    %v4261 = vpack.c.bf16 %v4207, %v4206
    %v4262 = vpack.c.bf16 %v4223, %v4222
    %v4263 = vpack.c.bf16 %v3903, %v3902
    %v4264 = vld [vmem:[%s5] sm:$0xf]
    %v4265 = vld [vmem:[%s5 + $0x4] sm:$0xf]
    %v4266 = vld [vmem:[%s5 + $0x8] sm:$0xf]
    %v4267 = vld [vmem:[%s5 + $0xc] sm:$0xf]
    %v4268 = vld [vmem:[%s5 + $0x10] sm:$0xf]
    %v4269 = vld [vmem:[%s5 + $0x14] sm:$0xf]
    %v4270 = vld [vmem:[%s5 + $0x18] sm:$0xf]
    %v4271 = vld [vmem:[%s5 + $0x1c] sm:$0xf]
    %v4272 = vld [vmem:[%s5 + $0x20] sm:$0xf]
    %v4273 = vld [vmem:[%s5 + $0x24] sm:$0xf]
    %v4274 = vld [vmem:[%s5 + $0x28] sm:$0xf]
    %v4275 = vld [vmem:[%s5 + $0x2c] sm:$0xf]
    %v4276 = vld [vmem:[%s5 + $0x30] sm:$0xf]
    %v4277 = vld [vmem:[%s5 + $0x34] sm:$0xf]
    %v4278 = vld [vmem:[%s5 + $0x38] sm:$0xf]
    %v4279 = vld [vmem:[%s5 + $0x3c] sm:$0xf]
    %v4280 = vld [vmem:[%s5 + $0x40] sm:$0xf]
    %v4281 = vld [vmem:[%s5 + $0x44] sm:$0xf]
    %v4282 = vld [vmem:[%s5 + $0x48] sm:$0xf]
    %v4283 = vld [vmem:[%s5 + $0x4c] sm:$0xf]
    %v4284 = vld [vmem:[%s5 + $0x50] sm:$0xf]
    %v4285 = vld [vmem:[%s5 + $0x54] sm:$0xf]
    %v4286 = vld [vmem:[%s5 + $0x58] sm:$0xf]
    %v4287 = vld [vmem:[%s5 + $0x5c] sm:$0xf]
    %v4288 = vld [vmem:[%s5 + $0x60] sm:$0xf]
    %v4289 = vld [vmem:[%s5 + $0x64] sm:$0xf]
    %v4290 = vld [vmem:[%s5 + $0x68] sm:$0xf]
    %v4291 = vld [vmem:[%s5 + $0x6c] sm:$0xf]
    %v4292 = vld [vmem:[%s5 + $0x70] sm:$0xf]
    %v4293 = vld [vmem:[%s5 + $0x74] sm:$0xf]
    %v4294 = vld [vmem:[%s5 + $0x78] sm:$0xf]
    %v4295 = vld [vmem:[%s5 + $0x7c] sm:$0xf]
    %v4296 = vld [vmem:[%s5 + $0x80] sm:$0xf]
    %v4297 = vld [vmem:[%s5 + $0x84] sm:$0xf]
    %v4298 = vld [vmem:[%s5 + $0x88] sm:$0xf]
    %v4299 = vld [vmem:[%s5 + $0x8c] sm:$0xf]
    %v4300 = vld [vmem:[%s5 + $0x90] sm:$0xf]
    %v4301 = vld [vmem:[%s5 + $0x94] sm:$0xf]
    %v4302 = vld [vmem:[%s5 + $0x98] sm:$0xf]
    %v4303 = vld [vmem:[%s5 + $0x9c] sm:$0xf]
    %v4304 = vld [vmem:[%s5 + $0xa0] sm:$0xf]
    %v4305 = vld [vmem:[%s5 + $0xa4] sm:$0xf]
    %v4306 = vld [vmem:[%s5 + $0xa8] sm:$0xf]
    %v4307 = vld [vmem:[%s5 + $0xac] sm:$0xf]
    %v4308 = vld [vmem:[%s5 + $0xb0] sm:$0xf]
    %v4309 = vld [vmem:[%s5 + $0xb4] sm:$0xf]
    %v4310 = vld [vmem:[%s5 + $0xb8] sm:$0xf]
    %v4311 = vld [vmem:[%s5 + $0xbc] sm:$0xf]
    %v4312 = vld [vmem:[%s5 + $0xc0] sm:$0xf]
    %v4313 = vld [vmem:[%s5 + $0xc4] sm:$0xf]
    %v4314 = vld [vmem:[%s5 + $0xc8] sm:$0xf]
    %v4315 = vld [vmem:[%s5 + $0xcc] sm:$0xf]
    %v4316 = vld [vmem:[%s5 + $0xd0] sm:$0xf]
    %v4317 = vld [vmem:[%s5 + $0xd4] sm:$0xf]
    %v4318 = vld [vmem:[%s5 + $0xd8] sm:$0xf]
    %v4319 = vld [vmem:[%s5 + $0xdc] sm:$0xf]
    %v4320 = vld [vmem:[%s5 + $0xe0] sm:$0xf]
    %v4321 = vld [vmem:[%s5 + $0xe4] sm:$0xf]
    %v4322 = vld [vmem:[%s5 + $0xe8] sm:$0xf]
    %v4323 = vld [vmem:[%s5 + $0xec] sm:$0xf]
    %v4324 = vld [vmem:[%s5 + $0xf0] sm:$0xf]
    %v4325 = vld [vmem:[%s5 + $0xf4] sm:$0xf]
    %v4326 = vld [vmem:[%s5 + $0xf8] sm:$0xf]
    %v4327 = vld [vmem:[%s5 + $0xfc] sm:$0xf]
    %v4328 = vld [vmem:[%s5 + $0x100] sm:$0xf]
    %v4329 = vld [vmem:[%s5 + $0x104] sm:$0xf]
    %v4330 = vld [vmem:[%s5 + $0x108] sm:$0xf]
    %v4331 = vld [vmem:[%s5 + $0x10c] sm:$0xf]
    %v4332 = vld [vmem:[%s5 + $0x110] sm:$0xf]
    %v4333 = vld [vmem:[%s5 + $0x114] sm:$0xf]
    %v4334 = vld [vmem:[%s5 + $0x118] sm:$0xf]
    %v4335 = vld [vmem:[%s5 + $0x11c] sm:$0xf]
    %v4336 = vld [vmem:[%s6] sm:$0x1]
    %v4338 = vperm.slane %v4336, 0
    %v4412 = vunpack.c.l.b16 %v4264
    %v4413 = vunpack.c.l.b16 %v4265
    %v4414 = vunpack.c.l.b16 %v4266
    %v4415 = vunpack.c.l.b16 %v4267
    %v4416 = vunpack.c.l.b16 %v4268
    %v4417 = vunpack.c.l.b16 %v4269
    %v4418 = vunpack.c.l.b16 %v4270
    %v4419 = vunpack.c.l.b16 %v4271
    %v4420 = vunpack.c.l.b16 %v4272
    %v4421 = vunpack.c.l.b16 %v4273
    %v4422 = vunpack.c.l.b16 %v4274
    %v4423 = vunpack.c.l.b16 %v4275
    %v4424 = vunpack.c.l.b16 %v4276
    %v4425 = vunpack.c.l.b16 %v4277
    %v4426 = vunpack.c.l.b16 %v4278
    %v4427 = vunpack.c.l.b16 %v4279
    %v4428 = vunpack.c.l.b16 %v4280
    %v4429 = vunpack.c.l.b16 %v4281
    %v4430 = vunpack.c.l.b16 %v4282
    %v4431 = vunpack.c.l.b16 %v4283
    %v4432 = vunpack.c.l.b16 %v4284
    %v4433 = vunpack.c.l.b16 %v4285
    %v4434 = vunpack.c.l.b16 %v4286
    %v4435 = vunpack.c.l.b16 %v4287
    %v4436 = vunpack.c.l.b16 %v4288
    %v4437 = vunpack.c.l.b16 %v4289
    %v4438 = vunpack.c.l.b16 %v4290
    %v4439 = vunpack.c.l.b16 %v4291
    %v4440 = vunpack.c.l.b16 %v4292
    %v4441 = vunpack.c.l.b16 %v4293
    %v4442 = vunpack.c.l.b16 %v4294
    %v4443 = vunpack.c.l.b16 %v4295
    %v4444 = vunpack.c.l.b16 %v4296
    %v4445 = vunpack.c.l.b16 %v4297
    %v4446 = vunpack.c.l.b16 %v4298
    %v4447 = vunpack.c.l.b16 %v4299
    %v4448 = vunpack.c.l.b16 %v4300
    %v4449 = vunpack.c.l.b16 %v4301
    %v4450 = vunpack.c.l.b16 %v4302
    %v4451 = vunpack.c.l.b16 %v4303
    %v4452 = vunpack.c.l.b16 %v4304
    %v4453 = vunpack.c.l.b16 %v4305
    %v4454 = vunpack.c.l.b16 %v4306
    %v4455 = vunpack.c.l.b16 %v4307
    %v4456 = vunpack.c.l.b16 %v4308
    %v4457 = vunpack.c.l.b16 %v4309
    %v4458 = vunpack.c.l.b16 %v4310
    %v4459 = vunpack.c.l.b16 %v4311
    %v4460 = vunpack.c.l.b16 %v4312
    %v4461 = vunpack.c.l.b16 %v4313
    %v4462 = vunpack.c.l.b16 %v4314
    %v4463 = vunpack.c.l.b16 %v4315
    %v4464 = vunpack.c.l.b16 %v4316
    %v4465 = vunpack.c.l.b16 %v4317
    %v4466 = vunpack.c.l.b16 %v4318
    %v4467 = vunpack.c.l.b16 %v4319
    %v4468 = vunpack.c.l.b16 %v4320
    %v4469 = vunpack.c.l.b16 %v4321
    %v4470 = vunpack.c.l.b16 %v4322
    %v4471 = vunpack.c.l.b16 %v4323
    %v4472 = vunpack.c.l.b16 %v4324
    %v4473 = vunpack.c.l.b16 %v4325
    %v4474 = vunpack.c.l.b16 %v4326
    %v4475 = vunpack.c.l.b16 %v4327
    %v4476 = vunpack.c.l.b16 %v4328
    %v4477 = vunpack.c.l.b16 %v4329
    %v4478 = vunpack.c.l.b16 %v4330
    %v4479 = vunpack.c.l.b16 %v4331
    %v4480 = vunpack.c.l.b16 %v4332
    %v4481 = vunpack.c.l.b16 %v4333
    %v4482 = vunpack.c.l.b16 %v4334
    %v4483 = vunpack.c.l.b16 %v4335
    %v4484 = vpack.c.b16 %v4413, %v4412
    %v4485 = vpack.c.b16 %v4415, %v4414
    %v4486 = vpack.c.b16 %v4417, %v4416
    %v4487 = vpack.c.b16 %v4419, %v4418
    %v4488 = vpack.c.b16 %v4421, %v4420
    %v4489 = vpack.c.b16 %v4423, %v4422
    %v4490 = vpack.c.b16 %v4425, %v4424
    %v4491 = vpack.c.b16 %v4427, %v4426
    %v4492 = vpack.c.b16 %v4429, %v4428
    %v4493 = vpack.c.b16 %v4431, %v4430
    %v4494 = vpack.c.b16 %v4433, %v4432
    %v4495 = vpack.c.b16 %v4435, %v4434
    %v4496 = vpack.c.b16 %v4437, %v4436
    %v4497 = vpack.c.b16 %v4439, %v4438
    %v4498 = vpack.c.b16 %v4441, %v4440
    %v4499 = vpack.c.b16 %v4443, %v4442
    %v4500 = vpack.c.b16 %v4445, %v4444
    %v4501 = vpack.c.b16 %v4447, %v4446
    %v4502 = vpack.c.b16 %v4449, %v4448
    %v4503 = vpack.c.b16 %v4451, %v4450
    %v4504 = vpack.c.b16 %v4453, %v4452
    %v4505 = vpack.c.b16 %v4455, %v4454
    %v4506 = vpack.c.b16 %v4457, %v4456
    %v4507 = vpack.c.b16 %v4459, %v4458
    %v4508 = vpack.c.b16 %v4461, %v4460
    %v4509 = vpack.c.b16 %v4463, %v4462
    %v4510 = vpack.c.b16 %v4465, %v4464
    %v4511 = vpack.c.b16 %v4467, %v4466
    %v4512 = vpack.c.b16 %v4469, %v4468
    %v4513 = vpack.c.b16 %v4471, %v4470
    %v4514 = vpack.c.b16 %v4473, %v4472
    %v4515 = vpack.c.b16 %v4475, %v4474
    %v4516 = vpack.c.b16 %v4477, %v4476
    %v4517 = vpack.c.b16 %v4479, %v4478
    %v4518 = vpack.c.b16 %v4481, %v4480
    %v4519 = vpack.c.b16 %v4483, %v4482
    %v4557 = vsel %vm1683, %v4228, 0
    %v4560 = vsel %vm1683, %v4233, 0
    %v4563 = vsel %vm1683, %v4238, 0
    %v4566 = vsel %vm1683, %v4243, 0
    %v4569 = vsel %vm1683, %v4248, 0
    %v4572 = vsel %vm1683, %v4253, 0
    %v4575 = vsel %vm1683, %v4258, 0
    %v4578 = vsel %vm1683, %v4263, 0
    %4580 = vmatpush.bf16.msra.mxu0 %v4491
    %4581 = vmatpush.bf16.msra.mxu0 %v4490
    %4582 = vmatpush.bf16.msra.mxu0 %v4489
    %4583 = vmatpush.bf16.msra.mxu0 %v4488
    %4584 = vmatpush.bf16.msra.mxu0 %v4487
    %4585 = vmatpush.bf16.msra.mxu0 %v4486
    %4586 = vmatpush.bf16.msra.mxu0 %v4485
    %4587 = vmatpush.bf16.msra.mxu0 %v4484
    %4588 = vmatmul.bf16.gmra.mxu0 %v4224
    %v4589 = vpop.f32.mrf.mxu0
    %v4590 = vadd.f32 %v4338, %v4589
    %v4591 = vpop.f32.mrf.mxu0
    %v4592 = vadd.f32 %v4338, %v4591
    %4593 = vmatmul.bf16.gmra.mxu0 %v4229
    %v4594 = vpop.f32.mrf.mxu0
    %v4595 = vadd.f32 %v4338, %v4594
    %v4596 = vpop.f32.mrf.mxu0
    %v4597 = vadd.f32 %v4338, %v4596
    %4598 = vmatmul.bf16.gmra.mxu0 %v4234
    %v4599 = vpop.f32.mrf.mxu0
    %v4600 = vadd.f32 %v4338, %v4599
    %v4601 = vpop.f32.mrf.mxu0
    %v4602 = vadd.f32 %v4338, %v4601
    %4603 = vmatmul.bf16.gmra.mxu0 %v4239
    %v4604 = vpop.f32.mrf.mxu0
    %v4605 = vadd.f32 %v4338, %v4604
    %v4606 = vpop.f32.mrf.mxu0
    %v4607 = vadd.f32 %v4338, %v4606
    %4608 = vmatmul.bf16.gmra.mxu0 %v4244
    %v4609 = vpop.f32.mrf.mxu0
    %v4610 = vadd.f32 %v4338, %v4609
    %v4611 = vpop.f32.mrf.mxu0
    %v4612 = vadd.f32 %v4338, %v4611
    %4613 = vmatmul.bf16.gmra.mxu0 %v4249
    %v4614 = vpop.f32.mrf.mxu0
    %v4615 = vadd.f32 %v4338, %v4614
    %v4616 = vpop.f32.mrf.mxu0
    %v4617 = vadd.f32 %v4338, %v4616
    %4618 = vmatmul.bf16.gmra.mxu0 %v4254
    %v4619 = vpop.f32.mrf.mxu0
    %v4620 = vadd.f32 %v4338, %v4619
    %v4621 = vpop.f32.mrf.mxu0
    %v4622 = vadd.f32 %v4338, %v4621
    %4623 = vmatmul.bf16.gmra.mxu0 %v4259
    %v4624 = vpop.f32.mrf.mxu0
    %v4625 = vadd.f32 %v4338, %v4624
    %v4626 = vpop.f32.mrf.mxu0
    %v4627 = vadd.f32 %v4338, %v4626
    %4628 = vdwg.mxu0
    %4629 = vmatpush.bf16.msra.mxu0 %v4499
    %4630 = vmatpush.bf16.msra.mxu0 %v4498
    %4631 = vmatpush.bf16.msra.mxu0 %v4497
    %4632 = vmatpush.bf16.msra.mxu0 %v4496
    %4633 = vmatpush.bf16.msra.mxu0 %v4495
    %4634 = vmatpush.bf16.msra.mxu0 %v4494
    %4635 = vmatpush.bf16.msra.mxu0 %v4493
    %4636 = vmatpush.bf16.msra.mxu0 %v4492
    %4637 = vmatmul.bf16.gmra.mxu0 %v4225
    %v4638 = vpop.f32.mrf.mxu0
    %v4639 = vadd.f32 %v4590, %v4638
    %v4640 = vpop.f32.mrf.mxu0
    %v4641 = vadd.f32 %v4592, %v4640
    %4642 = vmatmul.bf16.gmra.mxu0 %v4230
    %v4643 = vpop.f32.mrf.mxu0
    %v4644 = vadd.f32 %v4595, %v4643
    %v4645 = vpop.f32.mrf.mxu0
    %v4646 = vadd.f32 %v4597, %v4645
    %4647 = vmatmul.bf16.gmra.mxu0 %v4235
    %v4648 = vpop.f32.mrf.mxu0
    %v4649 = vadd.f32 %v4600, %v4648
    %v4650 = vpop.f32.mrf.mxu0
    %v4651 = vadd.f32 %v4602, %v4650
    %4652 = vmatmul.bf16.gmra.mxu0 %v4240
    %v4653 = vpop.f32.mrf.mxu0
    %v4654 = vadd.f32 %v4605, %v4653
    %v4655 = vpop.f32.mrf.mxu0
    %v4656 = vadd.f32 %v4607, %v4655
    %4657 = vmatmul.bf16.gmra.mxu0 %v4245
    %v4658 = vpop.f32.mrf.mxu0
    %v4659 = vadd.f32 %v4610, %v4658
    %v4660 = vpop.f32.mrf.mxu0
    %v4661 = vadd.f32 %v4612, %v4660
    %4662 = vmatmul.bf16.gmra.mxu0 %v4250
    %v4663 = vpop.f32.mrf.mxu0
    %v4664 = vadd.f32 %v4615, %v4663
    %v4665 = vpop.f32.mrf.mxu0
    %v4666 = vadd.f32 %v4617, %v4665
    %4667 = vmatmul.bf16.gmra.mxu0 %v4255
    %v4668 = vpop.f32.mrf.mxu0
    %v4669 = vadd.f32 %v4620, %v4668
    %v4670 = vpop.f32.mrf.mxu0
    %v4671 = vadd.f32 %v4622, %v4670
    %4672 = vmatmul.bf16.gmra.mxu0 %v4260
    %v4673 = vpop.f32.mrf.mxu0
    %v4674 = vadd.f32 %v4625, %v4673
    %v4675 = vpop.f32.mrf.mxu0
    %v4676 = vadd.f32 %v4627, %v4675
    %4677 = vdwg.mxu0
    %4678 = vmatpush.bf16.msra.mxu0 %v4507
    %4679 = vmatpush.bf16.msra.mxu0 %v4506
    %4680 = vmatpush.bf16.msra.mxu0 %v4505
    %4681 = vmatpush.bf16.msra.mxu0 %v4504
    %4682 = vmatpush.bf16.msra.mxu0 %v4503
    %4683 = vmatpush.bf16.msra.mxu0 %v4502
    %4684 = vmatpush.bf16.msra.mxu0 %v4501
    %4685 = vmatpush.bf16.msra.mxu0 %v4500
    %4686 = vmatmul.bf16.gmra.mxu0 %v4226
    %v4687 = vpop.f32.mrf.mxu0
    %v4688 = vadd.f32 %v4639, %v4687
    %v4689 = vpop.f32.mrf.mxu0
    %v4690 = vadd.f32 %v4641, %v4689
    %4691 = vmatmul.bf16.gmra.mxu0 %v4231
    %v4692 = vpop.f32.mrf.mxu0
    %v4693 = vadd.f32 %v4644, %v4692
    %v4694 = vpop.f32.mrf.mxu0
    %v4695 = vadd.f32 %v4646, %v4694
    %4696 = vmatmul.bf16.gmra.mxu0 %v4236
    %v4697 = vpop.f32.mrf.mxu0
    %v4698 = vadd.f32 %v4649, %v4697
    %v4699 = vpop.f32.mrf.mxu0
    %v4700 = vadd.f32 %v4651, %v4699
    %4701 = vmatmul.bf16.gmra.mxu0 %v4241
    %v4702 = vpop.f32.mrf.mxu0
    %v4703 = vadd.f32 %v4654, %v4702
    %v4704 = vpop.f32.mrf.mxu0
    %v4705 = vadd.f32 %v4656, %v4704
    %4706 = vmatmul.bf16.gmra.mxu0 %v4246
    %v4707 = vpop.f32.mrf.mxu0
    %v4708 = vadd.f32 %v4659, %v4707
    %v4709 = vpop.f32.mrf.mxu0
    %v4710 = vadd.f32 %v4661, %v4709
    %4711 = vmatmul.bf16.gmra.mxu0 %v4251
    %v4712 = vpop.f32.mrf.mxu0
    %v4713 = vadd.f32 %v4664, %v4712
    %v4714 = vpop.f32.mrf.mxu0
    %v4715 = vadd.f32 %v4666, %v4714
    %4716 = vmatmul.bf16.gmra.mxu0 %v4256
    %v4717 = vpop.f32.mrf.mxu0
    %v4718 = vadd.f32 %v4669, %v4717
    %v4719 = vpop.f32.mrf.mxu0
    %v4720 = vadd.f32 %v4671, %v4719
    %4721 = vmatmul.bf16.gmra.mxu0 %v4261
    %v4722 = vpop.f32.mrf.mxu0
    %v4723 = vadd.f32 %v4674, %v4722
    %v4724 = vpop.f32.mrf.mxu0
    %v4725 = vadd.f32 %v4676, %v4724
    %4726 = vdwg.mxu0
    %4727 = vmatpush.bf16.msra.mxu0 %v4515
    %4728 = vmatpush.bf16.msra.mxu0 %v4514
    %4729 = vmatpush.bf16.msra.mxu0 %v4513
    %4730 = vmatpush.bf16.msra.mxu0 %v4512
    %4731 = vmatpush.bf16.msra.mxu0 %v4511
    %4732 = vmatpush.bf16.msra.mxu0 %v4510
    %4733 = vmatpush.bf16.msra.mxu0 %v4509
    %4734 = vmatpush.bf16.msra.mxu0 %v4508
    %4735 = vmatmul.bf16.gmra.mxu0 %v4227
    %v4736 = vpop.f32.mrf.mxu0
    %v4737 = vadd.f32 %v4688, %v4736
    %v4738 = vpop.f32.mrf.mxu0
    %v4739 = vadd.f32 %v4690, %v4738
    %4740 = vmatmul.bf16.gmra.mxu0 %v4232
    %v4741 = vpop.f32.mrf.mxu0
    %v4742 = vadd.f32 %v4693, %v4741
    %v4743 = vpop.f32.mrf.mxu0
    %v4744 = vadd.f32 %v4695, %v4743
    %4745 = vmatmul.bf16.gmra.mxu0 %v4237
    %v4746 = vpop.f32.mrf.mxu0
    %v4747 = vadd.f32 %v4698, %v4746
    %v4748 = vpop.f32.mrf.mxu0
    %v4749 = vadd.f32 %v4700, %v4748
    %4750 = vmatmul.bf16.gmra.mxu0 %v4242
    %v4751 = vpop.f32.mrf.mxu0
    %v4752 = vadd.f32 %v4703, %v4751
    %v4753 = vpop.f32.mrf.mxu0
    %v4754 = vadd.f32 %v4705, %v4753
    %4755 = vmatmul.bf16.gmra.mxu0 %v4247
    %v4756 = vpop.f32.mrf.mxu0
    %v4757 = vadd.f32 %v4708, %v4756
    %v4758 = vpop.f32.mrf.mxu0
    %v4759 = vadd.f32 %v4710, %v4758
    %4760 = vmatmul.bf16.gmra.mxu0 %v4252
    %v4761 = vpop.f32.mrf.mxu0
    %v4762 = vadd.f32 %v4713, %v4761
    %v4763 = vpop.f32.mrf.mxu0
    %v4764 = vadd.f32 %v4715, %v4763
    %4765 = vmatmul.bf16.gmra.mxu0 %v4257
    %v4766 = vpop.f32.mrf.mxu0
    %v4767 = vadd.f32 %v4718, %v4766
    %v4768 = vpop.f32.mrf.mxu0
    %v4769 = vadd.f32 %v4720, %v4768
    %4770 = vmatmul.bf16.gmra.mxu0 %v4262
    %v4771 = vpop.f32.mrf.mxu0
    %v4772 = vadd.f32 %v4723, %v4771
    %v4773 = vpop.f32.mrf.mxu0
    %v4774 = vadd.f32 %v4725, %v4773
    %4775 = vdwg.mxu0
    %4776 = vmatpush.bf16.msra.mxu0 0
    %4777 = vmatpush.bf16.msra.mxu0 0
    %4778 = vmatpush.bf16.msra.mxu0 0
    %4779 = vmatpush.bf16.msra.mxu0 0
    %4780 = vmatpush.bf16.msra.mxu0 %v4519
    %4781 = vmatpush.bf16.msra.mxu0 %v4518
    %4782 = vmatpush.bf16.msra.mxu0 %v4517
    %4783 = vmatpush.bf16.msra.mxu0 %v4516
    %4784 = vmatmul.bf16.gmra.mxu0 %v4557
    %v4785 = vpop.f32.mrf.mxu0
    %v4786 = vadd.f32 %v4737, %v4785
    %v4787 = vpop.f32.mrf.mxu0
    %v4788 = vadd.f32 %v4739, %v4787
    %4789 = vmatmul.bf16.gmra.mxu0 %v4560
    %v4790 = vpop.f32.mrf.mxu0
    %v4791 = vadd.f32 %v4742, %v4790
    %v4792 = vpop.f32.mrf.mxu0
    %v4793 = vadd.f32 %v4744, %v4792
    %4794 = vmatmul.bf16.gmra.mxu0 %v4563
    %v4795 = vpop.f32.mrf.mxu0
    %v4796 = vadd.f32 %v4747, %v4795
    %v4797 = vpop.f32.mrf.mxu0
    %v4798 = vadd.f32 %v4749, %v4797
    %4799 = vmatmul.bf16.gmra.mxu0 %v4566
    %v4800 = vpop.f32.mrf.mxu0
    %v4801 = vadd.f32 %v4752, %v4800
    %v4802 = vpop.f32.mrf.mxu0
    %v4803 = vadd.f32 %v4754, %v4802
    %4804 = vmatmul.bf16.gmra.mxu0 %v4569
    %v4805 = vpop.f32.mrf.mxu0
    %v4806 = vadd.f32 %v4757, %v4805
    %v4807 = vpop.f32.mrf.mxu0
    %v4808 = vadd.f32 %v4759, %v4807
    %4809 = vmatmul.bf16.gmra.mxu0 %v4572
    %v4810 = vpop.f32.mrf.mxu0
    %v4811 = vadd.f32 %v4762, %v4810
    %v4812 = vpop.f32.mrf.mxu0
    %v4813 = vadd.f32 %v4764, %v4812
    %4814 = vmatmul.bf16.gmra.mxu0 %v4575
    %v4815 = vpop.f32.mrf.mxu0
    %v4816 = vadd.f32 %v4767, %v4815
    %v4817 = vpop.f32.mrf.mxu0
    %v4818 = vadd.f32 %v4769, %v4817
    %4819 = vmatmul.bf16.gmra.mxu0 %v4578
    %v4820 = vpop.f32.mrf.mxu0
    %v4821 = vadd.f32 %v4772, %v4820
    %v4822 = vpop.f32.mrf.mxu0
    %v4823 = vadd.f32 %v4774, %v4822
    %4824 = vdwg.mxu0
    %v4825 = vmax.f32 %v4786, 0.0
    %v4826 = vmax.f32 %v4788, 0.0
    %v4827 = vmax.f32 %v4791, 0.0
    %v4828 = vmax.f32 %v4793, 0.0
    %v4829 = vmax.f32 %v4796, 0.0
    %v4830 = vmax.f32 %v4798, 0.0
    %v4831 = vmax.f32 %v4801, 0.0
    %v4832 = vmax.f32 %v4803, 0.0
    %v4833 = vmax.f32 %v4806, 0.0
    %v4834 = vmax.f32 %v4808, 0.0
    %v4835 = vmax.f32 %v4811, 0.0
    %v4836 = vmax.f32 %v4813, 0.0
    %v4837 = vmax.f32 %v4816, 0.0
    %v4838 = vmax.f32 %v4818, 0.0
    %v4839 = vmax.f32 %v4821, 0.0
    %v4840 = vmax.f32 %v4823, 0.0
    %4841 = vst.msk [vmem:[#allocation4] sm:$0xff] %vm1649, 0.0
    %vm4842 = vcmask 779264
    %4843 = vst.msk [vmem:[#allocation4 + $0x8] sm:$0x3] %vm4842, 0.0
    %4844 = vst.msk [vmem:[#allocation4 + $0x10] sm:$0xff] %vm1649, 0.0
    %4845 = vst.msk [vmem:[#allocation4 + $0x18] sm:$0x3] %vm4842, 0.0
    %4846 = vst.msk [vmem:[#allocation4 + $0x20] sm:$0xff] %vm1649, 0.0
    %4847 = vst.msk [vmem:[#allocation4 + $0x28] sm:$0x3] %vm4842, 0.0
    %4848 = vst.msk [vmem:[#allocation4 + $0x30] sm:$0xff] %vm1649, 0.0
    %4849 = vst.msk [vmem:[#allocation4 + $0x38] sm:$0x3] %vm4842, 0.0
    %4850 = vst.msk [vmem:[#allocation4 + $0x40] sm:$0xff] %vm1649, 0.0
    %4851 = vst.msk [vmem:[#allocation4 + $0x48] sm:$0x3] %vm4842, 0.0
    %4852 = vst.msk [vmem:[#allocation4 + $0x50] sm:$0xff] %vm1649, 0.0
    %4853 = vst.msk [vmem:[#allocation4 + $0x58] sm:$0x3] %vm4842, 0.0
    %4854 = vst.msk [vmem:[#allocation4 + $0x60] sm:$0xff] %vm1649, 0.0
    %4855 = vst.msk [vmem:[#allocation4 + $0x68] sm:$0x3] %vm4842, 0.0
    %4856 = vst.msk [vmem:[#allocation4 + $0x70] sm:$0xff] %vm1649, 0.0
    %4857 = vst.msk [vmem:[#allocation4 + $0x78] sm:$0x3] %vm4842, 0.0
    %4858 = vst.msk [vmem:[#allocation4 + $0x80] sm:$0xff] %vm1649, 0.0
    %4859 = vst.msk [vmem:[#allocation4 + $0x88] sm:$0x3] %vm4842, 0.0
    %4860 = vst.msk [vmem:[#allocation4 + $0x90] sm:$0xff] %vm1649, 0.0
    %4861 = vst.msk [vmem:[#allocation4 + $0x98] sm:$0x3] %vm4842, 0.0
    %4862 = vst.msk [vmem:[#allocation4 + $0xa0] sm:$0xff] %vm1649, 0.0
    %4863 = vst.msk [vmem:[#allocation4 + $0xa8] sm:$0x3] %vm4842, 0.0
    %4864 = vst.msk [vmem:[#allocation4 + $0xb0] sm:$0xff] %vm1649, 0.0
    %4865 = vst.msk [vmem:[#allocation4 + $0xb8] sm:$0x3] %vm4842, 0.0
    %4866 = vst.msk [vmem:[#allocation4 + $0xc0] sm:$0xff] %vm1649, 0.0
    %4867 = vst.msk [vmem:[#allocation4 + $0xc8] sm:$0x3] %vm4842, 0.0
    %4868 = vst.msk [vmem:[#allocation4 + $0xd0] sm:$0xff] %vm1649, 0.0
    %4869 = vst.msk [vmem:[#allocation4 + $0xd8] sm:$0x3] %vm4842, 0.0
    %4870 = vst.msk [vmem:[#allocation4 + $0xe0] sm:$0xff] %vm1649, 0.0
    %4871 = vst.msk [vmem:[#allocation4 + $0xe8] sm:$0x3] %vm4842, 0.0
    %4872 = vst.msk [vmem:[#allocation4 + $0xf0] sm:$0xff] %vm1649, 0.0
    %4873 = vst.msk [vmem:[#allocation4 + $0xf8] sm:$0x3] %vm4842, 0.0
    %4874 = vst.msk [vmem:[#allocation4 + $0x100] sm:$0xff] %vm1649, 0.0
    %4875 = vst.msk [vmem:[#allocation4 + $0x108] sm:$0x3] %vm4842, 0.0
    %4876 = vst.msk [vmem:[#allocation4 + $0x110] sm:$0xff] %vm1649, 0.0
    %4877 = vst.msk [vmem:[#allocation4 + $0x118] sm:$0x3] %vm4842, 0.0
    %4878 = vst.msk [vmem:[#allocation4 + $0x120] sm:$0xff] %vm1649, 0.0
    %4879 = vst.msk [vmem:[#allocation4 + $0x128] sm:$0x3] %vm4842, 0.0
    %4880 = vst.msk [vmem:[#allocation4 + $0x130] sm:$0xff] %vm1649, 0.0
    %4881 = vst.msk [vmem:[#allocation4 + $0x138] sm:$0x3] %vm4842, 0.0
    %s4882 = scalar_lea.vmem [#allocation4], 16
    %4883 = vst.msk [vmem:[%s4882 + $0x1] sm:$0xff] %vm1649, %v4825
    %4884 = vst.msk [vmem:[%s4882 + $0x11] sm:$0xff] %vm1649, %v4826
    %4885 = vst.msk [vmem:[%s4882 + $0x21] sm:$0xff] %vm1649, %v4827
    %4886 = vst.msk [vmem:[%s4882 + $0x31] sm:$0xff] %vm1649, %v4828
    %4887 = vst.msk [vmem:[%s4882 + $0x41] sm:$0xff] %vm1649, %v4829
    %4888 = vst.msk [vmem:[%s4882 + $0x51] sm:$0xff] %vm1649, %v4830
    %4889 = vst.msk [vmem:[%s4882 + $0x61] sm:$0xff] %vm1649, %v4831
    %4890 = vst.msk [vmem:[%s4882 + $0x71] sm:$0xff] %vm1649, %v4832
    %4891 = vst.msk [vmem:[%s4882 + $0xa1] sm:$0xff] %vm1649, %v4833
    %4892 = vst.msk [vmem:[%s4882 + $0xb1] sm:$0xff] %vm1649, %v4834
    %4893 = vst.msk [vmem:[%s4882 + $0xc1] sm:$0xff] %vm1649, %v4835
    %4894 = vst.msk [vmem:[%s4882 + $0xd1] sm:$0xff] %vm1649, %v4836
    %4895 = vst.msk [vmem:[%s4882 + $0xe1] sm:$0xff] %vm1649, %v4837
    %4896 = vst.msk [vmem:[%s4882 + $0xf1] sm:$0xff] %vm1649, %v4838
    %4897 = vst.msk [vmem:[%s4882 + $0x101] sm:$0xff] %vm1649, %v4839
    %4898 = vst.msk [vmem:[%s4882 + $0x111] sm:$0xff] %vm1649, %v4840
    %v4899 = vld [vmem:[#allocation4] sm:$0xff]
    %v4900 = vld [vmem:[#allocation4 + $0x10] sm:$0xff]
    %v4901 = vld [vmem:[#allocation4 + $0x20] sm:$0xff]
    %v4902 = vld [vmem:[#allocation4 + $0x30] sm:$0xff]
    %v4903 = vld [vmem:[#allocation4 + $0x40] sm:$0xff]
    %v4904 = vld [vmem:[#allocation4 + $0x50] sm:$0xff]
    %v4905 = vld [vmem:[#allocation4 + $0x60] sm:$0xff]
    %v4906 = vld [vmem:[#allocation4 + $0x70] sm:$0xff]
    %v4907 = vld [vmem:[#allocation4 + $0xa0] sm:$0xff]
    %v4908 = vld [vmem:[#allocation4 + $0xb0] sm:$0xff]
    %v4909 = vld [vmem:[#allocation4 + $0xc0] sm:$0xff]
    %v4910 = vld [vmem:[#allocation4 + $0xd0] sm:$0xff]
    %v4911 = vld [vmem:[#allocation4 + $0xe0] sm:$0xff]
    %v4912 = vld [vmem:[#allocation4 + $0xf0] sm:$0xff]
    %v4913 = vld [vmem:[#allocation4 + $0x100] sm:$0xff]
    %v4914 = vld [vmem:[#allocation4 + $0x110] sm:$0xff]
    %v4915 = vld [vmem:[#allocation4 + $0x1] sm:$0xff]
    %v4916 = vld [vmem:[#allocation4 + $0x11] sm:$0xff]
    %v4917 = vld [vmem:[#allocation4 + $0x21] sm:$0xff]
    %v4918 = vld [vmem:[#allocation4 + $0x31] sm:$0xff]
    %v4919 = vld [vmem:[#allocation4 + $0x41] sm:$0xff]
    %v4920 = vld [vmem:[#allocation4 + $0x51] sm:$0xff]
    %v4921 = vld [vmem:[#allocation4 + $0x61] sm:$0xff]
    %v4922 = vld [vmem:[#allocation4 + $0x71] sm:$0xff]
    %v4923 = vld [vmem:[#allocation4 + $0xa1] sm:$0xff]
    %v4924 = vld [vmem:[#allocation4 + $0xb1] sm:$0xff]
    %v4925 = vld [vmem:[#allocation4 + $0xc1] sm:$0xff]
    %v4926 = vld [vmem:[#allocation4 + $0xd1] sm:$0xff]
    %v4927 = vld [vmem:[#allocation4 + $0xe1] sm:$0xff]
    %v4928 = vld [vmem:[#allocation4 + $0xf1] sm:$0xff]
    %v4929 = vld [vmem:[#allocation4 + $0x101] sm:$0xff]
    %v4930 = vld [vmem:[#allocation4 + $0x111] sm:$0xff]
    %v4931 = vld [vmem:[#allocation4 + $0x2] sm:$0xff]
    %v4932 = vld [vmem:[#allocation4 + $0x12] sm:$0xff]
    %v4933 = vld [vmem:[#allocation4 + $0x22] sm:$0xff]
    %v4934 = vld [vmem:[#allocation4 + $0x32] sm:$0xff]
    %v4935 = vld [vmem:[#allocation4 + $0x42] sm:$0xff]
    %v4936 = vld [vmem:[#allocation4 + $0x52] sm:$0xff]
    %v4937 = vld [vmem:[#allocation4 + $0x62] sm:$0xff]
    %v4938 = vld [vmem:[#allocation4 + $0x72] sm:$0xff]
    %v4939 = vld [vmem:[#allocation4 + $0xa2] sm:$0xff]
    %v4940 = vld [vmem:[#allocation4 + $0xb2] sm:$0xff]
    %v4941 = vld [vmem:[#allocation4 + $0xc2] sm:$0xff]
    %v4942 = vld [vmem:[#allocation4 + $0xd2] sm:$0xff]
    %v4943 = vld [vmem:[#allocation4 + $0xe2] sm:$0xff]
    %v4944 = vld [vmem:[#allocation4 + $0xf2] sm:$0xff]
    %v4945 = vld [vmem:[#allocation4 + $0x102] sm:$0xff]
    %v4946 = vld [vmem:[#allocation4 + $0x112] sm:$0xff]
    %v4947 = vld [vmem:[%s4882] sm:$0xff]
    %v4948 = vld [vmem:[%s4882 + $0x10] sm:$0xff]
    %v4949 = vld [vmem:[%s4882 + $0x20] sm:$0xff]
    %v4950 = vld [vmem:[%s4882 + $0x30] sm:$0xff]
    %v4951 = vld [vmem:[%s4882 + $0x40] sm:$0xff]
    %v4952 = vld [vmem:[%s4882 + $0x50] sm:$0xff]
    %v4953 = vld [vmem:[%s4882 + $0x60] sm:$0xff]
    %v4954 = vld [vmem:[%s4882 + $0x70] sm:$0xff]
    %v4955 = vld [vmem:[%s4882 + $0xa0] sm:$0xff]
    %v4956 = vld [vmem:[%s4882 + $0xb0] sm:$0xff]
    %v4957 = vld [vmem:[%s4882 + $0xc0] sm:$0xff]
    %v4958 = vld [vmem:[%s4882 + $0xd0] sm:$0xff]
    %v4959 = vld [vmem:[%s4882 + $0xe0] sm:$0xff]
    %v4960 = vld [vmem:[%s4882 + $0xf0] sm:$0xff]
    %v4961 = vld [vmem:[%s4882 + $0x100] sm:$0xff]
    %v4962 = vld [vmem:[%s4882 + $0x110] sm:$0xff]
    %v4963 = vld [vmem:[%s4882 + $0x1] sm:$0xff]
    %v4964 = vld [vmem:[%s4882 + $0x11] sm:$0xff]
    %v4965 = vld [vmem:[%s4882 + $0x21] sm:$0xff]
    %v4966 = vld [vmem:[%s4882 + $0x31] sm:$0xff]
    %v4967 = vld [vmem:[%s4882 + $0x41] sm:$0xff]
    %v4968 = vld [vmem:[%s4882 + $0x51] sm:$0xff]
    %v4969 = vld [vmem:[%s4882 + $0x61] sm:$0xff]
    %v4970 = vld [vmem:[%s4882 + $0x71] sm:$0xff]
    %v4971 = vld [vmem:[%s4882 + $0xa1] sm:$0xff]
    %v4972 = vld [vmem:[%s4882 + $0xb1] sm:$0xff]
    %v4973 = vld [vmem:[%s4882 + $0xc1] sm:$0xff]
    %v4974 = vld [vmem:[%s4882 + $0xd1] sm:$0xff]
    %v4975 = vld [vmem:[%s4882 + $0xe1] sm:$0xff]
    %v4976 = vld [vmem:[%s4882 + $0xf1] sm:$0xff]
    %v4977 = vld [vmem:[%s4882 + $0x101] sm:$0xff]
    %v4978 = vld [vmem:[%s4882 + $0x111] sm:$0xff]
    %v4979 = vld [vmem:[%s4882 + $0x2] sm:$0xff]
    %v4980 = vld [vmem:[%s4882 + $0x12] sm:$0xff]
    %v4981 = vld [vmem:[%s4882 + $0x22] sm:$0xff]
    %v4982 = vld [vmem:[%s4882 + $0x32] sm:$0xff]
    %v4983 = vld [vmem:[%s4882 + $0x42] sm:$0xff]
    %v4984 = vld [vmem:[%s4882 + $0x52] sm:$0xff]
    %v4985 = vld [vmem:[%s4882 + $0x62] sm:$0xff]
    %v4986 = vld [vmem:[%s4882 + $0x72] sm:$0xff]
    %v4987 = vld [vmem:[%s4882 + $0xa2] sm:$0xff]
    %v4988 = vld [vmem:[%s4882 + $0xb2] sm:$0xff]
    %v4989 = vld [vmem:[%s4882 + $0xc2] sm:$0xff]
    %v4990 = vld [vmem:[%s4882 + $0xd2] sm:$0xff]
    %v4991 = vld [vmem:[%s4882 + $0xe2] sm:$0xff]
    %v4992 = vld [vmem:[%s4882 + $0xf2] sm:$0xff]
    %v4993 = vld [vmem:[%s4882 + $0x102] sm:$0xff]
    %v4994 = vld [vmem:[%s4882 + $0x112] sm:$0xff]
    %s4995 = scalar_lea.vmem [#allocation4], 32
    %v4996 = vld [vmem:[%s4995] sm:$0xff]
    %v4997 = vld [vmem:[%s4995 + $0x10] sm:$0xff]
    %v4998 = vld [vmem:[%s4995 + $0x20] sm:$0xff]
    %v4999 = vld [vmem:[%s4995 + $0x30] sm:$0xff]
    %v5000 = vld [vmem:[%s4995 + $0x40] sm:$0xff]
    %v5001 = vld [vmem:[%s4995 + $0x50] sm:$0xff]
    %v5002 = vld [vmem:[%s4995 + $0x60] sm:$0xff]
    %v5003 = vld [vmem:[%s4995 + $0x70] sm:$0xff]
    %v5004 = vld [vmem:[%s4995 + $0xa0] sm:$0xff]
    %v5005 = vld [vmem:[%s4995 + $0xb0] sm:$0xff]
    %v5006 = vld [vmem:[%s4995 + $0xc0] sm:$0xff]
    %v5007 = vld [vmem:[%s4995 + $0xd0] sm:$0xff]
    %v5008 = vld [vmem:[%s4995 + $0xe0] sm:$0xff]
    %v5009 = vld [vmem:[%s4995 + $0xf0] sm:$0xff]
    %v5010 = vld [vmem:[%s4995 + $0x100] sm:$0xff]
    %v5011 = vld [vmem:[%s4995 + $0x110] sm:$0xff]
    %v5012 = vld [vmem:[%s4995 + $0x1] sm:$0xff]
    %v5013 = vld [vmem:[%s4995 + $0x11] sm:$0xff]
    %v5014 = vld [vmem:[%s4995 + $0x21] sm:$0xff]
    %v5015 = vld [vmem:[%s4995 + $0x31] sm:$0xff]
    %v5016 = vld [vmem:[%s4995 + $0x41] sm:$0xff]
    %v5017 = vld [vmem:[%s4995 + $0x51] sm:$0xff]
    %v5018 = vld [vmem:[%s4995 + $0x61] sm:$0xff]
    %v5019 = vld [vmem:[%s4995 + $0x71] sm:$0xff]
    %v5020 = vld [vmem:[%s4995 + $0xa1] sm:$0xff]
    %v5021 = vld [vmem:[%s4995 + $0xb1] sm:$0xff]
    %v5022 = vld [vmem:[%s4995 + $0xc1] sm:$0xff]
    %v5023 = vld [vmem:[%s4995 + $0xd1] sm:$0xff]
    %v5024 = vld [vmem:[%s4995 + $0xe1] sm:$0xff]
    %v5025 = vld [vmem:[%s4995 + $0xf1] sm:$0xff]
    %v5026 = vld [vmem:[%s4995 + $0x101] sm:$0xff]
    %v5027 = vld [vmem:[%s4995 + $0x111] sm:$0xff]
    %v5028 = vld [vmem:[%s4995 + $0x2] sm:$0xff]
    %v5029 = vld [vmem:[%s4995 + $0x12] sm:$0xff]
    %v5030 = vld [vmem:[%s4995 + $0x22] sm:$0xff]
    %v5031 = vld [vmem:[%s4995 + $0x32] sm:$0xff]
    %v5032 = vld [vmem:[%s4995 + $0x42] sm:$0xff]
    %v5033 = vld [vmem:[%s4995 + $0x52] sm:$0xff]
    %v5034 = vld [vmem:[%s4995 + $0x62] sm:$0xff]
    %v5035 = vld [vmem:[%s4995 + $0x72] sm:$0xff]
    %v5036 = vld [vmem:[%s4995 + $0xa2] sm:$0xff]
    %v5037 = vld [vmem:[%s4995 + $0xb2] sm:$0xff]
    %v5038 = vld [vmem:[%s4995 + $0xc2] sm:$0xff]
    %v5039 = vld [vmem:[%s4995 + $0xd2] sm:$0xff]
    %v5040 = vld [vmem:[%s4995 + $0xe2] sm:$0xff]
    %v5041 = vld [vmem:[%s4995 + $0xf2] sm:$0xff]
    %v5042 = vld [vmem:[%s4995 + $0x102] sm:$0xff]
    %v5043 = vld [vmem:[%s4995 + $0x112] sm:$0xff]
    %5060 = vrot.lane.b32.xlu0 %v4915, 96
    %v5061 = vpop.permute.xlu0 %5060
    %5062 = vrot.lane.b32.xlu0 %v4916, 96
    %v5063 = vpop.permute.xlu0 %5062
    %5064 = vrot.lane.b32.xlu0 %v4917, 96
    %v5065 = vpop.permute.xlu0 %5064
    %5066 = vrot.lane.b32.xlu0 %v4918, 96
    %v5067 = vpop.permute.xlu0 %5066
    %5068 = vrot.lane.b32.xlu0 %v4919, 96
    %v5069 = vpop.permute.xlu0 %5068
    %5070 = vrot.lane.b32.xlu0 %v4920, 96
    %v5071 = vpop.permute.xlu0 %5070
    %5072 = vrot.lane.b32.xlu0 %v4921, 96
    %v5073 = vpop.permute.xlu0 %5072
    %5074 = vrot.lane.b32.xlu0 %v4922, 96
    %v5075 = vpop.permute.xlu0 %5074
    %5076 = vrot.lane.b32.xlu0 %v4923, 96
    %v5077 = vpop.permute.xlu0 %5076
    %5078 = vrot.lane.b32.xlu0 %v4924, 96
    %v5079 = vpop.permute.xlu0 %5078
    %5080 = vrot.lane.b32.xlu0 %v4925, 96
    %v5081 = vpop.permute.xlu0 %5080
    %5082 = vrot.lane.b32.xlu0 %v4926, 96
    %v5083 = vpop.permute.xlu0 %5082
    %5084 = vrot.lane.b32.xlu0 %v4927, 96
    %v5085 = vpop.permute.xlu0 %5084
    %5086 = vrot.lane.b32.xlu0 %v4928, 96
    %v5087 = vpop.permute.xlu0 %5086
    %5088 = vrot.lane.b32.xlu0 %v4929, 96
    %v5089 = vpop.permute.xlu0 %5088
    %5090 = vrot.lane.b32.xlu0 %v4930, 96
    %v5091 = vpop.permute.xlu0 %5090
    %5124 = vrot.lane.b32.xlu0 %v4931, 64
    %v5125 = vpop.permute.xlu0 %5124
    %5126 = vrot.lane.b32.xlu0 %v4932, 64
    %v5127 = vpop.permute.xlu0 %5126
    %5128 = vrot.lane.b32.xlu0 %v4933, 64
    %v5129 = vpop.permute.xlu0 %5128
    %5130 = vrot.lane.b32.xlu0 %v4934, 64
    %v5131 = vpop.permute.xlu0 %5130
    %5132 = vrot.lane.b32.xlu0 %v4935, 64
    %v5133 = vpop.permute.xlu0 %5132
    %5134 = vrot.lane.b32.xlu0 %v4936, 64
    %v5135 = vpop.permute.xlu0 %5134
    %5136 = vrot.lane.b32.xlu0 %v4937, 64
    %v5137 = vpop.permute.xlu0 %5136
    %5138 = vrot.lane.b32.xlu0 %v4938, 64
    %v5139 = vpop.permute.xlu0 %5138
    %5140 = vrot.lane.b32.xlu0 %v4939, 64
    %v5141 = vpop.permute.xlu0 %5140
    %5142 = vrot.lane.b32.xlu0 %v4940, 64
    %v5143 = vpop.permute.xlu0 %5142
    %5144 = vrot.lane.b32.xlu0 %v4941, 64
    %v5145 = vpop.permute.xlu0 %5144
    %5146 = vrot.lane.b32.xlu0 %v4942, 64
    %v5147 = vpop.permute.xlu0 %5146
    %5148 = vrot.lane.b32.xlu0 %v4943, 64
    %v5149 = vpop.permute.xlu0 %5148
    %5150 = vrot.lane.b32.xlu0 %v4944, 64
    %v5151 = vpop.permute.xlu0 %5150
    %5152 = vrot.lane.b32.xlu0 %v4945, 64
    %v5153 = vpop.permute.xlu0 %5152
    %5154 = vrot.lane.b32.xlu0 %v4946, 64
    %v5155 = vpop.permute.xlu0 %5154
    %5188 = vrot.lane.b32.xlu0 %v4947, 32
    %v5189 = vpop.permute.xlu0 %5188
    %5190 = vrot.lane.b32.xlu0 %v4948, 32
    %v5191 = vpop.permute.xlu0 %5190
    %5192 = vrot.lane.b32.xlu0 %v4949, 32
    %v5193 = vpop.permute.xlu0 %5192
    %5194 = vrot.lane.b32.xlu0 %v4950, 32
    %v5195 = vpop.permute.xlu0 %5194
    %5196 = vrot.lane.b32.xlu0 %v4951, 32
    %v5197 = vpop.permute.xlu0 %5196
    %5198 = vrot.lane.b32.xlu0 %v4952, 32
    %v5199 = vpop.permute.xlu0 %5198
    %5200 = vrot.lane.b32.xlu0 %v4953, 32
    %v5201 = vpop.permute.xlu0 %5200
    %5202 = vrot.lane.b32.xlu0 %v4954, 32
    %v5203 = vpop.permute.xlu0 %5202
    %5204 = vrot.lane.b32.xlu0 %v4955, 32
    %v5205 = vpop.permute.xlu0 %5204
    %5206 = vrot.lane.b32.xlu0 %v4956, 32
    %v5207 = vpop.permute.xlu0 %5206
    %5208 = vrot.lane.b32.xlu0 %v4957, 32
    %v5209 = vpop.permute.xlu0 %5208
    %5210 = vrot.lane.b32.xlu0 %v4958, 32
    %v5211 = vpop.permute.xlu0 %5210
    %5212 = vrot.lane.b32.xlu0 %v4959, 32
    %v5213 = vpop.permute.xlu0 %5212
    %5214 = vrot.lane.b32.xlu0 %v4960, 32
    %v5215 = vpop.permute.xlu0 %5214
    %5216 = vrot.lane.b32.xlu0 %v4961, 32
    %v5217 = vpop.permute.xlu0 %5216
    %5218 = vrot.lane.b32.xlu0 %v4962, 32
    %v5219 = vpop.permute.xlu0 %5218
    %5252 = vrot.lane.b32.xlu0 %v4979, 96
    %v5253 = vpop.permute.xlu0 %5252
    %5254 = vrot.lane.b32.xlu0 %v4980, 96
    %v5255 = vpop.permute.xlu0 %5254
    %5256 = vrot.lane.b32.xlu0 %v4981, 96
    %v5257 = vpop.permute.xlu0 %5256
    %5258 = vrot.lane.b32.xlu0 %v4982, 96
    %v5259 = vpop.permute.xlu0 %5258
    %5260 = vrot.lane.b32.xlu0 %v4983, 96
    %v5261 = vpop.permute.xlu0 %5260
    %5262 = vrot.lane.b32.xlu0 %v4984, 96
    %v5263 = vpop.permute.xlu0 %5262
    %5264 = vrot.lane.b32.xlu0 %v4985, 96
    %v5265 = vpop.permute.xlu0 %5264
    %5266 = vrot.lane.b32.xlu0 %v4986, 96
    %v5267 = vpop.permute.xlu0 %5266
    %5268 = vrot.lane.b32.xlu0 %v4987, 96
    %v5269 = vpop.permute.xlu0 %5268
    %5270 = vrot.lane.b32.xlu0 %v4988, 96
    %v5271 = vpop.permute.xlu0 %5270
    %5272 = vrot.lane.b32.xlu0 %v4989, 96
    %v5273 = vpop.permute.xlu0 %5272
    %5274 = vrot.lane.b32.xlu0 %v4990, 96
    %v5275 = vpop.permute.xlu0 %5274
    %5276 = vrot.lane.b32.xlu0 %v4991, 96
    %v5277 = vpop.permute.xlu0 %5276
    %5278 = vrot.lane.b32.xlu0 %v4992, 96
    %v5279 = vpop.permute.xlu0 %5278
    %5280 = vrot.lane.b32.xlu0 %v4993, 96
    %v5281 = vpop.permute.xlu0 %5280
    %5282 = vrot.lane.b32.xlu0 %v4994, 96
    %v5283 = vpop.permute.xlu0 %5282
    %5316 = vrot.lane.b32.xlu0 %v4996, 64
    %v5317 = vpop.permute.xlu0 %5316
    %5318 = vrot.lane.b32.xlu0 %v4997, 64
    %v5319 = vpop.permute.xlu0 %5318
    %5320 = vrot.lane.b32.xlu0 %v4998, 64
    %v5321 = vpop.permute.xlu0 %5320
    %5322 = vrot.lane.b32.xlu0 %v4999, 64
    %v5323 = vpop.permute.xlu0 %5322
    %5324 = vrot.lane.b32.xlu0 %v5000, 64
    %v5325 = vpop.permute.xlu0 %5324
    %5326 = vrot.lane.b32.xlu0 %v5001, 64
    %v5327 = vpop.permute.xlu0 %5326
    %5328 = vrot.lane.b32.xlu0 %v5002, 64
    %v5329 = vpop.permute.xlu0 %5328
    %5330 = vrot.lane.b32.xlu0 %v5003, 64
    %v5331 = vpop.permute.xlu0 %5330
    %5332 = vrot.lane.b32.xlu0 %v5004, 64
    %v5333 = vpop.permute.xlu0 %5332
    %5334 = vrot.lane.b32.xlu0 %v5005, 64
    %v5335 = vpop.permute.xlu0 %5334
    %5336 = vrot.lane.b32.xlu0 %v5006, 64
    %v5337 = vpop.permute.xlu0 %5336
    %5338 = vrot.lane.b32.xlu0 %v5007, 64
    %v5339 = vpop.permute.xlu0 %5338
    %5340 = vrot.lane.b32.xlu0 %v5008, 64
    %v5341 = vpop.permute.xlu0 %5340
    %5342 = vrot.lane.b32.xlu0 %v5009, 64
    %v5343 = vpop.permute.xlu0 %5342
    %5344 = vrot.lane.b32.xlu0 %v5010, 64
    %v5345 = vpop.permute.xlu0 %5344
    %5346 = vrot.lane.b32.xlu0 %v5011, 64
    %v5347 = vpop.permute.xlu0 %5346
    %5380 = vrot.lane.b32.xlu0 %v5012, 32
    %v5381 = vpop.permute.xlu0 %5380
    %5382 = vrot.lane.b32.xlu0 %v5013, 32
    %v5383 = vpop.permute.xlu0 %5382
    %5384 = vrot.lane.b32.xlu0 %v5014, 32
    %v5385 = vpop.permute.xlu0 %5384
    %5386 = vrot.lane.b32.xlu0 %v5015, 32
    %v5387 = vpop.permute.xlu0 %5386
    %5388 = vrot.lane.b32.xlu0 %v5016, 32
    %v5389 = vpop.permute.xlu0 %5388
    %5390 = vrot.lane.b32.xlu0 %v5017, 32
    %v5391 = vpop.permute.xlu0 %5390
    %5392 = vrot.lane.b32.xlu0 %v5018, 32
    %v5393 = vpop.permute.xlu0 %5392
    %5394 = vrot.lane.b32.xlu0 %v5019, 32
    %v5395 = vpop.permute.xlu0 %5394
    %5396 = vrot.lane.b32.xlu0 %v5020, 32
    %v5397 = vpop.permute.xlu0 %5396
    %5398 = vrot.lane.b32.xlu0 %v5021, 32
    %v5399 = vpop.permute.xlu0 %5398
    %5400 = vrot.lane.b32.xlu0 %v5022, 32
    %v5401 = vpop.permute.xlu0 %5400
    %5402 = vrot.lane.b32.xlu0 %v5023, 32
    %v5403 = vpop.permute.xlu0 %5402
    %5404 = vrot.lane.b32.xlu0 %v5024, 32
    %v5405 = vpop.permute.xlu0 %5404
    %5406 = vrot.lane.b32.xlu0 %v5025, 32
    %v5407 = vpop.permute.xlu0 %5406
    %5408 = vrot.lane.b32.xlu0 %v5026, 32
    %v5409 = vpop.permute.xlu0 %5408
    %5410 = vrot.lane.b32.xlu0 %v5027, 32
    %v5411 = vpop.permute.xlu0 %5410
    %v5428 = vsel %vm1649, %v4899, %v5061
    %v5429 = vsel %vm1649, %v4900, %v5063
    %v5430 = vsel %vm1649, %v4901, %v5065
    %v5431 = vsel %vm1649, %v4902, %v5067
    %v5432 = vsel %vm1649, %v4903, %v5069
    %v5433 = vsel %vm1649, %v4904, %v5071
    %v5434 = vsel %vm1649, %v4905, %v5073
    %v5435 = vsel %vm1649, %v4906, %v5075
    %v5436 = vsel %vm1649, %v4907, %v5077
    %v5437 = vsel %vm1649, %v4908, %v5079
    %v5438 = vsel %vm1649, %v4909, %v5081
    %v5439 = vsel %vm1649, %v4910, %v5083
    %v5440 = vsel %vm1649, %v4911, %v5085
    %v5441 = vsel %vm1649, %v4912, %v5087
    %v5442 = vsel %vm1649, %v4913, %v5089
    %v5443 = vsel %vm1649, %v4914, %v5091
    %v5444 = vsel %vm1683, %v5061, %v5125
    %v5445 = vsel %vm1683, %v5063, %v5127
    %v5446 = vsel %vm1683, %v5065, %v5129
    %v5447 = vsel %vm1683, %v5067, %v5131
    %v5448 = vsel %vm1683, %v5069, %v5133
    %v5449 = vsel %vm1683, %v5071, %v5135
    %v5450 = vsel %vm1683, %v5073, %v5137
    %v5451 = vsel %vm1683, %v5075, %v5139
    %v5452 = vsel %vm1683, %v5077, %v5141
    %v5453 = vsel %vm1683, %v5079, %v5143
    %v5454 = vsel %vm1683, %v5081, %v5145
    %v5455 = vsel %vm1683, %v5083, %v5147
    %v5456 = vsel %vm1683, %v5085, %v5149
    %v5457 = vsel %vm1683, %v5087, %v5151
    %v5458 = vsel %vm1683, %v5089, %v5153
    %v5459 = vsel %vm1683, %v5091, %v5155
    %v5460 = vsel %vm1717, %v5125, %v5189
    %v5461 = vsel %vm1717, %v5127, %v5191
    %v5462 = vsel %vm1717, %v5129, %v5193
    %v5463 = vsel %vm1717, %v5131, %v5195
    %v5464 = vsel %vm1717, %v5133, %v5197
    %v5465 = vsel %vm1717, %v5135, %v5199
    %v5466 = vsel %vm1717, %v5137, %v5201
    %v5467 = vsel %vm1717, %v5139, %v5203
    %v5468 = vsel %vm1717, %v5141, %v5205
    %v5469 = vsel %vm1717, %v5143, %v5207
    %v5470 = vsel %vm1717, %v5145, %v5209
    %v5471 = vsel %vm1717, %v5147, %v5211
    %v5472 = vsel %vm1717, %v5149, %v5213
    %v5473 = vsel %vm1717, %v5151, %v5215
    %v5474 = vsel %vm1717, %v5153, %v5217
    %v5475 = vsel %vm1717, %v5155, %v5219
    %v5476 = vsel %vm1649, %v4963, %v5253
    %v5477 = vsel %vm1649, %v4964, %v5255
    %v5478 = vsel %vm1649, %v4965, %v5257
    %v5479 = vsel %vm1649, %v4966, %v5259
    %v5480 = vsel %vm1649, %v4967, %v5261
    %v5481 = vsel %vm1649, %v4968, %v5263
    %v5482 = vsel %vm1649, %v4969, %v5265
    %v5483 = vsel %vm1649, %v4970, %v5267
    %v5484 = vsel %vm1649, %v4971, %v5269
    %v5485 = vsel %vm1649, %v4972, %v5271
    %v5486 = vsel %vm1649, %v4973, %v5273
    %v5487 = vsel %vm1649, %v4974, %v5275
    %v5488 = vsel %vm1649, %v4975, %v5277
    %v5489 = vsel %vm1649, %v4976, %v5279
    %v5490 = vsel %vm1649, %v4977, %v5281
    %v5491 = vsel %vm1649, %v4978, %v5283
    %v5492 = vsel %vm1683, %v5253, %v5317
    %v5493 = vsel %vm1683, %v5255, %v5319
    %v5494 = vsel %vm1683, %v5257, %v5321
    %v5495 = vsel %vm1683, %v5259, %v5323
    %v5496 = vsel %vm1683, %v5261, %v5325
    %v5497 = vsel %vm1683, %v5263, %v5327
    %v5498 = vsel %vm1683, %v5265, %v5329
    %v5499 = vsel %vm1683, %v5267, %v5331
    %v5500 = vsel %vm1683, %v5269, %v5333
    %v5501 = vsel %vm1683, %v5271, %v5335
    %v5502 = vsel %vm1683, %v5273, %v5337
    %v5503 = vsel %vm1683, %v5275, %v5339
    %v5504 = vsel %vm1683, %v5277, %v5341
    %v5505 = vsel %vm1683, %v5279, %v5343
    %v5506 = vsel %vm1683, %v5281, %v5345
    %v5507 = vsel %vm1683, %v5283, %v5347
    %v5508 = vsel %vm1717, %v5317, %v5381
    %v5509 = vsel %vm1717, %v5319, %v5383
    %v5510 = vsel %vm1717, %v5321, %v5385
    %v5511 = vsel %vm1717, %v5323, %v5387
    %v5512 = vsel %vm1717, %v5325, %v5389
    %v5513 = vsel %vm1717, %v5327, %v5391
    %v5514 = vsel %vm1717, %v5329, %v5393
    %v5515 = vsel %vm1717, %v5331, %v5395
    %v5516 = vsel %vm1717, %v5333, %v5397
    %v5517 = vsel %vm1717, %v5335, %v5399
    %v5518 = vsel %vm1717, %v5337, %v5401
    %v5519 = vsel %vm1717, %v5339, %v5403
    %v5520 = vsel %vm1717, %v5341, %v5405
    %v5521 = vsel %vm1717, %v5343, %v5407
    %v5522 = vsel %vm1717, %v5345, %v5409
    %v5523 = vsel %vm1717, %v5347, %v5411
    %v5524 = vpack.c.bf16 %v5429, %v5428
    %v5525 = vpack.c.bf16 %v5445, %v5444
    %v5526 = vpack.c.bf16 %v5461, %v5460
    %v5527 = vpack.c.bf16 %v5477, %v5476
    %v5528 = vpack.c.bf16 %v5493, %v5492
    %v5529 = vpack.c.bf16 %v5509, %v5508
    %v5530 = vpack.c.bf16 %v5029, %v5028
    %v5531 = vpack.c.bf16 %v5431, %v5430
    %v5532 = vpack.c.bf16 %v5447, %v5446
    %v5533 = vpack.c.bf16 %v5463, %v5462
    %v5534 = vpack.c.bf16 %v5479, %v5478
    %v5535 = vpack.c.bf16 %v5495, %v5494
    %v5536 = vpack.c.bf16 %v5511, %v5510
    %v5537 = vpack.c.bf16 %v5031, %v5030
    %v5538 = vpack.c.bf16 %v5433, %v5432
    %v5539 = vpack.c.bf16 %v5449, %v5448
    %v5540 = vpack.c.bf16 %v5465, %v5464
    %v5541 = vpack.c.bf16 %v5481, %v5480
    %v5542 = vpack.c.bf16 %v5497, %v5496
    %v5543 = vpack.c.bf16 %v5513, %v5512
    %v5544 = vpack.c.bf16 %v5033, %v5032
    %v5545 = vpack.c.bf16 %v5435, %v5434
    %v5546 = vpack.c.bf16 %v5451, %v5450
    %v5547 = vpack.c.bf16 %v5467, %v5466
    %v5548 = vpack.c.bf16 %v5483, %v5482
    %v5549 = vpack.c.bf16 %v5499, %v5498
    %v5550 = vpack.c.bf16 %v5515, %v5514
    %v5551 = vpack.c.bf16 %v5035, %v5034
    %v5552 = vpack.c.bf16 %v5437, %v5436
    %v5553 = vpack.c.bf16 %v5453, %v5452
    %v5554 = vpack.c.bf16 %v5469, %v5468
    %v5555 = vpack.c.bf16 %v5485, %v5484
    %v5556 = vpack.c.bf16 %v5501, %v5500
    %v5557 = vpack.c.bf16 %v5517, %v5516
    %v5558 = vpack.c.bf16 %v5037, %v5036
    %v5559 = vpack.c.bf16 %v5439, %v5438
    %v5560 = vpack.c.bf16 %v5455, %v5454
    %v5561 = vpack.c.bf16 %v5471, %v5470
    %v5562 = vpack.c.bf16 %v5487, %v5486
    %v5563 = vpack.c.bf16 %v5503, %v5502
    %v5564 = vpack.c.bf16 %v5519, %v5518
    %v5565 = vpack.c.bf16 %v5039, %v5038
    %v5566 = vpack.c.bf16 %v5441, %v5440
    %v5567 = vpack.c.bf16 %v5457, %v5456
    %v5568 = vpack.c.bf16 %v5473, %v5472
    %v5569 = vpack.c.bf16 %v5489, %v5488
    %v5570 = vpack.c.bf16 %v5505, %v5504
    %v5571 = vpack.c.bf16 %v5521, %v5520
    %v5572 = vpack.c.bf16 %v5041, %v5040
    %v5573 = vpack.c.bf16 %v5443, %v5442
    %v5574 = vpack.c.bf16 %v5459, %v5458
    %v5575 = vpack.c.bf16 %v5475, %v5474
    %v5576 = vpack.c.bf16 %v5491, %v5490
    %v5577 = vpack.c.bf16 %v5507, %v5506
    %v5578 = vpack.c.bf16 %v5523, %v5522
    %v5579 = vpack.c.bf16 %v5043, %v5042
    %v5580 = vld [vmem:[%s7] sm:$0xf]
    %v5581 = vld [vmem:[%s7 + $0x4] sm:$0xf]
    %v5582 = vld [vmem:[%s7 + $0x8] sm:$0xf]
    %v5583 = vld [vmem:[%s7 + $0xc] sm:$0xf]
    %v5584 = vld [vmem:[%s7 + $0x10] sm:$0xf]
    %v5585 = vld [vmem:[%s7 + $0x14] sm:$0xf]
    %v5586 = vld [vmem:[%s7 + $0x18] sm:$0xf]
    %v5587 = vld [vmem:[%s7 + $0x1c] sm:$0xf]
    %v5588 = vld [vmem:[%s7 + $0x20] sm:$0xf]
    %v5589 = vld [vmem:[%s7 + $0x24] sm:$0xf]
    %v5590 = vld [vmem:[%s7 + $0x28] sm:$0xf]
    %v5591 = vld [vmem:[%s7 + $0x2c] sm:$0xf]
    %v5592 = vld [vmem:[%s7 + $0x30] sm:$0xf]
    %v5593 = vld [vmem:[%s7 + $0x34] sm:$0xf]
    %v5594 = vld [vmem:[%s7 + $0x38] sm:$0xf]
    %v5595 = vld [vmem:[%s7 + $0x3c] sm:$0xf]
    %v5596 = vld [vmem:[%s7 + $0x40] sm:$0xf]
    %v5597 = vld [vmem:[%s7 + $0x44] sm:$0xf]
    %v5598 = vld [vmem:[%s7 + $0x48] sm:$0xf]
    %v5599 = vld [vmem:[%s7 + $0x4c] sm:$0xf]
    %v5600 = vld [vmem:[%s7 + $0x50] sm:$0xf]
    %v5601 = vld [vmem:[%s7 + $0x54] sm:$0xf]
    %v5602 = vld [vmem:[%s7 + $0x58] sm:$0xf]
    %v5603 = vld [vmem:[%s7 + $0x5c] sm:$0xf]
    %v5604 = vld [vmem:[%s7 + $0x60] sm:$0xf]
    %v5605 = vld [vmem:[%s7 + $0x64] sm:$0xf]
    %v5606 = vld [vmem:[%s7 + $0x68] sm:$0xf]
    %v5607 = vld [vmem:[%s7 + $0x6c] sm:$0xf]
    %v5608 = vld [vmem:[%s7 + $0x70] sm:$0xf]
    %v5609 = vld [vmem:[%s7 + $0x74] sm:$0xf]
    %v5610 = vld [vmem:[%s7 + $0x78] sm:$0xf]
    %v5611 = vld [vmem:[%s7 + $0x7c] sm:$0xf]
    %v5612 = vld [vmem:[%s7 + $0x80] sm:$0xf]
    %v5613 = vld [vmem:[%s7 + $0x84] sm:$0xf]
    %v5614 = vld [vmem:[%s7 + $0x88] sm:$0xf]
    %v5615 = vld [vmem:[%s7 + $0x8c] sm:$0xf]
    %v5616 = vld [vmem:[%s7 + $0x90] sm:$0xf]
    %v5617 = vld [vmem:[%s7 + $0x94] sm:$0xf]
    %v5618 = vld [vmem:[%s7 + $0x98] sm:$0xf]
    %v5619 = vld [vmem:[%s7 + $0x9c] sm:$0xf]
    %v5620 = vld [vmem:[%s7 + $0xa0] sm:$0xf]
    %v5621 = vld [vmem:[%s7 + $0xa4] sm:$0xf]
    %v5622 = vld [vmem:[%s7 + $0xa8] sm:$0xf]
    %v5623 = vld [vmem:[%s7 + $0xac] sm:$0xf]
    %v5624 = vld [vmem:[%s7 + $0xb0] sm:$0xf]
    %v5625 = vld [vmem:[%s7 + $0xb4] sm:$0xf]
    %v5626 = vld [vmem:[%s7 + $0xb8] sm:$0xf]
    %v5627 = vld [vmem:[%s7 + $0xbc] sm:$0xf]
    %v5628 = vld [vmem:[%s7 + $0xc0] sm:$0xf]
    %v5629 = vld [vmem:[%s7 + $0xc4] sm:$0xf]
    %v5630 = vld [vmem:[%s7 + $0xc8] sm:$0xf]
    %v5631 = vld [vmem:[%s7 + $0xcc] sm:$0xf]
    %v5632 = vld [vmem:[%s7 + $0xd0] sm:$0xf]
    %v5633 = vld [vmem:[%s7 + $0xd4] sm:$0xf]
    %v5634 = vld [vmem:[%s7 + $0xd8] sm:$0xf]
    %v5635 = vld [vmem:[%s7 + $0xdc] sm:$0xf]
    %v5636 = vld [vmem:[%s7 + $0xe0] sm:$0xf]
    %v5637 = vld [vmem:[%s7 + $0xe4] sm:$0xf]
    %v5638 = vld [vmem:[%s7 + $0xe8] sm:$0xf]
    %v5639 = vld [vmem:[%s7 + $0xec] sm:$0xf]
    %v5640 = vld [vmem:[%s7 + $0xf0] sm:$0xf]
    %v5641 = vld [vmem:[%s7 + $0xf4] sm:$0xf]
    %v5642 = vld [vmem:[%s7 + $0xf8] sm:$0xf]
    %v5643 = vld [vmem:[%s7 + $0xfc] sm:$0xf]
    %v5644 = vld [vmem:[%s7 + $0x100] sm:$0xf]
    %v5645 = vld [vmem:[%s7 + $0x104] sm:$0xf]
    %v5646 = vld [vmem:[%s7 + $0x108] sm:$0xf]
    %v5647 = vld [vmem:[%s7 + $0x10c] sm:$0xf]
    %v5648 = vld [vmem:[%s7 + $0x110] sm:$0xf]
    %v5649 = vld [vmem:[%s7 + $0x114] sm:$0xf]
    %v5650 = vld [vmem:[%s7 + $0x118] sm:$0xf]
    %v5651 = vld [vmem:[%s7 + $0x11c] sm:$0xf]
    %v5652 = vld [vmem:[%s7 + $0x120] sm:$0xf]
    %v5653 = vld [vmem:[%s7 + $0x124] sm:$0xf]
    %v5654 = vld [vmem:[%s7 + $0x128] sm:$0xf]
    %v5655 = vld [vmem:[%s7 + $0x12c] sm:$0xf]
    %v5656 = vld [vmem:[%s7 + $0x130] sm:$0xf]
    %v5657 = vld [vmem:[%s7 + $0x134] sm:$0xf]
    %v5658 = vld [vmem:[%s7 + $0x138] sm:$0xf]
    %v5659 = vld [vmem:[%s7 + $0x13c] sm:$0xf]
    %v5660 = vld [vmem:[%s7 + $0x140] sm:$0xf]
    %v5661 = vld [vmem:[%s7 + $0x144] sm:$0xf]
    %v5662 = vld [vmem:[%s7 + $0x148] sm:$0xf]
    %v5663 = vld [vmem:[%s7 + $0x14c] sm:$0xf]
    %v5664 = vld [vmem:[%s7 + $0x150] sm:$0xf]
    %v5665 = vld [vmem:[%s7 + $0x154] sm:$0xf]
    %v5666 = vld [vmem:[%s7 + $0x158] sm:$0xf]
    %v5667 = vld [vmem:[%s7 + $0x15c] sm:$0xf]
    %v5668 = vld [vmem:[%s7 + $0x160] sm:$0xf]
    %v5669 = vld [vmem:[%s7 + $0x164] sm:$0xf]
    %v5670 = vld [vmem:[%s7 + $0x168] sm:$0xf]
    %v5671 = vld [vmem:[%s7 + $0x16c] sm:$0xf]
    %v5672 = vld [vmem:[%s7 + $0x170] sm:$0xf]
    %v5673 = vld [vmem:[%s7 + $0x174] sm:$0xf]
    %v5674 = vld [vmem:[%s7 + $0x178] sm:$0xf]
    %v5675 = vld [vmem:[%s7 + $0x17c] sm:$0xf]
    %v5676 = vld [vmem:[%s7 + $0x180] sm:$0xf]
    %v5677 = vld [vmem:[%s7 + $0x184] sm:$0xf]
    %v5678 = vld [vmem:[%s7 + $0x188] sm:$0xf]
    %v5679 = vld [vmem:[%s7 + $0x18c] sm:$0xf]
    %v5680 = vld [vmem:[%s7 + $0x190] sm:$0xf]
    %v5681 = vld [vmem:[%s7 + $0x194] sm:$0xf]
    %v5682 = vld [vmem:[%s7 + $0x198] sm:$0xf]
    %v5683 = vld [vmem:[%s7 + $0x19c] sm:$0xf]
    %v5684 = vld [vmem:[%s7 + $0x1a0] sm:$0xf]
    %v5685 = vld [vmem:[%s7 + $0x1a4] sm:$0xf]
    %v5686 = vld [vmem:[%s7 + $0x1a8] sm:$0xf]
    %v5687 = vld [vmem:[%s7 + $0x1ac] sm:$0xf]
    %v5688 = vld [vmem:[%s8] sm:$0x1]
    %v5690 = vperm.slane %v5688, 0
    %v5800 = vunpack.c.l.b16 %v5580
    %v5801 = vunpack.c.l.b16 %v5581
    %v5802 = vunpack.c.l.b16 %v5582
    %v5803 = vunpack.c.l.b16 %v5583
    %v5804 = vunpack.c.l.b16 %v5584
    %v5805 = vunpack.c.l.b16 %v5585
    %v5806 = vunpack.c.l.b16 %v5586
    %v5807 = vunpack.c.l.b16 %v5587
    %v5808 = vunpack.c.l.b16 %v5588
    %v5809 = vunpack.c.l.b16 %v5589
    %v5810 = vunpack.c.l.b16 %v5590
    %v5811 = vunpack.c.l.b16 %v5591
    %v5812 = vunpack.c.l.b16 %v5592
    %v5813 = vunpack.c.l.b16 %v5593
    %v5814 = vunpack.c.l.b16 %v5594
    %v5815 = vunpack.c.l.b16 %v5595
    %v5816 = vunpack.c.l.b16 %v5596
    %v5817 = vunpack.c.l.b16 %v5597
    %v5818 = vunpack.c.l.b16 %v5598
    %v5819 = vunpack.c.l.b16 %v5599
    %v5820 = vunpack.c.l.b16 %v5600
    %v5821 = vunpack.c.l.b16 %v5601
    %v5822 = vunpack.c.l.b16 %v5602
    %v5823 = vunpack.c.l.b16 %v5603
    %v5824 = vunpack.c.l.b16 %v5604
    %v5825 = vunpack.c.l.b16 %v5605
    %v5826 = vunpack.c.l.b16 %v5606
    %v5827 = vunpack.c.l.b16 %v5607
    %v5828 = vunpack.c.l.b16 %v5608
    %v5829 = vunpack.c.l.b16 %v5609
    %v5830 = vunpack.c.l.b16 %v5610
    %v5831 = vunpack.c.l.b16 %v5611
    %v5832 = vunpack.c.l.b16 %v5612
    %v5833 = vunpack.c.l.b16 %v5613
    %v5834 = vunpack.c.l.b16 %v5614
    %v5835 = vunpack.c.l.b16 %v5615
    %v5836 = vunpack.c.l.b16 %v5616
    %v5837 = vunpack.c.l.b16 %v5617
    %v5838 = vunpack.c.l.b16 %v5618
    %v5839 = vunpack.c.l.b16 %v5619
    %v5840 = vunpack.c.l.b16 %v5620
    %v5841 = vunpack.c.l.b16 %v5621
    %v5842 = vunpack.c.l.b16 %v5622
    %v5843 = vunpack.c.l.b16 %v5623
    %v5844 = vunpack.c.l.b16 %v5624
    %v5845 = vunpack.c.l.b16 %v5625
    %v5846 = vunpack.c.l.b16 %v5626
    %v5847 = vunpack.c.l.b16 %v5627
    %v5848 = vunpack.c.l.b16 %v5628
    %v5849 = vunpack.c.l.b16 %v5629
    %v5850 = vunpack.c.l.b16 %v5630
    %v5851 = vunpack.c.l.b16 %v5631
    %v5852 = vunpack.c.l.b16 %v5632
    %v5853 = vunpack.c.l.b16 %v5633
    %v5854 = vunpack.c.l.b16 %v5634
    %v5855 = vunpack.c.l.b16 %v5635
    %v5856 = vunpack.c.l.b16 %v5636
    %v5857 = vunpack.c.l.b16 %v5637
    %v5858 = vunpack.c.l.b16 %v5638
    %v5859 = vunpack.c.l.b16 %v5639
    %v5860 = vunpack.c.l.b16 %v5640
    %v5861 = vunpack.c.l.b16 %v5641
    %v5862 = vunpack.c.l.b16 %v5642
    %v5863 = vunpack.c.l.b16 %v5643
    %v5864 = vunpack.c.l.b16 %v5644
    %v5865 = vunpack.c.l.b16 %v5645
    %v5866 = vunpack.c.l.b16 %v5646
    %v5867 = vunpack.c.l.b16 %v5647
    %v5868 = vunpack.c.l.b16 %v5648
    %v5869 = vunpack.c.l.b16 %v5649
    %v5870 = vunpack.c.l.b16 %v5650
    %v5871 = vunpack.c.l.b16 %v5651
    %v5872 = vunpack.c.l.b16 %v5652
    %v5873 = vunpack.c.l.b16 %v5653
    %v5874 = vunpack.c.l.b16 %v5654
    %v5875 = vunpack.c.l.b16 %v5655
    %v5876 = vunpack.c.l.b16 %v5656
    %v5877 = vunpack.c.l.b16 %v5657
    %v5878 = vunpack.c.l.b16 %v5658
    %v5879 = vunpack.c.l.b16 %v5659
    %v5880 = vunpack.c.l.b16 %v5660
    %v5881 = vunpack.c.l.b16 %v5661
    %v5882 = vunpack.c.l.b16 %v5662
    %v5883 = vunpack.c.l.b16 %v5663
    %v5884 = vunpack.c.l.b16 %v5664
    %v5885 = vunpack.c.l.b16 %v5665
    %v5886 = vunpack.c.l.b16 %v5666
    %v5887 = vunpack.c.l.b16 %v5667
    %v5888 = vunpack.c.l.b16 %v5668
    %v5889 = vunpack.c.l.b16 %v5669
    %v5890 = vunpack.c.l.b16 %v5670
    %v5891 = vunpack.c.l.b16 %v5671
    %v5892 = vunpack.c.l.b16 %v5672
    %v5893 = vunpack.c.l.b16 %v5673
    %v5894 = vunpack.c.l.b16 %v5674
    %v5895 = vunpack.c.l.b16 %v5675
    %v5896 = vunpack.c.l.b16 %v5676
    %v5897 = vunpack.c.l.b16 %v5677
    %v5898 = vunpack.c.l.b16 %v5678
    %v5899 = vunpack.c.l.b16 %v5679
    %v5900 = vunpack.c.l.b16 %v5680
    %v5901 = vunpack.c.l.b16 %v5681
    %v5902 = vunpack.c.l.b16 %v5682
    %v5903 = vunpack.c.l.b16 %v5683
    %v5904 = vunpack.c.l.b16 %v5684
    %v5905 = vunpack.c.l.b16 %v5685
    %v5906 = vunpack.c.l.b16 %v5686
    %v5907 = vunpack.c.l.b16 %v5687
    %v5908 = vpack.c.b16 %v5801, %v5800
    %v5909 = vpack.c.b16 %v5803, %v5802
    %v5910 = vpack.c.b16 %v5805, %v5804
    %v5911 = vpack.c.b16 %v5807, %v5806
    %v5912 = vpack.c.b16 %v5809, %v5808
    %v5913 = vpack.c.b16 %v5811, %v5810
    %v5914 = vpack.c.b16 %v5813, %v5812
    %v5915 = vpack.c.b16 %v5815, %v5814
    %v5916 = vpack.c.b16 %v5817, %v5816
    %v5917 = vpack.c.b16 %v5819, %v5818
    %v5918 = vpack.c.b16 %v5821, %v5820
    %v5919 = vpack.c.b16 %v5823, %v5822
    %v5920 = vpack.c.b16 %v5825, %v5824
    %v5921 = vpack.c.b16 %v5827, %v5826
    %v5922 = vpack.c.b16 %v5829, %v5828
    %v5923 = vpack.c.b16 %v5831, %v5830
    %v5924 = vpack.c.b16 %v5833, %v5832
    %v5925 = vpack.c.b16 %v5835, %v5834
    %v5926 = vpack.c.b16 %v5837, %v5836
    %v5927 = vpack.c.b16 %v5839, %v5838
    %v5928 = vpack.c.b16 %v5841, %v5840
    %v5929 = vpack.c.b16 %v5843, %v5842
    %v5930 = vpack.c.b16 %v5845, %v5844
    %v5931 = vpack.c.b16 %v5847, %v5846
    %v5932 = vpack.c.b16 %v5849, %v5848
    %v5933 = vpack.c.b16 %v5851, %v5850
    %v5934 = vpack.c.b16 %v5853, %v5852
    %v5935 = vpack.c.b16 %v5855, %v5854
    %v5936 = vpack.c.b16 %v5857, %v5856
    %v5937 = vpack.c.b16 %v5859, %v5858
    %v5938 = vpack.c.b16 %v5861, %v5860
    %v5939 = vpack.c.b16 %v5863, %v5862
    %v5940 = vpack.c.b16 %v5865, %v5864
    %v5941 = vpack.c.b16 %v5867, %v5866
    %v5942 = vpack.c.b16 %v5869, %v5868
    %v5943 = vpack.c.b16 %v5871, %v5870
    %v5944 = vpack.c.b16 %v5873, %v5872
    %v5945 = vpack.c.b16 %v5875, %v5874
    %v5946 = vpack.c.b16 %v5877, %v5876
    %v5947 = vpack.c.b16 %v5879, %v5878
    %v5948 = vpack.c.b16 %v5881, %v5880
    %v5949 = vpack.c.b16 %v5883, %v5882
    %v5950 = vpack.c.b16 %v5885, %v5884
    %v5951 = vpack.c.b16 %v5887, %v5886
    %v5952 = vpack.c.b16 %v5889, %v5888
    %v5953 = vpack.c.b16 %v5891, %v5890
    %v5954 = vpack.c.b16 %v5893, %v5892
    %v5955 = vpack.c.b16 %v5895, %v5894
    %v5956 = vpack.c.b16 %v5897, %v5896
    %v5957 = vpack.c.b16 %v5899, %v5898
    %v5958 = vpack.c.b16 %v5901, %v5900
    %v5959 = vpack.c.b16 %v5903, %v5902
    %v5960 = vpack.c.b16 %v5905, %v5904
    %v5961 = vpack.c.b16 %v5907, %v5906
    %v6017 = vsel %vm1649, %v5530, 0
    %v6020 = vsel %vm1649, %v5537, 0
    %v6023 = vsel %vm1649, %v5544, 0
    %v6026 = vsel %vm1649, %v5551, 0
    %v6029 = vsel %vm1649, %v5558, 0
    %v6032 = vsel %vm1649, %v5565, 0
    %v6035 = vsel %vm1649, %v5572, 0
    %v6038 = vsel %vm1649, %v5579, 0
    %6040 = vmatpush.bf16.msra.mxu0 %v5915
    %6041 = vmatpush.bf16.msra.mxu0 %v5914
    %6042 = vmatpush.bf16.msra.mxu0 %v5913
    %6043 = vmatpush.bf16.msra.mxu0 %v5912
    %6044 = vmatpush.bf16.msra.mxu0 %v5911
    %6045 = vmatpush.bf16.msra.mxu0 %v5910
    %6046 = vmatpush.bf16.msra.mxu0 %v5909
    %6047 = vmatpush.bf16.msra.mxu0 %v5908
    %6048 = vmatmul.bf16.gmra.mxu0 %v5524
    %v6049 = vpop.f32.mrf.mxu0
    %v6050 = vadd.f32 %v5690, %v6049
    %v6051 = vpop.f32.mrf.mxu0
    %v6052 = vadd.f32 %v5690, %v6051
    %6053 = vmatmul.bf16.gmra.mxu0 %v5531
    %v6054 = vpop.f32.mrf.mxu0
    %v6055 = vadd.f32 %v5690, %v6054
    %v6056 = vpop.f32.mrf.mxu0
    %v6057 = vadd.f32 %v5690, %v6056
    %6058 = vmatmul.bf16.gmra.mxu0 %v5538
    %v6059 = vpop.f32.mrf.mxu0
    %v6060 = vadd.f32 %v5690, %v6059
    %v6061 = vpop.f32.mrf.mxu0
    %v6062 = vadd.f32 %v5690, %v6061
    %6063 = vmatmul.bf16.gmra.mxu0 %v5545
    %v6064 = vpop.f32.mrf.mxu0
    %v6065 = vadd.f32 %v5690, %v6064
    %v6066 = vpop.f32.mrf.mxu0
    %v6067 = vadd.f32 %v5690, %v6066
    %6068 = vmatmul.bf16.gmra.mxu0 %v5552
    %v6069 = vpop.f32.mrf.mxu0
    %v6070 = vadd.f32 %v5690, %v6069
    %v6071 = vpop.f32.mrf.mxu0
    %v6072 = vadd.f32 %v5690, %v6071
    %6073 = vmatmul.bf16.gmra.mxu0 %v5559
    %v6074 = vpop.f32.mrf.mxu0
    %v6075 = vadd.f32 %v5690, %v6074
    %v6076 = vpop.f32.mrf.mxu0
    %v6077 = vadd.f32 %v5690, %v6076
    %6078 = vmatmul.bf16.gmra.mxu0 %v5566
    %v6079 = vpop.f32.mrf.mxu0
    %v6080 = vadd.f32 %v5690, %v6079
    %v6081 = vpop.f32.mrf.mxu0
    %v6082 = vadd.f32 %v5690, %v6081
    %6083 = vmatmul.bf16.gmra.mxu0 %v5573
    %v6084 = vpop.f32.mrf.mxu0
    %v6085 = vadd.f32 %v5690, %v6084
    %v6086 = vpop.f32.mrf.mxu0
    %v6087 = vadd.f32 %v5690, %v6086
    %6088 = vdwg.mxu0
    %6089 = vmatpush.bf16.msra.mxu0 %v5923
    %6090 = vmatpush.bf16.msra.mxu0 %v5922
    %6091 = vmatpush.bf16.msra.mxu0 %v5921
    %6092 = vmatpush.bf16.msra.mxu0 %v5920
    %6093 = vmatpush.bf16.msra.mxu0 %v5919
    %6094 = vmatpush.bf16.msra.mxu0 %v5918
    %6095 = vmatpush.bf16.msra.mxu0 %v5917
    %6096 = vmatpush.bf16.msra.mxu0 %v5916
    %6097 = vmatmul.bf16.gmra.mxu0 %v5525
    %v6098 = vpop.f32.mrf.mxu0
    %v6099 = vadd.f32 %v6050, %v6098
    %v6100 = vpop.f32.mrf.mxu0
    %v6101 = vadd.f32 %v6052, %v6100
    %6102 = vmatmul.bf16.gmra.mxu0 %v5532
    %v6103 = vpop.f32.mrf.mxu0
    %v6104 = vadd.f32 %v6055, %v6103
    %v6105 = vpop.f32.mrf.mxu0
    %v6106 = vadd.f32 %v6057, %v6105
    %6107 = vmatmul.bf16.gmra.mxu0 %v5539
    %v6108 = vpop.f32.mrf.mxu0
    %v6109 = vadd.f32 %v6060, %v6108
    %v6110 = vpop.f32.mrf.mxu0
    %v6111 = vadd.f32 %v6062, %v6110
    %6112 = vmatmul.bf16.gmra.mxu0 %v5546
    %v6113 = vpop.f32.mrf.mxu0
    %v6114 = vadd.f32 %v6065, %v6113
    %v6115 = vpop.f32.mrf.mxu0
    %v6116 = vadd.f32 %v6067, %v6115
    %6117 = vmatmul.bf16.gmra.mxu0 %v5553
    %v6118 = vpop.f32.mrf.mxu0
    %v6119 = vadd.f32 %v6070, %v6118
    %v6120 = vpop.f32.mrf.mxu0
    %v6121 = vadd.f32 %v6072, %v6120
    %6122 = vmatmul.bf16.gmra.mxu0 %v5560
    %v6123 = vpop.f32.mrf.mxu0
    %v6124 = vadd.f32 %v6075, %v6123
    %v6125 = vpop.f32.mrf.mxu0
    %v6126 = vadd.f32 %v6077, %v6125
    %6127 = vmatmul.bf16.gmra.mxu0 %v5567
    %v6128 = vpop.f32.mrf.mxu0
    %v6129 = vadd.f32 %v6080, %v6128
    %v6130 = vpop.f32.mrf.mxu0
    %v6131 = vadd.f32 %v6082, %v6130
    %6132 = vmatmul.bf16.gmra.mxu0 %v5574
    %v6133 = vpop.f32.mrf.mxu0
    %v6134 = vadd.f32 %v6085, %v6133
    %v6135 = vpop.f32.mrf.mxu0
    %v6136 = vadd.f32 %v6087, %v6135
    %6137 = vdwg.mxu0
    %6138 = vmatpush.bf16.msra.mxu0 %v5931
    %6139 = vmatpush.bf16.msra.mxu0 %v5930
    %6140 = vmatpush.bf16.msra.mxu0 %v5929
    %6141 = vmatpush.bf16.msra.mxu0 %v5928
    %6142 = vmatpush.bf16.msra.mxu0 %v5927
    %6143 = vmatpush.bf16.msra.mxu0 %v5926
    %6144 = vmatpush.bf16.msra.mxu0 %v5925
    %6145 = vmatpush.bf16.msra.mxu0 %v5924
    %6146 = vmatmul.bf16.gmra.mxu0 %v5526
    %v6147 = vpop.f32.mrf.mxu0
    %v6148 = vadd.f32 %v6099, %v6147
    %v6149 = vpop.f32.mrf.mxu0
    %v6150 = vadd.f32 %v6101, %v6149
    %6151 = vmatmul.bf16.gmra.mxu0 %v5533
    %v6152 = vpop.f32.mrf.mxu0
    %v6153 = vadd.f32 %v6104, %v6152
    %v6154 = vpop.f32.mrf.mxu0
    %v6155 = vadd.f32 %v6106, %v6154
    %6156 = vmatmul.bf16.gmra.mxu0 %v5540
    %v6157 = vpop.f32.mrf.mxu0
    %v6158 = vadd.f32 %v6109, %v6157
    %v6159 = vpop.f32.mrf.mxu0
    %v6160 = vadd.f32 %v6111, %v6159
    %6161 = vmatmul.bf16.gmra.mxu0 %v5547
    %v6162 = vpop.f32.mrf.mxu0
    %v6163 = vadd.f32 %v6114, %v6162
    %v6164 = vpop.f32.mrf.mxu0
    %v6165 = vadd.f32 %v6116, %v6164
    %6166 = vmatmul.bf16.gmra.mxu0 %v5554
    %v6167 = vpop.f32.mrf.mxu0
    %v6168 = vadd.f32 %v6119, %v6167
    %v6169 = vpop.f32.mrf.mxu0
    %v6170 = vadd.f32 %v6121, %v6169
    %6171 = vmatmul.bf16.gmra.mxu0 %v5561
    %v6172 = vpop.f32.mrf.mxu0
    %v6173 = vadd.f32 %v6124, %v6172
    %v6174 = vpop.f32.mrf.mxu0
    %v6175 = vadd.f32 %v6126, %v6174
    %6176 = vmatmul.bf16.gmra.mxu0 %v5568
    %v6177 = vpop.f32.mrf.mxu0
    %v6178 = vadd.f32 %v6129, %v6177
    %v6179 = vpop.f32.mrf.mxu0
    %v6180 = vadd.f32 %v6131, %v6179
    %6181 = vmatmul.bf16.gmra.mxu0 %v5575
    %v6182 = vpop.f32.mrf.mxu0
    %v6183 = vadd.f32 %v6134, %v6182
    %v6184 = vpop.f32.mrf.mxu0
    %v6185 = vadd.f32 %v6136, %v6184
    %6186 = vdwg.mxu0
    %6187 = vmatpush.bf16.msra.mxu0 %v5939
    %6188 = vmatpush.bf16.msra.mxu0 %v5938
    %6189 = vmatpush.bf16.msra.mxu0 %v5937
    %6190 = vmatpush.bf16.msra.mxu0 %v5936
    %6191 = vmatpush.bf16.msra.mxu0 %v5935
    %6192 = vmatpush.bf16.msra.mxu0 %v5934
    %6193 = vmatpush.bf16.msra.mxu0 %v5933
    %6194 = vmatpush.bf16.msra.mxu0 %v5932
    %6195 = vmatmul.bf16.gmra.mxu0 %v5527
    %v6196 = vpop.f32.mrf.mxu0
    %v6197 = vadd.f32 %v6148, %v6196
    %v6198 = vpop.f32.mrf.mxu0
    %v6199 = vadd.f32 %v6150, %v6198
    %6200 = vmatmul.bf16.gmra.mxu0 %v5534
    %v6201 = vpop.f32.mrf.mxu0
    %v6202 = vadd.f32 %v6153, %v6201
    %v6203 = vpop.f32.mrf.mxu0
    %v6204 = vadd.f32 %v6155, %v6203
    %6205 = vmatmul.bf16.gmra.mxu0 %v5541
    %v6206 = vpop.f32.mrf.mxu0
    %v6207 = vadd.f32 %v6158, %v6206
    %v6208 = vpop.f32.mrf.mxu0
    %v6209 = vadd.f32 %v6160, %v6208
    %6210 = vmatmul.bf16.gmra.mxu0 %v5548
    %v6211 = vpop.f32.mrf.mxu0
    %v6212 = vadd.f32 %v6163, %v6211
    %v6213 = vpop.f32.mrf.mxu0
    %v6214 = vadd.f32 %v6165, %v6213
    %6215 = vmatmul.bf16.gmra.mxu0 %v5555
    %v6216 = vpop.f32.mrf.mxu0
    %v6217 = vadd.f32 %v6168, %v6216
    %v6218 = vpop.f32.mrf.mxu0
    %v6219 = vadd.f32 %v6170, %v6218
    %6220 = vmatmul.bf16.gmra.mxu0 %v5562
    %v6221 = vpop.f32.mrf.mxu0
    %v6222 = vadd.f32 %v6173, %v6221
    %v6223 = vpop.f32.mrf.mxu0
    %v6224 = vadd.f32 %v6175, %v6223
    %6225 = vmatmul.bf16.gmra.mxu0 %v5569
    %v6226 = vpop.f32.mrf.mxu0
    %v6227 = vadd.f32 %v6178, %v6226
    %v6228 = vpop.f32.mrf.mxu0
    %v6229 = vadd.f32 %v6180, %v6228
    %6230 = vmatmul.bf16.gmra.mxu0 %v5576
    %v6231 = vpop.f32.mrf.mxu0
    %v6232 = vadd.f32 %v6183, %v6231
    %v6233 = vpop.f32.mrf.mxu0
    %v6234 = vadd.f32 %v6185, %v6233
    %6235 = vdwg.mxu0
    %6236 = vmatpush.bf16.msra.mxu0 %v5947
    %6237 = vmatpush.bf16.msra.mxu0 %v5946
    %6238 = vmatpush.bf16.msra.mxu0 %v5945
    %6239 = vmatpush.bf16.msra.mxu0 %v5944
    %6240 = vmatpush.bf16.msra.mxu0 %v5943
    %6241 = vmatpush.bf16.msra.mxu0 %v5942
    %6242 = vmatpush.bf16.msra.mxu0 %v5941
    %6243 = vmatpush.bf16.msra.mxu0 %v5940
    %6244 = vmatmul.bf16.gmra.mxu0 %v5528
    %v6245 = vpop.f32.mrf.mxu0
    %v6246 = vadd.f32 %v6197, %v6245
    %v6247 = vpop.f32.mrf.mxu0
    %v6248 = vadd.f32 %v6199, %v6247
    %6249 = vmatmul.bf16.gmra.mxu0 %v5535
    %v6250 = vpop.f32.mrf.mxu0
    %v6251 = vadd.f32 %v6202, %v6250
    %v6252 = vpop.f32.mrf.mxu0
    %v6253 = vadd.f32 %v6204, %v6252
    %6254 = vmatmul.bf16.gmra.mxu0 %v5542
    %v6255 = vpop.f32.mrf.mxu0
    %v6256 = vadd.f32 %v6207, %v6255
    %v6257 = vpop.f32.mrf.mxu0
    %v6258 = vadd.f32 %v6209, %v6257
    %6259 = vmatmul.bf16.gmra.mxu0 %v5549
    %v6260 = vpop.f32.mrf.mxu0
    %v6261 = vadd.f32 %v6212, %v6260
    %v6262 = vpop.f32.mrf.mxu0
    %v6263 = vadd.f32 %v6214, %v6262
    %6264 = vmatmul.bf16.gmra.mxu0 %v5556
    %v6265 = vpop.f32.mrf.mxu0
    %v6266 = vadd.f32 %v6217, %v6265
    %v6267 = vpop.f32.mrf.mxu0
    %v6268 = vadd.f32 %v6219, %v6267
    %6269 = vmatmul.bf16.gmra.mxu0 %v5563
    %v6270 = vpop.f32.mrf.mxu0
    %v6271 = vadd.f32 %v6222, %v6270
    %v6272 = vpop.f32.mrf.mxu0
    %v6273 = vadd.f32 %v6224, %v6272
    %6274 = vmatmul.bf16.gmra.mxu0 %v5570
    %v6275 = vpop.f32.mrf.mxu0
    %v6276 = vadd.f32 %v6227, %v6275
    %v6277 = vpop.f32.mrf.mxu0
    %v6278 = vadd.f32 %v6229, %v6277
    %6279 = vmatmul.bf16.gmra.mxu0 %v5577
    %v6280 = vpop.f32.mrf.mxu0
    %v6281 = vadd.f32 %v6232, %v6280
    %v6282 = vpop.f32.mrf.mxu0
    %v6283 = vadd.f32 %v6234, %v6282
    %6284 = vdwg.mxu0
    %6285 = vmatpush.bf16.msra.mxu0 %v5955
    %6286 = vmatpush.bf16.msra.mxu0 %v5954
    %6287 = vmatpush.bf16.msra.mxu0 %v5953
    %6288 = vmatpush.bf16.msra.mxu0 %v5952
    %6289 = vmatpush.bf16.msra.mxu0 %v5951
    %6290 = vmatpush.bf16.msra.mxu0 %v5950
    %6291 = vmatpush.bf16.msra.mxu0 %v5949
    %6292 = vmatpush.bf16.msra.mxu0 %v5948
    %6293 = vmatmul.bf16.gmra.mxu0 %v5529
    %v6294 = vpop.f32.mrf.mxu0
    %v6295 = vadd.f32 %v6246, %v6294
    %v6296 = vpop.f32.mrf.mxu0
    %v6297 = vadd.f32 %v6248, %v6296
    %6298 = vmatmul.bf16.gmra.mxu0 %v5536
    %v6299 = vpop.f32.mrf.mxu0
    %v6300 = vadd.f32 %v6251, %v6299
    %v6301 = vpop.f32.mrf.mxu0
    %v6302 = vadd.f32 %v6253, %v6301
    %6303 = vmatmul.bf16.gmra.mxu0 %v5543
    %v6304 = vpop.f32.mrf.mxu0
    %v6305 = vadd.f32 %v6256, %v6304
    %v6306 = vpop.f32.mrf.mxu0
    %v6307 = vadd.f32 %v6258, %v6306
    %6308 = vmatmul.bf16.gmra.mxu0 %v5550
    %v6309 = vpop.f32.mrf.mxu0
    %v6310 = vadd.f32 %v6261, %v6309
    %v6311 = vpop.f32.mrf.mxu0
    %v6312 = vadd.f32 %v6263, %v6311
    %6313 = vmatmul.bf16.gmra.mxu0 %v5557
    %v6314 = vpop.f32.mrf.mxu0
    %v6315 = vadd.f32 %v6266, %v6314
    %v6316 = vpop.f32.mrf.mxu0
    %v6317 = vadd.f32 %v6268, %v6316
    %6318 = vmatmul.bf16.gmra.mxu0 %v5564
    %v6319 = vpop.f32.mrf.mxu0
    %v6320 = vadd.f32 %v6271, %v6319
    %v6321 = vpop.f32.mrf.mxu0
    %v6322 = vadd.f32 %v6273, %v6321
    %6323 = vmatmul.bf16.gmra.mxu0 %v5571
    %v6324 = vpop.f32.mrf.mxu0
    %v6325 = vadd.f32 %v6276, %v6324
    %v6326 = vpop.f32.mrf.mxu0
    %v6327 = vadd.f32 %v6278, %v6326
    %6328 = vmatmul.bf16.gmra.mxu0 %v5578
    %v6329 = vpop.f32.mrf.mxu0
    %v6330 = vadd.f32 %v6281, %v6329
    %v6331 = vpop.f32.mrf.mxu0
    %v6332 = vadd.f32 %v6283, %v6331
    %6333 = vdwg.mxu0
    %6334 = vmatpush.bf16.msra.mxu0 0
    %6335 = vmatpush.bf16.msra.mxu0 0
    %6336 = vmatpush.bf16.msra.mxu0 %v5961
    %6337 = vmatpush.bf16.msra.mxu0 %v5960
    %6338 = vmatpush.bf16.msra.mxu0 %v5959
    %6339 = vmatpush.bf16.msra.mxu0 %v5958
    %6340 = vmatpush.bf16.msra.mxu0 %v5957
    %6341 = vmatpush.bf16.msra.mxu0 %v5956
    %6342 = vmatmul.bf16.gmra.mxu0 %v6017
    %v6343 = vpop.f32.mrf.mxu0
    %v6344 = vadd.f32 %v6295, %v6343
    %v6345 = vpop.f32.mrf.mxu0
    %v6346 = vadd.f32 %v6297, %v6345
    %6347 = vmatmul.bf16.gmra.mxu0 %v6020
    %v6348 = vpop.f32.mrf.mxu0
    %v6349 = vadd.f32 %v6300, %v6348
    %v6350 = vpop.f32.mrf.mxu0
    %v6351 = vadd.f32 %v6302, %v6350
    %6352 = vmatmul.bf16.gmra.mxu0 %v6023
    %v6353 = vpop.f32.mrf.mxu0
    %v6354 = vadd.f32 %v6305, %v6353
    %v6355 = vpop.f32.mrf.mxu0
    %v6356 = vadd.f32 %v6307, %v6355
    %6357 = vmatmul.bf16.gmra.mxu0 %v6026
    %v6358 = vpop.f32.mrf.mxu0
    %v6359 = vadd.f32 %v6310, %v6358
    %v6360 = vpop.f32.mrf.mxu0
    %v6361 = vadd.f32 %v6312, %v6360
    %6362 = vmatmul.bf16.gmra.mxu0 %v6029
    %v6363 = vpop.f32.mrf.mxu0
    %v6364 = vadd.f32 %v6315, %v6363
    %v6365 = vpop.f32.mrf.mxu0
    %v6366 = vadd.f32 %v6317, %v6365
    %6367 = vmatmul.bf16.gmra.mxu0 %v6032
    %v6368 = vpop.f32.mrf.mxu0
    %v6369 = vadd.f32 %v6320, %v6368
    %v6370 = vpop.f32.mrf.mxu0
    %v6371 = vadd.f32 %v6322, %v6370
    %6372 = vmatmul.bf16.gmra.mxu0 %v6035
    %v6373 = vpop.f32.mrf.mxu0
    %v6374 = vadd.f32 %v6325, %v6373
    %v6375 = vpop.f32.mrf.mxu0
    %v6376 = vadd.f32 %v6327, %v6375
    %6377 = vmatmul.bf16.gmra.mxu0 %v6038
    %v6378 = vpop.f32.mrf.mxu0
    %v6379 = vadd.f32 %v6330, %v6378
    %v6380 = vpop.f32.mrf.mxu0
    %v6381 = vadd.f32 %v6332, %v6380
    %6382 = vdwg.mxu0
    %v6383 = vmax.f32 %v6344, 0.0
    %v6384 = vmax.f32 %v6346, 0.0
    %v6385 = vmax.f32 %v6349, 0.0
    %v6386 = vmax.f32 %v6351, 0.0
    %v6387 = vmax.f32 %v6354, 0.0
    %v6388 = vmax.f32 %v6356, 0.0
    %v6389 = vmax.f32 %v6359, 0.0
    %v6390 = vmax.f32 %v6361, 0.0
    %v6391 = vmax.f32 %v6364, 0.0
    %v6392 = vmax.f32 %v6366, 0.0
    %v6393 = vmax.f32 %v6369, 0.0
    %v6394 = vmax.f32 %v6371, 0.0
    %v6395 = vmax.f32 %v6374, 0.0
    %v6396 = vmax.f32 %v6376, 0.0
    %v6397 = vmax.f32 %v6379, 0.0
    %v6398 = vmax.f32 %v6381, 0.0
    %6399 = vst.msk [vmem:[#allocation5] sm:$0xff] %vm1717, 0.0
    %vm6400 = vcmask 254976
    %6401 = vst.msk [vmem:[#allocation5 + $0x8] sm:$0x3] %vm6400, 0.0
    %6402 = vst.msk [vmem:[#allocation5 + $0x10] sm:$0xff] %vm1717, 0.0
    %6403 = vst.msk [vmem:[#allocation5 + $0x18] sm:$0x3] %vm6400, 0.0
    %6404 = vst.msk [vmem:[#allocation5 + $0x20] sm:$0xff] %vm1717, 0.0
    %6405 = vst.msk [vmem:[#allocation5 + $0x28] sm:$0x3] %vm6400, 0.0
    %6406 = vst.msk [vmem:[#allocation5 + $0x30] sm:$0xff] %vm1717, 0.0
    %6407 = vst.msk [vmem:[#allocation5 + $0x38] sm:$0x3] %vm6400, 0.0
    %6408 = vst.msk [vmem:[#allocation5 + $0x40] sm:$0xff] %vm1717, 0.0
    %6409 = vst.msk [vmem:[#allocation5 + $0x48] sm:$0x3] %vm6400, 0.0
    %6410 = vst.msk [vmem:[#allocation5 + $0x50] sm:$0xff] %vm1717, 0.0
    %6411 = vst.msk [vmem:[#allocation5 + $0x58] sm:$0x3] %vm6400, 0.0
    %6412 = vst.msk [vmem:[#allocation5 + $0x60] sm:$0xff] %vm1717, 0.0
    %6413 = vst.msk [vmem:[#allocation5 + $0x68] sm:$0x3] %vm6400, 0.0
    %6414 = vst.msk [vmem:[#allocation5 + $0x70] sm:$0xff] %vm1717, 0.0
    %6415 = vst.msk [vmem:[#allocation5 + $0x78] sm:$0x3] %vm6400, 0.0
    %6416 = vst.msk [vmem:[#allocation5 + $0x80] sm:$0xff] %vm1717, 0.0
    %6417 = vst.msk [vmem:[#allocation5 + $0x88] sm:$0x3] %vm6400, 0.0
    %6418 = vst.msk [vmem:[#allocation5 + $0x90] sm:$0xff] %vm1717, 0.0
    %6419 = vst.msk [vmem:[#allocation5 + $0x98] sm:$0x3] %vm6400, 0.0
    %6420 = vst.msk [vmem:[#allocation5 + $0xa0] sm:$0xff] %vm1717, 0.0
    %6421 = vst.msk [vmem:[#allocation5 + $0xa8] sm:$0x3] %vm6400, 0.0
    %6422 = vst.msk [vmem:[#allocation5 + $0xb0] sm:$0xff] %vm1717, 0.0
    %6423 = vst.msk [vmem:[#allocation5 + $0xb8] sm:$0x3] %vm6400, 0.0
    %6424 = vst.msk [vmem:[#allocation5 + $0xc0] sm:$0xff] %vm1717, 0.0
    %6425 = vst.msk [vmem:[#allocation5 + $0xc8] sm:$0x3] %vm6400, 0.0
    %6426 = vst.msk [vmem:[#allocation5 + $0xd0] sm:$0xff] %vm1717, 0.0
    %6427 = vst.msk [vmem:[#allocation5 + $0xd8] sm:$0x3] %vm6400, 0.0
    %6428 = vst.msk [vmem:[#allocation5 + $0xe0] sm:$0xff] %vm1717, 0.0
    %6429 = vst.msk [vmem:[#allocation5 + $0xe8] sm:$0x3] %vm6400, 0.0
    %6430 = vst.msk [vmem:[#allocation5 + $0xf0] sm:$0xff] %vm1717, 0.0
    %6431 = vst.msk [vmem:[#allocation5 + $0xf8] sm:$0x3] %vm6400, 0.0
    %6432 = vst.msk [vmem:[#allocation5 + $0x100] sm:$0xff] %vm1717, 0.0
    %6433 = vst.msk [vmem:[#allocation5 + $0x108] sm:$0x3] %vm6400, 0.0
    %6434 = vst.msk [vmem:[#allocation5 + $0x110] sm:$0xff] %vm1717, 0.0
    %6435 = vst.msk [vmem:[#allocation5 + $0x118] sm:$0x3] %vm6400, 0.0
    %6436 = vst.msk [vmem:[#allocation5 + $0x120] sm:$0xff] %vm1717, 0.0
    %6437 = vst.msk [vmem:[#allocation5 + $0x128] sm:$0x3] %vm6400, 0.0
    %6438 = vst.msk [vmem:[#allocation5 + $0x130] sm:$0xff] %vm1717, 0.0
    %6439 = vst.msk [vmem:[#allocation5 + $0x138] sm:$0x3] %vm6400, 0.0
    %6456 = vrot.lane.b32.xlu0 %v196, 80
    %v6457 = vpop.permute.xlu0 %6456
    %6458 = vrot.lane.b32.xlu0 %v198, 80
    %v6459 = vpop.permute.xlu0 %6458
    %6460 = vrot.lane.b32.xlu0 %v201, 80
    %v6461 = vpop.permute.xlu0 %6460
    %6462 = vrot.lane.b32.xlu0 %v203, 80
    %v6463 = vpop.permute.xlu0 %6462
    %6464 = vrot.lane.b32.xlu0 %v206, 80
    %v6465 = vpop.permute.xlu0 %6464
    %6466 = vrot.lane.b32.xlu0 %v208, 80
    %v6467 = vpop.permute.xlu0 %6466
    %6468 = vrot.lane.b32.xlu0 %v211, 80
    %v6469 = vpop.permute.xlu0 %6468
    %6470 = vrot.lane.b32.xlu0 %v213, 80
    %v6471 = vpop.permute.xlu0 %6470
    %6472 = vrot.lane.b32.xlu0 %v216, 80
    %v6473 = vpop.permute.xlu0 %6472
    %6474 = vrot.lane.b32.xlu0 %v218, 80
    %v6475 = vpop.permute.xlu0 %6474
    %6476 = vrot.lane.b32.xlu0 %v221, 80
    %v6477 = vpop.permute.xlu0 %6476
    %6478 = vrot.lane.b32.xlu0 %v223, 80
    %v6479 = vpop.permute.xlu0 %6478
    %6480 = vrot.lane.b32.xlu0 %v226, 80
    %v6481 = vpop.permute.xlu0 %6480
    %6482 = vrot.lane.b32.xlu0 %v228, 80
    %v6483 = vpop.permute.xlu0 %6482
    %6484 = vrot.lane.b32.xlu0 %v231, 80
    %v6485 = vpop.permute.xlu0 %6484
    %6486 = vrot.lane.b32.xlu0 %v233, 80
    %v6487 = vpop.permute.xlu0 %6486
    %s6504 = scalar_lea.vmem [#allocation5], 16
    %6505 = vst.msk [vmem:[%s6504 + $0x1] sm:$0xff] %vm1717, %v6457
    %6506 = vst.msk [vmem:[%s6504 + $0x11] sm:$0xff] %vm1717, %v6459
    %6507 = vst.msk [vmem:[%s6504 + $0x21] sm:$0xff] %vm1717, %v6461
    %6508 = vst.msk [vmem:[%s6504 + $0x31] sm:$0xff] %vm1717, %v6463
    %6509 = vst.msk [vmem:[%s6504 + $0x41] sm:$0xff] %vm1717, %v6465
    %6510 = vst.msk [vmem:[%s6504 + $0x51] sm:$0xff] %vm1717, %v6467
    %6511 = vst.msk [vmem:[%s6504 + $0x61] sm:$0xff] %vm1717, %v6469
    %6512 = vst.msk [vmem:[%s6504 + $0x71] sm:$0xff] %vm1717, %v6471
    %6513 = vst.msk [vmem:[%s6504 + $0xa1] sm:$0xff] %vm1717, %v6473
    %6514 = vst.msk [vmem:[%s6504 + $0xb1] sm:$0xff] %vm1717, %v6475
    %6515 = vst.msk [vmem:[%s6504 + $0xc1] sm:$0xff] %vm1717, %v6477
    %6516 = vst.msk [vmem:[%s6504 + $0xd1] sm:$0xff] %vm1717, %v6479
    %6517 = vst.msk [vmem:[%s6504 + $0xe1] sm:$0xff] %vm1717, %v6481
    %6518 = vst.msk [vmem:[%s6504 + $0xf1] sm:$0xff] %vm1717, %v6483
    %6519 = vst.msk [vmem:[%s6504 + $0x101] sm:$0xff] %vm1717, %v6485
    %6520 = vst.msk [vmem:[%s6504 + $0x111] sm:$0xff] %vm1717, %v6487
    %v6521 = vld [vmem:[#allocation5] sm:$0xff]
    %v6522 = vld [vmem:[#allocation5 + $0x10] sm:$0xff]
    %v6523 = vld [vmem:[#allocation5 + $0x20] sm:$0xff]
    %v6524 = vld [vmem:[#allocation5 + $0x30] sm:$0xff]
    %v6525 = vld [vmem:[#allocation5 + $0x40] sm:$0xff]
    %v6526 = vld [vmem:[#allocation5 + $0x50] sm:$0xff]
    %v6527 = vld [vmem:[#allocation5 + $0x60] sm:$0xff]
    %v6528 = vld [vmem:[#allocation5 + $0x70] sm:$0xff]
    %v6529 = vld [vmem:[#allocation5 + $0xa0] sm:$0xff]
    %v6530 = vld [vmem:[#allocation5 + $0xb0] sm:$0xff]
    %v6531 = vld [vmem:[#allocation5 + $0xc0] sm:$0xff]
    %v6532 = vld [vmem:[#allocation5 + $0xd0] sm:$0xff]
    %v6533 = vld [vmem:[#allocation5 + $0xe0] sm:$0xff]
    %v6534 = vld [vmem:[#allocation5 + $0xf0] sm:$0xff]
    %v6535 = vld [vmem:[#allocation5 + $0x100] sm:$0xff]
    %v6536 = vld [vmem:[#allocation5 + $0x110] sm:$0xff]
    %v6537 = vadd.f32 %v6521, 0.0
    %v6538 = vadd.f32 %v6522, 0.0
    %v6539 = vadd.f32 %v6523, 0.0
    %v6540 = vadd.f32 %v6524, 0.0
    %v6541 = vadd.f32 %v6525, 0.0
    %v6542 = vadd.f32 %v6526, 0.0
    %v6543 = vadd.f32 %v6527, 0.0
    %v6544 = vadd.f32 %v6528, 0.0
    %v6545 = vadd.f32 %v6529, 0.0
    %v6546 = vadd.f32 %v6530, 0.0
    %v6547 = vadd.f32 %v6531, 0.0
    %v6548 = vadd.f32 %v6532, 0.0
    %v6549 = vadd.f32 %v6533, 0.0
    %v6550 = vadd.f32 %v6534, 0.0
    %v6551 = vadd.f32 %v6535, 0.0
    %v6552 = vadd.f32 %v6536, 0.0
    %v6553 = vld [vmem:[#allocation5 + $0x1] sm:$0xff]
    %v6554 = vld [vmem:[#allocation5 + $0x11] sm:$0xff]
    %v6555 = vld [vmem:[#allocation5 + $0x21] sm:$0xff]
    %v6556 = vld [vmem:[#allocation5 + $0x31] sm:$0xff]
    %v6557 = vld [vmem:[#allocation5 + $0x41] sm:$0xff]
    %v6558 = vld [vmem:[#allocation5 + $0x51] sm:$0xff]
    %v6559 = vld [vmem:[#allocation5 + $0x61] sm:$0xff]
    %v6560 = vld [vmem:[#allocation5 + $0x71] sm:$0xff]
    %v6561 = vld [vmem:[#allocation5 + $0xa1] sm:$0xff]
    %v6562 = vld [vmem:[#allocation5 + $0xb1] sm:$0xff]
    %v6563 = vld [vmem:[#allocation5 + $0xc1] sm:$0xff]
    %v6564 = vld [vmem:[#allocation5 + $0xd1] sm:$0xff]
    %v6565 = vld [vmem:[#allocation5 + $0xe1] sm:$0xff]
    %v6566 = vld [vmem:[#allocation5 + $0xf1] sm:$0xff]
    %v6567 = vld [vmem:[#allocation5 + $0x101] sm:$0xff]
    %v6568 = vld [vmem:[#allocation5 + $0x111] sm:$0xff]
    %v6569 = vadd.f32 %v6537, %v6553
    %v6570 = vadd.f32 %v6538, %v6554
    %v6571 = vadd.f32 %v6539, %v6555
    %v6572 = vadd.f32 %v6540, %v6556
    %v6573 = vadd.f32 %v6541, %v6557
    %v6574 = vadd.f32 %v6542, %v6558
    %v6575 = vadd.f32 %v6543, %v6559
    %v6576 = vadd.f32 %v6544, %v6560
    %v6577 = vadd.f32 %v6545, %v6561
    %v6578 = vadd.f32 %v6546, %v6562
    %v6579 = vadd.f32 %v6547, %v6563
    %v6580 = vadd.f32 %v6548, %v6564
    %v6581 = vadd.f32 %v6549, %v6565
    %v6582 = vadd.f32 %v6550, %v6566
    %v6583 = vadd.f32 %v6551, %v6567
    %v6584 = vadd.f32 %v6552, %v6568
    %v6585 = vld [vmem:[#allocation5 + $0x2] sm:$0xff]
    %v6586 = vld [vmem:[#allocation5 + $0x12] sm:$0xff]
    %v6587 = vld [vmem:[#allocation5 + $0x22] sm:$0xff]
    %v6588 = vld [vmem:[#allocation5 + $0x32] sm:$0xff]
    %v6589 = vld [vmem:[#allocation5 + $0x42] sm:$0xff]
    %v6590 = vld [vmem:[#allocation5 + $0x52] sm:$0xff]
    %v6591 = vld [vmem:[#allocation5 + $0x62] sm:$0xff]
    %v6592 = vld [vmem:[#allocation5 + $0x72] sm:$0xff]
    %v6593 = vld [vmem:[#allocation5 + $0xa2] sm:$0xff]
    %v6594 = vld [vmem:[#allocation5 + $0xb2] sm:$0xff]
    %v6595 = vld [vmem:[#allocation5 + $0xc2] sm:$0xff]
    %v6596 = vld [vmem:[#allocation5 + $0xd2] sm:$0xff]
    %v6597 = vld [vmem:[#allocation5 + $0xe2] sm:$0xff]
    %v6598 = vld [vmem:[#allocation5 + $0xf2] sm:$0xff]
    %v6599 = vld [vmem:[#allocation5 + $0x102] sm:$0xff]
    %v6600 = vld [vmem:[#allocation5 + $0x112] sm:$0xff]
    %v6601 = vadd.f32 %v6569, %v6585
    %v6602 = vadd.f32 %v6570, %v6586
    %v6603 = vadd.f32 %v6571, %v6587
    %v6604 = vadd.f32 %v6572, %v6588
    %v6605 = vadd.f32 %v6573, %v6589
    %v6606 = vadd.f32 %v6574, %v6590
    %v6607 = vadd.f32 %v6575, %v6591
    %v6608 = vadd.f32 %v6576, %v6592
    %v6609 = vadd.f32 %v6577, %v6593
    %v6610 = vadd.f32 %v6578, %v6594
    %v6611 = vadd.f32 %v6579, %v6595
    %v6612 = vadd.f32 %v6580, %v6596
    %v6613 = vadd.f32 %v6581, %v6597
    %v6614 = vadd.f32 %v6582, %v6598
    %v6615 = vadd.f32 %v6583, %v6599
    %v6616 = vadd.f32 %v6584, %v6600
    %v6617 = vld [vmem:[%s6504] sm:$0xff]
    %v6618 = vld [vmem:[%s6504 + $0x10] sm:$0xff]
    %v6619 = vld [vmem:[%s6504 + $0x20] sm:$0xff]
    %v6620 = vld [vmem:[%s6504 + $0x30] sm:$0xff]
    %v6621 = vld [vmem:[%s6504 + $0x40] sm:$0xff]
    %v6622 = vld [vmem:[%s6504 + $0x50] sm:$0xff]
    %v6623 = vld [vmem:[%s6504 + $0x60] sm:$0xff]
    %v6624 = vld [vmem:[%s6504 + $0x70] sm:$0xff]
    %v6625 = vld [vmem:[%s6504 + $0xa0] sm:$0xff]
    %v6626 = vld [vmem:[%s6504 + $0xb0] sm:$0xff]
    %v6627 = vld [vmem:[%s6504 + $0xc0] sm:$0xff]
    %v6628 = vld [vmem:[%s6504 + $0xd0] sm:$0xff]
    %v6629 = vld [vmem:[%s6504 + $0xe0] sm:$0xff]
    %v6630 = vld [vmem:[%s6504 + $0xf0] sm:$0xff]
    %v6631 = vld [vmem:[%s6504 + $0x100] sm:$0xff]
    %v6632 = vld [vmem:[%s6504 + $0x110] sm:$0xff]
    %v6633 = vadd.f32 %v6601, %v6617
    %v6634 = vadd.f32 %v6602, %v6618
    %v6635 = vadd.f32 %v6603, %v6619
    %v6636 = vadd.f32 %v6604, %v6620
    %v6637 = vadd.f32 %v6605, %v6621
    %v6638 = vadd.f32 %v6606, %v6622
    %v6639 = vadd.f32 %v6607, %v6623
    %v6640 = vadd.f32 %v6608, %v6624
    %v6641 = vadd.f32 %v6609, %v6625
    %v6642 = vadd.f32 %v6610, %v6626
    %v6643 = vadd.f32 %v6611, %v6627
    %v6644 = vadd.f32 %v6612, %v6628
    %v6645 = vadd.f32 %v6613, %v6629
    %v6646 = vadd.f32 %v6614, %v6630
    %v6647 = vadd.f32 %v6615, %v6631
    %v6648 = vadd.f32 %v6616, %v6632
    %v6649 = vld [vmem:[%s6504 + $0x1] sm:$0xff]
    %v6650 = vld [vmem:[%s6504 + $0x11] sm:$0xff]
    %v6651 = vld [vmem:[%s6504 + $0x21] sm:$0xff]
    %v6652 = vld [vmem:[%s6504 + $0x31] sm:$0xff]
    %v6653 = vld [vmem:[%s6504 + $0x41] sm:$0xff]
    %v6654 = vld [vmem:[%s6504 + $0x51] sm:$0xff]
    %v6655 = vld [vmem:[%s6504 + $0x61] sm:$0xff]
    %v6656 = vld [vmem:[%s6504 + $0x71] sm:$0xff]
    %v6657 = vld [vmem:[%s6504 + $0xa1] sm:$0xff]
    %v6658 = vld [vmem:[%s6504 + $0xb1] sm:$0xff]
    %v6659 = vld [vmem:[%s6504 + $0xc1] sm:$0xff]
    %v6660 = vld [vmem:[%s6504 + $0xd1] sm:$0xff]
    %v6661 = vld [vmem:[%s6504 + $0xe1] sm:$0xff]
    %v6662 = vld [vmem:[%s6504 + $0xf1] sm:$0xff]
    %v6663 = vld [vmem:[%s6504 + $0x101] sm:$0xff]
    %v6664 = vld [vmem:[%s6504 + $0x111] sm:$0xff]
    %v6665 = vadd.f32 %v6633, %v6649
    %v6666 = vadd.f32 %v6634, %v6650
    %v6667 = vadd.f32 %v6635, %v6651
    %v6668 = vadd.f32 %v6636, %v6652
    %v6669 = vadd.f32 %v6637, %v6653
    %v6670 = vadd.f32 %v6638, %v6654
    %v6671 = vadd.f32 %v6639, %v6655
    %v6672 = vadd.f32 %v6640, %v6656
    %v6673 = vadd.f32 %v6641, %v6657
    %v6674 = vadd.f32 %v6642, %v6658
    %v6675 = vadd.f32 %v6643, %v6659
    %v6676 = vadd.f32 %v6644, %v6660
    %v6677 = vadd.f32 %v6645, %v6661
    %v6678 = vadd.f32 %v6646, %v6662
    %v6679 = vadd.f32 %v6647, %v6663
    %v6680 = vadd.f32 %v6648, %v6664
    %v6681 = vld [vmem:[%s6504 + $0x2] sm:$0xff]
    %v6682 = vld [vmem:[%s6504 + $0x12] sm:$0xff]
    %v6683 = vld [vmem:[%s6504 + $0x22] sm:$0xff]
    %v6684 = vld [vmem:[%s6504 + $0x32] sm:$0xff]
    %v6685 = vld [vmem:[%s6504 + $0x42] sm:$0xff]
    %v6686 = vld [vmem:[%s6504 + $0x52] sm:$0xff]
    %v6687 = vld [vmem:[%s6504 + $0x62] sm:$0xff]
    %v6688 = vld [vmem:[%s6504 + $0x72] sm:$0xff]
    %v6689 = vld [vmem:[%s6504 + $0xa2] sm:$0xff]
    %v6690 = vld [vmem:[%s6504 + $0xb2] sm:$0xff]
    %v6691 = vld [vmem:[%s6504 + $0xc2] sm:$0xff]
    %v6692 = vld [vmem:[%s6504 + $0xd2] sm:$0xff]
    %v6693 = vld [vmem:[%s6504 + $0xe2] sm:$0xff]
    %v6694 = vld [vmem:[%s6504 + $0xf2] sm:$0xff]
    %v6695 = vld [vmem:[%s6504 + $0x102] sm:$0xff]
    %v6696 = vld [vmem:[%s6504 + $0x112] sm:$0xff]
    %v6697 = vadd.f32 %v6665, %v6681
    %v6698 = vadd.f32 %v6666, %v6682
    %v6699 = vadd.f32 %v6667, %v6683
    %v6700 = vadd.f32 %v6668, %v6684
    %v6701 = vadd.f32 %v6669, %v6685
    %v6702 = vadd.f32 %v6670, %v6686
    %v6703 = vadd.f32 %v6671, %v6687
    %v6704 = vadd.f32 %v6672, %v6688
    %v6705 = vadd.f32 %v6673, %v6689
    %v6706 = vadd.f32 %v6674, %v6690
    %v6707 = vadd.f32 %v6675, %v6691
    %v6708 = vadd.f32 %v6676, %v6692
    %v6709 = vadd.f32 %v6677, %v6693
    %v6710 = vadd.f32 %v6678, %v6694
    %v6711 = vadd.f32 %v6679, %v6695
    %v6712 = vadd.f32 %v6680, %v6696
    %s6713 = scalar_lea.vmem [#allocation5], 32
    %v6714 = vld [vmem:[%s6713] sm:$0xff]
    %v6715 = vld [vmem:[%s6713 + $0x10] sm:$0xff]
    %v6716 = vld [vmem:[%s6713 + $0x20] sm:$0xff]
    %v6717 = vld [vmem:[%s6713 + $0x30] sm:$0xff]
    %v6718 = vld [vmem:[%s6713 + $0x40] sm:$0xff]
    %v6719 = vld [vmem:[%s6713 + $0x50] sm:$0xff]
    %v6720 = vld [vmem:[%s6713 + $0x60] sm:$0xff]
    %v6721 = vld [vmem:[%s6713 + $0x70] sm:$0xff]
    %v6722 = vld [vmem:[%s6713 + $0xa0] sm:$0xff]
    %v6723 = vld [vmem:[%s6713 + $0xb0] sm:$0xff]
    %v6724 = vld [vmem:[%s6713 + $0xc0] sm:$0xff]
    %v6725 = vld [vmem:[%s6713 + $0xd0] sm:$0xff]
    %v6726 = vld [vmem:[%s6713 + $0xe0] sm:$0xff]
    %v6727 = vld [vmem:[%s6713 + $0xf0] sm:$0xff]
    %v6728 = vld [vmem:[%s6713 + $0x100] sm:$0xff]
    %v6729 = vld [vmem:[%s6713 + $0x110] sm:$0xff]
    %v6730 = vadd.f32 %v6697, %v6714
    %v6731 = vadd.f32 %v6698, %v6715
    %v6732 = vadd.f32 %v6699, %v6716
    %v6733 = vadd.f32 %v6700, %v6717
    %v6734 = vadd.f32 %v6701, %v6718
    %v6735 = vadd.f32 %v6702, %v6719
    %v6736 = vadd.f32 %v6703, %v6720
    %v6737 = vadd.f32 %v6704, %v6721
    %v6738 = vadd.f32 %v6705, %v6722
    %v6739 = vadd.f32 %v6706, %v6723
    %v6740 = vadd.f32 %v6707, %v6724
    %v6741 = vadd.f32 %v6708, %v6725
    %v6742 = vadd.f32 %v6709, %v6726
    %v6743 = vadd.f32 %v6710, %v6727
    %v6744 = vadd.f32 %v6711, %v6728
    %v6745 = vadd.f32 %v6712, %v6729
    %v6746 = vld [vmem:[%s6713 + $0x1] sm:$0xff]
    %v6747 = vld [vmem:[%s6713 + $0x11] sm:$0xff]
    %v6748 = vld [vmem:[%s6713 + $0x21] sm:$0xff]
    %v6749 = vld [vmem:[%s6713 + $0x31] sm:$0xff]
    %v6750 = vld [vmem:[%s6713 + $0x41] sm:$0xff]
    %v6751 = vld [vmem:[%s6713 + $0x51] sm:$0xff]
    %v6752 = vld [vmem:[%s6713 + $0x61] sm:$0xff]
    %v6753 = vld [vmem:[%s6713 + $0x71] sm:$0xff]
    %v6754 = vld [vmem:[%s6713 + $0xa1] sm:$0xff]
    %v6755 = vld [vmem:[%s6713 + $0xb1] sm:$0xff]
    %v6756 = vld [vmem:[%s6713 + $0xc1] sm:$0xff]
    %v6757 = vld [vmem:[%s6713 + $0xd1] sm:$0xff]
    %v6758 = vld [vmem:[%s6713 + $0xe1] sm:$0xff]
    %v6759 = vld [vmem:[%s6713 + $0xf1] sm:$0xff]
    %v6760 = vld [vmem:[%s6713 + $0x101] sm:$0xff]
    %v6761 = vld [vmem:[%s6713 + $0x111] sm:$0xff]
    %v6762 = vadd.f32 %v6730, %v6746
    %v6763 = vadd.f32 %v6731, %v6747
    %v6764 = vadd.f32 %v6732, %v6748
    %v6765 = vadd.f32 %v6733, %v6749
    %v6766 = vadd.f32 %v6734, %v6750
    %v6767 = vadd.f32 %v6735, %v6751
    %v6768 = vadd.f32 %v6736, %v6752
    %v6769 = vadd.f32 %v6737, %v6753
    %v6770 = vadd.f32 %v6738, %v6754
    %v6771 = vadd.f32 %v6739, %v6755
    %v6772 = vadd.f32 %v6740, %v6756
    %v6773 = vadd.f32 %v6741, %v6757
    %v6774 = vadd.f32 %v6742, %v6758
    %v6775 = vadd.f32 %v6743, %v6759
    %v6776 = vadd.f32 %v6744, %v6760
    %v6777 = vadd.f32 %v6745, %v6761
    %v6778 = vld [vmem:[%s6713 + $0x2] sm:$0xff]
    %v6779 = vld [vmem:[%s6713 + $0x12] sm:$0xff]
    %v6780 = vld [vmem:[%s6713 + $0x22] sm:$0xff]
    %v6781 = vld [vmem:[%s6713 + $0x32] sm:$0xff]
    %v6782 = vld [vmem:[%s6713 + $0x42] sm:$0xff]
    %v6783 = vld [vmem:[%s6713 + $0x52] sm:$0xff]
    %v6784 = vld [vmem:[%s6713 + $0x62] sm:$0xff]
    %v6785 = vld [vmem:[%s6713 + $0x72] sm:$0xff]
    %v6786 = vld [vmem:[%s6713 + $0xa2] sm:$0xff]
    %v6787 = vld [vmem:[%s6713 + $0xb2] sm:$0xff]
    %v6788 = vld [vmem:[%s6713 + $0xc2] sm:$0xff]
    %v6789 = vld [vmem:[%s6713 + $0xd2] sm:$0xff]
    %v6790 = vld [vmem:[%s6713 + $0xe2] sm:$0xff]
    %v6791 = vld [vmem:[%s6713 + $0xf2] sm:$0xff]
    %v6792 = vld [vmem:[%s6713 + $0x102] sm:$0xff]
    %v6793 = vld [vmem:[%s6713 + $0x112] sm:$0xff]
    %v6794 = vadd.f32 %v6762, %v6778
    %v6795 = vadd.f32 %v6763, %v6779
    %v6796 = vadd.f32 %v6764, %v6780
    %v6797 = vadd.f32 %v6765, %v6781
    %v6798 = vadd.f32 %v6766, %v6782
    %v6799 = vadd.f32 %v6767, %v6783
    %v6800 = vadd.f32 %v6768, %v6784
    %v6801 = vadd.f32 %v6769, %v6785
    %v6802 = vadd.f32 %v6770, %v6786
    %v6803 = vadd.f32 %v6771, %v6787
    %v6804 = vadd.f32 %v6772, %v6788
    %v6805 = vadd.f32 %v6773, %v6789
    %v6806 = vadd.f32 %v6774, %v6790
    %v6807 = vadd.f32 %v6775, %v6791
    %v6808 = vadd.f32 %v6776, %v6792
    %v6809 = vadd.f32 %v6777, %v6793
    %v6810 = vmul.f32 %v6794, 0.11111111
    %v6811 = vmul.f32 %v6795, 0.11111111
    %v6812 = vmul.f32 %v6796, 0.11111111
    %v6813 = vmul.f32 %v6797, 0.11111111
    %v6814 = vmul.f32 %v6798, 0.11111111
    %v6815 = vmul.f32 %v6799, 0.11111111
    %v6816 = vmul.f32 %v6800, 0.11111111
    %v6817 = vmul.f32 %v6801, 0.11111111
    %v6818 = vmul.f32 %v6802, 0.11111111
    %v6819 = vmul.f32 %v6803, 0.11111111
    %v6820 = vmul.f32 %v6804, 0.11111111
    %v6821 = vmul.f32 %v6805, 0.11111111
    %v6822 = vmul.f32 %v6806, 0.11111111
    %v6823 = vmul.f32 %v6807, 0.11111111
    %v6824 = vmul.f32 %v6808, 0.11111111
    %v6825 = vmul.f32 %v6809, 0.11111111
    %v6826 = vld [vmem:[%s9] sm:$0x1]
    %v6828 = vperm.slane %v6826, 0
    %v6830 = vadd.f32 %v6810, %v6828
    %v6831 = vadd.f32 %v6811, %v6828
    %v6832 = vadd.f32 %v6812, %v6828
    %v6833 = vadd.f32 %v6813, %v6828
    %v6834 = vadd.f32 %v6814, %v6828
    %v6835 = vadd.f32 %v6815, %v6828
    %v6836 = vadd.f32 %v6816, %v6828
    %v6837 = vadd.f32 %v6817, %v6828
    %v6838 = vadd.f32 %v6818, %v6828
    %v6839 = vadd.f32 %v6819, %v6828
    %v6840 = vadd.f32 %v6820, %v6828
    %v6841 = vadd.f32 %v6821, %v6828
    %v6842 = vadd.f32 %v6822, %v6828
    %v6843 = vadd.f32 %v6823, %v6828
    %v6844 = vadd.f32 %v6824, %v6828
    %v6845 = vadd.f32 %v6825, %v6828
    %v6846 = vmax.f32 %v6830, 0.0
    %v6847 = vmax.f32 %v6831, 0.0
    %v6848 = vmax.f32 %v6832, 0.0
    %v6849 = vmax.f32 %v6833, 0.0
    %v6850 = vmax.f32 %v6834, 0.0
    %v6851 = vmax.f32 %v6835, 0.0
    %v6852 = vmax.f32 %v6836, 0.0
    %v6853 = vmax.f32 %v6837, 0.0
    %v6854 = vmax.f32 %v6838, 0.0
    %v6855 = vmax.f32 %v6839, 0.0
    %v6856 = vmax.f32 %v6840, 0.0
    %v6857 = vmax.f32 %v6841, 0.0
    %v6858 = vmax.f32 %v6842, 0.0
    %v6859 = vmax.f32 %v6843, 0.0
    %v6860 = vmax.f32 %v6844, 0.0
    %v6861 = vmax.f32 %v6845, 0.0
    %6878 = vrot.lane.b32.xlu0 %v3621, 64
    %v6879 = vpop.permute.xlu0 %6878
    %6880 = vrot.lane.b32.xlu0 %v3622, 64
    %v6881 = vpop.permute.xlu0 %6880
    %6882 = vrot.lane.b32.xlu0 %v3623, 64
    %v6883 = vpop.permute.xlu0 %6882
    %6884 = vrot.lane.b32.xlu0 %v3624, 64
    %v6885 = vpop.permute.xlu0 %6884
    %6886 = vrot.lane.b32.xlu0 %v3625, 64
    %v6887 = vpop.permute.xlu0 %6886
    %6888 = vrot.lane.b32.xlu0 %v3626, 64
    %v6889 = vpop.permute.xlu0 %6888
    %6890 = vrot.lane.b32.xlu0 %v3627, 64
    %v6891 = vpop.permute.xlu0 %6890
    %6892 = vrot.lane.b32.xlu0 %v3628, 64
    %v6893 = vpop.permute.xlu0 %6892
    %6894 = vrot.lane.b32.xlu0 %v3629, 64
    %v6895 = vpop.permute.xlu0 %6894
    %6896 = vrot.lane.b32.xlu0 %v3630, 64
    %v6897 = vpop.permute.xlu0 %6896
    %6898 = vrot.lane.b32.xlu0 %v3631, 64
    %v6899 = vpop.permute.xlu0 %6898
    %6900 = vrot.lane.b32.xlu0 %v3632, 64
    %v6901 = vpop.permute.xlu0 %6900
    %6902 = vrot.lane.b32.xlu0 %v3633, 64
    %v6903 = vpop.permute.xlu0 %6902
    %6904 = vrot.lane.b32.xlu0 %v3634, 64
    %v6905 = vpop.permute.xlu0 %6904
    %6906 = vrot.lane.b32.xlu0 %v3635, 64
    %v6907 = vpop.permute.xlu0 %6906
    %6908 = vrot.lane.b32.xlu0 %v3636, 64
    %v6909 = vpop.permute.xlu0 %6908
    %6942 = vrot.lane.b32.xlu0 %v6846, 96
    %v6943 = vpop.permute.xlu0 %6942
    %6944 = vrot.lane.b32.xlu0 %v6847, 96
    %v6945 = vpop.permute.xlu0 %6944
    %6946 = vrot.lane.b32.xlu0 %v6848, 96
    %v6947 = vpop.permute.xlu0 %6946
    %6948 = vrot.lane.b32.xlu0 %v6849, 96
    %v6949 = vpop.permute.xlu0 %6948
    %6950 = vrot.lane.b32.xlu0 %v6850, 96
    %v6951 = vpop.permute.xlu0 %6950
    %6952 = vrot.lane.b32.xlu0 %v6851, 96
    %v6953 = vpop.permute.xlu0 %6952
    %6954 = vrot.lane.b32.xlu0 %v6852, 96
    %v6955 = vpop.permute.xlu0 %6954
    %6956 = vrot.lane.b32.xlu0 %v6853, 96
    %v6957 = vpop.permute.xlu0 %6956
    %6958 = vrot.lane.b32.xlu0 %v6854, 96
    %v6959 = vpop.permute.xlu0 %6958
    %6960 = vrot.lane.b32.xlu0 %v6855, 96
    %v6961 = vpop.permute.xlu0 %6960
    %6962 = vrot.lane.b32.xlu0 %v6856, 96
    %v6963 = vpop.permute.xlu0 %6962
    %6964 = vrot.lane.b32.xlu0 %v6857, 96
    %v6965 = vpop.permute.xlu0 %6964
    %6966 = vrot.lane.b32.xlu0 %v6858, 96
    %v6967 = vpop.permute.xlu0 %6966
    %6968 = vrot.lane.b32.xlu0 %v6859, 96
    %v6969 = vpop.permute.xlu0 %6968
    %6970 = vrot.lane.b32.xlu0 %v6860, 96
    %v6971 = vpop.permute.xlu0 %6970
    %6972 = vrot.lane.b32.xlu0 %v6861, 96
    %v6973 = vpop.permute.xlu0 %6972
    %v6990 = vsel %vm1683, %v235, %v6879
    %v6991 = vsel %vm1683, %v236, %v6881
    %v6992 = vsel %vm1683, %v237, %v6883
    %v6993 = vsel %vm1683, %v238, %v6885
    %v6994 = vsel %vm1683, %v239, %v6887
    %v6995 = vsel %vm1683, %v240, %v6889
    %v6996 = vsel %vm1683, %v241, %v6891
    %v6997 = vsel %vm1683, %v242, %v6893
    %v6998 = vsel %vm1683, %v243, %v6895
    %v6999 = vsel %vm1683, %v244, %v6897
    %v7000 = vsel %vm1683, %v245, %v6899
    %v7001 = vsel %vm1683, %v246, %v6901
    %v7002 = vsel %vm1683, %v247, %v6903
    %v7003 = vsel %vm1683, %v248, %v6905
    %v7004 = vsel %vm1683, %v249, %v6907
    %v7005 = vsel %vm1683, %v250, %v6909
    %v7006 = vsel %vm1649, %v6383, %v6943
    %v7007 = vsel %vm1649, %v6384, %v6945
    %v7008 = vsel %vm1649, %v6385, %v6947
    %v7009 = vsel %vm1649, %v6386, %v6949
    %v7010 = vsel %vm1649, %v6387, %v6951
    %v7011 = vsel %vm1649, %v6388, %v6953
    %v7012 = vsel %vm1649, %v6389, %v6955
    %v7013 = vsel %vm1649, %v6390, %v6957
    %v7014 = vsel %vm1649, %v6391, %v6959
    %v7015 = vsel %vm1649, %v6392, %v6961
    %v7016 = vsel %vm1649, %v6393, %v6963
    %v7017 = vsel %vm1649, %v6394, %v6965
    %v7018 = vsel %vm1649, %v6395, %v6967
    %v7019 = vsel %vm1649, %v6396, %v6969
    %v7020 = vsel %vm1649, %v6397, %v6971
    %v7021 = vsel %vm1649, %v6398, %v6973
    %7022 = vst [vmem:[#allocation6] sm:$0xff] %v6990
    %7023 = vst [vmem:[#allocation6 + $0x8] sm:$0xff] %v7006
    %7024 = vst [vmem:[#allocation6 + $0x10] sm:$0xff] %v6991
    %7025 = vst [vmem:[#allocation6 + $0x18] sm:$0xff] %v7007
    %7026 = vst [vmem:[#allocation6 + $0x20] sm:$0xff] %v6992
    %7027 = vst [vmem:[#allocation6 + $0x28] sm:$0xff] %v7008
    %7028 = vst [vmem:[#allocation6 + $0x30] sm:$0xff] %v6993
    %7029 = vst [vmem:[#allocation6 + $0x38] sm:$0xff] %v7009
    %7030 = vst [vmem:[#allocation6 + $0x40] sm:$0xff] %v6994
    %7031 = vst [vmem:[#allocation6 + $0x48] sm:$0xff] %v7010
    %7032 = vst [vmem:[#allocation6 + $0x50] sm:$0xff] %v6995
    %7033 = vst [vmem:[#allocation6 + $0x58] sm:$0xff] %v7011
    %7034 = vst [vmem:[#allocation6 + $0x60] sm:$0xff] %v6996
    %7035 = vst [vmem:[#allocation6 + $0x68] sm:$0xff] %v7012
    %7036 = vst [vmem:[#allocation6 + $0x70] sm:$0xff] %v6997
    %7037 = vst [vmem:[#allocation6 + $0x78] sm:$0xff] %v7013
    %7038 = vst [vmem:[#allocation6 + $0x80] sm:$0xff] %v6998
    %7039 = vst [vmem:[#allocation6 + $0x88] sm:$0xff] %v7014
    %7040 = vst [vmem:[#allocation6 + $0x90] sm:$0xff] %v6999
    %7041 = vst [vmem:[#allocation6 + $0x98] sm:$0xff] %v7015
    %7042 = vst [vmem:[#allocation6 + $0xa0] sm:$0xff] %v7000
    %7043 = vst [vmem:[#allocation6 + $0xa8] sm:$0xff] %v7016
    %7044 = vst [vmem:[#allocation6 + $0xb0] sm:$0xff] %v7001
    %7045 = vst [vmem:[#allocation6 + $0xb8] sm:$0xff] %v7017
    %7046 = vst [vmem:[#allocation6 + $0xc0] sm:$0xff] %v7002
    %7047 = vst [vmem:[#allocation6 + $0xc8] sm:$0xff] %v7018
    %7048 = vst [vmem:[#allocation6 + $0xd0] sm:$0xff] %v7003
    %7049 = vst [vmem:[#allocation6 + $0xd8] sm:$0xff] %v7019
    %7050 = vst [vmem:[#allocation6 + $0xe0] sm:$0xff] %v7004
    %7051 = vst [vmem:[#allocation6 + $0xe8] sm:$0xff] %v7020
    %7052 = vst [vmem:[#allocation6 + $0xf0] sm:$0xff] %v7005
    %7053 = vst [vmem:[#allocation6 + $0xf8] sm:$0xff] %v7021
    // Predicated region
    $region42: #{inception_a_unit.1} parent=1 // pred_check
      _
    $region43: #{inception_a_unit.1} parent=1 // pred_check_branch
      %7055 = sbr.rel (0) target = $region45
    $region44: #{inception_a_unit.1} parent=1 // pred_region
      %7057 = vsyncadd [#allocation7], 0
      %s7058 = sshll.u32 [#allocation6], 4
      %s7059 = int_to_ptr.vmem [resolvable:$true] %s7058
      %s7060 = sshll.u32 %s10, 4
      %s7061 = int_to_ptr.hbm [resolvable:$true] %s7060
      %7066 = dma.vmem_to_hbm [thread:$0]  %s7059, 4096, %s7061, [#allocation7], 256, 256, 16
    $region45: #{inception_a_unit.1} parent=1 // pred_fallthru
      _
    // Predicated region
    $region46: #{inception_a_unit.1} parent=1 // pred_check
      _
    $region47: #{inception_a_unit.1} parent=1 // pred_check_branch
      %7068 = sbr.rel (0) target = $region49
    $region48: #{inception_a_unit.1} parent=1 // pred_region
      %7070 = dma.done [#allocation7], 4096
    $region49: #{inception_a_unit.1} parent=1 // pred_fallthru
      _
    %7071 = vsyncpa [#allocation7], 1

</llo_original>
